<compile_context>
chip_gen: v7x
topology: tpu7x:2x2x1
jax: 0.10.0
libtpu: 0.0.40
codegen_flags: <defaults>
</compile_context>

<pallas_src>
import functools
import math

import jax
import jax.numpy as jnp
from jax import lax
from jax.experimental import pallas as pl
from jax.experimental.pallas import tpu as pltpu


def decoder_layer_kernel(x_ref, mem_ref, lam_ref, pam_ref,
                         swq, sbq, swk, sbk, swv, sbv, swo, sbo, g1, bt1,
                         cwq, cbq, cwk, cbk, cwv, cbv, cwo, cbo, g2, bt2,
                         fw1, fb1, fw2, fb2, g3, bt3,
                         o_ref, *, num_heads):
    x = x_ref[...]          # (S, d)      float32
    mem = mem_ref[...]      # (S_mem, d)  float32
    lam = lam_ref[...]      # (S, S)      look-ahead mask (1 = masked)
    pam = pam_ref[...]      # (S, S_mem)  target padding mask (1 = masked)

    def linear(h, w_ref, b_ref):
        return jnp.dot(h, w_ref[...], preferred_element_type=jnp.float32) + b_ref[...]

    def layer_norm(h, g_ref, b_ref):
        inv_n = 1.0 / h.shape[-1]
        mean = jnp.sum(h, axis=-1, keepdims=True) * inv_n
        msq = jnp.sum(h * h, axis=-1, keepdims=True) * inv_n
        var = msq - mean * mean
        return (h - mean) * lax.rsqrt(var + 1e-6) * g_ref[...] + b_ref[...]

    def mha(xq, xkv, mask, wq, bq, wk, bk, wv, bv, wo, bo):
        d = xq.shape[-1]
        d_k = d // num_heads
        scale = 1.0 / float(math.sqrt(d_k))
        q = linear(xq, wq, bq)    # (S_q, d)
        k = linear(xkv, wk, bk)   # (S_k, d)
        v = linear(xkv, wv, bv)   # (S_k, d)
        acc = None
        for h in range(num_heads):
            lo = h * d_k
            qh = q[:, lo:lo + d_k]                       # (S_q, d_k)
            kh = k[:, lo:lo + d_k]                       # (S_k, d_k)
            vh = v[:, lo:lo + d_k]                       # (S_k, d_k)
            s = lax.dot_general(qh, kh, (((1,), (1,)), ((), ())),
                                preferred_element_type=jnp.float32) * scale
            s = s + mask * (-1e9)
            s = s - jnp.max(s, axis=-1, keepdims=True)
            e = jnp.exp(s)
            p = e / jnp.sum(e, axis=-1, keepdims=True)
            head = jnp.dot(p, vh, preferred_element_type=jnp.float32)        # (S_q, d_k)
            part = jnp.dot(head, wo[lo:lo + d_k, :],
                           preferred_element_type=jnp.float32)               # (S_q, d)
            acc = part if acc is None else acc + part
        return acc + bo[...]

    # sub-layer 1: masked self-attention + residual + LayerNorm
    a1 = mha(x, x, lam, swq, sbq, swk, sbk, swv, sbv, swo, sbo)
    h1 = layer_norm(x + a1, g1, bt1)

    # sub-layer 2: cross-attention over encoder memory + residual + LayerNorm
    a2 = mha(h1, mem, pam, cwq, cbq, cwk, cbk, cwv, cbv, cwo, cbo)
    h2 = layer_norm(h1 + a2, g2, bt2)

    # sub-layer 3: position-wise FFN + residual + LayerNorm
    f = jnp.maximum(linear(h2, fw1, fb1), 0.0)
    f = linear(f, fw2, fb2)
    o_ref[...] = layer_norm(h2 + f, g3, bt3).astype(o_ref.dtype)


def decoder_layer(x, memory, look_ahead_mask, trg_padding_mask, params, *, num_heads):
    """x: (B, S, d), memory: (B, S_mem, d), masks: (B, S, S) / (B, S, S_mem)."""
    B, S, d = x.shape
    S_mem = memory.shape[1]

    (swq, sbq, swk, sbk, swv, sbv, swo, sbo, g1, bt1,
     cwq, cbq, cwk, cbk, cwv, cbv, cwo, cbo, g2, bt2,
     fw1, fb1, fw2, fb2, g3, bt3) = params

    lam = jnp.broadcast_to(look_ahead_mask.astype(x.dtype), (B, S, S))
    pam = jnp.broadcast_to(trg_padding_mask.astype(x.dtype), (B, S, S_mem))

    row = lambda v: v.reshape(1, -1)
    args = [x, memory, lam, pam,
            swq, row(sbq), swk, row(sbk), swv, row(sbv), swo, row(sbo), row(g1), row(bt1),
            cwq, row(cbq), cwk, row(cbk), cwv, row(cbv), cwo, row(cbo), row(g2), row(bt2),
            fw1, row(fb1), fw2, row(fb2), row(g3), row(bt3)]

    def const2d(a):
        return pl.BlockSpec(a.shape, lambda b: (0, 0))

    in_specs = [
        pl.BlockSpec((None, S, d), lambda b: (b, 0, 0)),        # x       (per batch)
        pl.BlockSpec((None, S_mem, d), lambda b: (b, 0, 0)),    # memory  (per batch)
        pl.BlockSpec((None, S, S), lambda b: (b, 0, 0)),        # look-ahead mask
        pl.BlockSpec((None, S, S_mem), lambda b: (b, 0, 0)),    # padding mask
    ] + [const2d(a) for a in args[4:]]

    out = pl.pallas_call(
        functools.partial(decoder_layer_kernel, num_heads=num_heads),
        out_shape=jax.ShapeDtypeStruct((B, S, d), x.dtype),
        grid=(B,),
        in_specs=in_specs,
        out_specs=pl.BlockSpec((None, S, d), lambda b: (b, 0, 0)),
        compiler_params=pltpu.CompilerParams(dimension_semantics=("parallel",)),
    )(*args)
    return out


def init_params(key, d_model, num_heads, dff):
    """Deterministic synthetic parameters (PyTorch Linear init, pre-transposed)."""
    ks = jax.random.split(key, 20)

    def lin(kw, kb, fan_in, fan_out):
        bound = 1.0 / math.sqrt(fan_in)
        w = jax.random.uniform(kw, (fan_out, fan_in), jnp.float32, -bound, bound)
        b = jax.random.uniform(kb, (fan_out,), jnp.float32, -bound, bound)
        return w.T, b   # (fan_in, fan_out)

    swq, sbq = lin(ks[0], ks[1], d_model, d_model)
    swk, sbk = lin(ks[2], ks[3], d_model, d_model)
    swv, sbv = lin(ks[4], ks[5], d_model, d_model)
    swo, sbo = lin(ks[6], ks[7], d_model, d_model)
    cwq, cbq = lin(ks[8], ks[9], d_model, d_model)
    cwk, cbk = lin(ks[10], ks[11], d_model, d_model)
    cwv, cbv = lin(ks[12], ks[13], d_model, d_model)
    cwo, cbo = lin(ks[14], ks[15], d_model, d_model)
    fw1, fb1 = lin(ks[16], ks[17], d_model, dff)
    fw2, fb2 = lin(ks[18], ks[19], dff, d_model)
    ones = jnp.ones((d_model,), jnp.float32)
    zeros = jnp.zeros((d_model,), jnp.float32)
    return (swq, sbq, swk, sbk, swv, sbv, swo, sbo, ones, zeros,
            cwq, cbq, cwk, cbk, cwv, cbv, cwo, cbo, ones, zeros,
            fw1, fb1, fw2, fb2, ones, zeros)


# ---------------- pure-JAX reference (high precision) ----------------
def _ref_mha(xq, xkv, mask, wq, bq, wk, bk, wv, bv, wo, bo, num_heads):
    hp = "highest"
    B, Sq, d = xq.shape
    Sk = xkv.shape[1]
    dk = d // num_heads
    q = (jnp.einsum("bsd,de->bse", xq, wq, precision=hp) + bq).reshape(B, Sq, num_heads, dk).transpose(0, 2, 1, 3)
    k = (jnp.einsum("bsd,de->bse", xkv, wk, precision=hp) + bk).reshape(B, Sk, num_heads, dk).transpose(0, 2, 1, 3)
    v = (jnp.einsum("bsd,de->bse", xkv, wv, precision=hp) + bv).reshape(B, Sk, num_heads, dk).transpose(0, 2, 1, 3)
    s = jnp.einsum("bhqe,bhke->bhqk", q, k, precision=hp) / math.sqrt(dk)
    s = s + mask[:, None, :, :] * (-1e9)
    p = jax.nn.softmax(s, axis=-1)
    ctx = jnp.einsum("bhqk,bhke->bhqe", p, v, precision=hp).transpose(0, 2, 1, 3).reshape(B, Sq, d)
    return jnp.einsum("bsd,de->bse", ctx, wo, precision=hp) + bo


def _ref_ln(h, g, b):
    m = jnp.mean(h, axis=-1, keepdims=True)
    v = jnp.mean((h - m) ** 2, axis=-1, keepdims=True)
    return (h - m) * lax.rsqrt(v + 1e-6) * g + b


def decoder_layer_ref(x, memory, lam, pam, params, num_heads):
    (swq, sbq, swk, sbk, swv, sbv, swo, sbo, g1, bt1,
     cwq, cbq, cwk, cbk, cwv, cbv, cwo, cbo, g2, bt2,
     fw1, fb1, fw2, fb2, g3, bt3) = params
    hp = "highest"
    a1 = _ref_mha(x, x, lam, swq, sbq, swk, sbk, swv, sbv, swo, sbo, num_heads)
    h1 = _ref_ln(x + a1, g1, bt1)
    a2 = _ref_mha(h1, memory, pam, cwq, cbq, cwk, cbk, cwv, cbv, cwo, cbo, num_heads)
    h2 = _ref_ln(h1 + a2, g2, bt2)
    f = jnp.maximum(jnp.einsum("bsd,df->bsf", h2, fw1, precision=hp) + fb1, 0.0)
    f = jnp.einsum("bsf,fd->bsd", f, fw2, precision=hp) + fb2
    return _ref_ln(h2 + f, g3, bt3)


if __name__ == "__main__":
    B, S, S_mem = 2, 8, 16
    d_model, num_heads, dff = 128, 8, 256   # d_model = 128 -> lane-dense stores

    key = jax.random.PRNGKey(0)
    kx, km, kp = jax.random.split(key, 3)
    x = jax.random.normal(kx, (B, S, d_model), jnp.float32)
    memory = jax.random.normal(km, (B, S_mem, d_model), jnp.float32)
    params = init_params(kp, d_model, num_heads, dff)

    # look-ahead (causal) mask: 1 above the diagonal, broadcast over batch
    look_ahead_mask = jnp.broadcast_to(
        jnp.triu(jnp.ones((S, S), jnp.float32), k=1)[None, :, :], (B, S, S))
    # target padding mask over memory: pad the last 3 positions of batch 1
    trg_padding_mask = jnp.zeros((B, 1, S_mem), jnp.float32).at[1, 0, S_mem - 3:].set(1.0)
    trg_padding_mask = jnp.broadcast_to(trg_padding_mask, (B, S, S_mem))

    out = decoder_layer(x, memory, look_ahead_mask, trg_padding_mask, params,
                        num_heads=num_heads)
    out = jax.block_until_ready(out)

    ref = decoder_layer_ref(x, memory, look_ahead_mask, trg_padding_mask, params, num_heads)
    assert out.shape == (B, S, d_model)
    max_err = float(jnp.max(jnp.abs(out - ref)))
    assert jnp.allclose(out, ref, atol=1e-2, rtol=1e-2), f"mismatch vs reference, max_err={max_err}"
    print("KERNEL_OK")
</pallas_src>

<mosaic_0001>
module attributes {stable_mosaic.version = 11 : i64} {
  func.func @decoder_layer_kernel(%arg0: i32, %arg1: memref<1x8x128xf32, #tpu.memory_space<vmem>>, %arg2: memref<1x16x128xf32, #tpu.memory_space<vmem>>, %arg3: memref<1x8x8xf32, #tpu.memory_space<vmem>>, %arg4: memref<1x8x16xf32, #tpu.memory_space<vmem>>, %arg5: memref<128x128xf32, #tpu.memory_space<vmem>>, %arg6: memref<1x128xf32, #tpu.memory_space<vmem>>, %arg7: memref<128x128xf32, #tpu.memory_space<vmem>>, %arg8: memref<1x128xf32, #tpu.memory_space<vmem>>, %arg9: memref<128x128xf32, #tpu.memory_space<vmem>>, %arg10: memref<1x128xf32, #tpu.memory_space<vmem>>, %arg11: memref<128x128xf32, #tpu.memory_space<vmem>>, %arg12: memref<1x128xf32, #tpu.memory_space<vmem>>, %arg13: memref<1x128xf32, #tpu.memory_space<vmem>>, %arg14: memref<1x128xf32, #tpu.memory_space<vmem>>, %arg15: memref<128x128xf32, #tpu.memory_space<vmem>>, %arg16: memref<1x128xf32, #tpu.memory_space<vmem>>, %arg17: memref<128x128xf32, #tpu.memory_space<vmem>>, %arg18: memref<1x128xf32, #tpu.memory_space<vmem>>, %arg19: memref<128x128xf32, #tpu.memory_space<vmem>>, %arg20: memref<1x128xf32, #tpu.memory_space<vmem>>, %arg21: memref<128x128xf32, #tpu.memory_space<vmem>>, %arg22: memref<1x128xf32, #tpu.memory_space<vmem>>, %arg23: memref<1x128xf32, #tpu.memory_space<vmem>>, %arg24: memref<1x128xf32, #tpu.memory_space<vmem>>, %arg25: memref<128x256xf32, #tpu.memory_space<vmem>>, %arg26: memref<1x256xf32, #tpu.memory_space<vmem>>, %arg27: memref<256x128xf32, #tpu.memory_space<vmem>>, %arg28: memref<1x128xf32, #tpu.memory_space<vmem>>, %arg29: memref<1x128xf32, #tpu.memory_space<vmem>>, %arg30: memref<1x128xf32, #tpu.memory_space<vmem>>, %arg31: memref<1x8x128xf32, #tpu.memory_space<vmem>>) attributes {dimension_semantics = [#tpu.dimension_semantics<parallel>], iteration_bounds = array<i64: 2>, scalar_prefetch = 0 : i64, scratch_operands = 0 : i64, tpu.core_type = #tpu.core_type<tc>, window_params = [{transform_indices = @transform_0, window_bounds = array<i64: 1, 8, 128>}, {transform_indices = @transform_1, window_bounds = array<i64: 1, 16, 128>}, {transform_indices = @transform_2, window_bounds = array<i64: 1, 8, 8>}, {transform_indices = @transform_3, window_bounds = array<i64: 1, 8, 16>}, {pipeline_mode = #tpu.pipeline_mode<synchronous>, transform_indices = @transform_4, window_bounds = array<i64: 128, 128>}, {pipeline_mode = #tpu.pipeline_mode<synchronous>, transform_indices = @transform_5, window_bounds = array<i64: 1, 128>}, {pipeline_mode = #tpu.pipeline_mode<synchronous>, transform_indices = @transform_6, window_bounds = array<i64: 128, 128>}, {pipeline_mode = #tpu.pipeline_mode<synchronous>, transform_indices = @transform_7, window_bounds = array<i64: 1, 128>}, {pipeline_mode = #tpu.pipeline_mode<synchronous>, transform_indices = @transform_8, window_bounds = array<i64: 128, 128>}, {pipeline_mode = #tpu.pipeline_mode<synchronous>, transform_indices = @transform_9, window_bounds = array<i64: 1, 128>}, {pipeline_mode = #tpu.pipeline_mode<synchronous>, transform_indices = @transform_10, window_bounds = array<i64: 128, 128>}, {pipeline_mode = #tpu.pipeline_mode<synchronous>, transform_indices = @transform_11, window_bounds = array<i64: 1, 128>}, {pipeline_mode = #tpu.pipeline_mode<synchronous>, transform_indices = @transform_12, window_bounds = array<i64: 1, 128>}, {pipeline_mode = #tpu.pipeline_mode<synchronous>, transform_indices = @transform_13, window_bounds = array<i64: 1, 128>}, {pipeline_mode = #tpu.pipeline_mode<synchronous>, transform_indices = @transform_14, window_bounds = array<i64: 128, 128>}, {pipeline_mode = #tpu.pipeline_mode<synchronous>, transform_indices = @transform_15, window_bounds = array<i64: 1, 128>}, {pipeline_mode = #tpu.pipeline_mode<synchronous>, transform_indices = @transform_16, window_bounds = array<i64: 128, 128>}, {pipeline_mode = #tpu.pipeline_mode<synchronous>, transform_indices = @transform_17, window_bounds = array<i64: 1, 128>}, {pipeline_mode = #tpu.pipeline_mode<synchronous>, transform_indices = @transform_18, window_bounds = array<i64: 128, 128>}, {pipeline_mode = #tpu.pipeline_mode<synchronous>, transform_indices = @transform_19, window_bounds = array<i64: 1, 128>}, {pipeline_mode = #tpu.pipeline_mode<synchronous>, transform_indices = @transform_20, window_bounds = array<i64: 128, 128>}, {pipeline_mode = #tpu.pipeline_mode<synchronous>, transform_indices = @transform_21, window_bounds = array<i64: 1, 128>}, {pipeline_mode = #tpu.pipeline_mode<synchronous>, transform_indices = @transform_22, window_bounds = array<i64: 1, 128>}, {pipeline_mode = #tpu.pipeline_mode<synchronous>, transform_indices = @transform_23, window_bounds = array<i64: 1, 128>}, {pipeline_mode = #tpu.pipeline_mode<synchronous>, transform_indices = @transform_24, window_bounds = array<i64: 128, 256>}, {pipeline_mode = #tpu.pipeline_mode<synchronous>, transform_indices = @transform_25, window_bounds = array<i64: 1, 256>}, {pipeline_mode = #tpu.pipeline_mode<synchronous>, transform_indices = @transform_26, window_bounds = array<i64: 256, 128>}, {pipeline_mode = #tpu.pipeline_mode<synchronous>, transform_indices = @transform_27, window_bounds = array<i64: 1, 128>}, {pipeline_mode = #tpu.pipeline_mode<synchronous>, transform_indices = @transform_28, window_bounds = array<i64: 1, 128>}, {pipeline_mode = #tpu.pipeline_mode<synchronous>, transform_indices = @transform_29, window_bounds = array<i64: 1, 128>}, {transform_indices = @transform_30, window_bounds = array<i64: 1, 8, 128>}]} {
    %c0 = arith.constant 0 : index
    %c0_0 = arith.constant 0 : index
    %c0_1 = arith.constant 0 : index
    %0 = vector.load %arg1[%c0, %c0_0, %c0_1] : memref<1x8x128xf32, #tpu.memory_space<vmem>>, vector<1x8x128xf32>
    %1 = vector.shape_cast %0 : vector<1x8x128xf32> to vector<8x128xf32>
    %c0_2 = arith.constant 0 : index
    %c0_3 = arith.constant 0 : index
    %c0_4 = arith.constant 0 : index
    %2 = vector.load %arg2[%c0_2, %c0_3, %c0_4] : memref<1x16x128xf32, #tpu.memory_space<vmem>>, vector<1x16x128xf32>
    %3 = vector.shape_cast %2 : vector<1x16x128xf32> to vector<16x128xf32>
    %c0_5 = arith.constant 0 : index
    %c0_6 = arith.constant 0 : index
    %c0_7 = arith.constant 0 : index
    %4 = vector.load %arg3[%c0_5, %c0_6, %c0_7] : memref<1x8x8xf32, #tpu.memory_space<vmem>>, vector<1x8x8xf32>
    %5 = vector.shape_cast %4 : vector<1x8x8xf32> to vector<8x8xf32>
    %c0_8 = arith.constant 0 : index
    %c0_9 = arith.constant 0 : index
    %c0_10 = arith.constant 0 : index
    %6 = vector.load %arg4[%c0_8, %c0_9, %c0_10] : memref<1x8x16xf32, #tpu.memory_space<vmem>>, vector<1x8x16xf32>
    %7 = vector.shape_cast %6 : vector<1x8x16xf32> to vector<8x16xf32>
    %c0_11 = arith.constant 0 : index
    %c0_12 = arith.constant 0 : index
    %8 = vector.load %arg5[%c0_11, %c0_12] : memref<128x128xf32, #tpu.memory_space<vmem>>, vector<128x128xf32>
    %cst = arith.constant dense<0.000000e+00> : vector<8x128xf32>
    %9 = tpu.matmul %1, %8, %cst {dimension_numbers = #tpu.dot_dimension_numbers<[1], [0], [0], [1], [0, 0, 1, 1], [], []>} : vector<8x128xf32>, vector<128x128xf32>, vector<8x128xf32> -> vector<8x128xf32>
    %c0_13 = arith.constant 0 : index
    %c0_14 = arith.constant 0 : index
    %10 = vector.load %arg6[%c0_13, %c0_14] : memref<1x128xf32, #tpu.memory_space<vmem>>, vector<1x128xf32>
    %11 = vector.broadcast %10 : vector<1x128xf32> to vector<8x128xf32>
    %12 = arith.addf %9, %11 : vector<8x128xf32>
    %c0_15 = arith.constant 0 : index
    %c0_16 = arith.constant 0 : index
    %13 = vector.load %arg7[%c0_15, %c0_16] : memref<128x128xf32, #tpu.memory_space<vmem>>, vector<128x128xf32>
    %cst_17 = arith.constant dense<0.000000e+00> : vector<8x128xf32>
    %14 = tpu.matmul %1, %13, %cst_17 {dimension_numbers = #tpu.dot_dimension_numbers<[1], [0], [0], [1], [0, 0, 1, 1], [], []>} : vector<8x128xf32>, vector<128x128xf32>, vector<8x128xf32> -> vector<8x128xf32>
    %c0_18 = arith.constant 0 : index
    %c0_19 = arith.constant 0 : index
    %15 = vector.load %arg8[%c0_18, %c0_19] : memref<1x128xf32, #tpu.memory_space<vmem>>, vector<1x128xf32>
    %16 = vector.broadcast %15 : vector<1x128xf32> to vector<8x128xf32>
    %17 = arith.addf %14, %16 : vector<8x128xf32>
    %c0_20 = arith.constant 0 : index
    %c0_21 = arith.constant 0 : index
    %18 = vector.load %arg9[%c0_20, %c0_21] : memref<128x128xf32, #tpu.memory_space<vmem>>, vector<128x128xf32>
    %cst_22 = arith.constant dense<0.000000e+00> : vector<8x128xf32>
    %19 = tpu.matmul %1, %18, %cst_22 {dimension_numbers = #tpu.dot_dimension_numbers<[1], [0], [0], [1], [0, 0, 1, 1], [], []>} : vector<8x128xf32>, vector<128x128xf32>, vector<8x128xf32> -> vector<8x128xf32>
    %c0_23 = arith.constant 0 : index
    %c0_24 = arith.constant 0 : index
    %20 = vector.load %arg10[%c0_23, %c0_24] : memref<1x128xf32, #tpu.memory_space<vmem>>, vector<1x128xf32>
    %21 = vector.broadcast %20 : vector<1x128xf32> to vector<8x128xf32>
    %22 = arith.addf %19, %21 : vector<8x128xf32>
    %23 = vector.extract_strided_slice %12 {offsets = [0, 0], sizes = [8, 16], strides = [1, 1]} : vector<8x128xf32> to vector<8x16xf32>
    %24 = vector.extract_strided_slice %17 {offsets = [0, 0], sizes = [8, 16], strides = [1, 1]} : vector<8x128xf32> to vector<8x16xf32>
    %25 = vector.extract_strided_slice %22 {offsets = [0, 0], sizes = [8, 16], strides = [1, 1]} : vector<8x128xf32> to vector<8x16xf32>
    %cst_25 = arith.constant dense<0.000000e+00> : vector<8x8xf32>
    %26 = tpu.matmul %23, %24, %cst_25 {dimension_numbers = #tpu.dot_dimension_numbers<[1], [1], [0], [0], [0, 0, 1, 0], [], []>} : vector<8x16xf32>, vector<8x16xf32>, vector<8x8xf32> -> vector<8x8xf32>
    %cst_26 = arith.constant 2.500000e-01 : f32
    %27 = vector.broadcast %cst_26 : f32 to vector<8x8xf32>
    %28 = arith.mulf %26, %27 : vector<8x8xf32>
    %cst_27 = arith.constant -1.000000e+09 : f32
    %29 = vector.broadcast %cst_27 : f32 to vector<8x8xf32>
    %30 = arith.mulf %5, %29 : vector<8x8xf32>
    %31 = arith.addf %28, %30 : vector<8x8xf32>
    %cst_28 = arith.constant dense<0xFF800000> : vector<8xf32>
    %32 = vector.multi_reduction <maximumf>, %31, %cst_28 [1] : vector<8x8xf32> to vector<8xf32>
    %33 = vector.shape_cast %32 : vector<8xf32> to vector<8x1xf32>
    %34 = vector.broadcast %33 : vector<8x1xf32> to vector<8x8xf32>
    %35 = arith.subf %31, %34 : vector<8x8xf32>
    %36 = math.exp %35 : vector<8x8xf32>
    %cst_29 = arith.constant dense<0.000000e+00> : vector<8xf32>
    %37 = vector.multi_reduction <add>, %36, %cst_29 [1] : vector<8x8xf32> to vector<8xf32>
    %38 = vector.shape_cast %37 : vector<8xf32> to vector<8x1xf32>
    %39 = vector.broadcast %38 : vector<8x1xf32> to vector<8x8xf32>
    %40 = arith.divf %36, %39 : vector<8x8xf32>
    %cst_30 = arith.constant dense<0.000000e+00> : vector<8x16xf32>
    %41 = tpu.matmul %40, %25, %cst_30 {dimension_numbers = #tpu.dot_dimension_numbers<[1], [0], [0], [1], [0, 0, 1, 1], [], []>} : vector<8x8xf32>, vector<8x16xf32>, vector<8x16xf32> -> vector<8x16xf32>
    %c0_31 = arith.constant 0 : index
    %c0_32 = arith.constant 0 : index
    %42 = vector.load %arg11[%c0_31, %c0_32] : memref<128x128xf32, #tpu.memory_space<vmem>>, vector<16x128xf32>
    %cst_33 = arith.constant dense<0.000000e+00> : vector<8x128xf32>
    %43 = tpu.matmul %41, %42, %cst_33 {dimension_numbers = #tpu.dot_dimension_numbers<[1], [0], [0], [1], [0, 0, 1, 1], [], []>} : vector<8x16xf32>, vector<16x128xf32>, vector<8x128xf32> -> vector<8x128xf32>
    %44 = vector.extract_strided_slice %12 {offsets = [0, 16], sizes = [8, 16], strides = [1, 1]} : vector<8x128xf32> to vector<8x16xf32>
    %45 = vector.extract_strided_slice %17 {offsets = [0, 16], sizes = [8, 16], strides = [1, 1]} : vector<8x128xf32> to vector<8x16xf32>
    %46 = vector.extract_strided_slice %22 {offsets = [0, 16], sizes = [8, 16], strides = [1, 1]} : vector<8x128xf32> to vector<8x16xf32>
    %cst_34 = arith.constant dense<0.000000e+00> : vector<8x8xf32>
    %47 = tpu.matmul %44, %45, %cst_34 {dimension_numbers = #tpu.dot_dimension_numbers<[1], [1], [0], [0], [0, 0, 1, 0], [], []>} : vector<8x16xf32>, vector<8x16xf32>, vector<8x8xf32> -> vector<8x8xf32>
    %cst_35 = arith.constant 2.500000e-01 : f32
    %48 = vector.broadcast %cst_35 : f32 to vector<8x8xf32>
    %49 = arith.mulf %47, %48 : vector<8x8xf32>
    %cst_36 = arith.constant -1.000000e+09 : f32
    %50 = vector.broadcast %cst_36 : f32 to vector<8x8xf32>
    %51 = arith.mulf %5, %50 : vector<8x8xf32>
    %52 = arith.addf %49, %51 : vector<8x8xf32>
    %cst_37 = arith.constant dense<0xFF800000> : vector<8xf32>
    %53 = vector.multi_reduction <maximumf>, %52, %cst_37 [1] : vector<8x8xf32> to vector<8xf32>
    %54 = vector.shape_cast %53 : vector<8xf32> to vector<8x1xf32>
    %55 = vector.broadcast %54 : vector<8x1xf32> to vector<8x8xf32>
    %56 = arith.subf %52, %55 : vector<8x8xf32>
    %57 = math.exp %56 : vector<8x8xf32>
    %cst_38 = arith.constant dense<0.000000e+00> : vector<8xf32>
    %58 = vector.multi_reduction <add>, %57, %cst_38 [1] : vector<8x8xf32> to vector<8xf32>
    %59 = vector.shape_cast %58 : vector<8xf32> to vector<8x1xf32>
    %60 = vector.broadcast %59 : vector<8x1xf32> to vector<8x8xf32>
    %61 = arith.divf %57, %60 : vector<8x8xf32>
    %cst_39 = arith.constant dense<0.000000e+00> : vector<8x16xf32>
    %62 = tpu.matmul %61, %46, %cst_39 {dimension_numbers = #tpu.dot_dimension_numbers<[1], [0], [0], [1], [0, 0, 1, 1], [], []>} : vector<8x8xf32>, vector<8x16xf32>, vector<8x16xf32> -> vector<8x16xf32>
    %c16 = arith.constant 16 : index
    %c0_40 = arith.constant 0 : index
    %63 = vector.load %arg11[%c16, %c0_40] : memref<128x128xf32, #tpu.memory_space<vmem>>, vector<16x128xf32>
    %cst_41 = arith.constant dense<0.000000e+00> : vector<8x128xf32>
    %64 = tpu.matmul %62, %63, %cst_41 {dimension_numbers = #tpu.dot_dimension_numbers<[1], [0], [0], [1], [0, 0, 1, 1], [], []>} : vector<8x16xf32>, vector<16x128xf32>, vector<8x128xf32> -> vector<8x128xf32>
    %65 = arith.addf %43, %64 : vector<8x128xf32>
    %66 = vector.extract_strided_slice %12 {offsets = [0, 32], sizes = [8, 16], strides = [1, 1]} : vector<8x128xf32> to vector<8x16xf32>
    %67 = vector.extract_strided_slice %17 {offsets = [0, 32], sizes = [8, 16], strides = [1, 1]} : vector<8x128xf32> to vector<8x16xf32>
    %68 = vector.extract_strided_slice %22 {offsets = [0, 32], sizes = [8, 16], strides = [1, 1]} : vector<8x128xf32> to vector<8x16xf32>
    %cst_42 = arith.constant dense<0.000000e+00> : vector<8x8xf32>
    %69 = tpu.matmul %66, %67, %cst_42 {dimension_numbers = #tpu.dot_dimension_numbers<[1], [1], [0], [0], [0, 0, 1, 0], [], []>} : vector<8x16xf32>, vector<8x16xf32>, vector<8x8xf32> -> vector<8x8xf32>
    %cst_43 = arith.constant 2.500000e-01 : f32
    %70 = vector.broadcast %cst_43 : f32 to vector<8x8xf32>
    %71 = arith.mulf %69, %70 : vector<8x8xf32>
    %cst_44 = arith.constant -1.000000e+09 : f32
    %72 = vector.broadcast %cst_44 : f32 to vector<8x8xf32>
    %73 = arith.mulf %5, %72 : vector<8x8xf32>
    %74 = arith.addf %71, %73 : vector<8x8xf32>
    %cst_45 = arith.constant dense<0xFF800000> : vector<8xf32>
    %75 = vector.multi_reduction <maximumf>, %74, %cst_45 [1] : vector<8x8xf32> to vector<8xf32>
    %76 = vector.shape_cast %75 : vector<8xf32> to vector<8x1xf32>
    %77 = vector.broadcast %76 : vector<8x1xf32> to vector<8x8xf32>
    %78 = arith.subf %74, %77 : vector<8x8xf32>
    %79 = math.exp %78 : vector<8x8xf32>
    %cst_46 = arith.constant dense<0.000000e+00> : vector<8xf32>
    %80 = vector.multi_reduction <add>, %79, %cst_46 [1] : vector<8x8xf32> to vector<8xf32>
    %81 = vector.shape_cast %80 : vector<8xf32> to vector<8x1xf32>
    %82 = vector.broadcast %81 : vector<8x1xf32> to vector<8x8xf32>
    %83 = arith.divf %79, %82 : vector<8x8xf32>
    %cst_47 = arith.constant dense<0.000000e+00> : vector<8x16xf32>
    %84 = tpu.matmul %83, %68, %cst_47 {dimension_numbers = #tpu.dot_dimension_numbers<[1], [0], [0], [1], [0, 0, 1, 1], [], []>} : vector<8x8xf32>, vector<8x16xf32>, vector<8x16xf32> -> vector<8x16xf32>
    %c32 = arith.constant 32 : index
    %c0_48 = arith.constant 0 : index
    %85 = vector.load %arg11[%c32, %c0_48] : memref<128x128xf32, #tpu.memory_space<vmem>>, vector<16x128xf32>
    %cst_49 = arith.constant dense<0.000000e+00> : vector<8x128xf32>
    %86 = tpu.matmul %84, %85, %cst_49 {dimension_numbers = #tpu.dot_dimension_numbers<[1], [0], [0], [1], [0, 0, 1, 1], [], []>} : vector<8x16xf32>, vector<16x128xf32>, vector<8x128xf32> -> vector<8x128xf32>
    %87 = arith.addf %65, %86 : vector<8x128xf32>
    %88 = vector.extract_strided_slice %12 {offsets = [0, 48], sizes = [8, 16], strides = [1, 1]} : vector<8x128xf32> to vector<8x16xf32>
    %89 = vector.extract_strided_slice %17 {offsets = [0, 48], sizes = [8, 16], strides = [1, 1]} : vector<8x128xf32> to vector<8x16xf32>
    %90 = vector.extract_strided_slice %22 {offsets = [0, 48], sizes = [8, 16], strides = [1, 1]} : vector<8x128xf32> to vector<8x16xf32>
    %cst_50 = arith.constant dense<0.000000e+00> : vector<8x8xf32>
    %91 = tpu.matmul %88, %89, %cst_50 {dimension_numbers = #tpu.dot_dimension_numbers<[1], [1], [0], [0], [0, 0, 1, 0], [], []>} : vector<8x16xf32>, vector<8x16xf32>, vector<8x8xf32> -> vector<8x8xf32>
    %cst_51 = arith.constant 2.500000e-01 : f32
    %92 = vector.broadcast %cst_51 : f32 to vector<8x8xf32>
    %93 = arith.mulf %91, %92 : vector<8x8xf32>
    %cst_52 = arith.constant -1.000000e+09 : f32
    %94 = vector.broadcast %cst_52 : f32 to vector<8x8xf32>
    %95 = arith.mulf %5, %94 : vector<8x8xf32>
    %96 = arith.addf %93, %95 : vector<8x8xf32>
    %cst_53 = arith.constant dense<0xFF800000> : vector<8xf32>
    %97 = vector.multi_reduction <maximumf>, %96, %cst_53 [1] : vector<8x8xf32> to vector<8xf32>
    %98 = vector.shape_cast %97 : vector<8xf32> to vector<8x1xf32>
    %99 = vector.broadcast %98 : vector<8x1xf32> to vector<8x8xf32>
    %100 = arith.subf %96, %99 : vector<8x8xf32>
    %101 = math.exp %100 : vector<8x8xf32>
    %cst_54 = arith.constant dense<0.000000e+00> : vector<8xf32>
    %102 = vector.multi_reduction <add>, %101, %cst_54 [1] : vector<8x8xf32> to vector<8xf32>
    %103 = vector.shape_cast %102 : vector<8xf32> to vector<8x1xf32>
    %104 = vector.broadcast %103 : vector<8x1xf32> to vector<8x8xf32>
    %105 = arith.divf %101, %104 : vector<8x8xf32>
    %cst_55 = arith.constant dense<0.000000e+00> : vector<8x16xf32>
    %106 = tpu.matmul %105, %90, %cst_55 {dimension_numbers = #tpu.dot_dimension_numbers<[1], [0], [0], [1], [0, 0, 1, 1], [], []>} : vector<8x8xf32>, vector<8x16xf32>, vector<8x16xf32> -> vector<8x16xf32>
    %c48 = arith.constant 48 : index
    %c0_56 = arith.constant 0 : index
    %107 = vector.load %arg11[%c48, %c0_56] : memref<128x128xf32, #tpu.memory_space<vmem>>, vector<16x128xf32>
    %cst_57 = arith.constant dense<0.000000e+00> : vector<8x128xf32>
    %108 = tpu.matmul %106, %107, %cst_57 {dimension_numbers = #tpu.dot_dimension_numbers<[1], [0], [0], [1], [0, 0, 1, 1], [], []>} : vector<8x16xf32>, vector<16x128xf32>, vector<8x128xf32> -> vector<8x128xf32>
    %109 = arith.addf %87, %108 : vector<8x128xf32>
    %110 = vector.extract_strided_slice %12 {offsets = [0, 64], sizes = [8, 16], strides = [1, 1]} : vector<8x128xf32> to vector<8x16xf32>
    %111 = vector.extract_strided_slice %17 {offsets = [0, 64], sizes = [8, 16], strides = [1, 1]} : vector<8x128xf32> to vector<8x16xf32>
    %112 = vector.extract_strided_slice %22 {offsets = [0, 64], sizes = [8, 16], strides = [1, 1]} : vector<8x128xf32> to vector<8x16xf32>
    %cst_58 = arith.constant dense<0.000000e+00> : vector<8x8xf32>
    %113 = tpu.matmul %110, %111, %cst_58 {dimension_numbers = #tpu.dot_dimension_numbers<[1], [1], [0], [0], [0, 0, 1, 0], [], []>} : vector<8x16xf32>, vector<8x16xf32>, vector<8x8xf32> -> vector<8x8xf32>
    %cst_59 = arith.constant 2.500000e-01 : f32
    %114 = vector.broadcast %cst_59 : f32 to vector<8x8xf32>
    %115 = arith.mulf %113, %114 : vector<8x8xf32>
    %cst_60 = arith.constant -1.000000e+09 : f32
    %116 = vector.broadcast %cst_60 : f32 to vector<8x8xf32>
    %117 = arith.mulf %5, %116 : vector<8x8xf32>
    %118 = arith.addf %115, %117 : vector<8x8xf32>
    %cst_61 = arith.constant dense<0xFF800000> : vector<8xf32>
    %119 = vector.multi_reduction <maximumf>, %118, %cst_61 [1] : vector<8x8xf32> to vector<8xf32>
    %120 = vector.shape_cast %119 : vector<8xf32> to vector<8x1xf32>
    %121 = vector.broadcast %120 : vector<8x1xf32> to vector<8x8xf32>
    %122 = arith.subf %118, %121 : vector<8x8xf32>
    %123 = math.exp %122 : vector<8x8xf32>
    %cst_62 = arith.constant dense<0.000000e+00> : vector<8xf32>
    %124 = vector.multi_reduction <add>, %123, %cst_62 [1] : vector<8x8xf32> to vector<8xf32>
    %125 = vector.shape_cast %124 : vector<8xf32> to vector<8x1xf32>
    %126 = vector.broadcast %125 : vector<8x1xf32> to vector<8x8xf32>
    %127 = arith.divf %123, %126 : vector<8x8xf32>
    %cst_63 = arith.constant dense<0.000000e+00> : vector<8x16xf32>
    %128 = tpu.matmul %127, %112, %cst_63 {dimension_numbers = #tpu.dot_dimension_numbers<[1], [0], [0], [1], [0, 0, 1, 1], [], []>} : vector<8x8xf32>, vector<8x16xf32>, vector<8x16xf32> -> vector<8x16xf32>
    %c64 = arith.constant 64 : index
    %c0_64 = arith.constant 0 : index
    %129 = vector.load %arg11[%c64, %c0_64] : memref<128x128xf32, #tpu.memory_space<vmem>>, vector<16x128xf32>
    %cst_65 = arith.constant dense<0.000000e+00> : vector<8x128xf32>
    %130 = tpu.matmul %128, %129, %cst_65 {dimension_numbers = #tpu.dot_dimension_numbers<[1], [0], [0], [1], [0, 0, 1, 1], [], []>} : vector<8x16xf32>, vector<16x128xf32>, vector<8x128xf32> -> vector<8x128xf32>
    %131 = arith.addf %109, %130 : vector<8x128xf32>
    %132 = vector.extract_strided_slice %12 {offsets = [0, 80], sizes = [8, 16], strides = [1, 1]} : vector<8x128xf32> to vector<8x16xf32>
    %133 = vector.extract_strided_slice %17 {offsets = [0, 80], sizes = [8, 16], strides = [1, 1]} : vector<8x128xf32> to vector<8x16xf32>
    %134 = vector.extract_strided_slice %22 {offsets = [0, 80], sizes = [8, 16], strides = [1, 1]} : vector<8x128xf32> to vector<8x16xf32>
    %cst_66 = arith.constant dense<0.000000e+00> : vector<8x8xf32>
    %135 = tpu.matmul %132, %133, %cst_66 {dimension_numbers = #tpu.dot_dimension_numbers<[1], [1], [0], [0], [0, 0, 1, 0], [], []>} : vector<8x16xf32>, vector<8x16xf32>, vector<8x8xf32> -> vector<8x8xf32>
    %cst_67 = arith.constant 2.500000e-01 : f32
    %136 = vector.broadcast %cst_67 : f32 to vector<8x8xf32>
    %137 = arith.mulf %135, %136 : vector<8x8xf32>
    %cst_68 = arith.constant -1.000000e+09 : f32
    %138 = vector.broadcast %cst_68 : f32 to vector<8x8xf32>
    %139 = arith.mulf %5, %138 : vector<8x8xf32>
    %140 = arith.addf %137, %139 : vector<8x8xf32>
    %cst_69 = arith.constant dense<0xFF800000> : vector<8xf32>
    %141 = vector.multi_reduction <maximumf>, %140, %cst_69 [1] : vector<8x8xf32> to vector<8xf32>
    %142 = vector.shape_cast %141 : vector<8xf32> to vector<8x1xf32>
    %143 = vector.broadcast %142 : vector<8x1xf32> to vector<8x8xf32>
    %144 = arith.subf %140, %143 : vector<8x8xf32>
    %145 = math.exp %144 : vector<8x8xf32>
    %cst_70 = arith.constant dense<0.000000e+00> : vector<8xf32>
    %146 = vector.multi_reduction <add>, %145, %cst_70 [1] : vector<8x8xf32> to vector<8xf32>
    %147 = vector.shape_cast %146 : vector<8xf32> to vector<8x1xf32>
    %148 = vector.broadcast %147 : vector<8x1xf32> to vector<8x8xf32>
    %149 = arith.divf %145, %148 : vector<8x8xf32>
    %cst_71 = arith.constant dense<0.000000e+00> : vector<8x16xf32>
    %150 = tpu.matmul %149, %134, %cst_71 {dimension_numbers = #tpu.dot_dimension_numbers<[1], [0], [0], [1], [0, 0, 1, 1], [], []>} : vector<8x8xf32>, vector<8x16xf32>, vector<8x16xf32> -> vector<8x16xf32>
    %c80 = arith.constant 80 : index
    %c0_72 = arith.constant 0 : index
    %151 = vector.load %arg11[%c80, %c0_72] : memref<128x128xf32, #tpu.memory_space<vmem>>, vector<16x128xf32>
    %cst_73 = arith.constant dense<0.000000e+00> : vector<8x128xf32>
    %152 = tpu.matmul %150, %151, %cst_73 {dimension_numbers = #tpu.dot_dimension_numbers<[1], [0], [0], [1], [0, 0, 1, 1], [], []>} : vector<8x16xf32>, vector<16x128xf32>, vector<8x128xf32> -> vector<8x128xf32>
    %153 = arith.addf %131, %152 : vector<8x128xf32>
    %154 = vector.extract_strided_slice %12 {offsets = [0, 96], sizes = [8, 16], strides = [1, 1]} : vector<8x128xf32> to vector<8x16xf32>
    %155 = vector.extract_strided_slice %17 {offsets = [0, 96], sizes = [8, 16], strides = [1, 1]} : vector<8x128xf32> to vector<8x16xf32>
    %156 = vector.extract_strided_slice %22 {offsets = [0, 96], sizes = [8, 16], strides = [1, 1]} : vector<8x128xf32> to vector<8x16xf32>
    %cst_74 = arith.constant dense<0.000000e+00> : vector<8x8xf32>
    %157 = tpu.matmul %154, %155, %cst_74 {dimension_numbers = #tpu.dot_dimension_numbers<[1], [1], [0], [0], [0, 0, 1, 0], [], []>} : vector<8x16xf32>, vector<8x16xf32>, vector<8x8xf32> -> vector<8x8xf32>
    %cst_75 = arith.constant 2.500000e-01 : f32
    %158 = vector.broadcast %cst_75 : f32 to vector<8x8xf32>
    %159 = arith.mulf %157, %158 : vector<8x8xf32>
    %cst_76 = arith.constant -1.000000e+09 : f32
    %160 = vector.broadcast %cst_76 : f32 to vector<8x8xf32>
    %161 = arith.mulf %5, %160 : vector<8x8xf32>
    %162 = arith.addf %159, %161 : vector<8x8xf32>
    %cst_77 = arith.constant dense<0xFF800000> : vector<8xf32>
    %163 = vector.multi_reduction <maximumf>, %162, %cst_77 [1] : vector<8x8xf32> to vector<8xf32>
    %164 = vector.shape_cast %163 : vector<8xf32> to vector<8x1xf32>
    %165 = vector.broadcast %164 : vector<8x1xf32> to vector<8x8xf32>
    %166 = arith.subf %162, %165 : vector<8x8xf32>
    %167 = math.exp %166 : vector<8x8xf32>
    %cst_78 = arith.constant dense<0.000000e+00> : vector<8xf32>
    %168 = vector.multi_reduction <add>, %167, %cst_78 [1] : vector<8x8xf32> to vector<8xf32>
    %169 = vector.shape_cast %168 : vector<8xf32> to vector<8x1xf32>
    %170 = vector.broadcast %169 : vector<8x1xf32> to vector<8x8xf32>
    %171 = arith.divf %167, %170 : vector<8x8xf32>
    %cst_79 = arith.constant dense<0.000000e+00> : vector<8x16xf32>
    %172 = tpu.matmul %171, %156, %cst_79 {dimension_numbers = #tpu.dot_dimension_numbers<[1], [0], [0], [1], [0, 0, 1, 1], [], []>} : vector<8x8xf32>, vector<8x16xf32>, vector<8x16xf32> -> vector<8x16xf32>
    %c96 = arith.constant 96 : index
    %c0_80 = arith.constant 0 : index
    %173 = vector.load %arg11[%c96, %c0_80] : memref<128x128xf32, #tpu.memory_space<vmem>>, vector<16x128xf32>
    %cst_81 = arith.constant dense<0.000000e+00> : vector<8x128xf32>
    %174 = tpu.matmul %172, %173, %cst_81 {dimension_numbers = #tpu.dot_dimension_numbers<[1], [0], [0], [1], [0, 0, 1, 1], [], []>} : vector<8x16xf32>, vector<16x128xf32>, vector<8x128xf32> -> vector<8x128xf32>
    %175 = arith.addf %153, %174 : vector<8x128xf32>
    %176 = vector.extract_strided_slice %12 {offsets = [0, 112], sizes = [8, 16], strides = [1, 1]} : vector<8x128xf32> to vector<8x16xf32>
    %177 = vector.extract_strided_slice %17 {offsets = [0, 112], sizes = [8, 16], strides = [1, 1]} : vector<8x128xf32> to vector<8x16xf32>
    %178 = vector.extract_strided_slice %22 {offsets = [0, 112], sizes = [8, 16], strides = [1, 1]} : vector<8x128xf32> to vector<8x16xf32>
    %cst_82 = arith.constant dense<0.000000e+00> : vector<8x8xf32>
    %179 = tpu.matmul %176, %177, %cst_82 {dimension_numbers = #tpu.dot_dimension_numbers<[1], [1], [0], [0], [0, 0, 1, 0], [], []>} : vector<8x16xf32>, vector<8x16xf32>, vector<8x8xf32> -> vector<8x8xf32>
    %cst_83 = arith.constant 2.500000e-01 : f32
    %180 = vector.broadcast %cst_83 : f32 to vector<8x8xf32>
    %181 = arith.mulf %179, %180 : vector<8x8xf32>
    %cst_84 = arith.constant -1.000000e+09 : f32
    %182 = vector.broadcast %cst_84 : f32 to vector<8x8xf32>
    %183 = arith.mulf %5, %182 : vector<8x8xf32>
    %184 = arith.addf %181, %183 : vector<8x8xf32>
    %cst_85 = arith.constant dense<0xFF800000> : vector<8xf32>
    %185 = vector.multi_reduction <maximumf>, %184, %cst_85 [1] : vector<8x8xf32> to vector<8xf32>
    %186 = vector.shape_cast %185 : vector<8xf32> to vector<8x1xf32>
    %187 = vector.broadcast %186 : vector<8x1xf32> to vector<8x8xf32>
    %188 = arith.subf %184, %187 : vector<8x8xf32>
    %189 = math.exp %188 : vector<8x8xf32>
    %cst_86 = arith.constant dense<0.000000e+00> : vector<8xf32>
    %190 = vector.multi_reduction <add>, %189, %cst_86 [1] : vector<8x8xf32> to vector<8xf32>
    %191 = vector.shape_cast %190 : vector<8xf32> to vector<8x1xf32>
    %192 = vector.broadcast %191 : vector<8x1xf32> to vector<8x8xf32>
    %193 = arith.divf %189, %192 : vector<8x8xf32>
    %cst_87 = arith.constant dense<0.000000e+00> : vector<8x16xf32>
    %194 = tpu.matmul %193, %178, %cst_87 {dimension_numbers = #tpu.dot_dimension_numbers<[1], [0], [0], [1], [0, 0, 1, 1], [], []>} : vector<8x8xf32>, vector<8x16xf32>, vector<8x16xf32> -> vector<8x16xf32>
    %c112 = arith.constant 112 : index
    %c0_88 = arith.constant 0 : index
    %195 = vector.load %arg11[%c112, %c0_88] : memref<128x128xf32, #tpu.memory_space<vmem>>, vector<16x128xf32>
    %cst_89 = arith.constant dense<0.000000e+00> : vector<8x128xf32>
    %196 = tpu.matmul %194, %195, %cst_89 {dimension_numbers = #tpu.dot_dimension_numbers<[1], [0], [0], [1], [0, 0, 1, 1], [], []>} : vector<8x16xf32>, vector<16x128xf32>, vector<8x128xf32> -> vector<8x128xf32>
    %197 = arith.addf %175, %196 : vector<8x128xf32>
    %c0_90 = arith.constant 0 : index
    %c0_91 = arith.constant 0 : index
    %198 = vector.load %arg12[%c0_90, %c0_91] : memref<1x128xf32, #tpu.memory_space<vmem>>, vector<1x128xf32>
    %199 = vector.broadcast %198 : vector<1x128xf32> to vector<8x128xf32>
    %200 = arith.addf %197, %199 : vector<8x128xf32>
    %201 = arith.addf %1, %200 : vector<8x128xf32>
    %cst_92 = arith.constant dense<0.000000e+00> : vector<8xf32>
    %202 = vector.multi_reduction <add>, %201, %cst_92 [1] : vector<8x128xf32> to vector<8xf32>
    %203 = vector.shape_cast %202 : vector<8xf32> to vector<8x1xf32>
    %cst_93 = arith.constant 7.812500e-03 : f32
    %204 = vector.broadcast %cst_93 : f32 to vector<8x1xf32>
    %205 = arith.mulf %203, %204 : vector<8x1xf32>
    %206 = arith.mulf %201, %201 : vector<8x128xf32>
    %cst_94 = arith.constant dense<0.000000e+00> : vector<8xf32>
    %207 = vector.multi_reduction <add>, %206, %cst_94 [1] : vector<8x128xf32> to vector<8xf32>
    %208 = vector.shape_cast %207 : vector<8xf32> to vector<8x1xf32>
    %cst_95 = arith.constant 7.812500e-03 : f32
    %209 = vector.broadcast %cst_95 : f32 to vector<8x1xf32>
    %210 = arith.mulf %208, %209 : vector<8x1xf32>
    %211 = arith.mulf %205, %205 : vector<8x1xf32>
    %212 = arith.subf %210, %211 : vector<8x1xf32>
    %213 = vector.broadcast %205 : vector<8x1xf32> to vector<8x128xf32>
    %214 = arith.subf %201, %213 : vector<8x128xf32>
    %cst_96 = arith.constant 9.99999997E-7 : f32
    %215 = vector.broadcast %cst_96 : f32 to vector<8x1xf32>
    %216 = arith.addf %212, %215 : vector<8x1xf32>
    %217 = math.rsqrt %216 : vector<8x1xf32>
    %218 = vector.broadcast %217 : vector<8x1xf32> to vector<8x128xf32>
    %219 = arith.mulf %214, %218 : vector<8x128xf32>
    %c0_97 = arith.constant 0 : index
    %c0_98 = arith.constant 0 : index
    %220 = vector.load %arg13[%c0_97, %c0_98] : memref<1x128xf32, #tpu.memory_space<vmem>>, vector<1x128xf32>
    %221 = vector.broadcast %220 : vector<1x128xf32> to vector<8x128xf32>
    %222 = arith.mulf %219, %221 : vector<8x128xf32>
    %c0_99 = arith.constant 0 : index
    %c0_100 = arith.constant 0 : index
    %223 = vector.load %arg14[%c0_99, %c0_100] : memref<1x128xf32, #tpu.memory_space<vmem>>, vector<1x128xf32>
    %224 = vector.broadcast %223 : vector<1x128xf32> to vector<8x128xf32>
    %225 = arith.addf %222, %224 : vector<8x128xf32>
    %c0_101 = arith.constant 0 : index
    %c0_102 = arith.constant 0 : index
    %226 = vector.load %arg15[%c0_101, %c0_102] : memref<128x128xf32, #tpu.memory_space<vmem>>, vector<128x128xf32>
    %cst_103 = arith.constant dense<0.000000e+00> : vector<8x128xf32>
    %227 = tpu.matmul %225, %226, %cst_103 {dimension_numbers = #tpu.dot_dimension_numbers<[1], [0], [0], [1], [0, 0, 1, 1], [], []>} : vector<8x128xf32>, vector<128x128xf32>, vector<8x128xf32> -> vector<8x128xf32>
    %c0_104 = arith.constant 0 : index
    %c0_105 = arith.constant 0 : index
    %228 = vector.load %arg16[%c0_104, %c0_105] : memref<1x128xf32, #tpu.memory_space<vmem>>, vector<1x128xf32>
    %229 = vector.broadcast %228 : vector<1x128xf32> to vector<8x128xf32>
    %230 = arith.addf %227, %229 : vector<8x128xf32>
    %c0_106 = arith.constant 0 : index
    %c0_107 = arith.constant 0 : index
    %231 = vector.load %arg17[%c0_106, %c0_107] : memref<128x128xf32, #tpu.memory_space<vmem>>, vector<128x128xf32>
    %cst_108 = arith.constant dense<0.000000e+00> : vector<16x128xf32>
    %232 = tpu.matmul %3, %231, %cst_108 {dimension_numbers = #tpu.dot_dimension_numbers<[1], [0], [0], [1], [0, 0, 1, 1], [], []>} : vector<16x128xf32>, vector<128x128xf32>, vector<16x128xf32> -> vector<16x128xf32>
    %c0_109 = arith.constant 0 : index
    %c0_110 = arith.constant 0 : index
    %233 = vector.load %arg18[%c0_109, %c0_110] : memref<1x128xf32, #tpu.memory_space<vmem>>, vector<1x128xf32>
    %234 = vector.broadcast %233 : vector<1x128xf32> to vector<16x128xf32>
    %235 = arith.addf %232, %234 : vector<16x128xf32>
    %c0_111 = arith.constant 0 : index
    %c0_112 = arith.constant 0 : index
    %236 = vector.load %arg19[%c0_111, %c0_112] : memref<128x128xf32, #tpu.memory_space<vmem>>, vector<128x128xf32>
    %cst_113 = arith.constant dense<0.000000e+00> : vector<16x128xf32>
    %237 = tpu.matmul %3, %236, %cst_113 {dimension_numbers = #tpu.dot_dimension_numbers<[1], [0], [0], [1], [0, 0, 1, 1], [], []>} : vector<16x128xf32>, vector<128x128xf32>, vector<16x128xf32> -> vector<16x128xf32>
    %c0_114 = arith.constant 0 : index
    %c0_115 = arith.constant 0 : index
    %238 = vector.load %arg20[%c0_114, %c0_115] : memref<1x128xf32, #tpu.memory_space<vmem>>, vector<1x128xf32>
    %239 = vector.broadcast %238 : vector<1x128xf32> to vector<16x128xf32>
    %240 = arith.addf %237, %239 : vector<16x128xf32>
    %241 = vector.extract_strided_slice %230 {offsets = [0, 0], sizes = [8, 16], strides = [1, 1]} : vector<8x128xf32> to vector<8x16xf32>
    %242 = vector.extract_strided_slice %235 {offsets = [0, 0], sizes = [16, 16], strides = [1, 1]} : vector<16x128xf32> to vector<16x16xf32>
    %243 = vector.extract_strided_slice %240 {offsets = [0, 0], sizes = [16, 16], strides = [1, 1]} : vector<16x128xf32> to vector<16x16xf32>
    %cst_116 = arith.constant dense<0.000000e+00> : vector<8x16xf32>
    %244 = tpu.matmul %241, %242, %cst_116 {dimension_numbers = #tpu.dot_dimension_numbers<[1], [1], [0], [0], [0, 0, 1, 0], [], []>} : vector<8x16xf32>, vector<16x16xf32>, vector<8x16xf32> -> vector<8x16xf32>
    %cst_117 = arith.constant 2.500000e-01 : f32
    %245 = vector.broadcast %cst_117 : f32 to vector<8x16xf32>
    %246 = arith.mulf %244, %245 : vector<8x16xf32>
    %cst_118 = arith.constant -1.000000e+09 : f32
    %247 = vector.broadcast %cst_118 : f32 to vector<8x16xf32>
    %248 = arith.mulf %7, %247 : vector<8x16xf32>
    %249 = arith.addf %246, %248 : vector<8x16xf32>
    %cst_119 = arith.constant dense<0xFF800000> : vector<8xf32>
    %250 = vector.multi_reduction <maximumf>, %249, %cst_119 [1] : vector<8x16xf32> to vector<8xf32>
    %251 = vector.shape_cast %250 : vector<8xf32> to vector<8x1xf32>
    %252 = vector.broadcast %251 : vector<8x1xf32> to vector<8x16xf32>
    %253 = arith.subf %249, %252 : vector<8x16xf32>
    %254 = math.exp %253 : vector<8x16xf32>
    %cst_120 = arith.constant dense<0.000000e+00> : vector<8xf32>
    %255 = vector.multi_reduction <add>, %254, %cst_120 [1] : vector<8x16xf32> to vector<8xf32>
    %256 = vector.shape_cast %255 : vector<8xf32> to vector<8x1xf32>
    %257 = vector.broadcast %256 : vector<8x1xf32> to vector<8x16xf32>
    %258 = arith.divf %254, %257 : vector<8x16xf32>
    %cst_121 = arith.constant dense<0.000000e+00> : vector<8x16xf32>
    %259 = tpu.matmul %258, %243, %cst_121 {dimension_numbers = #tpu.dot_dimension_numbers<[1], [0], [0], [1], [0, 0, 1, 1], [], []>} : vector<8x16xf32>, vector<16x16xf32>, vector<8x16xf32> -> vector<8x16xf32>
    %c0_122 = arith.constant 0 : index
    %c0_123 = arith.constant 0 : index
    %260 = vector.load %arg21[%c0_122, %c0_123] : memref<128x128xf32, #tpu.memory_space<vmem>>, vector<16x128xf32>
    %cst_124 = arith.constant dense<0.000000e+00> : vector<8x128xf32>
    %261 = tpu.matmul %259, %260, %cst_124 {dimension_numbers = #tpu.dot_dimension_numbers<[1], [0], [0], [1], [0, 0, 1, 1], [], []>} : vector<8x16xf32>, vector<16x128xf32>, vector<8x128xf32> -> vector<8x128xf32>
    %262 = vector.extract_strided_slice %230 {offsets = [0, 16], sizes = [8, 16], strides = [1, 1]} : vector<8x128xf32> to vector<8x16xf32>
    %263 = vector.extract_strided_slice %235 {offsets = [0, 16], sizes = [16, 16], strides = [1, 1]} : vector<16x128xf32> to vector<16x16xf32>
    %264 = vector.extract_strided_slice %240 {offsets = [0, 16], sizes = [16, 16], strides = [1, 1]} : vector<16x128xf32> to vector<16x16xf32>
    %cst_125 = arith.constant dense<0.000000e+00> : vector<8x16xf32>
    %265 = tpu.matmul %262, %263, %cst_125 {dimension_numbers = #tpu.dot_dimension_numbers<[1], [1], [0], [0], [0, 0, 1, 0], [], []>} : vector<8x16xf32>, vector<16x16xf32>, vector<8x16xf32> -> vector<8x16xf32>
    %cst_126 = arith.constant 2.500000e-01 : f32
    %266 = vector.broadcast %cst_126 : f32 to vector<8x16xf32>
    %267 = arith.mulf %265, %266 : vector<8x16xf32>
    %cst_127 = arith.constant -1.000000e+09 : f32
    %268 = vector.broadcast %cst_127 : f32 to vector<8x16xf32>
    %269 = arith.mulf %7, %268 : vector<8x16xf32>
    %270 = arith.addf %267, %269 : vector<8x16xf32>
    %cst_128 = arith.constant dense<0xFF800000> : vector<8xf32>
    %271 = vector.multi_reduction <maximumf>, %270, %cst_128 [1] : vector<8x16xf32> to vector<8xf32>
    %272 = vector.shape_cast %271 : vector<8xf32> to vector<8x1xf32>
    %273 = vector.broadcast %272 : vector<8x1xf32> to vector<8x16xf32>
    %274 = arith.subf %270, %273 : vector<8x16xf32>
    %275 = math.exp %274 : vector<8x16xf32>
    %cst_129 = arith.constant dense<0.000000e+00> : vector<8xf32>
    %276 = vector.multi_reduction <add>, %275, %cst_129 [1] : vector<8x16xf32> to vector<8xf32>
    %277 = vector.shape_cast %276 : vector<8xf32> to vector<8x1xf32>
    %278 = vector.broadcast %277 : vector<8x1xf32> to vector<8x16xf32>
    %279 = arith.divf %275, %278 : vector<8x16xf32>
    %cst_130 = arith.constant dense<0.000000e+00> : vector<8x16xf32>
    %280 = tpu.matmul %279, %264, %cst_130 {dimension_numbers = #tpu.dot_dimension_numbers<[1], [0], [0], [1], [0, 0, 1, 1], [], []>} : vector<8x16xf32>, vector<16x16xf32>, vector<8x16xf32> -> vector<8x16xf32>
    %c16_131 = arith.constant 16 : index
    %c0_132 = arith.constant 0 : index
    %281 = vector.load %arg21[%c16_131, %c0_132] : memref<128x128xf32, #tpu.memory_space<vmem>>, vector<16x128xf32>
    %cst_133 = arith.constant dense<0.000000e+00> : vector<8x128xf32>
    %282 = tpu.matmul %280, %281, %cst_133 {dimension_numbers = #tpu.dot_dimension_numbers<[1], [0], [0], [1], [0, 0, 1, 1], [], []>} : vector<8x16xf32>, vector<16x128xf32>, vector<8x128xf32> -> vector<8x128xf32>
    %283 = arith.addf %261, %282 : vector<8x128xf32>
    %284 = vector.extract_strided_slice %230 {offsets = [0, 32], sizes = [8, 16], strides = [1, 1]} : vector<8x128xf32> to vector<8x16xf32>
    %285 = vector.extract_strided_slice %235 {offsets = [0, 32], sizes = [16, 16], strides = [1, 1]} : vector<16x128xf32> to vector<16x16xf32>
    %286 = vector.extract_strided_slice %240 {offsets = [0, 32], sizes = [16, 16], strides = [1, 1]} : vector<16x128xf32> to vector<16x16xf32>
    %cst_134 = arith.constant dense<0.000000e+00> : vector<8x16xf32>
    %287 = tpu.matmul %284, %285, %cst_134 {dimension_numbers = #tpu.dot_dimension_numbers<[1], [1], [0], [0], [0, 0, 1, 0], [], []>} : vector<8x16xf32>, vector<16x16xf32>, vector<8x16xf32> -> vector<8x16xf32>
    %cst_135 = arith.constant 2.500000e-01 : f32
    %288 = vector.broadcast %cst_135 : f32 to vector<8x16xf32>
    %289 = arith.mulf %287, %288 : vector<8x16xf32>
    %cst_136 = arith.constant -1.000000e+09 : f32
    %290 = vector.broadcast %cst_136 : f32 to vector<8x16xf32>
    %291 = arith.mulf %7, %290 : vector<8x16xf32>
    %292 = arith.addf %289, %291 : vector<8x16xf32>
    %cst_137 = arith.constant dense<0xFF800000> : vector<8xf32>
    %293 = vector.multi_reduction <maximumf>, %292, %cst_137 [1] : vector<8x16xf32> to vector<8xf32>
    %294 = vector.shape_cast %293 : vector<8xf32> to vector<8x1xf32>
    %295 = vector.broadcast %294 : vector<8x1xf32> to vector<8x16xf32>
    %296 = arith.subf %292, %295 : vector<8x16xf32>
    %297 = math.exp %296 : vector<8x16xf32>
    %cst_138 = arith.constant dense<0.000000e+00> : vector<8xf32>
    %298 = vector.multi_reduction <add>, %297, %cst_138 [1] : vector<8x16xf32> to vector<8xf32>
    %299 = vector.shape_cast %298 : vector<8xf32> to vector<8x1xf32>
    %300 = vector.broadcast %299 : vector<8x1xf32> to vector<8x16xf32>
    %301 = arith.divf %297, %300 : vector<8x16xf32>
    %cst_139 = arith.constant dense<0.000000e+00> : vector<8x16xf32>
    %302 = tpu.matmul %301, %286, %cst_139 {dimension_numbers = #tpu.dot_dimension_numbers<[1], [0], [0], [1], [0, 0, 1, 1], [], []>} : vector<8x16xf32>, vector<16x16xf32>, vector<8x16xf32> -> vector<8x16xf32>
    %c32_140 = arith.constant 32 : index
    %c0_141 = arith.constant 0 : index
    %303 = vector.load %arg21[%c32_140, %c0_141] : memref<128x128xf32, #tpu.memory_space<vmem>>, vector<16x128xf32>
    %cst_142 = arith.constant dense<0.000000e+00> : vector<8x128xf32>
    %304 = tpu.matmul %302, %303, %cst_142 {dimension_numbers = #tpu.dot_dimension_numbers<[1], [0], [0], [1], [0, 0, 1, 1], [], []>} : vector<8x16xf32>, vector<16x128xf32>, vector<8x128xf32> -> vector<8x128xf32>
    %305 = arith.addf %283, %304 : vector<8x128xf32>
    %306 = vector.extract_strided_slice %230 {offsets = [0, 48], sizes = [8, 16], strides = [1, 1]} : vector<8x128xf32> to vector<8x16xf32>
    %307 = vector.extract_strided_slice %235 {offsets = [0, 48], sizes = [16, 16], strides = [1, 1]} : vector<16x128xf32> to vector<16x16xf32>
    %308 = vector.extract_strided_slice %240 {offsets = [0, 48], sizes = [16, 16], strides = [1, 1]} : vector<16x128xf32> to vector<16x16xf32>
    %cst_143 = arith.constant dense<0.000000e+00> : vector<8x16xf32>
    %309 = tpu.matmul %306, %307, %cst_143 {dimension_numbers = #tpu.dot_dimension_numbers<[1], [1], [0], [0], [0, 0, 1, 0], [], []>} : vector<8x16xf32>, vector<16x16xf32>, vector<8x16xf32> -> vector<8x16xf32>
    %cst_144 = arith.constant 2.500000e-01 : f32
    %310 = vector.broadcast %cst_144 : f32 to vector<8x16xf32>
    %311 = arith.mulf %309, %310 : vector<8x16xf32>
    %cst_145 = arith.constant -1.000000e+09 : f32
    %312 = vector.broadcast %cst_145 : f32 to vector<8x16xf32>
    %313 = arith.mulf %7, %312 : vector<8x16xf32>
    %314 = arith.addf %311, %313 : vector<8x16xf32>
    %cst_146 = arith.constant dense<0xFF800000> : vector<8xf32>
    %315 = vector.multi_reduction <maximumf>, %314, %cst_146 [1] : vector<8x16xf32> to vector<8xf32>
    %316 = vector.shape_cast %315 : vector<8xf32> to vector<8x1xf32>
    %317 = vector.broadcast %316 : vector<8x1xf32> to vector<8x16xf32>
    %318 = arith.subf %314, %317 : vector<8x16xf32>
    %319 = math.exp %318 : vector<8x16xf32>
    %cst_147 = arith.constant dense<0.000000e+00> : vector<8xf32>
    %320 = vector.multi_reduction <add>, %319, %cst_147 [1] : vector<8x16xf32> to vector<8xf32>
    %321 = vector.shape_cast %320 : vector<8xf32> to vector<8x1xf32>
    %322 = vector.broadcast %321 : vector<8x1xf32> to vector<8x16xf32>
    %323 = arith.divf %319, %322 : vector<8x16xf32>
    %cst_148 = arith.constant dense<0.000000e+00> : vector<8x16xf32>
    %324 = tpu.matmul %323, %308, %cst_148 {dimension_numbers = #tpu.dot_dimension_numbers<[1], [0], [0], [1], [0, 0, 1, 1], [], []>} : vector<8x16xf32>, vector<16x16xf32>, vector<8x16xf32> -> vector<8x16xf32>
    %c48_149 = arith.constant 48 : index
    %c0_150 = arith.constant 0 : index
    %325 = vector.load %arg21[%c48_149, %c0_150] : memref<128x128xf32, #tpu.memory_space<vmem>>, vector<16x128xf32>
    %cst_151 = arith.constant dense<0.000000e+00> : vector<8x128xf32>
    %326 = tpu.matmul %324, %325, %cst_151 {dimension_numbers = #tpu.dot_dimension_numbers<[1], [0], [0], [1], [0, 0, 1, 1], [], []>} : vector<8x16xf32>, vector<16x128xf32>, vector<8x128xf32> -> vector<8x128xf32>
    %327 = arith.addf %305, %326 : vector<8x128xf32>
    %328 = vector.extract_strided_slice %230 {offsets = [0, 64], sizes = [8, 16], strides = [1, 1]} : vector<8x128xf32> to vector<8x16xf32>
    %329 = vector.extract_strided_slice %235 {offsets = [0, 64], sizes = [16, 16], strides = [1, 1]} : vector<16x128xf32> to vector<16x16xf32>
    %330 = vector.extract_strided_slice %240 {offsets = [0, 64], sizes = [16, 16], strides = [1, 1]} : vector<16x128xf32> to vector<16x16xf32>
    %cst_152 = arith.constant dense<0.000000e+00> : vector<8x16xf32>
    %331 = tpu.matmul %328, %329, %cst_152 {dimension_numbers = #tpu.dot_dimension_numbers<[1], [1], [0], [0], [0, 0, 1, 0], [], []>} : vector<8x16xf32>, vector<16x16xf32>, vector<8x16xf32> -> vector<8x16xf32>
    %cst_153 = arith.constant 2.500000e-01 : f32
    %332 = vector.broadcast %cst_153 : f32 to vector<8x16xf32>
    %333 = arith.mulf %331, %332 : vector<8x16xf32>
    %cst_154 = arith.constant -1.000000e+09 : f32
    %334 = vector.broadcast %cst_154 : f32 to vector<8x16xf32>
    %335 = arith.mulf %7, %334 : vector<8x16xf32>
    %336 = arith.addf %333, %335 : vector<8x16xf32>
    %cst_155 = arith.constant dense<0xFF800000> : vector<8xf32>
    %337 = vector.multi_reduction <maximumf>, %336, %cst_155 [1] : vector<8x16xf32> to vector<8xf32>
    %338 = vector.shape_cast %337 : vector<8xf32> to vector<8x1xf32>
    %339 = vector.broadcast %338 : vector<8x1xf32> to vector<8x16xf32>
    %340 = arith.subf %336, %339 : vector<8x16xf32>
    %341 = math.exp %340 : vector<8x16xf32>
    %cst_156 = arith.constant dense<0.000000e+00> : vector<8xf32>
    %342 = vector.multi_reduction <add>, %341, %cst_156 [1] : vector<8x16xf32> to vector<8xf32>
    %343 = vector.shape_cast %342 : vector<8xf32> to vector<8x1xf32>
    %344 = vector.broadcast %343 : vector<8x1xf32> to vector<8x16xf32>
    %345 = arith.divf %341, %344 : vector<8x16xf32>
    %cst_157 = arith.constant dense<0.000000e+00> : vector<8x16xf32>
    %346 = tpu.matmul %345, %330, %cst_157 {dimension_numbers = #tpu.dot_dimension_numbers<[1], [0], [0], [1], [0, 0, 1, 1], [], []>} : vector<8x16xf32>, vector<16x16xf32>, vector<8x16xf32> -> vector<8x16xf32>
    %c64_158 = arith.constant 64 : index
    %c0_159 = arith.constant 0 : index
    %347 = vector.load %arg21[%c64_158, %c0_159] : memref<128x128xf32, #tpu.memory_space<vmem>>, vector<16x128xf32>
    %cst_160 = arith.constant dense<0.000000e+00> : vector<8x128xf32>
    %348 = tpu.matmul %346, %347, %cst_160 {dimension_numbers = #tpu.dot_dimension_numbers<[1], [0], [0], [1], [0, 0, 1, 1], [], []>} : vector<8x16xf32>, vector<16x128xf32>, vector<8x128xf32> -> vector<8x128xf32>
    %349 = arith.addf %327, %348 : vector<8x128xf32>
    %350 = vector.extract_strided_slice %230 {offsets = [0, 80], sizes = [8, 16], strides = [1, 1]} : vector<8x128xf32> to vector<8x16xf32>
    %351 = vector.extract_strided_slice %235 {offsets = [0, 80], sizes = [16, 16], strides = [1, 1]} : vector<16x128xf32> to vector<16x16xf32>
    %352 = vector.extract_strided_slice %240 {offsets = [0, 80], sizes = [16, 16], strides = [1, 1]} : vector<16x128xf32> to vector<16x16xf32>
    %cst_161 = arith.constant dense<0.000000e+00> : vector<8x16xf32>
    %353 = tpu.matmul %350, %351, %cst_161 {dimension_numbers = #tpu.dot_dimension_numbers<[1], [1], [0], [0], [0, 0, 1, 0], [], []>} : vector<8x16xf32>, vector<16x16xf32>, vector<8x16xf32> -> vector<8x16xf32>
    %cst_162 = arith.constant 2.500000e-01 : f32
    %354 = vector.broadcast %cst_162 : f32 to vector<8x16xf32>
    %355 = arith.mulf %353, %354 : vector<8x16xf32>
    %cst_163 = arith.constant -1.000000e+09 : f32
    %356 = vector.broadcast %cst_163 : f32 to vector<8x16xf32>
    %357 = arith.mulf %7, %356 : vector<8x16xf32>
    %358 = arith.addf %355, %357 : vector<8x16xf32>
    %cst_164 = arith.constant dense<0xFF800000> : vector<8xf32>
    %359 = vector.multi_reduction <maximumf>, %358, %cst_164 [1] : vector<8x16xf32> to vector<8xf32>
    %360 = vector.shape_cast %359 : vector<8xf32> to vector<8x1xf32>
    %361 = vector.broadcast %360 : vector<8x1xf32> to vector<8x16xf32>
    %362 = arith.subf %358, %361 : vector<8x16xf32>
    %363 = math.exp %362 : vector<8x16xf32>
    %cst_165 = arith.constant dense<0.000000e+00> : vector<8xf32>
    %364 = vector.multi_reduction <add>, %363, %cst_165 [1] : vector<8x16xf32> to vector<8xf32>
    %365 = vector.shape_cast %364 : vector<8xf32> to vector<8x1xf32>
    %366 = vector.broadcast %365 : vector<8x1xf32> to vector<8x16xf32>
    %367 = arith.divf %363, %366 : vector<8x16xf32>
    %cst_166 = arith.constant dense<0.000000e+00> : vector<8x16xf32>
    %368 = tpu.matmul %367, %352, %cst_166 {dimension_numbers = #tpu.dot_dimension_numbers<[1], [0], [0], [1], [0, 0, 1, 1], [], []>} : vector<8x16xf32>, vector<16x16xf32>, vector<8x16xf32> -> vector<8x16xf32>
    %c80_167 = arith.constant 80 : index
    %c0_168 = arith.constant 0 : index
    %369 = vector.load %arg21[%c80_167, %c0_168] : memref<128x128xf32, #tpu.memory_space<vmem>>, vector<16x128xf32>
    %cst_169 = arith.constant dense<0.000000e+00> : vector<8x128xf32>
    %370 = tpu.matmul %368, %369, %cst_169 {dimension_numbers = #tpu.dot_dimension_numbers<[1], [0], [0], [1], [0, 0, 1, 1], [], []>} : vector<8x16xf32>, vector<16x128xf32>, vector<8x128xf32> -> vector<8x128xf32>
    %371 = arith.addf %349, %370 : vector<8x128xf32>
    %372 = vector.extract_strided_slice %230 {offsets = [0, 96], sizes = [8, 16], strides = [1, 1]} : vector<8x128xf32> to vector<8x16xf32>
    %373 = vector.extract_strided_slice %235 {offsets = [0, 96], sizes = [16, 16], strides = [1, 1]} : vector<16x128xf32> to vector<16x16xf32>
    %374 = vector.extract_strided_slice %240 {offsets = [0, 96], sizes = [16, 16], strides = [1, 1]} : vector<16x128xf32> to vector<16x16xf32>
    %cst_170 = arith.constant dense<0.000000e+00> : vector<8x16xf32>
    %375 = tpu.matmul %372, %373, %cst_170 {dimension_numbers = #tpu.dot_dimension_numbers<[1], [1], [0], [0], [0, 0, 1, 0], [], []>} : vector<8x16xf32>, vector<16x16xf32>, vector<8x16xf32> -> vector<8x16xf32>
    %cst_171 = arith.constant 2.500000e-01 : f32
    %376 = vector.broadcast %cst_171 : f32 to vector<8x16xf32>
    %377 = arith.mulf %375, %376 : vector<8x16xf32>
    %cst_172 = arith.constant -1.000000e+09 : f32
    %378 = vector.broadcast %cst_172 : f32 to vector<8x16xf32>
    %379 = arith.mulf %7, %378 : vector<8x16xf32>
    %380 = arith.addf %377, %379 : vector<8x16xf32>
    %cst_173 = arith.constant dense<0xFF800000> : vector<8xf32>
    %381 = vector.multi_reduction <maximumf>, %380, %cst_173 [1] : vector<8x16xf32> to vector<8xf32>
    %382 = vector.shape_cast %381 : vector<8xf32> to vector<8x1xf32>
    %383 = vector.broadcast %382 : vector<8x1xf32> to vector<8x16xf32>
    %384 = arith.subf %380, %383 : vector<8x16xf32>
    %385 = math.exp %384 : vector<8x16xf32>
    %cst_174 = arith.constant dense<0.000000e+00> : vector<8xf32>
    %386 = vector.multi_reduction <add>, %385, %cst_174 [1] : vector<8x16xf32> to vector<8xf32>
    %387 = vector.shape_cast %386 : vector<8xf32> to vector<8x1xf32>
    %388 = vector.broadcast %387 : vector<8x1xf32> to vector<8x16xf32>
    %389 = arith.divf %385, %388 : vector<8x16xf32>
    %cst_175 = arith.constant dense<0.000000e+00> : vector<8x16xf32>
    %390 = tpu.matmul %389, %374, %cst_175 {dimension_numbers = #tpu.dot_dimension_numbers<[1], [0], [0], [1], [0, 0, 1, 1], [], []>} : vector<8x16xf32>, vector<16x16xf32>, vector<8x16xf32> -> vector<8x16xf32>
    %c96_176 = arith.constant 96 : index
    %c0_177 = arith.constant 0 : index
    %391 = vector.load %arg21[%c96_176, %c0_177] : memref<128x128xf32, #tpu.memory_space<vmem>>, vector<16x128xf32>
    %cst_178 = arith.constant dense<0.000000e+00> : vector<8x128xf32>
    %392 = tpu.matmul %390, %391, %cst_178 {dimension_numbers = #tpu.dot_dimension_numbers<[1], [0], [0], [1], [0, 0, 1, 1], [], []>} : vector<8x16xf32>, vector<16x128xf32>, vector<8x128xf32> -> vector<8x128xf32>
    %393 = arith.addf %371, %392 : vector<8x128xf32>
    %394 = vector.extract_strided_slice %230 {offsets = [0, 112], sizes = [8, 16], strides = [1, 1]} : vector<8x128xf32> to vector<8x16xf32>
    %395 = vector.extract_strided_slice %235 {offsets = [0, 112], sizes = [16, 16], strides = [1, 1]} : vector<16x128xf32> to vector<16x16xf32>
    %396 = vector.extract_strided_slice %240 {offsets = [0, 112], sizes = [16, 16], strides = [1, 1]} : vector<16x128xf32> to vector<16x16xf32>
    %cst_179 = arith.constant dense<0.000000e+00> : vector<8x16xf32>
    %397 = tpu.matmul %394, %395, %cst_179 {dimension_numbers = #tpu.dot_dimension_numbers<[1], [1], [0], [0], [0, 0, 1, 0], [], []>} : vector<8x16xf32>, vector<16x16xf32>, vector<8x16xf32> -> vector<8x16xf32>
    %cst_180 = arith.constant 2.500000e-01 : f32
    %398 = vector.broadcast %cst_180 : f32 to vector<8x16xf32>
    %399 = arith.mulf %397, %398 : vector<8x16xf32>
    %cst_181 = arith.constant -1.000000e+09 : f32
    %400 = vector.broadcast %cst_181 : f32 to vector<8x16xf32>
    %401 = arith.mulf %7, %400 : vector<8x16xf32>
    %402 = arith.addf %399, %401 : vector<8x16xf32>
    %cst_182 = arith.constant dense<0xFF800000> : vector<8xf32>
    %403 = vector.multi_reduction <maximumf>, %402, %cst_182 [1] : vector<8x16xf32> to vector<8xf32>
    %404 = vector.shape_cast %403 : vector<8xf32> to vector<8x1xf32>
    %405 = vector.broadcast %404 : vector<8x1xf32> to vector<8x16xf32>
    %406 = arith.subf %402, %405 : vector<8x16xf32>
    %407 = math.exp %406 : vector<8x16xf32>
    %cst_183 = arith.constant dense<0.000000e+00> : vector<8xf32>
    %408 = vector.multi_reduction <add>, %407, %cst_183 [1] : vector<8x16xf32> to vector<8xf32>
    %409 = vector.shape_cast %408 : vector<8xf32> to vector<8x1xf32>
    %410 = vector.broadcast %409 : vector<8x1xf32> to vector<8x16xf32>
    %411 = arith.divf %407, %410 : vector<8x16xf32>
    %cst_184 = arith.constant dense<0.000000e+00> : vector<8x16xf32>
    %412 = tpu.matmul %411, %396, %cst_184 {dimension_numbers = #tpu.dot_dimension_numbers<[1], [0], [0], [1], [0, 0, 1, 1], [], []>} : vector<8x16xf32>, vector<16x16xf32>, vector<8x16xf32> -> vector<8x16xf32>
    %c112_185 = arith.constant 112 : index
    %c0_186 = arith.constant 0 : index
    %413 = vector.load %arg21[%c112_185, %c0_186] : memref<128x128xf32, #tpu.memory_space<vmem>>, vector<16x128xf32>
    %cst_187 = arith.constant dense<0.000000e+00> : vector<8x128xf32>
    %414 = tpu.matmul %412, %413, %cst_187 {dimension_numbers = #tpu.dot_dimension_numbers<[1], [0], [0], [1], [0, 0, 1, 1], [], []>} : vector<8x16xf32>, vector<16x128xf32>, vector<8x128xf32> -> vector<8x128xf32>
    %415 = arith.addf %393, %414 : vector<8x128xf32>
    %c0_188 = arith.constant 0 : index
    %c0_189 = arith.constant 0 : index
    %416 = vector.load %arg22[%c0_188, %c0_189] : memref<1x128xf32, #tpu.memory_space<vmem>>, vector<1x128xf32>
    %417 = vector.broadcast %416 : vector<1x128xf32> to vector<8x128xf32>
    %418 = arith.addf %415, %417 : vector<8x128xf32>
    %419 = arith.addf %225, %418 : vector<8x128xf32>
    %cst_190 = arith.constant dense<0.000000e+00> : vector<8xf32>
    %420 = vector.multi_reduction <add>, %419, %cst_190 [1] : vector<8x128xf32> to vector<8xf32>
    %421 = vector.shape_cast %420 : vector<8xf32> to vector<8x1xf32>
    %cst_191 = arith.constant 7.812500e-03 : f32
    %422 = vector.broadcast %cst_191 : f32 to vector<8x1xf32>
    %423 = arith.mulf %421, %422 : vector<8x1xf32>
    %424 = arith.mulf %419, %419 : vector<8x128xf32>
    %cst_192 = arith.constant dense<0.000000e+00> : vector<8xf32>
    %425 = vector.multi_reduction <add>, %424, %cst_192 [1] : vector<8x128xf32> to vector<8xf32>
    %426 = vector.shape_cast %425 : vector<8xf32> to vector<8x1xf32>
    %cst_193 = arith.constant 7.812500e-03 : f32
    %427 = vector.broadcast %cst_193 : f32 to vector<8x1xf32>
    %428 = arith.mulf %426, %427 : vector<8x1xf32>
    %429 = arith.mulf %423, %423 : vector<8x1xf32>
    %430 = arith.subf %428, %429 : vector<8x1xf32>
    %431 = vector.broadcast %423 : vector<8x1xf32> to vector<8x128xf32>
    %432 = arith.subf %419, %431 : vector<8x128xf32>
    %cst_194 = arith.constant 9.99999997E-7 : f32
    %433 = vector.broadcast %cst_194 : f32 to vector<8x1xf32>
    %434 = arith.addf %430, %433 : vector<8x1xf32>
    %435 = math.rsqrt %434 : vector<8x1xf32>
    %436 = vector.broadcast %435 : vector<8x1xf32> to vector<8x128xf32>
    %437 = arith.mulf %432, %436 : vector<8x128xf32>
    %c0_195 = arith.constant 0 : index
    %c0_196 = arith.constant 0 : index
    %438 = vector.load %arg23[%c0_195, %c0_196] : memref<1x128xf32, #tpu.memory_space<vmem>>, vector<1x128xf32>
    %439 = vector.broadcast %438 : vector<1x128xf32> to vector<8x128xf32>
    %440 = arith.mulf %437, %439 : vector<8x128xf32>
    %c0_197 = arith.constant 0 : index
    %c0_198 = arith.constant 0 : index
    %441 = vector.load %arg24[%c0_197, %c0_198] : memref<1x128xf32, #tpu.memory_space<vmem>>, vector<1x128xf32>
    %442 = vector.broadcast %441 : vector<1x128xf32> to vector<8x128xf32>
    %443 = arith.addf %440, %442 : vector<8x128xf32>
    %c0_199 = arith.constant 0 : index
    %c0_200 = arith.constant 0 : index
    %444 = vector.load %arg25[%c0_199, %c0_200] : memref<128x256xf32, #tpu.memory_space<vmem>>, vector<128x256xf32>
    %cst_201 = arith.constant dense<0.000000e+00> : vector<8x256xf32>
    %445 = tpu.matmul %443, %444, %cst_201 {dimension_numbers = #tpu.dot_dimension_numbers<[1], [0], [0], [1], [0, 0, 1, 1], [], []>} : vector<8x128xf32>, vector<128x256xf32>, vector<8x256xf32> -> vector<8x256xf32>
    %c0_202 = arith.constant 0 : index
    %c0_203 = arith.constant 0 : index
    %446 = vector.load %arg26[%c0_202, %c0_203] : memref<1x256xf32, #tpu.memory_space<vmem>>, vector<1x256xf32>
    %447 = vector.broadcast %446 : vector<1x256xf32> to vector<8x256xf32>
    %448 = arith.addf %445, %447 : vector<8x256xf32>
    %cst_204 = arith.constant 0.000000e+00 : f32
    %449 = vector.broadcast %cst_204 : f32 to vector<8x256xf32>
    %450 = arith.maximumf %448, %449 : vector<8x256xf32>
    %c0_205 = arith.constant 0 : index
    %c0_206 = arith.constant 0 : index
    %451 = vector.load %arg27[%c0_205, %c0_206] : memref<256x128xf32, #tpu.memory_space<vmem>>, vector<256x128xf32>
    %cst_207 = arith.constant dense<0.000000e+00> : vector<8x128xf32>
    %452 = tpu.matmul %450, %451, %cst_207 {dimension_numbers = #tpu.dot_dimension_numbers<[1], [0], [0], [1], [0, 0, 1, 1], [], []>} : vector<8x256xf32>, vector<256x128xf32>, vector<8x128xf32> -> vector<8x128xf32>
    %c0_208 = arith.constant 0 : index
    %c0_209 = arith.constant 0 : index
    %453 = vector.load %arg28[%c0_208, %c0_209] : memref<1x128xf32, #tpu.memory_space<vmem>>, vector<1x128xf32>
    %454 = vector.broadcast %453 : vector<1x128xf32> to vector<8x128xf32>
    %455 = arith.addf %452, %454 : vector<8x128xf32>
    %456 = arith.addf %443, %455 : vector<8x128xf32>
    %cst_210 = arith.constant dense<0.000000e+00> : vector<8xf32>
    %457 = vector.multi_reduction <add>, %456, %cst_210 [1] : vector<8x128xf32> to vector<8xf32>
    %458 = vector.shape_cast %457 : vector<8xf32> to vector<8x1xf32>
    %cst_211 = arith.constant 7.812500e-03 : f32
    %459 = vector.broadcast %cst_211 : f32 to vector<8x1xf32>
    %460 = arith.mulf %458, %459 : vector<8x1xf32>
    %461 = arith.mulf %456, %456 : vector<8x128xf32>
    %cst_212 = arith.constant dense<0.000000e+00> : vector<8xf32>
    %462 = vector.multi_reduction <add>, %461, %cst_212 [1] : vector<8x128xf32> to vector<8xf32>
    %463 = vector.shape_cast %462 : vector<8xf32> to vector<8x1xf32>
    %cst_213 = arith.constant 7.812500e-03 : f32
    %464 = vector.broadcast %cst_213 : f32 to vector<8x1xf32>
    %465 = arith.mulf %463, %464 : vector<8x1xf32>
    %466 = arith.mulf %460, %460 : vector<8x1xf32>
    %467 = arith.subf %465, %466 : vector<8x1xf32>
    %468 = vector.broadcast %460 : vector<8x1xf32> to vector<8x128xf32>
    %469 = arith.subf %456, %468 : vector<8x128xf32>
    %cst_214 = arith.constant 9.99999997E-7 : f32
    %470 = vector.broadcast %cst_214 : f32 to vector<8x1xf32>
    %471 = arith.addf %467, %470 : vector<8x1xf32>
    %472 = math.rsqrt %471 : vector<8x1xf32>
    %473 = vector.broadcast %472 : vector<8x1xf32> to vector<8x128xf32>
    %474 = arith.mulf %469, %473 : vector<8x128xf32>
    %c0_215 = arith.constant 0 : index
    %c0_216 = arith.constant 0 : index
    %475 = vector.load %arg29[%c0_215, %c0_216] : memref<1x128xf32, #tpu.memory_space<vmem>>, vector<1x128xf32>
    %476 = vector.broadcast %475 : vector<1x128xf32> to vector<8x128xf32>
    %477 = arith.mulf %474, %476 : vector<8x128xf32>
    %c0_217 = arith.constant 0 : index
    %c0_218 = arith.constant 0 : index
    %478 = vector.load %arg30[%c0_217, %c0_218] : memref<1x128xf32, #tpu.memory_space<vmem>>, vector<1x128xf32>
    %479 = vector.broadcast %478 : vector<1x128xf32> to vector<8x128xf32>
    %480 = arith.addf %477, %479 : vector<8x128xf32>
    %c0_219 = arith.constant 0 : index
    %c0_220 = arith.constant 0 : index
    %c0_221 = arith.constant 0 : index
    %481 = vector.load %arg31[%c0_219, %c0_220, %c0_221] : memref<1x8x128xf32, #tpu.memory_space<vmem>>, vector<1x8x128xf32>
    %482 = vector.shape_cast %481 : vector<1x8x128xf32> to vector<8x128xf32>
    %483 = vector.shape_cast %480 : vector<8x128xf32> to vector<1x8x128xf32>
    tpu.vector_store %arg31[%c0_219, %c0_220, %c0_221], %483 {strides = array<i32>} : memref<1x8x128xf32, #tpu.memory_space<vmem>>, vector<1x8x128xf32>,
    return
  }
  func.func @transform_0(%arg0: i32) -> (i32, i32, i32) {
    %c0_i32 = arith.constant 0 : i32
    %c0_i32_0 = arith.constant 0 : i32
    %c0_i32_1 = arith.constant 0 : i32
    return %arg0, %c0_i32, %c0_i32_0 : i32, i32, i32
  }
  func.func @transform_1(%arg0: i32) -> (i32, i32, i32) {
    %c0_i32 = arith.constant 0 : i32
    %c0_i32_0 = arith.constant 0 : i32
    %c0_i32_1 = arith.constant 0 : i32
    return %arg0, %c0_i32, %c0_i32_0 : i32, i32, i32
  }
  func.func @transform_2(%arg0: i32) -> (i32, i32, i32) {
    %c0_i32 = arith.constant 0 : i32
    %c0_i32_0 = arith.constant 0 : i32
    %c0_i32_1 = arith.constant 0 : i32
    return %arg0, %c0_i32, %c0_i32_0 : i32, i32, i32
  }
  func.func @transform_3(%arg0: i32) -> (i32, i32, i32) {
    %c0_i32 = arith.constant 0 : i32
    %c0_i32_0 = arith.constant 0 : i32
    %c0_i32_1 = arith.constant 0 : i32
    return %arg0, %c0_i32, %c0_i32_0 : i32, i32, i32
  }
  func.func @transform_4(%arg0: i32) -> (i32, i32) {
    %c0_i32 = arith.constant 0 : i32
    %c0_i32_0 = arith.constant 0 : i32
    %c0_i32_1 = arith.constant 0 : i32
    return %c0_i32, %c0_i32_0 : i32, i32
  }
  func.func @transform_5(%arg0: i32) -> (i32, i32) {
    %c0_i32 = arith.constant 0 : i32
    %c0_i32_0 = arith.constant 0 : i32
    %c0_i32_1 = arith.constant 0 : i32
    return %c0_i32, %c0_i32_0 : i32, i32
  }
  func.func @transform_6(%arg0: i32) -> (i32, i32) {
    %c0_i32 = arith.constant 0 : i32
    %c0_i32_0 = arith.constant 0 : i32
    %c0_i32_1 = arith.constant 0 : i32
    return %c0_i32, %c0_i32_0 : i32, i32
  }
  func.func @transform_7(%arg0: i32) -> (i32, i32) {
    %c0_i32 = arith.constant 0 : i32
    %c0_i32_0 = arith.constant 0 : i32
    %c0_i32_1 = arith.constant 0 : i32
    return %c0_i32, %c0_i32_0 : i32, i32
  }
  func.func @transform_8(%arg0: i32) -> (i32, i32) {
    %c0_i32 = arith.constant 0 : i32
    %c0_i32_0 = arith.constant 0 : i32
    %c0_i32_1 = arith.constant 0 : i32
    return %c0_i32, %c0_i32_0 : i32, i32
  }
  func.func @transform_9(%arg0: i32) -> (i32, i32) {
    %c0_i32 = arith.constant 0 : i32
    %c0_i32_0 = arith.constant 0 : i32
    %c0_i32_1 = arith.constant 0 : i32
    return %c0_i32, %c0_i32_0 : i32, i32
  }
  func.func @transform_10(%arg0: i32) -> (i32, i32) {
    %c0_i32 = arith.constant 0 : i32
    %c0_i32_0 = arith.constant 0 : i32
    %c0_i32_1 = arith.constant 0 : i32
    return %c0_i32, %c0_i32_0 : i32, i32
  }
  func.func @transform_11(%arg0: i32) -> (i32, i32) {
    %c0_i32 = arith.constant 0 : i32
    %c0_i32_0 = arith.constant 0 : i32
    %c0_i32_1 = arith.constant 0 : i32
    return %c0_i32, %c0_i32_0 : i32, i32
  }
  func.func @transform_12(%arg0: i32) -> (i32, i32) {
    %c0_i32 = arith.constant 0 : i32
    %c0_i32_0 = arith.constant 0 : i32
    %c0_i32_1 = arith.constant 0 : i32
    return %c0_i32, %c0_i32_0 : i32, i32
  }
  func.func @transform_13(%arg0: i32) -> (i32, i32) {
    %c0_i32 = arith.constant 0 : i32
    %c0_i32_0 = arith.constant 0 : i32
    %c0_i32_1 = arith.constant 0 : i32
    return %c0_i32, %c0_i32_0 : i32, i32
  }
  func.func @transform_14(%arg0: i32) -> (i32, i32) {
    %c0_i32 = arith.constant 0 : i32
    %c0_i32_0 = arith.constant 0 : i32
    %c0_i32_1 = arith.constant 0 : i32
    return %c0_i32, %c0_i32_0 : i32, i32
  }
  func.func @transform_15(%arg0: i32) -> (i32, i32) {
    %c0_i32 = arith.constant 0 : i32
    %c0_i32_0 = arith.constant 0 : i32
    %c0_i32_1 = arith.constant 0 : i32
    return %c0_i32, %c0_i32_0 : i32, i32
  }
  func.func @transform_16(%arg0: i32) -> (i32, i32) {
    %c0_i32 = arith.constant 0 : i32
    %c0_i32_0 = arith.constant 0 : i32
    %c0_i32_1 = arith.constant 0 : i32
    return %c0_i32, %c0_i32_0 : i32, i32
  }
  func.func @transform_17(%arg0: i32) -> (i32, i32) {
    %c0_i32 = arith.constant 0 : i32
    %c0_i32_0 = arith.constant 0 : i32
    %c0_i32_1 = arith.constant 0 : i32
    return %c0_i32, %c0_i32_0 : i32, i32
  }
  func.func @transform_18(%arg0: i32) -> (i32, i32) {
    %c0_i32 = arith.constant 0 : i32
    %c0_i32_0 = arith.constant 0 : i32
    %c0_i32_1 = arith.constant 0 : i32
    return %c0_i32, %c0_i32_0 : i32, i32
  }
  func.func @transform_19(%arg0: i32) -> (i32, i32) {
    %c0_i32 = arith.constant 0 : i32
    %c0_i32_0 = arith.constant 0 : i32
    %c0_i32_1 = arith.constant 0 : i32
    return %c0_i32, %c0_i32_0 : i32, i32
  }
  func.func @transform_20(%arg0: i32) -> (i32, i32) {
    %c0_i32 = arith.constant 0 : i32
    %c0_i32_0 = arith.constant 0 : i32
    %c0_i32_1 = arith.constant 0 : i32
    return %c0_i32, %c0_i32_0 : i32, i32
  }
  func.func @transform_21(%arg0: i32) -> (i32, i32) {
    %c0_i32 = arith.constant 0 : i32
    %c0_i32_0 = arith.constant 0 : i32
    %c0_i32_1 = arith.constant 0 : i32
    return %c0_i32, %c0_i32_0 : i32, i32
  }
  func.func @transform_22(%arg0: i32) -> (i32, i32) {
    %c0_i32 = arith.constant 0 : i32
    %c0_i32_0 = arith.constant 0 : i32
    %c0_i32_1 = arith.constant 0 : i32
    return %c0_i32, %c0_i32_0 : i32, i32
  }
  func.func @transform_23(%arg0: i32) -> (i32, i32) {
    %c0_i32 = arith.constant 0 : i32
    %c0_i32_0 = arith.constant 0 : i32
    %c0_i32_1 = arith.constant 0 : i32
    return %c0_i32, %c0_i32_0 : i32, i32
  }
  func.func @transform_24(%arg0: i32) -> (i32, i32) {
    %c0_i32 = arith.constant 0 : i32
    %c0_i32_0 = arith.constant 0 : i32
    %c0_i32_1 = arith.constant 0 : i32
    return %c0_i32, %c0_i32_0 : i32, i32
  }
  func.func @transform_25(%arg0: i32) -> (i32, i32) {
    %c0_i32 = arith.constant 0 : i32
    %c0_i32_0 = arith.constant 0 : i32
    %c0_i32_1 = arith.constant 0 : i32
    return %c0_i32, %c0_i32_0 : i32, i32
  }
  func.func @transform_26(%arg0: i32) -> (i32, i32) {
    %c0_i32 = arith.constant 0 : i32
    %c0_i32_0 = arith.constant 0 : i32
    %c0_i32_1 = arith.constant 0 : i32
    return %c0_i32, %c0_i32_0 : i32, i32
  }
  func.func @transform_27(%arg0: i32) -> (i32, i32) {
    %c0_i32 = arith.constant 0 : i32
    %c0_i32_0 = arith.constant 0 : i32
    %c0_i32_1 = arith.constant 0 : i32
    return %c0_i32, %c0_i32_0 : i32, i32
  }
  func.func @transform_28(%arg0: i32) -> (i32, i32) {
    %c0_i32 = arith.constant 0 : i32
    %c0_i32_0 = arith.constant 0 : i32
    %c0_i32_1 = arith.constant 0 : i32
    return %c0_i32, %c0_i32_0 : i32, i32
  }
  func.func @transform_29(%arg0: i32) -> (i32, i32) {
    %c0_i32 = arith.constant 0 : i32
    %c0_i32_0 = arith.constant 0 : i32
    %c0_i32_1 = arith.constant 0 : i32
    return %c0_i32, %c0_i32_0 : i32, i32
  }
  func.func @transform_30(%arg0: i32) -> (i32, i32, i32) {
    %c0_i32 = arith.constant 0 : i32
    %c0_i32_0 = arith.constant 0 : i32
    %c0_i32_1 = arith.constant 0 : i32
    return %arg0, %c0_i32, %c0_i32_0 : i32, i32, i32
  }
}

</mosaic_0001>

<llo_original>
// kernel: tpu_custom_call.1
$region0: #{tpu_custom_call.1}
  #allocation0 [shape = 'u32[]', space=smem, size = 0x4, offset = 0x4, fixed_abs, tag = 'smem constant byte address 0x4 - core index']
  #allocation1 [shape = 'u32[144,128]{1,0:T(1,128)}', space=vmem, size = 0x12000, scoped, tag = 'internal scratch']
  %s0 = inlined_call_operand.smem [shape: u32[31], index: -1, kind: input, shape index: {}]
  %s1 = sld [smem:[%s0]]
  %s2 = scalar_lea.smem %s0, 1
  %s3 = sld [smem:[%s2]]
  %s4 = scalar_lea.smem %s0, 2
  %s5 = sld [smem:[%s4]]
  %s6 = scalar_lea.smem %s0, 3
  %s7 = sld [smem:[%s6]]
  %s8 = scalar_lea.smem %s0, 4
  %s9 = sld [smem:[%s8]]
  %s10 = scalar_lea.smem %s0, 5
  %s11 = sld [smem:[%s10]]
  %s12 = scalar_lea.smem %s0, 6
  %s13 = sld [smem:[%s12]]
  %s14 = scalar_lea.smem %s0, 7
  %s15 = sld [smem:[%s14]]
  %s16 = scalar_lea.smem %s0, 8
  %s17 = sld [smem:[%s16]]
  %s18 = scalar_lea.smem %s0, 9
  %s19 = sld [smem:[%s18]]
  %s20 = scalar_lea.smem %s0, 10
  %s21 = sld [smem:[%s20]]
  %s22 = scalar_lea.smem %s0, 11
  %s23 = sld [smem:[%s22]]
  %s24 = scalar_lea.smem %s0, 12
  %s25 = sld [smem:[%s24]]
  %s26 = scalar_lea.smem %s0, 13
  %s27 = sld [smem:[%s26]]
  %s28 = scalar_lea.smem %s0, 14
  %s29 = sld [smem:[%s28]]
  %s30 = scalar_lea.smem %s0, 15
  %s31 = sld [smem:[%s30]]
  %s32 = scalar_lea.smem %s0, 16
  %s33 = sld [smem:[%s32]]
  %s34 = scalar_lea.smem %s0, 17
  %s35 = sld [smem:[%s34]]
  %s36 = scalar_lea.smem %s0, 18
  %s37 = sld [smem:[%s36]]
  %s38 = scalar_lea.smem %s0, 19
  %s39 = sld [smem:[%s38]]
  %s40 = scalar_lea.smem %s0, 20
  %s41 = sld [smem:[%s40]]
  %s42 = scalar_lea.smem %s0, 21
  %s43 = sld [smem:[%s42]]
  %s44 = scalar_lea.smem %s0, 22
  %s45 = sld [smem:[%s44]]
  %s46 = scalar_lea.smem %s0, 23
  %s47 = sld [smem:[%s46]]
  %s48 = scalar_lea.smem %s0, 24
  %s49 = sld [smem:[%s48]]
  %s50 = scalar_lea.smem %s0, 25
  %s51 = sld [smem:[%s50]]
  %s52 = scalar_lea.smem %s0, 26
  %s53 = sld [smem:[%s52]]
  %s54 = scalar_lea.smem %s0, 27
  %s55 = sld [smem:[%s54]]
  %s56 = scalar_lea.smem %s0, 28
  %s57 = sld [smem:[%s56]]
  %s58 = scalar_lea.smem %s0, 29
  %s59 = sld [smem:[%s58]]
  %s60 = scalar_lea.smem %s0, 30
  %s61 = sld [smem:[%s60]]
  %s62 = sld [smem:[#allocation0]]
  $region209: #{tpu_custom_call.1} parent=0
    _
  %s64 = ssub.s32 1, %s62
  %s65 = scalar_select 0, %s64, %s62
  $region1: #{tpu_custom_call.1} parent=0
    #allocation2 [shape = 'u8[8192]{0}', space=vmem, size = 0x2000, scoped, tag = 'input window, operand 0']
    #allocation3 [shape = 's32[2]{0}', space=sflag, size = 0x8, scoped, tag = 'scoped memory for tpu_custom_call.1']
    #allocation4 [shape = 's32[2]{0}', space=sflag, size = 0x8, scoped, tag = 'scoped memory for tpu_custom_call.1']
    #allocation5 [shape = 'u8[16384]{0}', space=vmem, size = 0x4000, scoped, tag = 'input window, operand 1']
    #allocation6 [shape = 's32[2]{0}', space=sflag, size = 0x8, scoped, tag = 'scoped memory for tpu_custom_call.1']
    #allocation7 [shape = 'u8[8192]{0}', space=vmem, size = 0x2000, scoped, tag = 'input window, operand 2']
    #allocation8 [shape = 'u8[8192]{0}', space=vmem, size = 0x2000, scoped, tag = 'input window, operand 3']
    #allocation9 [shape = 's32[2]{0}', space=sflag, size = 0x8, scoped, tag = 'scoped memory for tpu_custom_call.1']
    #allocation10 [shape = 'u8[65536]{0}', space=vmem, size = 0x10000, scoped, tag = 'input window, operand 4, single buffered']
    #allocation11 [shape = 'u8[65536]{0}', space=vmem, size = 0x10000, scoped, tag = 'input window, operand 6, single buffered']
    #allocation12 [shape = 's32[1]{0}', space=sflag, size = 0x4, scoped, tag = 'scoped memory for tpu_custom_call.1']
    #allocation13 [shape = 'u8[65536]{0}', space=vmem, size = 0x10000, scoped, tag = 'input window, operand 8, single buffered']
    #allocation14 [shape = 'u8[65536]{0}', space=vmem, size = 0x10000, scoped, tag = 'input window, operand 10, single buffered']
    #allocation15 [shape = 's32[1]{0}', space=sflag, size = 0x4, scoped, tag = 'scoped memory for tpu_custom_call.1']
    #allocation16 [shape = 'u8[65536]{0}', space=vmem, size = 0x10000, scoped, tag = 'input window, operand 14, single buffered']
    #allocation17 [shape = 'u8[65536]{0}', space=vmem, size = 0x10000, scoped, tag = 'input window, operand 16, single buffered']
    #allocation18 [shape = 's32[1]{0}', space=sflag, size = 0x4, scoped, tag = 'scoped memory for tpu_custom_call.1']
    #allocation19 [shape = 'u8[65536]{0}', space=vmem, size = 0x10000, scoped, tag = 'input window, operand 18, single buffered']
    #allocation20 [shape = 'u8[65536]{0}', space=vmem, size = 0x10000, scoped, tag = 'input window, operand 20, single buffered']
    #allocation21 [shape = 's32[1]{0}', space=sflag, size = 0x4, scoped, tag = 'scoped memory for tpu_custom_call.1']
    #allocation22 [shape = 'u8[131072]{0}', space=vmem, size = 0x20000, scoped, tag = 'input window, operand 24, single buffered']
    #allocation23 [shape = 'u8[131072]{0}', space=vmem, size = 0x20000, scoped, tag = 'input window, operand 26, single buffered']
    #allocation24 [shape = 's32[1]{0}', space=sflag, size = 0x4, scoped, tag = 'scoped memory for tpu_custom_call.1']
    #allocation25 [shape = 'u8[8192]{0}', space=vmem, size = 0x2000, scoped, tag = 'output window, operand 0']
    %66 = vsyncpa [#allocation3], 0
    %s67 = scalar_lea.sflag [#allocation3], 1
    %68 = vsyncpa %s67, 0
    %69 = vsyncpa [#allocation6], 0
    %s70 = scalar_lea.sflag [#allocation6], 1
    %71 = vsyncpa %s70, 0
    %72 = vsyncpa [#allocation9], 0
    %s73 = scalar_lea.sflag [#allocation9], 1
    %74 = vsyncpa %s73, 0
    %75 = vsyncpa [#allocation12], 0
    %76 = vsyncpa [#allocation15], 0
    %77 = vsyncpa [#allocation18], 0
    %78 = vsyncpa [#allocation21], 0
    %79 = vsyncpa [#allocation24], 0
    %80 = vsyncpa [#allocation4], 0
    %s81 = scalar_lea.sflag [#allocation4], 1
    %82 = vsyncpa %s81, 0
    loop: start=0, step=1, limit=4
    $region2: #{tpu_custom_call.1} parent=1 // loop_pre_header
      _
    $region3: #{tpu_custom_call.1} parent=1 // loop_header
      %s84 = sphi 0, %s88
      %p85 = scmp.ge.s32.totalorder %s84, 4
      %s94 = sphi 0, %s96
      %s97 = sphi 0, %s94
      %s98 = sphi 0, %s97
      %s114 = sphi 0, %s98
      %s120 = sphi 0, %s122
      %s123 = sphi 0, %s120
      %s124 = sphi 0, %s123
      %s140 = sphi 0, %s124
      %s146 = sphi 0, %s148
      %s149 = sphi 0, %s146
      %s150 = sphi 0, %s149
      %s166 = sphi 0, %s150
      %s172 = sphi 0, %s174
      %s175 = sphi 0, %s172
      %s176 = sphi 0, %s175
      %s192 = sphi 0, %s176
      %s196 = sphi 0, %s196
      %s198 = sphi 0, %s196
      %s199 = sphi 0, %s198
      %s213 = sphi 0, %s199
      %s217 = sphi 0, %s217
      %s219 = sphi 0, %s217
      %s220 = sphi 0, %s219
      %s234 = sphi 0, %s220
      %s238 = sphi 0, %s238
      %s240 = sphi 0, %s238
      %s241 = sphi 0, %s240
      %s255 = sphi 0, %s241
      %s259 = sphi 0, %s259
      %s261 = sphi 0, %s259
      %s262 = sphi 0, %s261
      %s276 = sphi 0, %s262
      %s280 = sphi 0, %s280
      %s282 = sphi 0, %s280
      %s283 = sphi 0, %s282
      %s297 = sphi 0, %s283
      %s301 = sphi 0, %s301
      %s303 = sphi 0, %s301
      %s304 = sphi 0, %s303
      %s318 = sphi 0, %s304
      %s322 = sphi 0, %s322
      %s324 = sphi 0, %s322
      %s325 = sphi 0, %s324
      %s339 = sphi 0, %s325
      %s343 = sphi 0, %s343
      %s345 = sphi 0, %s343
      %s346 = sphi 0, %s345
      %s360 = sphi 0, %s346
      %s364 = sphi 0, %s364
      %s366 = sphi 0, %s364
      %s367 = sphi 0, %s366
      %s381 = sphi 0, %s367
      %s385 = sphi 0, %s385
      %s387 = sphi 0, %s385
      %s388 = sphi 0, %s387
      %s402 = sphi 0, %s388
      %s406 = sphi 0, %s406
      %s408 = sphi 0, %s406
      %s409 = sphi 0, %s408
      %s423 = sphi 0, %s409
      %s427 = sphi 0, %s427
      %s429 = sphi 0, %s427
      %s430 = sphi 0, %s429
      %s444 = sphi 0, %s430
      %s448 = sphi 0, %s448
      %s450 = sphi 0, %s448
      %s451 = sphi 0, %s450
      %s465 = sphi 0, %s451
      %s469 = sphi 0, %s469
      %s471 = sphi 0, %s469
      %s472 = sphi 0, %s471
      %s486 = sphi 0, %s472
      %s490 = sphi 0, %s490
      %s492 = sphi 0, %s490
      %s493 = sphi 0, %s492
      %s507 = sphi 0, %s493
      %s511 = sphi 0, %s511
      %s513 = sphi 0, %s511
      %s514 = sphi 0, %s513
      %s528 = sphi 0, %s514
      %s532 = sphi 0, %s532
      %s534 = sphi 0, %s532
      %s535 = sphi 0, %s534
      %s549 = sphi 0, %s535
      %s553 = sphi 0, %s553
      %s555 = sphi 0, %s553
      %s556 = sphi 0, %s555
      %s570 = sphi 0, %s556
      %s574 = sphi 0, %s574
      %s576 = sphi 0, %s574
      %s577 = sphi 0, %s576
      %s591 = sphi 0, %s577
      %s595 = sphi 0, %s595
      %s597 = sphi 0, %s595
      %s598 = sphi 0, %s597
      %s612 = sphi 0, %s598
      %s616 = sphi 0, %s616
      %s618 = sphi 0, %s616
      %s619 = sphi 0, %s618
      %s633 = sphi 0, %s619
      %s637 = sphi 0, %s637
      %s639 = sphi 0, %s637
      %s640 = sphi 0, %s639
      %s654 = sphi 0, %s640
      %s658 = sphi 0, %s658
      %s660 = sphi 0, %s658
      %s661 = sphi 0, %s660
      %s675 = sphi 0, %s661
      %s679 = sphi 0, %s679
      %s681 = sphi 0, %s679
      %s682 = sphi 0, %s681
      %s696 = sphi 0, %s682
      %s700 = sphi 0, %s700
      %s702 = sphi 0, %s700
      %s703 = sphi 0, %s702
      %s717 = sphi 0, %s703
      %s721 = sphi 0, %s721
      %s723 = sphi 0, %s721
      %s724 = sphi 0, %s723
      %s738 = sphi 0, %s724
      %s744 = sphi 0, %s746
      %s747 = sphi 0, %s744
      %s748 = sphi 0, %s747
      %s764 = sphi 0, %s748
    $region4: #{tpu_custom_call.1} parent=1 // loop_header_branch
      %87 = sbr.rel (%p85) target = $region8
    $region5: #{tpu_custom_call.1} parent=1 // loop_body
      %s89 = ssub.s32 %s84, 1
      %s90 = ssub.s32 %s84, 2
      %s91 = sadd.s32 %s84, 1
      %s92 = ssub.s32 %s84, %s91
      %p93 = scmp.eq.s32.totalorder %s92, 0
      %s95 = sadd.s32 %s94, 1
      %s96 = scalar_select %p93, %s94, %s95
      %p99 = pneg %p93
      %p100 = scmp.eq.s32.totalorder %s84, 1
      %p101 = por %p99, %p100
      %p102 = scmp.ne.s32.totalorder %s94, %s97
      %p103 = scmp.eq.s32.totalorder %s84, 0
      %p104 = por %p102, %p103
      %p105 = scmp.ne.s32.totalorder %s94, %s97
      %p106 = scmp.eq.s32.totalorder %s89, 1
      %p107 = por %p105, %p106
      %p108 = scmp.ne.s32.totalorder %s97, %s98
      %p109 = scmp.eq.s32.totalorder %s89, 0
      %p110 = por %p108, %p109
      %p111 = scmp.ne.s32.totalorder %s97, %s98
      %p112 = scmp.eq.s32.totalorder %s90, 1
      %p113 = por %p111, %p112
      %p115 = scmp.ne.s32.totalorder %s98, %s114
      %p116 = scmp.eq.s32.totalorder %s90, 0
      %p117 = por %p115, %p116
      %s118 = ssub.s32 %s84, %s91
      %p119 = scmp.eq.s32.totalorder %s118, 0
      %s121 = sadd.s32 %s120, 1
      %s122 = scalar_select %p119, %s120, %s121
      %p125 = pneg %p119
      %p126 = scmp.eq.s32.totalorder %s84, 1
      %p127 = por %p125, %p126
      %p128 = scmp.ne.s32.totalorder %s120, %s123
      %p129 = scmp.eq.s32.totalorder %s84, 0
      %p130 = por %p128, %p129
      %p131 = scmp.ne.s32.totalorder %s120, %s123
      %p132 = scmp.eq.s32.totalorder %s89, 1
      %p133 = por %p131, %p132
      %p134 = scmp.ne.s32.totalorder %s123, %s124
      %p135 = scmp.eq.s32.totalorder %s89, 0
      %p136 = por %p134, %p135
      %p137 = scmp.ne.s32.totalorder %s123, %s124
      %p138 = scmp.eq.s32.totalorder %s90, 1
      %p139 = por %p137, %p138
      %p141 = scmp.ne.s32.totalorder %s124, %s140
      %p142 = scmp.eq.s32.totalorder %s90, 0
      %p143 = por %p141, %p142
      %s144 = ssub.s32 %s84, %s91
      %p145 = scmp.eq.s32.totalorder %s144, 0
      %s147 = sadd.s32 %s146, 1
      %s148 = scalar_select %p145, %s146, %s147
      %p151 = pneg %p145
      %p152 = scmp.eq.s32.totalorder %s84, 1
      %p153 = por %p151, %p152
      %p154 = scmp.ne.s32.totalorder %s146, %s149
      %p155 = scmp.eq.s32.totalorder %s84, 0
      %p156 = por %p154, %p155
      %p157 = scmp.ne.s32.totalorder %s146, %s149
      %p158 = scmp.eq.s32.totalorder %s89, 1
      %p159 = por %p157, %p158
      %p160 = scmp.ne.s32.totalorder %s149, %s150
      %p161 = scmp.eq.s32.totalorder %s89, 0
      %p162 = por %p160, %p161
      %p163 = scmp.ne.s32.totalorder %s149, %s150
      %p164 = scmp.eq.s32.totalorder %s90, 1
      %p165 = por %p163, %p164
      %p167 = scmp.ne.s32.totalorder %s150, %s166
      %p168 = scmp.eq.s32.totalorder %s90, 0
      %p169 = por %p167, %p168
      %s170 = ssub.s32 %s84, %s91
      %p171 = scmp.eq.s32.totalorder %s170, 0
      %s173 = sadd.s32 %s172, 1
      %s174 = scalar_select %p171, %s172, %s173
      %p177 = pneg %p171
      %p178 = scmp.eq.s32.totalorder %s84, 1
      %p179 = por %p177, %p178
      %p180 = scmp.ne.s32.totalorder %s172, %s175
      %p181 = scmp.eq.s32.totalorder %s84, 0
      %p182 = por %p180, %p181
      %p183 = scmp.ne.s32.totalorder %s172, %s175
      %p184 = scmp.eq.s32.totalorder %s89, 1
      %p185 = por %p183, %p184
      %p186 = scmp.ne.s32.totalorder %s175, %s176
      %p187 = scmp.eq.s32.totalorder %s89, 0
      %p188 = por %p186, %p187
      %p189 = scmp.ne.s32.totalorder %s175, %s176
      %p190 = scmp.eq.s32.totalorder %s90, 1
      %p191 = por %p189, %p190
      %p193 = scmp.ne.s32.totalorder %s176, %s192
      %p194 = scmp.eq.s32.totalorder %s90, 0
      %p195 = por %p193, %p194
      %s197 = sadd.s32 %s196, 1
      %p200 = scmp.eq.s32.totalorder %s84, 1
      %p201 = scmp.ne.s32.totalorder %s196, %s198
      %p202 = scmp.eq.s32.totalorder %s84, 0
      %p203 = por %p201, %p202
      %p204 = scmp.ne.s32.totalorder %s196, %s198
      %p205 = scmp.eq.s32.totalorder %s89, 1
      %p206 = por %p204, %p205
      %p207 = scmp.ne.s32.totalorder %s198, %s199
      %p208 = scmp.eq.s32.totalorder %s89, 0
      %p209 = por %p207, %p208
      %p210 = scmp.ne.s32.totalorder %s198, %s199
      %p211 = scmp.eq.s32.totalorder %s90, 1
      %p212 = por %p210, %p211
      %p214 = scmp.ne.s32.totalorder %s199, %s213
      %p215 = scmp.eq.s32.totalorder %s90, 0
      %p216 = por %p214, %p215
      %s218 = sadd.s32 %s217, 1
      %p221 = scmp.eq.s32.totalorder %s84, 1
      %p222 = scmp.ne.s32.totalorder %s217, %s219
      %p223 = scmp.eq.s32.totalorder %s84, 0
      %p224 = por %p222, %p223
      %p225 = scmp.ne.s32.totalorder %s217, %s219
      %p226 = scmp.eq.s32.totalorder %s89, 1
      %p227 = por %p225, %p226
      %p228 = scmp.ne.s32.totalorder %s219, %s220
      %p229 = scmp.eq.s32.totalorder %s89, 0
      %p230 = por %p228, %p229
      %p231 = scmp.ne.s32.totalorder %s219, %s220
      %p232 = scmp.eq.s32.totalorder %s90, 1
      %p233 = por %p231, %p232
      %p235 = scmp.ne.s32.totalorder %s220, %s234
      %p236 = scmp.eq.s32.totalorder %s90, 0
      %p237 = por %p235, %p236
      %s239 = sadd.s32 %s238, 1
      %p242 = scmp.eq.s32.totalorder %s84, 1
      %p243 = scmp.ne.s32.totalorder %s238, %s240
      %p244 = scmp.eq.s32.totalorder %s84, 0
      %p245 = por %p243, %p244
      %p246 = scmp.ne.s32.totalorder %s238, %s240
      %p247 = scmp.eq.s32.totalorder %s89, 1
      %p248 = por %p246, %p247
      %p249 = scmp.ne.s32.totalorder %s240, %s241
      %p250 = scmp.eq.s32.totalorder %s89, 0
      %p251 = por %p249, %p250
      %p252 = scmp.ne.s32.totalorder %s240, %s241
      %p253 = scmp.eq.s32.totalorder %s90, 1
      %p254 = por %p252, %p253
      %p256 = scmp.ne.s32.totalorder %s241, %s255
      %p257 = scmp.eq.s32.totalorder %s90, 0
      %p258 = por %p256, %p257
      %s260 = sadd.s32 %s259, 1
      %p263 = scmp.eq.s32.totalorder %s84, 1
      %p264 = scmp.ne.s32.totalorder %s259, %s261
      %p265 = scmp.eq.s32.totalorder %s84, 0
      %p266 = por %p264, %p265
      %p267 = scmp.ne.s32.totalorder %s259, %s261
      %p268 = scmp.eq.s32.totalorder %s89, 1
      %p269 = por %p267, %p268
      %p270 = scmp.ne.s32.totalorder %s261, %s262
      %p271 = scmp.eq.s32.totalorder %s89, 0
      %p272 = por %p270, %p271
      %p273 = scmp.ne.s32.totalorder %s261, %s262
      %p274 = scmp.eq.s32.totalorder %s90, 1
      %p275 = por %p273, %p274
      %p277 = scmp.ne.s32.totalorder %s262, %s276
      %p278 = scmp.eq.s32.totalorder %s90, 0
      %p279 = por %p277, %p278
      %s281 = sadd.s32 %s280, 1
      %p284 = scmp.eq.s32.totalorder %s84, 1
      %p285 = scmp.ne.s32.totalorder %s280, %s282
      %p286 = scmp.eq.s32.totalorder %s84, 0
      %p287 = por %p285, %p286
      %p288 = scmp.ne.s32.totalorder %s280, %s282
      %p289 = scmp.eq.s32.totalorder %s89, 1
      %p290 = por %p288, %p289
      %p291 = scmp.ne.s32.totalorder %s282, %s283
      %p292 = scmp.eq.s32.totalorder %s89, 0
      %p293 = por %p291, %p292
      %p294 = scmp.ne.s32.totalorder %s282, %s283
      %p295 = scmp.eq.s32.totalorder %s90, 1
      %p296 = por %p294, %p295
      %p298 = scmp.ne.s32.totalorder %s283, %s297
      %p299 = scmp.eq.s32.totalorder %s90, 0
      %p300 = por %p298, %p299
      %s302 = sadd.s32 %s301, 1
      %p305 = scmp.eq.s32.totalorder %s84, 1
      %p306 = scmp.ne.s32.totalorder %s301, %s303
      %p307 = scmp.eq.s32.totalorder %s84, 0
      %p308 = por %p306, %p307
      %p309 = scmp.ne.s32.totalorder %s301, %s303
      %p310 = scmp.eq.s32.totalorder %s89, 1
      %p311 = por %p309, %p310
      %p312 = scmp.ne.s32.totalorder %s303, %s304
      %p313 = scmp.eq.s32.totalorder %s89, 0
      %p314 = por %p312, %p313
      %p315 = scmp.ne.s32.totalorder %s303, %s304
      %p316 = scmp.eq.s32.totalorder %s90, 1
      %p317 = por %p315, %p316
      %p319 = scmp.ne.s32.totalorder %s304, %s318
      %p320 = scmp.eq.s32.totalorder %s90, 0
      %p321 = por %p319, %p320
      %s323 = sadd.s32 %s322, 1
      %p326 = scmp.eq.s32.totalorder %s84, 1
      %p327 = scmp.ne.s32.totalorder %s322, %s324
      %p328 = scmp.eq.s32.totalorder %s84, 0
      %p329 = por %p327, %p328
      %p330 = scmp.ne.s32.totalorder %s322, %s324
      %p331 = scmp.eq.s32.totalorder %s89, 1
      %p332 = por %p330, %p331
      %p333 = scmp.ne.s32.totalorder %s324, %s325
      %p334 = scmp.eq.s32.totalorder %s89, 0
      %p335 = por %p333, %p334
      %p336 = scmp.ne.s32.totalorder %s324, %s325
      %p337 = scmp.eq.s32.totalorder %s90, 1
      %p338 = por %p336, %p337
      %p340 = scmp.ne.s32.totalorder %s325, %s339
      %p341 = scmp.eq.s32.totalorder %s90, 0
      %p342 = por %p340, %p341
      %s344 = sadd.s32 %s343, 1
      %p347 = scmp.eq.s32.totalorder %s84, 1
      %p348 = scmp.ne.s32.totalorder %s343, %s345
      %p349 = scmp.eq.s32.totalorder %s84, 0
      %p350 = por %p348, %p349
      %p351 = scmp.ne.s32.totalorder %s343, %s345
      %p352 = scmp.eq.s32.totalorder %s89, 1
      %p353 = por %p351, %p352
      %p354 = scmp.ne.s32.totalorder %s345, %s346
      %p355 = scmp.eq.s32.totalorder %s89, 0
      %p356 = por %p354, %p355
      %p357 = scmp.ne.s32.totalorder %s345, %s346
      %p358 = scmp.eq.s32.totalorder %s90, 1
      %p359 = por %p357, %p358
      %p361 = scmp.ne.s32.totalorder %s346, %s360
      %p362 = scmp.eq.s32.totalorder %s90, 0
      %p363 = por %p361, %p362
      %s365 = sadd.s32 %s364, 1
      %p368 = scmp.eq.s32.totalorder %s84, 1
      %p369 = scmp.ne.s32.totalorder %s364, %s366
      %p370 = scmp.eq.s32.totalorder %s84, 0
      %p371 = por %p369, %p370
      %p372 = scmp.ne.s32.totalorder %s364, %s366
      %p373 = scmp.eq.s32.totalorder %s89, 1
      %p374 = por %p372, %p373
      %p375 = scmp.ne.s32.totalorder %s366, %s367
      %p376 = scmp.eq.s32.totalorder %s89, 0
      %p377 = por %p375, %p376
      %p378 = scmp.ne.s32.totalorder %s366, %s367
      %p379 = scmp.eq.s32.totalorder %s90, 1
      %p380 = por %p378, %p379
      %p382 = scmp.ne.s32.totalorder %s367, %s381
      %p383 = scmp.eq.s32.totalorder %s90, 0
      %p384 = por %p382, %p383
      %s386 = sadd.s32 %s385, 1
      %p389 = scmp.eq.s32.totalorder %s84, 1
      %p390 = scmp.ne.s32.totalorder %s385, %s387
      %p391 = scmp.eq.s32.totalorder %s84, 0
      %p392 = por %p390, %p391
      %p393 = scmp.ne.s32.totalorder %s385, %s387
      %p394 = scmp.eq.s32.totalorder %s89, 1
      %p395 = por %p393, %p394
      %p396 = scmp.ne.s32.totalorder %s387, %s388
      %p397 = scmp.eq.s32.totalorder %s89, 0
      %p398 = por %p396, %p397
      %p399 = scmp.ne.s32.totalorder %s387, %s388
      %p400 = scmp.eq.s32.totalorder %s90, 1
      %p401 = por %p399, %p400
      %p403 = scmp.ne.s32.totalorder %s388, %s402
      %p404 = scmp.eq.s32.totalorder %s90, 0
      %p405 = por %p403, %p404
      %s407 = sadd.s32 %s406, 1
      %p410 = scmp.eq.s32.totalorder %s84, 1
      %p411 = scmp.ne.s32.totalorder %s406, %s408
      %p412 = scmp.eq.s32.totalorder %s84, 0
      %p413 = por %p411, %p412
      %p414 = scmp.ne.s32.totalorder %s406, %s408
      %p415 = scmp.eq.s32.totalorder %s89, 1
      %p416 = por %p414, %p415
      %p417 = scmp.ne.s32.totalorder %s408, %s409
      %p418 = scmp.eq.s32.totalorder %s89, 0
      %p419 = por %p417, %p418
      %p420 = scmp.ne.s32.totalorder %s408, %s409
      %p421 = scmp.eq.s32.totalorder %s90, 1
      %p422 = por %p420, %p421
      %p424 = scmp.ne.s32.totalorder %s409, %s423
      %p425 = scmp.eq.s32.totalorder %s90, 0
      %p426 = por %p424, %p425
      %s428 = sadd.s32 %s427, 1
      %p431 = scmp.eq.s32.totalorder %s84, 1
      %p432 = scmp.ne.s32.totalorder %s427, %s429
      %p433 = scmp.eq.s32.totalorder %s84, 0
      %p434 = por %p432, %p433
      %p435 = scmp.ne.s32.totalorder %s427, %s429
      %p436 = scmp.eq.s32.totalorder %s89, 1
      %p437 = por %p435, %p436
      %p438 = scmp.ne.s32.totalorder %s429, %s430
      %p439 = scmp.eq.s32.totalorder %s89, 0
      %p440 = por %p438, %p439
      %p441 = scmp.ne.s32.totalorder %s429, %s430
      %p442 = scmp.eq.s32.totalorder %s90, 1
      %p443 = por %p441, %p442
      %p445 = scmp.ne.s32.totalorder %s430, %s444
      %p446 = scmp.eq.s32.totalorder %s90, 0
      %p447 = por %p445, %p446
      %s449 = sadd.s32 %s448, 1
      %p452 = scmp.eq.s32.totalorder %s84, 1
      %p453 = scmp.ne.s32.totalorder %s448, %s450
      %p454 = scmp.eq.s32.totalorder %s84, 0
      %p455 = por %p453, %p454
      %p456 = scmp.ne.s32.totalorder %s448, %s450
      %p457 = scmp.eq.s32.totalorder %s89, 1
      %p458 = por %p456, %p457
      %p459 = scmp.ne.s32.totalorder %s450, %s451
      %p460 = scmp.eq.s32.totalorder %s89, 0
      %p461 = por %p459, %p460
      %p462 = scmp.ne.s32.totalorder %s450, %s451
      %p463 = scmp.eq.s32.totalorder %s90, 1
      %p464 = por %p462, %p463
      %p466 = scmp.ne.s32.totalorder %s451, %s465
      %p467 = scmp.eq.s32.totalorder %s90, 0
      %p468 = por %p466, %p467
      %s470 = sadd.s32 %s469, 1
      %p473 = scmp.eq.s32.totalorder %s84, 1
      %p474 = scmp.ne.s32.totalorder %s469, %s471
      %p475 = scmp.eq.s32.totalorder %s84, 0
      %p476 = por %p474, %p475
      %p477 = scmp.ne.s32.totalorder %s469, %s471
      %p478 = scmp.eq.s32.totalorder %s89, 1
      %p479 = por %p477, %p478
      %p480 = scmp.ne.s32.totalorder %s471, %s472
      %p481 = scmp.eq.s32.totalorder %s89, 0
      %p482 = por %p480, %p481
      %p483 = scmp.ne.s32.totalorder %s471, %s472
      %p484 = scmp.eq.s32.totalorder %s90, 1
      %p485 = por %p483, %p484
      %p487 = scmp.ne.s32.totalorder %s472, %s486
      %p488 = scmp.eq.s32.totalorder %s90, 0
      %p489 = por %p487, %p488
      %s491 = sadd.s32 %s490, 1
      %p494 = scmp.eq.s32.totalorder %s84, 1
      %p495 = scmp.ne.s32.totalorder %s490, %s492
      %p496 = scmp.eq.s32.totalorder %s84, 0
      %p497 = por %p495, %p496
      %p498 = scmp.ne.s32.totalorder %s490, %s492
      %p499 = scmp.eq.s32.totalorder %s89, 1
      %p500 = por %p498, %p499
      %p501 = scmp.ne.s32.totalorder %s492, %s493
      %p502 = scmp.eq.s32.totalorder %s89, 0
      %p503 = por %p501, %p502
      %p504 = scmp.ne.s32.totalorder %s492, %s493
      %p505 = scmp.eq.s32.totalorder %s90, 1
      %p506 = por %p504, %p505
      %p508 = scmp.ne.s32.totalorder %s493, %s507
      %p509 = scmp.eq.s32.totalorder %s90, 0
      %p510 = por %p508, %p509
      %s512 = sadd.s32 %s511, 1
      %p515 = scmp.eq.s32.totalorder %s84, 1
      %p516 = scmp.ne.s32.totalorder %s511, %s513
      %p517 = scmp.eq.s32.totalorder %s84, 0
      %p518 = por %p516, %p517
      %p519 = scmp.ne.s32.totalorder %s511, %s513
      %p520 = scmp.eq.s32.totalorder %s89, 1
      %p521 = por %p519, %p520
      %p522 = scmp.ne.s32.totalorder %s513, %s514
      %p523 = scmp.eq.s32.totalorder %s89, 0
      %p524 = por %p522, %p523
      %p525 = scmp.ne.s32.totalorder %s513, %s514
      %p526 = scmp.eq.s32.totalorder %s90, 1
      %p527 = por %p525, %p526
      %p529 = scmp.ne.s32.totalorder %s514, %s528
      %p530 = scmp.eq.s32.totalorder %s90, 0
      %p531 = por %p529, %p530
      %s533 = sadd.s32 %s532, 1
      %p536 = scmp.eq.s32.totalorder %s84, 1
      %p537 = scmp.ne.s32.totalorder %s532, %s534
      %p538 = scmp.eq.s32.totalorder %s84, 0
      %p539 = por %p537, %p538
      %p540 = scmp.ne.s32.totalorder %s532, %s534
      %p541 = scmp.eq.s32.totalorder %s89, 1
      %p542 = por %p540, %p541
      %p543 = scmp.ne.s32.totalorder %s534, %s535
      %p544 = scmp.eq.s32.totalorder %s89, 0
      %p545 = por %p543, %p544
      %p546 = scmp.ne.s32.totalorder %s534, %s535
      %p547 = scmp.eq.s32.totalorder %s90, 1
      %p548 = por %p546, %p547
      %p550 = scmp.ne.s32.totalorder %s535, %s549
      %p551 = scmp.eq.s32.totalorder %s90, 0
      %p552 = por %p550, %p551
      %s554 = sadd.s32 %s553, 1
      %p557 = scmp.eq.s32.totalorder %s84, 1
      %p558 = scmp.ne.s32.totalorder %s553, %s555
      %p559 = scmp.eq.s32.totalorder %s84, 0
      %p560 = por %p558, %p559
      %p561 = scmp.ne.s32.totalorder %s553, %s555
      %p562 = scmp.eq.s32.totalorder %s89, 1
      %p563 = por %p561, %p562
      %p564 = scmp.ne.s32.totalorder %s555, %s556
      %p565 = scmp.eq.s32.totalorder %s89, 0
      %p566 = por %p564, %p565
      %p567 = scmp.ne.s32.totalorder %s555, %s556
      %p568 = scmp.eq.s32.totalorder %s90, 1
      %p569 = por %p567, %p568
      %p571 = scmp.ne.s32.totalorder %s556, %s570
      %p572 = scmp.eq.s32.totalorder %s90, 0
      %p573 = por %p571, %p572
      %s575 = sadd.s32 %s574, 1
      %p578 = scmp.eq.s32.totalorder %s84, 1
      %p579 = scmp.ne.s32.totalorder %s574, %s576
      %p580 = scmp.eq.s32.totalorder %s84, 0
      %p581 = por %p579, %p580
      %p582 = scmp.ne.s32.totalorder %s574, %s576
      %p583 = scmp.eq.s32.totalorder %s89, 1
      %p584 = por %p582, %p583
      %p585 = scmp.ne.s32.totalorder %s576, %s577
      %p586 = scmp.eq.s32.totalorder %s89, 0
      %p587 = por %p585, %p586
      %p588 = scmp.ne.s32.totalorder %s576, %s577
      %p589 = scmp.eq.s32.totalorder %s90, 1
      %p590 = por %p588, %p589
      %p592 = scmp.ne.s32.totalorder %s577, %s591
      %p593 = scmp.eq.s32.totalorder %s90, 0
      %p594 = por %p592, %p593
      %s596 = sadd.s32 %s595, 1
      %p599 = scmp.eq.s32.totalorder %s84, 1
      %p600 = scmp.ne.s32.totalorder %s595, %s597
      %p601 = scmp.eq.s32.totalorder %s84, 0
      %p602 = por %p600, %p601
      %p603 = scmp.ne.s32.totalorder %s595, %s597
      %p604 = scmp.eq.s32.totalorder %s89, 1
      %p605 = por %p603, %p604
      %p606 = scmp.ne.s32.totalorder %s597, %s598
      %p607 = scmp.eq.s32.totalorder %s89, 0
      %p608 = por %p606, %p607
      %p609 = scmp.ne.s32.totalorder %s597, %s598
      %p610 = scmp.eq.s32.totalorder %s90, 1
      %p611 = por %p609, %p610
      %p613 = scmp.ne.s32.totalorder %s598, %s612
      %p614 = scmp.eq.s32.totalorder %s90, 0
      %p615 = por %p613, %p614
      %s617 = sadd.s32 %s616, 1
      %p620 = scmp.eq.s32.totalorder %s84, 1
      %p621 = scmp.ne.s32.totalorder %s616, %s618
      %p622 = scmp.eq.s32.totalorder %s84, 0
      %p623 = por %p621, %p622
      %p624 = scmp.ne.s32.totalorder %s616, %s618
      %p625 = scmp.eq.s32.totalorder %s89, 1
      %p626 = por %p624, %p625
      %p627 = scmp.ne.s32.totalorder %s618, %s619
      %p628 = scmp.eq.s32.totalorder %s89, 0
      %p629 = por %p627, %p628
      %p630 = scmp.ne.s32.totalorder %s618, %s619
      %p631 = scmp.eq.s32.totalorder %s90, 1
      %p632 = por %p630, %p631
      %p634 = scmp.ne.s32.totalorder %s619, %s633
      %p635 = scmp.eq.s32.totalorder %s90, 0
      %p636 = por %p634, %p635
      %s638 = sadd.s32 %s637, 1
      %p641 = scmp.eq.s32.totalorder %s84, 1
      %p642 = scmp.ne.s32.totalorder %s637, %s639
      %p643 = scmp.eq.s32.totalorder %s84, 0
      %p644 = por %p642, %p643
      %p645 = scmp.ne.s32.totalorder %s637, %s639
      %p646 = scmp.eq.s32.totalorder %s89, 1
      %p647 = por %p645, %p646
      %p648 = scmp.ne.s32.totalorder %s639, %s640
      %p649 = scmp.eq.s32.totalorder %s89, 0
      %p650 = por %p648, %p649
      %p651 = scmp.ne.s32.totalorder %s639, %s640
      %p652 = scmp.eq.s32.totalorder %s90, 1
      %p653 = por %p651, %p652
      %p655 = scmp.ne.s32.totalorder %s640, %s654
      %p656 = scmp.eq.s32.totalorder %s90, 0
      %p657 = por %p655, %p656
      %s659 = sadd.s32 %s658, 1
      %p662 = scmp.eq.s32.totalorder %s84, 1
      %p663 = scmp.ne.s32.totalorder %s658, %s660
      %p664 = scmp.eq.s32.totalorder %s84, 0
      %p665 = por %p663, %p664
      %p666 = scmp.ne.s32.totalorder %s658, %s660
      %p667 = scmp.eq.s32.totalorder %s89, 1
      %p668 = por %p666, %p667
      %p669 = scmp.ne.s32.totalorder %s660, %s661
      %p670 = scmp.eq.s32.totalorder %s89, 0
      %p671 = por %p669, %p670
      %p672 = scmp.ne.s32.totalorder %s660, %s661
      %p673 = scmp.eq.s32.totalorder %s90, 1
      %p674 = por %p672, %p673
      %p676 = scmp.ne.s32.totalorder %s661, %s675
      %p677 = scmp.eq.s32.totalorder %s90, 0
      %p678 = por %p676, %p677
      %s680 = sadd.s32 %s679, 1
      %p683 = scmp.eq.s32.totalorder %s84, 1
      %p684 = scmp.ne.s32.totalorder %s679, %s681
      %p685 = scmp.eq.s32.totalorder %s84, 0
      %p686 = por %p684, %p685
      %p687 = scmp.ne.s32.totalorder %s679, %s681
      %p688 = scmp.eq.s32.totalorder %s89, 1
      %p689 = por %p687, %p688
      %p690 = scmp.ne.s32.totalorder %s681, %s682
      %p691 = scmp.eq.s32.totalorder %s89, 0
      %p692 = por %p690, %p691
      %p693 = scmp.ne.s32.totalorder %s681, %s682
      %p694 = scmp.eq.s32.totalorder %s90, 1
      %p695 = por %p693, %p694
      %p697 = scmp.ne.s32.totalorder %s682, %s696
      %p698 = scmp.eq.s32.totalorder %s90, 0
      %p699 = por %p697, %p698
      %s701 = sadd.s32 %s700, 1
      %p704 = scmp.eq.s32.totalorder %s84, 1
      %p705 = scmp.ne.s32.totalorder %s700, %s702
      %p706 = scmp.eq.s32.totalorder %s84, 0
      %p707 = por %p705, %p706
      %p708 = scmp.ne.s32.totalorder %s700, %s702
      %p709 = scmp.eq.s32.totalorder %s89, 1
      %p710 = por %p708, %p709
      %p711 = scmp.ne.s32.totalorder %s702, %s703
      %p712 = scmp.eq.s32.totalorder %s89, 0
      %p713 = por %p711, %p712
      %p714 = scmp.ne.s32.totalorder %s702, %s703
      %p715 = scmp.eq.s32.totalorder %s90, 1
      %p716 = por %p714, %p715
      %p718 = scmp.ne.s32.totalorder %s703, %s717
      %p719 = scmp.eq.s32.totalorder %s90, 0
      %p720 = por %p718, %p719
      %s722 = sadd.s32 %s721, 1
      %p725 = scmp.eq.s32.totalorder %s84, 1
      %p726 = scmp.ne.s32.totalorder %s721, %s723
      %p727 = scmp.eq.s32.totalorder %s84, 0
      %p728 = por %p726, %p727
      %p729 = scmp.ne.s32.totalorder %s721, %s723
      %p730 = scmp.eq.s32.totalorder %s89, 1
      %p731 = por %p729, %p730
      %p732 = scmp.ne.s32.totalorder %s723, %s724
      %p733 = scmp.eq.s32.totalorder %s89, 0
      %p734 = por %p732, %p733
      %p735 = scmp.ne.s32.totalorder %s723, %s724
      %p736 = scmp.eq.s32.totalorder %s90, 1
      %p737 = por %p735, %p736
      %p739 = scmp.ne.s32.totalorder %s724, %s738
      %p740 = scmp.eq.s32.totalorder %s90, 0
      %p741 = por %p739, %p740
      %s742 = ssub.s32 %s84, %s91
      %p743 = scmp.eq.s32.totalorder %s742, 0
      %s745 = sadd.s32 %s744, 1
      %s746 = scalar_select %p743, %s744, %s745
      %p749 = pneg %p743
      %p750 = scmp.eq.s32.totalorder %s84, 1
      %p751 = por %p749, %p750
      %p752 = scmp.ne.s32.totalorder %s744, %s747
      %p753 = scmp.eq.s32.totalorder %s84, 0
      %p754 = por %p752, %p753
      %p755 = scmp.ne.s32.totalorder %s744, %s747
      %p756 = scmp.eq.s32.totalorder %s89, 1
      %p757 = por %p755, %p756
      %p758 = scmp.ne.s32.totalorder %s747, %s748
      %p759 = scmp.eq.s32.totalorder %s89, 0
      %p760 = por %p758, %p759
      %p761 = scmp.ne.s32.totalorder %s747, %s748
      %p762 = scmp.eq.s32.totalorder %s90, 1
      %p763 = por %p761, %p762
      %p765 = scmp.ne.s32.totalorder %s748, %s764
      %p766 = scmp.eq.s32.totalorder %s90, 0
      %p767 = por %p765, %p766
      %p768 = scmp.le.s32.totalorder 1, %s84
      %p769 = scmp.lt.s32.totalorder %s84, 3
      %p770 = pnand %p768, %p769
      %p771 = pneg %p770
      // Predicated region
      $region9: #{tpu_custom_call.1} parent=5 // pred_check
        _
      $region10: #{tpu_custom_call.1} parent=5 // pred_check_branch
        %773 = sbr.rel (%p770) target = $region12
      $region11: #{tpu_custom_call.1} parent=5 // pred_region
        %s774 = ssub.s32 %s84, 1
        // Predicated region
        $region13: #{tpu_custom_call.1} parent=11 // pred_check
          %p775 = pneg %p209
        $region14: #{tpu_custom_call.1} parent=11 // pred_check_branch
          %777 = sbr.rel (%p775) target = $region16
        $region15: #{tpu_custom_call.1} parent=11 // pred_region
          %s779 = ssub.s32 2048, 2048
          %780 = vsyncadd [#allocation9], %s779
          %s781 = sshll.u32 [#allocation10], 4
          %s782 = int_to_ptr.vmem [resolvable:$true] %s781
          %787 = dma.hbm_to_vmem [thread:$0]  %s9, 2048, %s782, [#allocation9], 128, 128, 8
        $region16: #{tpu_custom_call.1} parent=11 // pred_fallthru
          _
        // Predicated region
        $region17: #{tpu_custom_call.1} parent=11 // pred_check
          %p788 = pneg %p230
        $region18: #{tpu_custom_call.1} parent=11 // pred_check_branch
          %790 = sbr.rel (%p788) target = $region20
        $region19: #{tpu_custom_call.1} parent=11 // pred_region
          _
        $region20: #{tpu_custom_call.1} parent=11 // pred_fallthru
          _
        // Predicated region
        $region21: #{tpu_custom_call.1} parent=11 // pred_check
          %p791 = pneg %p251
        $region22: #{tpu_custom_call.1} parent=11 // pred_check_branch
          %793 = sbr.rel (%p791) target = $region24
        $region23: #{tpu_custom_call.1} parent=11 // pred_region
          %s795 = ssub.s32 2048, 2048
          %796 = vsyncadd [#allocation12], %s795
          %s797 = sshll.u32 [#allocation11], 4
          %s798 = int_to_ptr.vmem [resolvable:$true] %s797
          %803 = dma.hbm_to_vmem [thread:$0]  %s13, 2048, %s798, [#allocation12], 128, 128, 8
        $region24: #{tpu_custom_call.1} parent=11 // pred_fallthru
          _
        // Predicated region
        $region25: #{tpu_custom_call.1} parent=11 // pred_check
          %p804 = pneg %p272
        $region26: #{tpu_custom_call.1} parent=11 // pred_check_branch
          %806 = sbr.rel (%p804) target = $region28
        $region27: #{tpu_custom_call.1} parent=11 // pred_region
          _
        $region28: #{tpu_custom_call.1} parent=11 // pred_fallthru
          _
        // Predicated region
        $region29: #{tpu_custom_call.1} parent=11 // pred_check
          %p807 = pneg %p293
        $region30: #{tpu_custom_call.1} parent=11 // pred_check_branch
          %809 = sbr.rel (%p807) target = $region32
        $region31: #{tpu_custom_call.1} parent=11 // pred_region
          %s811 = ssub.s32 2048, 2048
          %812 = vsyncadd [#allocation12], %s811
          %s813 = sshll.u32 [#allocation13], 4
          %s814 = int_to_ptr.vmem [resolvable:$true] %s813
          %819 = dma.hbm_to_vmem [thread:$0]  %s17, 2048, %s814, [#allocation12], 128, 128, 8
        $region32: #{tpu_custom_call.1} parent=11 // pred_fallthru
          _
        // Predicated region
        $region33: #{tpu_custom_call.1} parent=11 // pred_check
          %p820 = pneg %p314
        $region34: #{tpu_custom_call.1} parent=11 // pred_check_branch
          %822 = sbr.rel (%p820) target = $region36
        $region35: #{tpu_custom_call.1} parent=11 // pred_region
          _
        $region36: #{tpu_custom_call.1} parent=11 // pred_fallthru
          _
        // Predicated region
        $region37: #{tpu_custom_call.1} parent=11 // pred_check
          %p823 = pneg %p335
        $region38: #{tpu_custom_call.1} parent=11 // pred_check_branch
          %825 = sbr.rel (%p823) target = $region40
        $region39: #{tpu_custom_call.1} parent=11 // pred_region
          %s827 = ssub.s32 2048, 2048
          %828 = vsyncadd [#allocation15], %s827
          %s829 = sshll.u32 [#allocation14], 4
          %s830 = int_to_ptr.vmem [resolvable:$true] %s829
          %835 = dma.hbm_to_vmem [thread:$0]  %s21, 2048, %s830, [#allocation15], 128, 128, 8
        $region40: #{tpu_custom_call.1} parent=11 // pred_fallthru
          _
        // Predicated region
        $region41: #{tpu_custom_call.1} parent=11 // pred_check
          %p836 = pneg %p356
        $region42: #{tpu_custom_call.1} parent=11 // pred_check_branch
          %838 = sbr.rel (%p836) target = $region44
        $region43: #{tpu_custom_call.1} parent=11 // pred_region
          _
        $region44: #{tpu_custom_call.1} parent=11 // pred_fallthru
          _
        // Predicated region
        $region45: #{tpu_custom_call.1} parent=11 // pred_check
          %p839 = pneg %p377
        $region46: #{tpu_custom_call.1} parent=11 // pred_check_branch
          %841 = sbr.rel (%p839) target = $region48
        $region47: #{tpu_custom_call.1} parent=11 // pred_region
          _
        $region48: #{tpu_custom_call.1} parent=11 // pred_fallthru
          _
        // Predicated region
        $region49: #{tpu_custom_call.1} parent=11 // pred_check
          %p842 = pneg %p398
        $region50: #{tpu_custom_call.1} parent=11 // pred_check_branch
          %844 = sbr.rel (%p842) target = $region52
        $region51: #{tpu_custom_call.1} parent=11 // pred_region
          _
        $region52: #{tpu_custom_call.1} parent=11 // pred_fallthru
          _
        // Predicated region
        $region53: #{tpu_custom_call.1} parent=11 // pred_check
          %p845 = pneg %p419
        $region54: #{tpu_custom_call.1} parent=11 // pred_check_branch
          %847 = sbr.rel (%p845) target = $region56
        $region55: #{tpu_custom_call.1} parent=11 // pred_region
          %s849 = ssub.s32 2048, 2048
          %850 = vsyncadd [#allocation15], %s849
          %s851 = sshll.u32 [#allocation16], 4
          %s852 = int_to_ptr.vmem [resolvable:$true] %s851
          %857 = dma.hbm_to_vmem [thread:$0]  %s29, 2048, %s852, [#allocation15], 128, 128, 8
        $region56: #{tpu_custom_call.1} parent=11 // pred_fallthru
          _
        // Predicated region
        $region57: #{tpu_custom_call.1} parent=11 // pred_check
          %p858 = pneg %p440
        $region58: #{tpu_custom_call.1} parent=11 // pred_check_branch
          %860 = sbr.rel (%p858) target = $region60
        $region59: #{tpu_custom_call.1} parent=11 // pred_region
          _
        $region60: #{tpu_custom_call.1} parent=11 // pred_fallthru
          _
        // Predicated region
        $region61: #{tpu_custom_call.1} parent=11 // pred_check
          %p861 = pneg %p461
        $region62: #{tpu_custom_call.1} parent=11 // pred_check_branch
          %863 = sbr.rel (%p861) target = $region64
        $region63: #{tpu_custom_call.1} parent=11 // pred_region
          %s865 = ssub.s32 2048, 2048
          %866 = vsyncadd [#allocation18], %s865
          %s867 = sshll.u32 [#allocation17], 4
          %s868 = int_to_ptr.vmem [resolvable:$true] %s867
          %873 = dma.hbm_to_vmem [thread:$0]  %s33, 2048, %s868, [#allocation18], 128, 128, 8
        $region64: #{tpu_custom_call.1} parent=11 // pred_fallthru
          _
        // Predicated region
        $region65: #{tpu_custom_call.1} parent=11 // pred_check
          %p874 = pneg %p482
        $region66: #{tpu_custom_call.1} parent=11 // pred_check_branch
          %876 = sbr.rel (%p874) target = $region68
        $region67: #{tpu_custom_call.1} parent=11 // pred_region
          _
        $region68: #{tpu_custom_call.1} parent=11 // pred_fallthru
          _
        // Predicated region
        $region69: #{tpu_custom_call.1} parent=11 // pred_check
          %p877 = pneg %p503
        $region70: #{tpu_custom_call.1} parent=11 // pred_check_branch
          %879 = sbr.rel (%p877) target = $region72
        $region71: #{tpu_custom_call.1} parent=11 // pred_region
          %s881 = ssub.s32 2048, 2048
          %882 = vsyncadd [#allocation18], %s881
          %s883 = sshll.u32 [#allocation19], 4
          %s884 = int_to_ptr.vmem [resolvable:$true] %s883
          %889 = dma.hbm_to_vmem [thread:$0]  %s37, 2048, %s884, [#allocation18], 128, 128, 8
        $region72: #{tpu_custom_call.1} parent=11 // pred_fallthru
          _
        // Predicated region
        $region73: #{tpu_custom_call.1} parent=11 // pred_check
          %p890 = pneg %p524
        $region74: #{tpu_custom_call.1} parent=11 // pred_check_branch
          %892 = sbr.rel (%p890) target = $region76
        $region75: #{tpu_custom_call.1} parent=11 // pred_region
          _
        $region76: #{tpu_custom_call.1} parent=11 // pred_fallthru
          _
        // Predicated region
        $region77: #{tpu_custom_call.1} parent=11 // pred_check
          %p893 = pneg %p545
        $region78: #{tpu_custom_call.1} parent=11 // pred_check_branch
          %895 = sbr.rel (%p893) target = $region80
        $region79: #{tpu_custom_call.1} parent=11 // pred_region
          %s897 = ssub.s32 2048, 2048
          %898 = vsyncadd [#allocation21], %s897
          %s899 = sshll.u32 [#allocation20], 4
          %s900 = int_to_ptr.vmem [resolvable:$true] %s899
          %905 = dma.hbm_to_vmem [thread:$0]  %s41, 2048, %s900, [#allocation21], 128, 128, 8
        $region80: #{tpu_custom_call.1} parent=11 // pred_fallthru
          _
        // Predicated region
        $region81: #{tpu_custom_call.1} parent=11 // pred_check
          %p906 = pneg %p566
        $region82: #{tpu_custom_call.1} parent=11 // pred_check_branch
          %908 = sbr.rel (%p906) target = $region84
        $region83: #{tpu_custom_call.1} parent=11 // pred_region
          _
        $region84: #{tpu_custom_call.1} parent=11 // pred_fallthru
          _
        // Predicated region
        $region85: #{tpu_custom_call.1} parent=11 // pred_check
          %p909 = pneg %p587
        $region86: #{tpu_custom_call.1} parent=11 // pred_check_branch
          %911 = sbr.rel (%p909) target = $region88
        $region87: #{tpu_custom_call.1} parent=11 // pred_region
          _
        $region88: #{tpu_custom_call.1} parent=11 // pred_fallthru
          _
        // Predicated region
        $region89: #{tpu_custom_call.1} parent=11 // pred_check
          %p912 = pneg %p608
        $region90: #{tpu_custom_call.1} parent=11 // pred_check_branch
          %914 = sbr.rel (%p912) target = $region92
        $region91: #{tpu_custom_call.1} parent=11 // pred_region
          _
        $region92: #{tpu_custom_call.1} parent=11 // pred_fallthru
          _
        // Predicated region
        $region93: #{tpu_custom_call.1} parent=11 // pred_check
          %p915 = pneg %p629
        $region94: #{tpu_custom_call.1} parent=11 // pred_check_branch
          %917 = sbr.rel (%p915) target = $region96
        $region95: #{tpu_custom_call.1} parent=11 // pred_region
          %s919 = ssub.s32 4096, 4096
          %920 = vsyncadd [#allocation21], %s919
          %s921 = sshll.u32 [#allocation22], 4
          %s922 = int_to_ptr.vmem [resolvable:$true] %s921
          %927 = dma.hbm_to_vmem [thread:$0]  %s49, 4096, %s922, [#allocation21], 256, 256, 16
        $region96: #{tpu_custom_call.1} parent=11 // pred_fallthru
          _
        // Predicated region
        $region97: #{tpu_custom_call.1} parent=11 // pred_check
          %p928 = pneg %p650
        $region98: #{tpu_custom_call.1} parent=11 // pred_check_branch
          %930 = sbr.rel (%p928) target = $region100
        $region99: #{tpu_custom_call.1} parent=11 // pred_region
          _
        $region100: #{tpu_custom_call.1} parent=11 // pred_fallthru
          _
        // Predicated region
        $region101: #{tpu_custom_call.1} parent=11 // pred_check
          %p931 = pneg %p671
        $region102: #{tpu_custom_call.1} parent=11 // pred_check_branch
          %933 = sbr.rel (%p931) target = $region104
        $region103: #{tpu_custom_call.1} parent=11 // pred_region
          %s935 = ssub.s32 4096, 4096
          %936 = vsyncadd [#allocation24], %s935
          %s937 = sshll.u32 [#allocation23], 4
          %s938 = int_to_ptr.vmem [resolvable:$true] %s937
          %943 = dma.hbm_to_vmem [thread:$0]  %s53, 4096, %s938, [#allocation24], 128, 128, 8
        $region104: #{tpu_custom_call.1} parent=11 // pred_fallthru
          _
        // Predicated region
        $region105: #{tpu_custom_call.1} parent=11 // pred_check
          %p944 = pneg %p692
        $region106: #{tpu_custom_call.1} parent=11 // pred_check_branch
          %946 = sbr.rel (%p944) target = $region108
        $region107: #{tpu_custom_call.1} parent=11 // pred_region
          _
        $region108: #{tpu_custom_call.1} parent=11 // pred_fallthru
          _
        // Predicated region
        $region109: #{tpu_custom_call.1} parent=11 // pred_check
          %p947 = pneg %p713
        $region110: #{tpu_custom_call.1} parent=11 // pred_check_branch
          %949 = sbr.rel (%p947) target = $region112
        $region111: #{tpu_custom_call.1} parent=11 // pred_region
          _
        $region112: #{tpu_custom_call.1} parent=11 // pred_fallthru
          _
        // Predicated region
        $region113: #{tpu_custom_call.1} parent=11 // pred_check
          %p950 = pneg %p734
        $region114: #{tpu_custom_call.1} parent=11 // pred_check_branch
          %952 = sbr.rel (%p950) target = $region116
        $region115: #{tpu_custom_call.1} parent=11 // pred_region
          _
        $region116: #{tpu_custom_call.1} parent=11 // pred_fallthru
          _
      $region12: #{tpu_custom_call.1} parent=5 // pred_fallthru
        _
      %p953 = scmp.lt.s32.totalorder %s84, 2
      // Predicated region
      $region117: #{tpu_custom_call.1} parent=5 // pred_check
        %p954 = pneg %p953
      $region118: #{tpu_custom_call.1} parent=5 // pred_check_branch
        %956 = sbr.rel (%p954) target = $region120
      $region119: #{tpu_custom_call.1} parent=5 // pred_region
        // Predicated region
        $region121: #{tpu_custom_call.1} parent=119 // pred_check
          %p957 = pneg %p104
        $region122: #{tpu_custom_call.1} parent=119 // pred_check_branch
          %959 = sbr.rel (%p957) target = $region124
        $region123: #{tpu_custom_call.1} parent=119 // pred_region
          %s960 = sand.u32 %s94, 1
          %s961 = scalar_lea.sflag [#allocation3], %s960
          %s962 = sand.u32 %s94, 1
          %s963 = smul.addr %s962, 8
          %s964 = scalar_lea.vmem [#allocation2], %s963
          %s966 = ssub.s32 128, 128
          %967 = vsyncadd %s961, %s966
          %s968 = smul.addr %s84, 128
          %s969 = scalar_lea.hbm %s1, %s968
          %s971 = sshll.u32 %s964, 4
          %s972 = int_to_ptr.vmem [resolvable:$true] %s971
          %974 = dma.hbm_to_vmem [thread:$0]  %s969, 128, %s972, %s961
        $region124: #{tpu_custom_call.1} parent=119 // pred_fallthru
          _
        // Predicated region
        $region125: #{tpu_custom_call.1} parent=119 // pred_check
          %p975 = pneg %p130
        $region126: #{tpu_custom_call.1} parent=119 // pred_check_branch
          %977 = sbr.rel (%p975) target = $region128
        $region127: #{tpu_custom_call.1} parent=119 // pred_region
          %s978 = sand.u32 %s84, 1
          %s979 = scalar_lea.sflag [#allocation6], %s978
          %s980 = sand.u32 %s120, 1
          %s981 = smul.addr %s980, 16
          %s982 = scalar_lea.vmem [#allocation5], %s981
          %s984 = ssub.s32 256, 256
          %985 = vsyncadd %s979, %s984
          %s986 = smul.addr %s84, 2
          %s987 = smul.addr %s986, 128
          %s988 = scalar_lea.hbm %s3, %s987
          %s989 = sshll.u32 %s982, 4
          %s990 = int_to_ptr.vmem [resolvable:$true] %s989
          %995 = dma.hbm_to_vmem [thread:$0]  %s988, 256, %s990, %s979, 128, 128, 8
        $region128: #{tpu_custom_call.1} parent=119 // pred_fallthru
          _
        // Predicated region
        $region129: #{tpu_custom_call.1} parent=119 // pred_check
          %p996 = pneg %p156
        $region130: #{tpu_custom_call.1} parent=119 // pred_check_branch
          %998 = sbr.rel (%p996) target = $region132
        $region131: #{tpu_custom_call.1} parent=119 // pred_region
          %s999 = sand.u32 %s84, 1
          %s1000 = scalar_lea.sflag [#allocation6], %s999
          %s1001 = sand.u32 %s146, 1
          %s1002 = smul.addr %s1001, 8
          %s1003 = scalar_lea.vmem [#allocation7], %s1002
          %s1005 = ssub.s32 128, 128
          %1006 = vsyncadd %s1000, %s1005
          %s1007 = smul.addr %s84, 128
          %s1008 = scalar_lea.hbm %s5, %s1007
          %s1010 = sshll.u32 %s1003, 4
          %s1011 = int_to_ptr.vmem [resolvable:$true] %s1010
          %1013 = dma.hbm_to_vmem [thread:$0]  %s1008, 128, %s1011, %s1000
        $region132: #{tpu_custom_call.1} parent=119 // pred_fallthru
          _
        // Predicated region
        $region133: #{tpu_custom_call.1} parent=119 // pred_check
          %p1014 = pneg %p182
        $region134: #{tpu_custom_call.1} parent=119 // pred_check_branch
          %1016 = sbr.rel (%p1014) target = $region136
        $region135: #{tpu_custom_call.1} parent=119 // pred_region
          %s1017 = sand.u32 %s84, 1
          %s1018 = scalar_lea.sflag [#allocation9], %s1017
          %s1019 = sand.u32 %s172, 1
          %s1020 = smul.addr %s1019, 8
          %s1021 = scalar_lea.vmem [#allocation8], %s1020
          %s1023 = ssub.s32 128, 128
          %1024 = vsyncadd %s1018, %s1023
          %s1025 = smul.addr %s84, 128
          %s1026 = scalar_lea.hbm %s7, %s1025
          %s1028 = sshll.u32 %s1021, 4
          %s1029 = int_to_ptr.vmem [resolvable:$true] %s1028
          %1031 = dma.hbm_to_vmem [thread:$0]  %s1026, 128, %s1029, %s1018
        $region136: #{tpu_custom_call.1} parent=119 // pred_fallthru
          _
      $region120: #{tpu_custom_call.1} parent=5 // pred_fallthru
        _
      %p1032 = scmp.le.s32.totalorder 1, %s84
      %p1033 = scmp.lt.s32.totalorder %s84, 3
      %p1034 = pnand %p1032, %p1033
      %p1035 = pneg %p1034
      // Predicated region
      $region137: #{tpu_custom_call.1} parent=5 // pred_check
        _
      $region138: #{tpu_custom_call.1} parent=5 // pred_check_branch
        %1037 = sbr.rel (%p1034) target = $region140
      $region139: #{tpu_custom_call.1} parent=5 // pred_region
        %s1038 = ssub.s32 %s84, 1
        %s1039 = sand.u32 %s97, 1
        %s1040 = scalar_lea.sflag [#allocation3], %s1039
        %s1041 = sand.u32 %s97, 1
        %s1042 = smul.addr %s1041, 8
        %s1043 = scalar_lea.vmem [#allocation2], %s1042
        // Predicated region
        $region141: #{tpu_custom_call.1} parent=139 // pred_check
          %p1044 = pneg %p110
        $region142: #{tpu_custom_call.1} parent=139 // pred_check_branch
          %1046 = sbr.rel (%p1044) target = $region144
        $region143: #{tpu_custom_call.1} parent=139 // pred_region
          %1047 = dma.done %s1040, 128
        $region144: #{tpu_custom_call.1} parent=139 // pred_fallthru
          _
        %s1048 = sand.u32 %s89, 1
        %s1049 = scalar_lea.sflag [#allocation6], %s1048
        %s1050 = sand.u32 %s123, 1
        %s1051 = smul.addr %s1050, 16
        %s1052 = scalar_lea.vmem [#allocation5], %s1051
        // Predicated region
        $region145: #{tpu_custom_call.1} parent=139 // pred_check
          %p1053 = pneg %p136
        $region146: #{tpu_custom_call.1} parent=139 // pred_check_branch
          %1055 = sbr.rel (%p1053) target = $region148
        $region147: #{tpu_custom_call.1} parent=139 // pred_region
          %1056 = dma.done %s1049, 256
        $region148: #{tpu_custom_call.1} parent=139 // pred_fallthru
          _
        %s1057 = sand.u32 %s89, 1
        %s1058 = scalar_lea.sflag [#allocation6], %s1057
        %s1059 = sand.u32 %s149, 1
        %s1060 = smul.addr %s1059, 8
        %s1061 = scalar_lea.vmem [#allocation7], %s1060
        // Predicated region
        $region149: #{tpu_custom_call.1} parent=139 // pred_check
          %p1062 = pneg %p162
        $region150: #{tpu_custom_call.1} parent=139 // pred_check_branch
          %1064 = sbr.rel (%p1062) target = $region152
        $region151: #{tpu_custom_call.1} parent=139 // pred_region
          %1065 = dma.done %s1058, 128
        $region152: #{tpu_custom_call.1} parent=139 // pred_fallthru
          _
        %s1066 = sand.u32 %s89, 1
        %s1067 = scalar_lea.sflag [#allocation9], %s1066
        %s1068 = sand.u32 %s175, 1
        %s1069 = smul.addr %s1068, 8
        %s1070 = scalar_lea.vmem [#allocation8], %s1069
        // Predicated region
        $region153: #{tpu_custom_call.1} parent=139 // pred_check
          %p1071 = pneg %p188
        $region154: #{tpu_custom_call.1} parent=139 // pred_check_branch
          %1073 = sbr.rel (%p1071) target = $region156
        $region155: #{tpu_custom_call.1} parent=139 // pred_region
          %1074 = dma.done %s1067, 128
        $region156: #{tpu_custom_call.1} parent=139 // pred_fallthru
          _
        // Predicated region
        $region157: #{tpu_custom_call.1} parent=139 // pred_check
          %p1075 = pneg %p209
        $region158: #{tpu_custom_call.1} parent=139 // pred_check_branch
          %1077 = sbr.rel (%p1075) target = $region160
        $region159: #{tpu_custom_call.1} parent=139 // pred_region
          %1078 = dma.done [#allocation9], 2048
        $region160: #{tpu_custom_call.1} parent=139 // pred_fallthru
          _
        // Predicated region
        $region161: #{tpu_custom_call.1} parent=139 // pred_check
          %p1079 = pneg %p251
        $region162: #{tpu_custom_call.1} parent=139 // pred_check_branch
          %1081 = sbr.rel (%p1079) target = $region164
        $region163: #{tpu_custom_call.1} parent=139 // pred_region
          %1082 = dma.done [#allocation12], 2048
        $region164: #{tpu_custom_call.1} parent=139 // pred_fallthru
          _
        // Predicated region
        $region165: #{tpu_custom_call.1} parent=139 // pred_check
          %p1083 = pneg %p293
        $region166: #{tpu_custom_call.1} parent=139 // pred_check_branch
          %1085 = sbr.rel (%p1083) target = $region168
        $region167: #{tpu_custom_call.1} parent=139 // pred_region
          %1086 = dma.done [#allocation12], 2048
        $region168: #{tpu_custom_call.1} parent=139 // pred_fallthru
          _
        // Predicated region
        $region169: #{tpu_custom_call.1} parent=139 // pred_check
          %p1087 = pneg %p335
        $region170: #{tpu_custom_call.1} parent=139 // pred_check_branch
          %1089 = sbr.rel (%p1087) target = $region172
        $region171: #{tpu_custom_call.1} parent=139 // pred_region
          %1090 = dma.done [#allocation15], 2048
        $region172: #{tpu_custom_call.1} parent=139 // pred_fallthru
          _
        // Predicated region
        $region173: #{tpu_custom_call.1} parent=139 // pred_check
          %p1091 = pneg %p419
        $region174: #{tpu_custom_call.1} parent=139 // pred_check_branch
          %1093 = sbr.rel (%p1091) target = $region176
        $region175: #{tpu_custom_call.1} parent=139 // pred_region
          %1094 = dma.done [#allocation15], 2048
        $region176: #{tpu_custom_call.1} parent=139 // pred_fallthru
          _
        // Predicated region
        $region177: #{tpu_custom_call.1} parent=139 // pred_check
          %p1095 = pneg %p461
        $region178: #{tpu_custom_call.1} parent=139 // pred_check_branch
          %1097 = sbr.rel (%p1095) target = $region180
        $region179: #{tpu_custom_call.1} parent=139 // pred_region
          %1098 = dma.done [#allocation18], 2048
        $region180: #{tpu_custom_call.1} parent=139 // pred_fallthru
          _
        // Predicated region
        $region181: #{tpu_custom_call.1} parent=139 // pred_check
          %p1099 = pneg %p503
        $region182: #{tpu_custom_call.1} parent=139 // pred_check_branch
          %1101 = sbr.rel (%p1099) target = $region184
        $region183: #{tpu_custom_call.1} parent=139 // pred_region
          %1102 = dma.done [#allocation18], 2048
        $region184: #{tpu_custom_call.1} parent=139 // pred_fallthru
          _
        // Predicated region
        $region185: #{tpu_custom_call.1} parent=139 // pred_check
          %p1103 = pneg %p545
        $region186: #{tpu_custom_call.1} parent=139 // pred_check_branch
          %1105 = sbr.rel (%p1103) target = $region188
        $region187: #{tpu_custom_call.1} parent=139 // pred_region
          %1106 = dma.done [#allocation21], 2048
        $region188: #{tpu_custom_call.1} parent=139 // pred_fallthru
          _
        // Predicated region
        $region189: #{tpu_custom_call.1} parent=139 // pred_check
          %p1107 = pneg %p629
        $region190: #{tpu_custom_call.1} parent=139 // pred_check_branch
          %1109 = sbr.rel (%p1107) target = $region192
        $region191: #{tpu_custom_call.1} parent=139 // pred_region
          %1110 = dma.done [#allocation21], 4096
        $region192: #{tpu_custom_call.1} parent=139 // pred_fallthru
          _
        // Predicated region
        $region193: #{tpu_custom_call.1} parent=139 // pred_check
          %p1111 = pneg %p671
        $region194: #{tpu_custom_call.1} parent=139 // pred_check_branch
          %1113 = sbr.rel (%p1111) target = $region196
        $region195: #{tpu_custom_call.1} parent=139 // pred_region
          %1114 = dma.done [#allocation24], 4096
        $region196: #{tpu_custom_call.1} parent=139 // pred_fallthru
          _
        %s1115 = sand.u32 %s97, 1
        %s1116 = scalar_lea.sflag [#allocation3], %s1115
        %s1117 = sand.u32 %s97, 1
        %s1118 = smul.addr %s1117, 8
        %s1119 = scalar_lea.vmem [#allocation2], %s1118
        %p1120 = pneg %p110
        %p1121 = pneg %p107
        %s1122 = sand.u32 %s89, 1
        %s1123 = scalar_lea.sflag [#allocation6], %s1122
        %s1124 = sand.u32 %s123, 1
        %s1125 = smul.addr %s1124, 16
        %s1126 = scalar_lea.vmem [#allocation5], %s1125
        %p1127 = pneg %p136
        %p1128 = pneg %p133
        %s1129 = sand.u32 %s89, 1
        %s1130 = scalar_lea.sflag [#allocation6], %s1129
        %s1131 = sand.u32 %s149, 1
        %s1132 = smul.addr %s1131, 8
        %s1133 = scalar_lea.vmem [#allocation7], %s1132
        %p1134 = pneg %p162
        %p1135 = pneg %p159
        %s1136 = sand.u32 %s89, 1
        %s1137 = scalar_lea.sflag [#allocation9], %s1136
        %s1138 = sand.u32 %s175, 1
        %s1139 = smul.addr %s1138, 8
        %s1140 = scalar_lea.vmem [#allocation8], %s1139
        %p1141 = pneg %p188
        %p1142 = pneg %p185
        %p1143 = pneg %p209
        %p1144 = pneg %p206
        %p1145 = pneg %p230
        %p1146 = pneg %p227
        %p1147 = pneg %p251
        %p1148 = pneg %p248
        %p1149 = pneg %p272
        %p1150 = pneg %p269
        %p1151 = pneg %p293
        %p1152 = pneg %p290
        %p1153 = pneg %p314
        %p1154 = pneg %p311
        %p1155 = pneg %p335
        %p1156 = pneg %p332
        %p1157 = pneg %p356
        %p1158 = pneg %p353
        %p1159 = pneg %p377
        %p1160 = pneg %p374
        %p1161 = pneg %p398
        %p1162 = pneg %p395
        %p1163 = pneg %p419
        %p1164 = pneg %p416
        %p1165 = pneg %p440
        %p1166 = pneg %p437
        %p1167 = pneg %p461
        %p1168 = pneg %p458
        %p1169 = pneg %p482
        %p1170 = pneg %p479
        %p1171 = pneg %p503
        %p1172 = pneg %p500
        %p1173 = pneg %p524
        %p1174 = pneg %p521
        %p1175 = pneg %p545
        %p1176 = pneg %p542
        %p1177 = pneg %p566
        %p1178 = pneg %p563
        %p1179 = pneg %p587
        %p1180 = pneg %p584
        %p1181 = pneg %p608
        %p1182 = pneg %p605
        %p1183 = pneg %p629
        %p1184 = pneg %p626
        %p1185 = pneg %p650
        %p1186 = pneg %p647
        %p1187 = pneg %p671
        %p1188 = pneg %p668
        %p1189 = pneg %p692
        %p1190 = pneg %p689
        %p1191 = pneg %p713
        %p1192 = pneg %p710
        %p1193 = pneg %p734
        %p1194 = pneg %p731
        %p1195 = pneg %p760
        %p1196 = pneg %p757
        %s1197 = sand.u32 %s747, 1
        %s1198 = scalar_lea.sflag [#allocation4], %s1197
        %s1199 = sand.u32 %s747, 1
        %s1200 = smul.addr %s1199, 8
        %s1201 = scalar_lea.vmem [#allocation25], %s1200
        %v1202 = vld [vmem:[%s1043] sm:$0xff]
        %v1203 = vld [vmem:[%s1052] sm:$0xff]
        %v1204 = vld [vmem:[%s1052 + $0x8] sm:$0xff]
        %v1205 = vld [vmem:[%s1061] sm:$0xff]
        %v1206 = vld [vmem:[%s1070] sm:$0xff]
        %v1207 = vld [vmem:[#allocation10] sm:$0xff]
        %v1208 = vld [vmem:[#allocation10 + $0x8] sm:$0xff]
        %v1209 = vld [vmem:[#allocation10 + $0x10] sm:$0xff]
        %v1210 = vld [vmem:[#allocation10 + $0x18] sm:$0xff]
        %v1211 = vld [vmem:[#allocation10 + $0x20] sm:$0xff]
        %v1212 = vld [vmem:[#allocation10 + $0x28] sm:$0xff]
        %v1213 = vld [vmem:[#allocation10 + $0x30] sm:$0xff]
        %v1214 = vld [vmem:[#allocation10 + $0x38] sm:$0xff]
        %v1215 = vld [vmem:[#allocation10 + $0x40] sm:$0xff]
        %v1216 = vld [vmem:[#allocation10 + $0x48] sm:$0xff]
        %v1217 = vld [vmem:[#allocation10 + $0x50] sm:$0xff]
        %v1218 = vld [vmem:[#allocation10 + $0x58] sm:$0xff]
        %v1219 = vld [vmem:[#allocation10 + $0x60] sm:$0xff]
        %v1220 = vld [vmem:[#allocation10 + $0x68] sm:$0xff]
        %v1221 = vld [vmem:[#allocation10 + $0x70] sm:$0xff]
        %v1222 = vld [vmem:[#allocation10 + $0x78] sm:$0xff]
        %v1223 = vld [vmem:[%s11] sm:$0x1]
        %v1225 = vlaneseq
        %v1226 = vshrl.u32 %v1225, 7
        %v1227 = vsub.s32 0, %v1226
        %v1228 = vrot.slane %v1223, %v1227
        %1230 = vmatprep.subr.mxu0 0.0
        %1231 = vmatpush1.msra.mxu0 %v1207
        %1232 = vmatprep.subr.mxu0 0.0
        %1233 = vmatpush1.msra.mxu0 %v1208
        %1234 = vmatprep.subr.mxu0 0.0
        %1235 = vmatpush1.msra.mxu0 %v1209
        %1236 = vmatprep.subr.mxu0 0.0
        %1237 = vmatpush1.msra.mxu0 %v1210
        %1238 = vmatprep.subr.mxu0 0.0
        %1239 = vmatpush1.msra.mxu0 %v1211
        %1240 = vmatprep.subr.mxu0 0.0
        %1241 = vmatpush1.msra.mxu0 %v1212
        %1242 = vmatprep.subr.mxu0 0.0
        %1243 = vmatpush1.msra.mxu0 %v1213
        %1244 = vmatprep.subr.mxu0 0.0
        %1245 = vmatpush1.msra.mxu0 %v1214
        %1246 = vmatprep.subr.mxu0 0.0
        %1247 = vmatpush1.msra.mxu0 %v1215
        %1248 = vmatprep.subr.mxu0 0.0
        %1249 = vmatpush1.msra.mxu0 %v1216
        %1250 = vmatprep.subr.mxu0 0.0
        %1251 = vmatpush1.msra.mxu0 %v1217
        %1252 = vmatprep.subr.mxu0 0.0
        %1253 = vmatpush1.msra.mxu0 %v1218
        %1254 = vmatprep.subr.mxu0 0.0
        %1255 = vmatpush1.msra.mxu0 %v1219
        %1256 = vmatprep.subr.mxu0 0.0
        %1257 = vmatpush1.msra.mxu0 %v1220
        %1258 = vmatprep.subr.mxu0 0.0
        %1259 = vmatpush1.msra.mxu0 %v1221
        %1260 = vmatprep.subr.mxu0 0.0
        %1261 = vmatpush1.msra.mxu0 %v1222
        %1262 = vmatprep.subr.mxu0 0.0
        %1263 = vmatpush1.msra.mxu0 0.0
        %1264 = vmatprep.subr.mxu0 0.0
        %1265 = vmatpush1.msra.mxu0 0.0
        %1266 = vmatprep.subr.mxu0 0.0
        %1267 = vmatpush1.msra.mxu0 0.0
        %1268 = vmatprep.subr.mxu0 0.0
        %1269 = vmatpush1.msra.mxu0 0.0
        %1270 = vmatprep.subr.mxu0 0.0
        %1271 = vmatpush1.msra.mxu0 0.0
        %1272 = vmatprep.subr.mxu0 0.0
        %1273 = vmatpush1.msra.mxu0 0.0
        %1274 = vmatprep.subr.mxu0 0.0
        %1275 = vmatpush1.msra.mxu0 0.0
        %1276 = vmatprep.subr.mxu0 0.0
        %1277 = vmatpush1.msra.mxu0 0.0
        %1278 = vmatprep.subr.mxu0 0.0
        %1279 = vmatpush1.msra.mxu0 0.0
        %1280 = vmatprep.subr.mxu0 0.0
        %1281 = vmatpush1.msra.mxu0 0.0
        %1282 = vmatprep.subr.mxu0 0.0
        %1283 = vmatpush1.msra.mxu0 0.0
        %1284 = vmatprep.subr.mxu0 0.0
        %1285 = vmatpush1.msra.mxu0 0.0
        %1286 = vmatprep.subr.mxu0 0.0
        %1287 = vmatpush1.msra.mxu0 0.0
        %1288 = vmatprep.subr.mxu0 0.0
        %1289 = vmatpush1.msra.mxu0 0.0
        %1290 = vmatprep.subr.mxu0 0.0
        %1291 = vmatpush1.msra.mxu0 0.0
        %1292 = vmatprep.subr.mxu0 0.0
        %1293 = vmatpush1.msra.mxu0 0.0
        %1294 = vmatprep.mubr.f32.mxu0 0.0
        %1295 = vmatmul.mubr.f32.gmra.mrb[0].mxu0 %v1202
        %v1296 = vpop.f32.mrb[0].mxu0
        %v1297 = vadd.f32 %v1228, %v1296
        %v1298 = vpop.f32.mrb[0].mxu0
        %1299 = vdwg.mxu0
        %v1300 = vld [vmem:[#allocation11] sm:$0xff]
        %v1301 = vld [vmem:[#allocation11 + $0x8] sm:$0xff]
        %v1302 = vld [vmem:[#allocation11 + $0x10] sm:$0xff]
        %v1303 = vld [vmem:[#allocation11 + $0x18] sm:$0xff]
        %v1304 = vld [vmem:[#allocation11 + $0x20] sm:$0xff]
        %v1305 = vld [vmem:[#allocation11 + $0x28] sm:$0xff]
        %v1306 = vld [vmem:[#allocation11 + $0x30] sm:$0xff]
        %v1307 = vld [vmem:[#allocation11 + $0x38] sm:$0xff]
        %v1308 = vld [vmem:[#allocation11 + $0x40] sm:$0xff]
        %v1309 = vld [vmem:[#allocation11 + $0x48] sm:$0xff]
        %v1310 = vld [vmem:[#allocation11 + $0x50] sm:$0xff]
        %v1311 = vld [vmem:[#allocation11 + $0x58] sm:$0xff]
        %v1312 = vld [vmem:[#allocation11 + $0x60] sm:$0xff]
        %v1313 = vld [vmem:[#allocation11 + $0x68] sm:$0xff]
        %v1314 = vld [vmem:[#allocation11 + $0x70] sm:$0xff]
        %v1315 = vld [vmem:[#allocation11 + $0x78] sm:$0xff]
        %v1316 = vld [vmem:[%s15] sm:$0x1]
        %v1318 = vlaneseq
        %v1319 = vshrl.u32 %v1318, 7
        %v1320 = vsub.s32 0, %v1319
        %v1321 = vrot.slane %v1316, %v1320
        %1323 = vmatprep.subr.mxu0 0.0
        %1324 = vmatpush1.msra.mxu0 %v1300
        %1325 = vmatprep.subr.mxu0 0.0
        %1326 = vmatpush1.msra.mxu0 %v1301
        %1327 = vmatprep.subr.mxu0 0.0
        %1328 = vmatpush1.msra.mxu0 %v1302
        %1329 = vmatprep.subr.mxu0 0.0
        %1330 = vmatpush1.msra.mxu0 %v1303
        %1331 = vmatprep.subr.mxu0 0.0
        %1332 = vmatpush1.msra.mxu0 %v1304
        %1333 = vmatprep.subr.mxu0 0.0
        %1334 = vmatpush1.msra.mxu0 %v1305
        %1335 = vmatprep.subr.mxu0 0.0
        %1336 = vmatpush1.msra.mxu0 %v1306
        %1337 = vmatprep.subr.mxu0 0.0
        %1338 = vmatpush1.msra.mxu0 %v1307
        %1339 = vmatprep.subr.mxu0 0.0
        %1340 = vmatpush1.msra.mxu0 %v1308
        %1341 = vmatprep.subr.mxu0 0.0
        %1342 = vmatpush1.msra.mxu0 %v1309
        %1343 = vmatprep.subr.mxu0 0.0
        %1344 = vmatpush1.msra.mxu0 %v1310
        %1345 = vmatprep.subr.mxu0 0.0
        %1346 = vmatpush1.msra.mxu0 %v1311
        %1347 = vmatprep.subr.mxu0 0.0
        %1348 = vmatpush1.msra.mxu0 %v1312
        %1349 = vmatprep.subr.mxu0 0.0
        %1350 = vmatpush1.msra.mxu0 %v1313
        %1351 = vmatprep.subr.mxu0 0.0
        %1352 = vmatpush1.msra.mxu0 %v1314
        %1353 = vmatprep.subr.mxu0 0.0
        %1354 = vmatpush1.msra.mxu0 %v1315
        %1355 = vmatprep.subr.mxu0 0.0
        %1356 = vmatpush1.msra.mxu0 0.0
        %1357 = vmatprep.subr.mxu0 0.0
        %1358 = vmatpush1.msra.mxu0 0.0
        %1359 = vmatprep.subr.mxu0 0.0
        %1360 = vmatpush1.msra.mxu0 0.0
        %1361 = vmatprep.subr.mxu0 0.0
        %1362 = vmatpush1.msra.mxu0 0.0
        %1363 = vmatprep.subr.mxu0 0.0
        %1364 = vmatpush1.msra.mxu0 0.0
        %1365 = vmatprep.subr.mxu0 0.0
        %1366 = vmatpush1.msra.mxu0 0.0
        %1367 = vmatprep.subr.mxu0 0.0
        %1368 = vmatpush1.msra.mxu0 0.0
        %1369 = vmatprep.subr.mxu0 0.0
        %1370 = vmatpush1.msra.mxu0 0.0
        %1371 = vmatprep.subr.mxu0 0.0
        %1372 = vmatpush1.msra.mxu0 0.0
        %1373 = vmatprep.subr.mxu0 0.0
        %1374 = vmatpush1.msra.mxu0 0.0
        %1375 = vmatprep.subr.mxu0 0.0
        %1376 = vmatpush1.msra.mxu0 0.0
        %1377 = vmatprep.subr.mxu0 0.0
        %1378 = vmatpush1.msra.mxu0 0.0
        %1379 = vmatprep.subr.mxu0 0.0
        %1380 = vmatpush1.msra.mxu0 0.0
        %1381 = vmatprep.subr.mxu0 0.0
        %1382 = vmatpush1.msra.mxu0 0.0
        %1383 = vmatprep.subr.mxu0 0.0
        %1384 = vmatpush1.msra.mxu0 0.0
        %1385 = vmatprep.subr.mxu0 0.0
        %1386 = vmatpush1.msra.mxu0 0.0
        %1387 = vmatprep.mubr.f32.mxu0 0.0
        %1388 = vmatmul.mubr.f32.gmra.mrb[0].mxu0 %v1202
        %v1389 = vpop.f32.mrb[0].mxu0
        %v1390 = vadd.f32 %v1321, %v1389
        %v1391 = vpop.f32.mrb[0].mxu0
        %1392 = vdwg.mxu0
        %v1393 = vld [vmem:[#allocation13] sm:$0xff]
        %v1394 = vld [vmem:[#allocation13 + $0x8] sm:$0xff]
        %v1395 = vld [vmem:[#allocation13 + $0x10] sm:$0xff]
        %v1396 = vld [vmem:[#allocation13 + $0x18] sm:$0xff]
        %v1397 = vld [vmem:[#allocation13 + $0x20] sm:$0xff]
        %v1398 = vld [vmem:[#allocation13 + $0x28] sm:$0xff]
        %v1399 = vld [vmem:[#allocation13 + $0x30] sm:$0xff]
        %v1400 = vld [vmem:[#allocation13 + $0x38] sm:$0xff]
        %v1401 = vld [vmem:[#allocation13 + $0x40] sm:$0xff]
        %v1402 = vld [vmem:[#allocation13 + $0x48] sm:$0xff]
        %v1403 = vld [vmem:[#allocation13 + $0x50] sm:$0xff]
        %v1404 = vld [vmem:[#allocation13 + $0x58] sm:$0xff]
        %v1405 = vld [vmem:[#allocation13 + $0x60] sm:$0xff]
        %v1406 = vld [vmem:[#allocation13 + $0x68] sm:$0xff]
        %v1407 = vld [vmem:[#allocation13 + $0x70] sm:$0xff]
        %v1408 = vld [vmem:[#allocation13 + $0x78] sm:$0xff]
        %v1409 = vld [vmem:[%s19] sm:$0x1]
        %v1411 = vlaneseq
        %v1412 = vshrl.u32 %v1411, 7
        %v1413 = vsub.s32 0, %v1412
        %v1414 = vrot.slane %v1409, %v1413
        %1416 = vmatprep.subr.mxu0 0.0
        %1417 = vmatpush1.msra.mxu0 %v1393
        %1418 = vmatprep.subr.mxu0 0.0
        %1419 = vmatpush1.msra.mxu0 %v1394
        %1420 = vmatprep.subr.mxu0 0.0
        %1421 = vmatpush1.msra.mxu0 %v1395
        %1422 = vmatprep.subr.mxu0 0.0
        %1423 = vmatpush1.msra.mxu0 %v1396
        %1424 = vmatprep.subr.mxu0 0.0
        %1425 = vmatpush1.msra.mxu0 %v1397
        %1426 = vmatprep.subr.mxu0 0.0
        %1427 = vmatpush1.msra.mxu0 %v1398
        %1428 = vmatprep.subr.mxu0 0.0
        %1429 = vmatpush1.msra.mxu0 %v1399
        %1430 = vmatprep.subr.mxu0 0.0
        %1431 = vmatpush1.msra.mxu0 %v1400
        %1432 = vmatprep.subr.mxu0 0.0
        %1433 = vmatpush1.msra.mxu0 %v1401
        %1434 = vmatprep.subr.mxu0 0.0
        %1435 = vmatpush1.msra.mxu0 %v1402
        %1436 = vmatprep.subr.mxu0 0.0
        %1437 = vmatpush1.msra.mxu0 %v1403
        %1438 = vmatprep.subr.mxu0 0.0
        %1439 = vmatpush1.msra.mxu0 %v1404
        %1440 = vmatprep.subr.mxu0 0.0
        %1441 = vmatpush1.msra.mxu0 %v1405
        %1442 = vmatprep.subr.mxu0 0.0
        %1443 = vmatpush1.msra.mxu0 %v1406
        %1444 = vmatprep.subr.mxu0 0.0
        %1445 = vmatpush1.msra.mxu0 %v1407
        %1446 = vmatprep.subr.mxu0 0.0
        %1447 = vmatpush1.msra.mxu0 %v1408
        %1448 = vmatprep.subr.mxu0 0.0
        %1449 = vmatpush1.msra.mxu0 0.0
        %1450 = vmatprep.subr.mxu0 0.0
        %1451 = vmatpush1.msra.mxu0 0.0
        %1452 = vmatprep.subr.mxu0 0.0
        %1453 = vmatpush1.msra.mxu0 0.0
        %1454 = vmatprep.subr.mxu0 0.0
        %1455 = vmatpush1.msra.mxu0 0.0
        %1456 = vmatprep.subr.mxu0 0.0
        %1457 = vmatpush1.msra.mxu0 0.0
        %1458 = vmatprep.subr.mxu0 0.0
        %1459 = vmatpush1.msra.mxu0 0.0
        %1460 = vmatprep.subr.mxu0 0.0
        %1461 = vmatpush1.msra.mxu0 0.0
        %1462 = vmatprep.subr.mxu0 0.0
        %1463 = vmatpush1.msra.mxu0 0.0
        %1464 = vmatprep.subr.mxu0 0.0
        %1465 = vmatpush1.msra.mxu0 0.0
        %1466 = vmatprep.subr.mxu0 0.0
        %1467 = vmatpush1.msra.mxu0 0.0
        %1468 = vmatprep.subr.mxu0 0.0
        %1469 = vmatpush1.msra.mxu0 0.0
        %1470 = vmatprep.subr.mxu0 0.0
        %1471 = vmatpush1.msra.mxu0 0.0
        %1472 = vmatprep.subr.mxu0 0.0
        %1473 = vmatpush1.msra.mxu0 0.0
        %1474 = vmatprep.subr.mxu0 0.0
        %1475 = vmatpush1.msra.mxu0 0.0
        %1476 = vmatprep.subr.mxu0 0.0
        %1477 = vmatpush1.msra.mxu0 0.0
        %1478 = vmatprep.subr.mxu0 0.0
        %1479 = vmatpush1.msra.mxu0 0.0
        %1480 = vmatprep.mubr.f32.mxu0 0.0
        %1481 = vmatmul.mubr.f32.gmra.mrb[0].mxu0 %v1202
        %v1482 = vpop.f32.mrb[0].mxu0
        %v1483 = vadd.f32 %v1414, %v1482
        %v1484 = vpop.f32.mrb[0].mxu0
        %1485 = vdwg.mxu0
        %vm1486 = vcmask 130048
        %v1488 = vsel %vm1486, %v1297, 0
        %v1491 = vsel %vm1486, %v1390, 0
        %1493 = vmatprep.subr.mxu0 0.0
        %1494 = vmatpush1.xpose.msra.mxu0 %v1491
        %1495 = vmatprep.subr.mxu0 0.0
        %1496 = vmatpush1.xpose.msra.mxu0 0.0
        %1497 = vmatprep.subr.mxu0 0.0
        %1498 = vmatpush1.xpose.msra.mxu0 0.0
        %1499 = vmatprep.subr.mxu0 0.0
        %1500 = vmatpush1.xpose.msra.mxu0 0.0
        %1501 = vmatprep.subr.mxu0 0.0
        %1502 = vmatpush1.xpose.msra.mxu0 0.0
        %1503 = vmatprep.subr.mxu0 0.0
        %1504 = vmatpush1.xpose.msra.mxu0 0.0
        %1505 = vmatprep.subr.mxu0 0.0
        %1506 = vmatpush1.xpose.msra.mxu0 0.0
        %1507 = vmatprep.subr.mxu0 0.0
        %1508 = vmatpush1.xpose.msra.mxu0 0.0
        %1509 = vmatprep.subr.mxu0 0.0
        %1510 = vmatpush1.xpose.msra.mxu0 0.0
        %1511 = vmatprep.subr.mxu0 0.0
        %1512 = vmatpush1.xpose.msra.mxu0 0.0
        %1513 = vmatprep.subr.mxu0 0.0
        %1514 = vmatpush1.xpose.msra.mxu0 0.0
        %1515 = vmatprep.subr.mxu0 0.0
        %1516 = vmatpush1.xpose.msra.mxu0 0.0
        %1517 = vmatprep.subr.mxu0 0.0
        %1518 = vmatpush1.xpose.msra.mxu0 0.0
        %1519 = vmatprep.subr.mxu0 0.0
        %1520 = vmatpush1.xpose.msra.mxu0 0.0
        %1521 = vmatprep.subr.mxu0 0.0
        %1522 = vmatpush1.xpose.msra.mxu0 0.0
        %1523 = vmatprep.subr.mxu0 0.0
        %1524 = vmatpush1.xpose.msra.mxu0 0.0
        %1525 = vmatprep.subr.mxu0 0.0
        %1526 = vmatpush1.xpose.msra.mxu0 0.0
        %1527 = vmatprep.subr.mxu0 0.0
        %1528 = vmatpush1.xpose.msra.mxu0 0.0
        %1529 = vmatprep.subr.mxu0 0.0
        %1530 = vmatpush1.xpose.msra.mxu0 0.0
        %1531 = vmatprep.subr.mxu0 0.0
        %1532 = vmatpush1.xpose.msra.mxu0 0.0
        %1533 = vmatprep.subr.mxu0 0.0
        %1534 = vmatpush1.xpose.msra.mxu0 0.0
        %1535 = vmatprep.subr.mxu0 0.0
        %1536 = vmatpush1.xpose.msra.mxu0 0.0
        %1537 = vmatprep.subr.mxu0 0.0
        %1538 = vmatpush1.xpose.msra.mxu0 0.0
        %1539 = vmatprep.subr.mxu0 0.0
        %1540 = vmatpush1.xpose.msra.mxu0 0.0
        %1541 = vmatprep.subr.mxu0 0.0
        %1542 = vmatpush1.xpose.msra.mxu0 0.0
        %1543 = vmatprep.subr.mxu0 0.0
        %1544 = vmatpush1.xpose.msra.mxu0 0.0
        %1545 = vmatprep.subr.mxu0 0.0
        %1546 = vmatpush1.xpose.msra.mxu0 0.0
        %1547 = vmatprep.subr.mxu0 0.0
        %1548 = vmatpush1.xpose.msra.mxu0 0.0
        %1549 = vmatprep.subr.mxu0 0.0
        %1550 = vmatpush1.xpose.msra.mxu0 0.0
        %1551 = vmatprep.subr.mxu0 0.0
        %1552 = vmatpush1.xpose.msra.mxu0 0.0
        %1553 = vmatprep.subr.mxu0 0.0
        %1554 = vmatpush1.xpose.msra.mxu0 0.0
        %1555 = vmatprep.subr.mxu0 0.0
        %1556 = vmatpush1.xpose.msra.mxu0 0.0
        %1557 = vmatprep.mubr.f32.mxu0 0.0
        %1558 = vmatmul.mubr.f32.gmra.mrb[0].mxu0 %v1488
        %v1559 = vpop.f32.mrb[0].mxu0
        %v1560 = vadd.f32 0.0, %v1559
        %v1561 = vpop.f32.mrb[0].mxu0
        %1562 = vdwg.mxu0
        %v1563 = vmul.f32 %v1560, 0.25
        %v1564 = vmul.f32 %v1205, -1e+09
        %v1565 = vadd.f32 %v1563, %v1564
        %vm1566 = vcmask 64512
        %v1567 = vsel %vm1566, %v1565, -inf
        %1568 = vmax.xlane.f32.xlu0 %v1567
        %v1569 = vpop.xlane.xlu0 %1568
        %v1570 = vsub.f32 %v1565, %v1569
        %v1571 = vmul.f32 %v1570, 1.442695
        %v1572 = vpow.pop %v1571
        %v1573 = vsel %vm1566, %v1572, 0.0
        %1574 = vadd.xlane.f32.xlu0 %v1573
        %v1575 = vpop.xlane.xlu0 %1574
        %v1576 = vrcp.pop %v1575
        %v1577 = vmul.f32 %v1572, %v1576
        %v1579 = vsel %vm1566, %v1577, 0
        %1581 = vmatprep.subr.mxu0 0.0
        %1582 = vmatpush1.msra.mxu0 %v1483
        %1583 = vmatprep.subr.mxu0 0.0
        %1584 = vmatpush1.msra.mxu0 0.0
        %1585 = vmatprep.subr.mxu0 0.0
        %1586 = vmatpush1.msra.mxu0 0.0
        %1587 = vmatprep.subr.mxu0 0.0
        %1588 = vmatpush1.msra.mxu0 0.0
        %1589 = vmatprep.subr.mxu0 0.0
        %1590 = vmatpush1.msra.mxu0 0.0
        %1591 = vmatprep.subr.mxu0 0.0
        %1592 = vmatpush1.msra.mxu0 0.0
        %1593 = vmatprep.subr.mxu0 0.0
        %1594 = vmatpush1.msra.mxu0 0.0
        %1595 = vmatprep.subr.mxu0 0.0
        %1596 = vmatpush1.msra.mxu0 0.0
        %1597 = vmatprep.subr.mxu0 0.0
        %1598 = vmatpush1.msra.mxu0 0.0
        %1599 = vmatprep.subr.mxu0 0.0
        %1600 = vmatpush1.msra.mxu0 0.0
        %1601 = vmatprep.subr.mxu0 0.0
        %1602 = vmatpush1.msra.mxu0 0.0
        %1603 = vmatprep.subr.mxu0 0.0
        %1604 = vmatpush1.msra.mxu0 0.0
        %1605 = vmatprep.subr.mxu0 0.0
        %1606 = vmatpush1.msra.mxu0 0.0
        %1607 = vmatprep.subr.mxu0 0.0
        %1608 = vmatpush1.msra.mxu0 0.0
        %1609 = vmatprep.subr.mxu0 0.0
        %1610 = vmatpush1.msra.mxu0 0.0
        %1611 = vmatprep.subr.mxu0 0.0
        %1612 = vmatpush1.msra.mxu0 0.0
        %1613 = vmatprep.subr.mxu0 0.0
        %1614 = vmatpush1.msra.mxu0 0.0
        %1615 = vmatprep.subr.mxu0 0.0
        %1616 = vmatpush1.msra.mxu0 0.0
        %1617 = vmatprep.subr.mxu0 0.0
        %1618 = vmatpush1.msra.mxu0 0.0
        %1619 = vmatprep.subr.mxu0 0.0
        %1620 = vmatpush1.msra.mxu0 0.0
        %1621 = vmatprep.subr.mxu0 0.0
        %1622 = vmatpush1.msra.mxu0 0.0
        %1623 = vmatprep.subr.mxu0 0.0
        %1624 = vmatpush1.msra.mxu0 0.0
        %1625 = vmatprep.subr.mxu0 0.0
        %1626 = vmatpush1.msra.mxu0 0.0
        %1627 = vmatprep.subr.mxu0 0.0
        %1628 = vmatpush1.msra.mxu0 0.0
        %1629 = vmatprep.subr.mxu0 0.0
        %1630 = vmatpush1.msra.mxu0 0.0
        %1631 = vmatprep.subr.mxu0 0.0
        %1632 = vmatpush1.msra.mxu0 0.0
        %1633 = vmatprep.subr.mxu0 0.0
        %1634 = vmatpush1.msra.mxu0 0.0
        %1635 = vmatprep.subr.mxu0 0.0
        %1636 = vmatpush1.msra.mxu0 0.0
        %1637 = vmatprep.subr.mxu0 0.0
        %1638 = vmatpush1.msra.mxu0 0.0
        %1639 = vmatprep.subr.mxu0 0.0
        %1640 = vmatpush1.msra.mxu0 0.0
        %1641 = vmatprep.subr.mxu0 0.0
        %1642 = vmatpush1.msra.mxu0 0.0
        %1643 = vmatprep.subr.mxu0 0.0
        %1644 = vmatpush1.msra.mxu0 0.0
        %1645 = vmatprep.mubr.f32.mxu0 0.0
        %1646 = vmatmul.mubr.f32.gmra.mrb[0].mxu0 %v1579
        %v1647 = vpop.f32.mrb[0].mxu0
        %v1648 = vadd.f32 0.0, %v1647
        %v1649 = vpop.f32.mrb[0].mxu0
        %1650 = vdwg.mxu0
        %v1651 = vld [vmem:[#allocation14] sm:$0xff]
        %v1652 = vld [vmem:[#allocation14 + $0x8] sm:$0xff]
        %1653 = vrot.lane.b32.xlu0 %v1297, 112
        %v1654 = vpop.permute.xlu0 %1653
        %1655 = vrot.lane.b32.xlu0 %v1390, 112
        %v1656 = vpop.permute.xlu0 %1655
        %v1657 = vsel %vm1486, %v1654, 0
        %v1659 = vsel %vm1486, %v1656, 0
        %1661 = vmatprep.subr.mxu0 0.0
        %1662 = vmatpush1.xpose.msra.mxu0 %v1659
        %1663 = vmatprep.subr.mxu0 0.0
        %1664 = vmatpush1.xpose.msra.mxu0 0.0
        %1665 = vmatprep.subr.mxu0 0.0
        %1666 = vmatpush1.xpose.msra.mxu0 0.0
        %1667 = vmatprep.subr.mxu0 0.0
        %1668 = vmatpush1.xpose.msra.mxu0 0.0
        %1669 = vmatprep.subr.mxu0 0.0
        %1670 = vmatpush1.xpose.msra.mxu0 0.0
        %1671 = vmatprep.subr.mxu0 0.0
        %1672 = vmatpush1.xpose.msra.mxu0 0.0
        %1673 = vmatprep.subr.mxu0 0.0
        %1674 = vmatpush1.xpose.msra.mxu0 0.0
        %1675 = vmatprep.subr.mxu0 0.0
        %1676 = vmatpush1.xpose.msra.mxu0 0.0
        %1677 = vmatprep.subr.mxu0 0.0
        %1678 = vmatpush1.xpose.msra.mxu0 0.0
        %1679 = vmatprep.subr.mxu0 0.0
        %1680 = vmatpush1.xpose.msra.mxu0 0.0
        %1681 = vmatprep.subr.mxu0 0.0
        %1682 = vmatpush1.xpose.msra.mxu0 0.0
        %1683 = vmatprep.subr.mxu0 0.0
        %1684 = vmatpush1.xpose.msra.mxu0 0.0
        %1685 = vmatprep.subr.mxu0 0.0
        %1686 = vmatpush1.xpose.msra.mxu0 0.0
        %1687 = vmatprep.subr.mxu0 0.0
        %1688 = vmatpush1.xpose.msra.mxu0 0.0
        %1689 = vmatprep.subr.mxu0 0.0
        %1690 = vmatpush1.xpose.msra.mxu0 0.0
        %1691 = vmatprep.subr.mxu0 0.0
        %1692 = vmatpush1.xpose.msra.mxu0 0.0
        %1693 = vmatprep.subr.mxu0 0.0
        %1694 = vmatpush1.xpose.msra.mxu0 0.0
        %1695 = vmatprep.subr.mxu0 0.0
        %1696 = vmatpush1.xpose.msra.mxu0 0.0
        %1697 = vmatprep.subr.mxu0 0.0
        %1698 = vmatpush1.xpose.msra.mxu0 0.0
        %1699 = vmatprep.subr.mxu0 0.0
        %1700 = vmatpush1.xpose.msra.mxu0 0.0
        %1701 = vmatprep.subr.mxu0 0.0
        %1702 = vmatpush1.xpose.msra.mxu0 0.0
        %1703 = vmatprep.subr.mxu0 0.0
        %1704 = vmatpush1.xpose.msra.mxu0 0.0
        %1705 = vmatprep.subr.mxu0 0.0
        %1706 = vmatpush1.xpose.msra.mxu0 0.0
        %1707 = vmatprep.subr.mxu0 0.0
        %1708 = vmatpush1.xpose.msra.mxu0 0.0
        %1709 = vmatprep.subr.mxu0 0.0
        %1710 = vmatpush1.xpose.msra.mxu0 0.0
        %1711 = vmatprep.subr.mxu0 0.0
        %1712 = vmatpush1.xpose.msra.mxu0 0.0
        %1713 = vmatprep.subr.mxu0 0.0
        %1714 = vmatpush1.xpose.msra.mxu0 0.0
        %1715 = vmatprep.subr.mxu0 0.0
        %1716 = vmatpush1.xpose.msra.mxu0 0.0
        %1717 = vmatprep.subr.mxu0 0.0
        %1718 = vmatpush1.xpose.msra.mxu0 0.0
        %1719 = vmatprep.subr.mxu0 0.0
        %1720 = vmatpush1.xpose.msra.mxu0 0.0
        %1721 = vmatprep.subr.mxu0 0.0
        %1722 = vmatpush1.xpose.msra.mxu0 0.0
        %1723 = vmatprep.subr.mxu0 0.0
        %1724 = vmatpush1.xpose.msra.mxu0 0.0
        %1725 = vmatprep.mubr.f32.mxu0 0.0
        %1726 = vmatmul.mubr.f32.gmra.mrb[0].mxu0 %v1657
        %v1727 = vpop.f32.mrb[0].mxu0
        %v1728 = vadd.f32 0.0, %v1727
        %v1729 = vpop.f32.mrb[0].mxu0
        %1730 = vdwg.mxu0
        %v1731 = vmul.f32 %v1728, 0.25
        %v1732 = vadd.f32 %v1731, %v1564
        %v1733 = vsel %vm1566, %v1732, -inf
        %1734 = vmax.xlane.f32.xlu0 %v1733
        %v1735 = vpop.xlane.xlu0 %1734
        %v1736 = vsub.f32 %v1732, %v1735
        %v1737 = vmul.f32 %v1736, 1.442695
        %v1738 = vpow.pop %v1737
        %v1739 = vsel %vm1566, %v1738, 0.0
        %1740 = vadd.xlane.f32.xlu0 %v1739
        %v1741 = vpop.xlane.xlu0 %1740
        %v1742 = vrcp.pop %v1741
        %v1743 = vmul.f32 %v1738, %v1742
        %1745 = vrot.lane.b32.xlu0 %v1483, 112
        %v1746 = vpop.permute.xlu0 %1745
        %v1749 = vsel %vm1566, %v1743, 0
        %1751 = vmatprep.subr.mxu0 0.0
        %1752 = vmatpush1.msra.mxu0 %v1746
        %1753 = vmatprep.subr.mxu0 0.0
        %1754 = vmatpush1.msra.mxu0 0.0
        %1755 = vmatprep.subr.mxu0 0.0
        %1756 = vmatpush1.msra.mxu0 0.0
        %1757 = vmatprep.subr.mxu0 0.0
        %1758 = vmatpush1.msra.mxu0 0.0
        %1759 = vmatprep.subr.mxu0 0.0
        %1760 = vmatpush1.msra.mxu0 0.0
        %1761 = vmatprep.subr.mxu0 0.0
        %1762 = vmatpush1.msra.mxu0 0.0
        %1763 = vmatprep.subr.mxu0 0.0
        %1764 = vmatpush1.msra.mxu0 0.0
        %1765 = vmatprep.subr.mxu0 0.0
        %1766 = vmatpush1.msra.mxu0 0.0
        %1767 = vmatprep.subr.mxu0 0.0
        %1768 = vmatpush1.msra.mxu0 0.0
        %1769 = vmatprep.subr.mxu0 0.0
        %1770 = vmatpush1.msra.mxu0 0.0
        %1771 = vmatprep.subr.mxu0 0.0
        %1772 = vmatpush1.msra.mxu0 0.0
        %1773 = vmatprep.subr.mxu0 0.0
        %1774 = vmatpush1.msra.mxu0 0.0
        %1775 = vmatprep.subr.mxu0 0.0
        %1776 = vmatpush1.msra.mxu0 0.0
        %1777 = vmatprep.subr.mxu0 0.0
        %1778 = vmatpush1.msra.mxu0 0.0
        %1779 = vmatprep.subr.mxu0 0.0
        %1780 = vmatpush1.msra.mxu0 0.0
        %1781 = vmatprep.subr.mxu0 0.0
        %1782 = vmatpush1.msra.mxu0 0.0
        %1783 = vmatprep.subr.mxu0 0.0
        %1784 = vmatpush1.msra.mxu0 0.0
        %1785 = vmatprep.subr.mxu0 0.0
        %1786 = vmatpush1.msra.mxu0 0.0
        %1787 = vmatprep.subr.mxu0 0.0
        %1788 = vmatpush1.msra.mxu0 0.0
        %1789 = vmatprep.subr.mxu0 0.0
        %1790 = vmatpush1.msra.mxu0 0.0
        %1791 = vmatprep.subr.mxu0 0.0
        %1792 = vmatpush1.msra.mxu0 0.0
        %1793 = vmatprep.subr.mxu0 0.0
        %1794 = vmatpush1.msra.mxu0 0.0
        %1795 = vmatprep.subr.mxu0 0.0
        %1796 = vmatpush1.msra.mxu0 0.0
        %1797 = vmatprep.subr.mxu0 0.0
        %1798 = vmatpush1.msra.mxu0 0.0
        %1799 = vmatprep.subr.mxu0 0.0
        %1800 = vmatpush1.msra.mxu0 0.0
        %1801 = vmatprep.subr.mxu0 0.0
        %1802 = vmatpush1.msra.mxu0 0.0
        %1803 = vmatprep.subr.mxu0 0.0
        %1804 = vmatpush1.msra.mxu0 0.0
        %1805 = vmatprep.subr.mxu0 0.0
        %1806 = vmatpush1.msra.mxu0 0.0
        %1807 = vmatprep.subr.mxu0 0.0
        %1808 = vmatpush1.msra.mxu0 0.0
        %1809 = vmatprep.subr.mxu0 0.0
        %1810 = vmatpush1.msra.mxu0 0.0
        %1811 = vmatprep.subr.mxu0 0.0
        %1812 = vmatpush1.msra.mxu0 0.0
        %1813 = vmatprep.subr.mxu0 0.0
        %1814 = vmatpush1.msra.mxu0 0.0
        %1815 = vmatprep.mubr.f32.mxu0 0.0
        %1816 = vmatmul.mubr.f32.gmra.mrb[0].mxu0 %v1749
        %v1817 = vpop.f32.mrb[0].mxu0
        %v1818 = vadd.f32 0.0, %v1817
        %v1819 = vpop.f32.mrb[0].mxu0
        %1820 = vdwg.mxu0
        %v1821 = vld [vmem:[#allocation14 + $0x10] sm:$0xff]
        %v1822 = vld [vmem:[#allocation14 + $0x18] sm:$0xff]
        %v1824 = vsel %vm1486, %v1818, 0
        %1826 = vmatprep.subr.mxu0 0.0
        %1827 = vmatpush1.msra.mxu0 %v1821
        %1828 = vmatprep.subr.mxu0 0.0
        %1829 = vmatpush1.msra.mxu0 %v1822
        %1830 = vmatprep.subr.mxu0 0.0
        %1831 = vmatpush1.msra.mxu0 0.0
        %1832 = vmatprep.subr.mxu0 0.0
        %1833 = vmatpush1.msra.mxu0 0.0
        %1834 = vmatprep.subr.mxu0 0.0
        %1835 = vmatpush1.msra.mxu0 0.0
        %1836 = vmatprep.subr.mxu0 0.0
        %1837 = vmatpush1.msra.mxu0 0.0
        %1838 = vmatprep.subr.mxu0 0.0
        %1839 = vmatpush1.msra.mxu0 0.0
        %1840 = vmatprep.subr.mxu0 0.0
        %1841 = vmatpush1.msra.mxu0 0.0
        %1842 = vmatprep.subr.mxu0 0.0
        %1843 = vmatpush1.msra.mxu0 0.0
        %1844 = vmatprep.subr.mxu0 0.0
        %1845 = vmatpush1.msra.mxu0 0.0
        %1846 = vmatprep.subr.mxu0 0.0
        %1847 = vmatpush1.msra.mxu0 0.0
        %1848 = vmatprep.subr.mxu0 0.0
        %1849 = vmatpush1.msra.mxu0 0.0
        %1850 = vmatprep.subr.mxu0 0.0
        %1851 = vmatpush1.msra.mxu0 0.0
        %1852 = vmatprep.subr.mxu0 0.0
        %1853 = vmatpush1.msra.mxu0 0.0
        %1854 = vmatprep.subr.mxu0 0.0
        %1855 = vmatpush1.msra.mxu0 0.0
        %1856 = vmatprep.subr.mxu0 0.0
        %1857 = vmatpush1.msra.mxu0 0.0
        %1858 = vmatprep.subr.mxu0 0.0
        %1859 = vmatpush1.msra.mxu0 0.0
        %1860 = vmatprep.subr.mxu0 0.0
        %1861 = vmatpush1.msra.mxu0 0.0
        %1862 = vmatprep.subr.mxu0 0.0
        %1863 = vmatpush1.msra.mxu0 0.0
        %1864 = vmatprep.subr.mxu0 0.0
        %1865 = vmatpush1.msra.mxu0 0.0
        %1866 = vmatprep.subr.mxu0 0.0
        %1867 = vmatpush1.msra.mxu0 0.0
        %1868 = vmatprep.subr.mxu0 0.0
        %1869 = vmatpush1.msra.mxu0 0.0
        %1870 = vmatprep.subr.mxu0 0.0
        %1871 = vmatpush1.msra.mxu0 0.0
        %1872 = vmatprep.subr.mxu0 0.0
        %1873 = vmatpush1.msra.mxu0 0.0
        %1874 = vmatprep.subr.mxu0 0.0
        %1875 = vmatpush1.msra.mxu0 0.0
        %1876 = vmatprep.subr.mxu0 0.0
        %1877 = vmatpush1.msra.mxu0 0.0
        %1878 = vmatprep.subr.mxu0 0.0
        %1879 = vmatpush1.msra.mxu0 0.0
        %1880 = vmatprep.subr.mxu0 0.0
        %1881 = vmatpush1.msra.mxu0 0.0
        %1882 = vmatprep.subr.mxu0 0.0
        %1883 = vmatpush1.msra.mxu0 0.0
        %1884 = vmatprep.subr.mxu0 0.0
        %1885 = vmatpush1.msra.mxu0 0.0
        %1886 = vmatprep.subr.mxu0 0.0
        %1887 = vmatpush1.msra.mxu0 0.0
        %1888 = vmatprep.subr.mxu0 0.0
        %1889 = vmatpush1.msra.mxu0 0.0
        %1890 = vmatprep.mubr.f32.mxu0 0.0
        %1891 = vmatmul.mubr.f32.gmra.mrb[0].mxu0 %v1824
        %v1892 = vpop.f32.mrb[0].mxu0
        %v1893 = vadd.f32 0.0, %v1892
        %v1894 = vpop.f32.mrb[0].mxu0
        %1895 = vdwg.mxu0
        %v1897 = vsel %vm1486, %v1648, 0
        %1899 = vmatprep.subr.mxu0 0.0
        %1900 = vmatpush1.msra.mxu0 %v1651
        %1901 = vmatprep.subr.mxu0 0.0
        %1902 = vmatpush1.msra.mxu0 %v1652
        %1903 = vmatprep.subr.mxu0 0.0
        %1904 = vmatpush1.msra.mxu0 0.0
        %1905 = vmatprep.subr.mxu0 0.0
        %1906 = vmatpush1.msra.mxu0 0.0
        %1907 = vmatprep.subr.mxu0 0.0
        %1908 = vmatpush1.msra.mxu0 0.0
        %1909 = vmatprep.subr.mxu0 0.0
        %1910 = vmatpush1.msra.mxu0 0.0
        %1911 = vmatprep.subr.mxu0 0.0
        %1912 = vmatpush1.msra.mxu0 0.0
        %1913 = vmatprep.subr.mxu0 0.0
        %1914 = vmatpush1.msra.mxu0 0.0
        %1915 = vmatprep.subr.mxu0 0.0
        %1916 = vmatpush1.msra.mxu0 0.0
        %1917 = vmatprep.subr.mxu0 0.0
        %1918 = vmatpush1.msra.mxu0 0.0
        %1919 = vmatprep.subr.mxu0 0.0
        %1920 = vmatpush1.msra.mxu0 0.0
        %1921 = vmatprep.subr.mxu0 0.0
        %1922 = vmatpush1.msra.mxu0 0.0
        %1923 = vmatprep.subr.mxu0 0.0
        %1924 = vmatpush1.msra.mxu0 0.0
        %1925 = vmatprep.subr.mxu0 0.0
        %1926 = vmatpush1.msra.mxu0 0.0
        %1927 = vmatprep.subr.mxu0 0.0
        %1928 = vmatpush1.msra.mxu0 0.0
        %1929 = vmatprep.subr.mxu0 0.0
        %1930 = vmatpush1.msra.mxu0 0.0
        %1931 = vmatprep.subr.mxu0 0.0
        %1932 = vmatpush1.msra.mxu0 0.0
        %1933 = vmatprep.subr.mxu0 0.0
        %1934 = vmatpush1.msra.mxu0 0.0
        %1935 = vmatprep.subr.mxu0 0.0
        %1936 = vmatpush1.msra.mxu0 0.0
        %1937 = vmatprep.subr.mxu0 0.0
        %1938 = vmatpush1.msra.mxu0 0.0
        %1939 = vmatprep.subr.mxu0 0.0
        %1940 = vmatpush1.msra.mxu0 0.0
        %1941 = vmatprep.subr.mxu0 0.0
        %1942 = vmatpush1.msra.mxu0 0.0
        %1943 = vmatprep.subr.mxu0 0.0
        %1944 = vmatpush1.msra.mxu0 0.0
        %1945 = vmatprep.subr.mxu0 0.0
        %1946 = vmatpush1.msra.mxu0 0.0
        %1947 = vmatprep.subr.mxu0 0.0
        %1948 = vmatpush1.msra.mxu0 0.0
        %1949 = vmatprep.subr.mxu0 0.0
        %1950 = vmatpush1.msra.mxu0 0.0
        %1951 = vmatprep.subr.mxu0 0.0
        %1952 = vmatpush1.msra.mxu0 0.0
        %1953 = vmatprep.subr.mxu0 0.0
        %1954 = vmatpush1.msra.mxu0 0.0
        %1955 = vmatprep.subr.mxu0 0.0
        %1956 = vmatpush1.msra.mxu0 0.0
        %1957 = vmatprep.subr.mxu0 0.0
        %1958 = vmatpush1.msra.mxu0 0.0
        %1959 = vmatprep.subr.mxu0 0.0
        %1960 = vmatpush1.msra.mxu0 0.0
        %1961 = vmatprep.subr.mxu0 0.0
        %1962 = vmatpush1.msra.mxu0 0.0
        %1963 = vmatprep.mubr.f32.mxu0 0.0
        %1964 = vmatmul.mubr.f32.gmra.mrb[0].mxu0 %v1897
        %v1965 = vpop.f32.mrb[0].mxu0
        %v1966 = vadd.f32 %v1893, %v1965
        %v1967 = vpop.f32.mrb[0].mxu0
        %1968 = vdwg.mxu0
        %1969 = vrot.lane.b32.xlu0 %v1297, 96
        %v1970 = vpop.permute.xlu0 %1969
        %1971 = vrot.lane.b32.xlu0 %v1390, 96
        %v1972 = vpop.permute.xlu0 %1971
        %v1973 = vsel %vm1486, %v1970, 0
        %v1975 = vsel %vm1486, %v1972, 0
        %1977 = vmatprep.subr.mxu0 0.0
        %1978 = vmatpush1.xpose.msra.mxu0 %v1975
        %1979 = vmatprep.subr.mxu0 0.0
        %1980 = vmatpush1.xpose.msra.mxu0 0.0
        %1981 = vmatprep.subr.mxu0 0.0
        %1982 = vmatpush1.xpose.msra.mxu0 0.0
        %1983 = vmatprep.subr.mxu0 0.0
        %1984 = vmatpush1.xpose.msra.mxu0 0.0
        %1985 = vmatprep.subr.mxu0 0.0
        %1986 = vmatpush1.xpose.msra.mxu0 0.0
        %1987 = vmatprep.subr.mxu0 0.0
        %1988 = vmatpush1.xpose.msra.mxu0 0.0
        %1989 = vmatprep.subr.mxu0 0.0
        %1990 = vmatpush1.xpose.msra.mxu0 0.0
        %1991 = vmatprep.subr.mxu0 0.0
        %1992 = vmatpush1.xpose.msra.mxu0 0.0
        %1993 = vmatprep.subr.mxu0 0.0
        %1994 = vmatpush1.xpose.msra.mxu0 0.0
        %1995 = vmatprep.subr.mxu0 0.0
        %1996 = vmatpush1.xpose.msra.mxu0 0.0
        %1997 = vmatprep.subr.mxu0 0.0
        %1998 = vmatpush1.xpose.msra.mxu0 0.0
        %1999 = vmatprep.subr.mxu0 0.0
        %2000 = vmatpush1.xpose.msra.mxu0 0.0
        %2001 = vmatprep.subr.mxu0 0.0
        %2002 = vmatpush1.xpose.msra.mxu0 0.0
        %2003 = vmatprep.subr.mxu0 0.0
        %2004 = vmatpush1.xpose.msra.mxu0 0.0
        %2005 = vmatprep.subr.mxu0 0.0
        %2006 = vmatpush1.xpose.msra.mxu0 0.0
        %2007 = vmatprep.subr.mxu0 0.0
        %2008 = vmatpush1.xpose.msra.mxu0 0.0
        %2009 = vmatprep.subr.mxu0 0.0
        %2010 = vmatpush1.xpose.msra.mxu0 0.0
        %2011 = vmatprep.subr.mxu0 0.0
        %2012 = vmatpush1.xpose.msra.mxu0 0.0
        %2013 = vmatprep.subr.mxu0 0.0
        %2014 = vmatpush1.xpose.msra.mxu0 0.0
        %2015 = vmatprep.subr.mxu0 0.0
        %2016 = vmatpush1.xpose.msra.mxu0 0.0
        %2017 = vmatprep.subr.mxu0 0.0
        %2018 = vmatpush1.xpose.msra.mxu0 0.0
        %2019 = vmatprep.subr.mxu0 0.0
        %2020 = vmatpush1.xpose.msra.mxu0 0.0
        %2021 = vmatprep.subr.mxu0 0.0
        %2022 = vmatpush1.xpose.msra.mxu0 0.0
        %2023 = vmatprep.subr.mxu0 0.0
        %2024 = vmatpush1.xpose.msra.mxu0 0.0
        %2025 = vmatprep.subr.mxu0 0.0
        %2026 = vmatpush1.xpose.msra.mxu0 0.0
        %2027 = vmatprep.subr.mxu0 0.0
        %2028 = vmatpush1.xpose.msra.mxu0 0.0
        %2029 = vmatprep.subr.mxu0 0.0
        %2030 = vmatpush1.xpose.msra.mxu0 0.0
        %2031 = vmatprep.subr.mxu0 0.0
        %2032 = vmatpush1.xpose.msra.mxu0 0.0
        %2033 = vmatprep.subr.mxu0 0.0
        %2034 = vmatpush1.xpose.msra.mxu0 0.0
        %2035 = vmatprep.subr.mxu0 0.0
        %2036 = vmatpush1.xpose.msra.mxu0 0.0
        %2037 = vmatprep.subr.mxu0 0.0
        %2038 = vmatpush1.xpose.msra.mxu0 0.0
        %2039 = vmatprep.subr.mxu0 0.0
        %2040 = vmatpush1.xpose.msra.mxu0 0.0
        %2041 = vmatprep.mubr.f32.mxu0 0.0
        %2042 = vmatmul.mubr.f32.gmra.mrb[0].mxu0 %v1973
        %v2043 = vpop.f32.mrb[0].mxu0
        %v2044 = vadd.f32 0.0, %v2043
        %v2045 = vpop.f32.mrb[0].mxu0
        %2046 = vdwg.mxu0
        %v2047 = vmul.f32 %v2044, 0.25
        %v2048 = vadd.f32 %v2047, %v1564
        %v2049 = vsel %vm1566, %v2048, -inf
        %2050 = vmax.xlane.f32.xlu0 %v2049
        %v2051 = vpop.xlane.xlu0 %2050
        %v2052 = vsub.f32 %v2048, %v2051
        %v2053 = vmul.f32 %v2052, 1.442695
        %v2054 = vpow.pop %v2053
        %v2055 = vsel %vm1566, %v2054, 0.0
        %2056 = vadd.xlane.f32.xlu0 %v2055
        %v2057 = vpop.xlane.xlu0 %2056
        %v2058 = vrcp.pop %v2057
        %v2059 = vmul.f32 %v2054, %v2058
        %2060 = vrot.lane.b32.xlu0 %v1483, 96
        %v2061 = vpop.permute.xlu0 %2060
        %v2064 = vsel %vm1566, %v2059, 0
        %2066 = vmatprep.subr.mxu0 0.0
        %2067 = vmatpush1.msra.mxu0 %v2061
        %2068 = vmatprep.subr.mxu0 0.0
        %2069 = vmatpush1.msra.mxu0 0.0
        %2070 = vmatprep.subr.mxu0 0.0
        %2071 = vmatpush1.msra.mxu0 0.0
        %2072 = vmatprep.subr.mxu0 0.0
        %2073 = vmatpush1.msra.mxu0 0.0
        %2074 = vmatprep.subr.mxu0 0.0
        %2075 = vmatpush1.msra.mxu0 0.0
        %2076 = vmatprep.subr.mxu0 0.0
        %2077 = vmatpush1.msra.mxu0 0.0
        %2078 = vmatprep.subr.mxu0 0.0
        %2079 = vmatpush1.msra.mxu0 0.0
        %2080 = vmatprep.subr.mxu0 0.0
        %2081 = vmatpush1.msra.mxu0 0.0
        %2082 = vmatprep.subr.mxu0 0.0
        %2083 = vmatpush1.msra.mxu0 0.0
        %2084 = vmatprep.subr.mxu0 0.0
        %2085 = vmatpush1.msra.mxu0 0.0
        %2086 = vmatprep.subr.mxu0 0.0
        %2087 = vmatpush1.msra.mxu0 0.0
        %2088 = vmatprep.subr.mxu0 0.0
        %2089 = vmatpush1.msra.mxu0 0.0
        %2090 = vmatprep.subr.mxu0 0.0
        %2091 = vmatpush1.msra.mxu0 0.0
        %2092 = vmatprep.subr.mxu0 0.0
        %2093 = vmatpush1.msra.mxu0 0.0
        %2094 = vmatprep.subr.mxu0 0.0
        %2095 = vmatpush1.msra.mxu0 0.0
        %2096 = vmatprep.subr.mxu0 0.0
        %2097 = vmatpush1.msra.mxu0 0.0
        %2098 = vmatprep.subr.mxu0 0.0
        %2099 = vmatpush1.msra.mxu0 0.0
        %2100 = vmatprep.subr.mxu0 0.0
        %2101 = vmatpush1.msra.mxu0 0.0
        %2102 = vmatprep.subr.mxu0 0.0
        %2103 = vmatpush1.msra.mxu0 0.0
        %2104 = vmatprep.subr.mxu0 0.0
        %2105 = vmatpush1.msra.mxu0 0.0
        %2106 = vmatprep.subr.mxu0 0.0
        %2107 = vmatpush1.msra.mxu0 0.0
        %2108 = vmatprep.subr.mxu0 0.0
        %2109 = vmatpush1.msra.mxu0 0.0
        %2110 = vmatprep.subr.mxu0 0.0
        %2111 = vmatpush1.msra.mxu0 0.0
        %2112 = vmatprep.subr.mxu0 0.0
        %2113 = vmatpush1.msra.mxu0 0.0
        %2114 = vmatprep.subr.mxu0 0.0
        %2115 = vmatpush1.msra.mxu0 0.0
        %2116 = vmatprep.subr.mxu0 0.0
        %2117 = vmatpush1.msra.mxu0 0.0
        %2118 = vmatprep.subr.mxu0 0.0
        %2119 = vmatpush1.msra.mxu0 0.0
        %2120 = vmatprep.subr.mxu0 0.0
        %2121 = vmatpush1.msra.mxu0 0.0
        %2122 = vmatprep.subr.mxu0 0.0
        %2123 = vmatpush1.msra.mxu0 0.0
        %2124 = vmatprep.subr.mxu0 0.0
        %2125 = vmatpush1.msra.mxu0 0.0
        %2126 = vmatprep.subr.mxu0 0.0
        %2127 = vmatpush1.msra.mxu0 0.0
        %2128 = vmatprep.subr.mxu0 0.0
        %2129 = vmatpush1.msra.mxu0 0.0
        %2130 = vmatprep.mubr.f32.mxu0 0.0
        %2131 = vmatmul.mubr.f32.gmra.mrb[0].mxu0 %v2064
        %v2132 = vpop.f32.mrb[0].mxu0
        %v2133 = vadd.f32 0.0, %v2132
        %v2134 = vpop.f32.mrb[0].mxu0
        %2135 = vdwg.mxu0
        %v2136 = vld [vmem:[#allocation14 + $0x20] sm:$0xff]
        %v2137 = vld [vmem:[#allocation14 + $0x28] sm:$0xff]
        %v2139 = vsel %vm1486, %v2133, 0
        %2141 = vmatprep.subr.mxu0 0.0
        %2142 = vmatpush1.msra.mxu0 %v2136
        %2143 = vmatprep.subr.mxu0 0.0
        %2144 = vmatpush1.msra.mxu0 %v2137
        %2145 = vmatprep.subr.mxu0 0.0
        %2146 = vmatpush1.msra.mxu0 0.0
        %2147 = vmatprep.subr.mxu0 0.0
        %2148 = vmatpush1.msra.mxu0 0.0
        %2149 = vmatprep.subr.mxu0 0.0
        %2150 = vmatpush1.msra.mxu0 0.0
        %2151 = vmatprep.subr.mxu0 0.0
        %2152 = vmatpush1.msra.mxu0 0.0
        %2153 = vmatprep.subr.mxu0 0.0
        %2154 = vmatpush1.msra.mxu0 0.0
        %2155 = vmatprep.subr.mxu0 0.0
        %2156 = vmatpush1.msra.mxu0 0.0
        %2157 = vmatprep.subr.mxu0 0.0
        %2158 = vmatpush1.msra.mxu0 0.0
        %2159 = vmatprep.subr.mxu0 0.0
        %2160 = vmatpush1.msra.mxu0 0.0
        %2161 = vmatprep.subr.mxu0 0.0
        %2162 = vmatpush1.msra.mxu0 0.0
        %2163 = vmatprep.subr.mxu0 0.0
        %2164 = vmatpush1.msra.mxu0 0.0
        %2165 = vmatprep.subr.mxu0 0.0
        %2166 = vmatpush1.msra.mxu0 0.0
        %2167 = vmatprep.subr.mxu0 0.0
        %2168 = vmatpush1.msra.mxu0 0.0
        %2169 = vmatprep.subr.mxu0 0.0
        %2170 = vmatpush1.msra.mxu0 0.0
        %2171 = vmatprep.subr.mxu0 0.0
        %2172 = vmatpush1.msra.mxu0 0.0
        %2173 = vmatprep.subr.mxu0 0.0
        %2174 = vmatpush1.msra.mxu0 0.0
        %2175 = vmatprep.subr.mxu0 0.0
        %2176 = vmatpush1.msra.mxu0 0.0
        %2177 = vmatprep.subr.mxu0 0.0
        %2178 = vmatpush1.msra.mxu0 0.0
        %2179 = vmatprep.subr.mxu0 0.0
        %2180 = vmatpush1.msra.mxu0 0.0
        %2181 = vmatprep.subr.mxu0 0.0
        %2182 = vmatpush1.msra.mxu0 0.0
        %2183 = vmatprep.subr.mxu0 0.0
        %2184 = vmatpush1.msra.mxu0 0.0
        %2185 = vmatprep.subr.mxu0 0.0
        %2186 = vmatpush1.msra.mxu0 0.0
        %2187 = vmatprep.subr.mxu0 0.0
        %2188 = vmatpush1.msra.mxu0 0.0
        %2189 = vmatprep.subr.mxu0 0.0
        %2190 = vmatpush1.msra.mxu0 0.0
        %2191 = vmatprep.subr.mxu0 0.0
        %2192 = vmatpush1.msra.mxu0 0.0
        %2193 = vmatprep.subr.mxu0 0.0
        %2194 = vmatpush1.msra.mxu0 0.0
        %2195 = vmatprep.subr.mxu0 0.0
        %2196 = vmatpush1.msra.mxu0 0.0
        %2197 = vmatprep.subr.mxu0 0.0
        %2198 = vmatpush1.msra.mxu0 0.0
        %2199 = vmatprep.subr.mxu0 0.0
        %2200 = vmatpush1.msra.mxu0 0.0
        %2201 = vmatprep.subr.mxu0 0.0
        %2202 = vmatpush1.msra.mxu0 0.0
        %2203 = vmatprep.subr.mxu0 0.0
        %2204 = vmatpush1.msra.mxu0 0.0
        %2205 = vmatprep.mubr.f32.mxu0 0.0
        %2206 = vmatmul.mubr.f32.gmra.mrb[0].mxu0 %v2139
        %v2207 = vpop.f32.mrb[0].mxu0
        %v2208 = vadd.f32 0.0, %v2207
        %v2209 = vpop.f32.mrb[0].mxu0
        %2210 = vdwg.mxu0
        %v2211 = vadd.f32 %v1966, %v2208
        %2212 = vrot.lane.b32.xlu0 %v1297, 80
        %v2213 = vpop.permute.xlu0 %2212
        %2214 = vrot.lane.b32.xlu0 %v1390, 80
        %v2215 = vpop.permute.xlu0 %2214
        %v2216 = vsel %vm1486, %v2213, 0
        %v2218 = vsel %vm1486, %v2215, 0
        %2220 = vmatprep.subr.mxu0 0.0
        %2221 = vmatpush1.xpose.msra.mxu0 %v2218
        %2222 = vmatprep.subr.mxu0 0.0
        %2223 = vmatpush1.xpose.msra.mxu0 0.0
        %2224 = vmatprep.subr.mxu0 0.0
        %2225 = vmatpush1.xpose.msra.mxu0 0.0
        %2226 = vmatprep.subr.mxu0 0.0
        %2227 = vmatpush1.xpose.msra.mxu0 0.0
        %2228 = vmatprep.subr.mxu0 0.0
        %2229 = vmatpush1.xpose.msra.mxu0 0.0
        %2230 = vmatprep.subr.mxu0 0.0
        %2231 = vmatpush1.xpose.msra.mxu0 0.0
        %2232 = vmatprep.subr.mxu0 0.0
        %2233 = vmatpush1.xpose.msra.mxu0 0.0
        %2234 = vmatprep.subr.mxu0 0.0
        %2235 = vmatpush1.xpose.msra.mxu0 0.0
        %2236 = vmatprep.subr.mxu0 0.0
        %2237 = vmatpush1.xpose.msra.mxu0 0.0
        %2238 = vmatprep.subr.mxu0 0.0
        %2239 = vmatpush1.xpose.msra.mxu0 0.0
        %2240 = vmatprep.subr.mxu0 0.0
        %2241 = vmatpush1.xpose.msra.mxu0 0.0
        %2242 = vmatprep.subr.mxu0 0.0
        %2243 = vmatpush1.xpose.msra.mxu0 0.0
        %2244 = vmatprep.subr.mxu0 0.0
        %2245 = vmatpush1.xpose.msra.mxu0 0.0
        %2246 = vmatprep.subr.mxu0 0.0
        %2247 = vmatpush1.xpose.msra.mxu0 0.0
        %2248 = vmatprep.subr.mxu0 0.0
        %2249 = vmatpush1.xpose.msra.mxu0 0.0
        %2250 = vmatprep.subr.mxu0 0.0
        %2251 = vmatpush1.xpose.msra.mxu0 0.0
        %2252 = vmatprep.subr.mxu0 0.0
        %2253 = vmatpush1.xpose.msra.mxu0 0.0
        %2254 = vmatprep.subr.mxu0 0.0
        %2255 = vmatpush1.xpose.msra.mxu0 0.0
        %2256 = vmatprep.subr.mxu0 0.0
        %2257 = vmatpush1.xpose.msra.mxu0 0.0
        %2258 = vmatprep.subr.mxu0 0.0
        %2259 = vmatpush1.xpose.msra.mxu0 0.0
        %2260 = vmatprep.subr.mxu0 0.0
        %2261 = vmatpush1.xpose.msra.mxu0 0.0
        %2262 = vmatprep.subr.mxu0 0.0
        %2263 = vmatpush1.xpose.msra.mxu0 0.0
        %2264 = vmatprep.subr.mxu0 0.0
        %2265 = vmatpush1.xpose.msra.mxu0 0.0
        %2266 = vmatprep.subr.mxu0 0.0
        %2267 = vmatpush1.xpose.msra.mxu0 0.0
        %2268 = vmatprep.subr.mxu0 0.0
        %2269 = vmatpush1.xpose.msra.mxu0 0.0
        %2270 = vmatprep.subr.mxu0 0.0
        %2271 = vmatpush1.xpose.msra.mxu0 0.0
        %2272 = vmatprep.subr.mxu0 0.0
        %2273 = vmatpush1.xpose.msra.mxu0 0.0
        %2274 = vmatprep.subr.mxu0 0.0
        %2275 = vmatpush1.xpose.msra.mxu0 0.0
        %2276 = vmatprep.subr.mxu0 0.0
        %2277 = vmatpush1.xpose.msra.mxu0 0.0
        %2278 = vmatprep.subr.mxu0 0.0
        %2279 = vmatpush1.xpose.msra.mxu0 0.0
        %2280 = vmatprep.subr.mxu0 0.0
        %2281 = vmatpush1.xpose.msra.mxu0 0.0
        %2282 = vmatprep.subr.mxu0 0.0
        %2283 = vmatpush1.xpose.msra.mxu0 0.0
        %2284 = vmatprep.mubr.f32.mxu0 0.0
        %2285 = vmatmul.mubr.f32.gmra.mrb[0].mxu0 %v2216
        %v2286 = vpop.f32.mrb[0].mxu0
        %v2287 = vadd.f32 0.0, %v2286
        %v2288 = vpop.f32.mrb[0].mxu0
        %2289 = vdwg.mxu0
        %v2290 = vmul.f32 %v2287, 0.25
        %v2291 = vadd.f32 %v2290, %v1564
        %v2292 = vsel %vm1566, %v2291, -inf
        %2293 = vmax.xlane.f32.xlu0 %v2292
        %v2294 = vpop.xlane.xlu0 %2293
        %v2295 = vsub.f32 %v2291, %v2294
        %v2296 = vmul.f32 %v2295, 1.442695
        %v2297 = vpow.pop %v2296
        %v2298 = vsel %vm1566, %v2297, 0.0
        %2299 = vadd.xlane.f32.xlu0 %v2298
        %v2300 = vpop.xlane.xlu0 %2299
        %v2301 = vrcp.pop %v2300
        %v2302 = vmul.f32 %v2297, %v2301
        %2303 = vrot.lane.b32.xlu0 %v1483, 80
        %v2304 = vpop.permute.xlu0 %2303
        %v2307 = vsel %vm1566, %v2302, 0
        %2309 = vmatprep.subr.mxu0 0.0
        %2310 = vmatpush1.msra.mxu0 %v2304
        %2311 = vmatprep.subr.mxu0 0.0
        %2312 = vmatpush1.msra.mxu0 0.0
        %2313 = vmatprep.subr.mxu0 0.0
        %2314 = vmatpush1.msra.mxu0 0.0
        %2315 = vmatprep.subr.mxu0 0.0
        %2316 = vmatpush1.msra.mxu0 0.0
        %2317 = vmatprep.subr.mxu0 0.0
        %2318 = vmatpush1.msra.mxu0 0.0
        %2319 = vmatprep.subr.mxu0 0.0
        %2320 = vmatpush1.msra.mxu0 0.0
        %2321 = vmatprep.subr.mxu0 0.0
        %2322 = vmatpush1.msra.mxu0 0.0
        %2323 = vmatprep.subr.mxu0 0.0
        %2324 = vmatpush1.msra.mxu0 0.0
        %2325 = vmatprep.subr.mxu0 0.0
        %2326 = vmatpush1.msra.mxu0 0.0
        %2327 = vmatprep.subr.mxu0 0.0
        %2328 = vmatpush1.msra.mxu0 0.0
        %2329 = vmatprep.subr.mxu0 0.0
        %2330 = vmatpush1.msra.mxu0 0.0
        %2331 = vmatprep.subr.mxu0 0.0
        %2332 = vmatpush1.msra.mxu0 0.0
        %2333 = vmatprep.subr.mxu0 0.0
        %2334 = vmatpush1.msra.mxu0 0.0
        %2335 = vmatprep.subr.mxu0 0.0
        %2336 = vmatpush1.msra.mxu0 0.0
        %2337 = vmatprep.subr.mxu0 0.0
        %2338 = vmatpush1.msra.mxu0 0.0
        %2339 = vmatprep.subr.mxu0 0.0
        %2340 = vmatpush1.msra.mxu0 0.0
        %2341 = vmatprep.subr.mxu0 0.0
        %2342 = vmatpush1.msra.mxu0 0.0
        %2343 = vmatprep.subr.mxu0 0.0
        %2344 = vmatpush1.msra.mxu0 0.0
        %2345 = vmatprep.subr.mxu0 0.0
        %2346 = vmatpush1.msra.mxu0 0.0
        %2347 = vmatprep.subr.mxu0 0.0
        %2348 = vmatpush1.msra.mxu0 0.0
        %2349 = vmatprep.subr.mxu0 0.0
        %2350 = vmatpush1.msra.mxu0 0.0
        %2351 = vmatprep.subr.mxu0 0.0
        %2352 = vmatpush1.msra.mxu0 0.0
        %2353 = vmatprep.subr.mxu0 0.0
        %2354 = vmatpush1.msra.mxu0 0.0
        %2355 = vmatprep.subr.mxu0 0.0
        %2356 = vmatpush1.msra.mxu0 0.0
        %2357 = vmatprep.subr.mxu0 0.0
        %2358 = vmatpush1.msra.mxu0 0.0
        %2359 = vmatprep.subr.mxu0 0.0
        %2360 = vmatpush1.msra.mxu0 0.0
        %2361 = vmatprep.subr.mxu0 0.0
        %2362 = vmatpush1.msra.mxu0 0.0
        %2363 = vmatprep.subr.mxu0 0.0
        %2364 = vmatpush1.msra.mxu0 0.0
        %2365 = vmatprep.subr.mxu0 0.0
        %2366 = vmatpush1.msra.mxu0 0.0
        %2367 = vmatprep.subr.mxu0 0.0
        %2368 = vmatpush1.msra.mxu0 0.0
        %2369 = vmatprep.subr.mxu0 0.0
        %2370 = vmatpush1.msra.mxu0 0.0
        %2371 = vmatprep.subr.mxu0 0.0
        %2372 = vmatpush1.msra.mxu0 0.0
        %2373 = vmatprep.mubr.f32.mxu0 0.0
        %2374 = vmatmul.mubr.f32.gmra.mrb[0].mxu0 %v2307
        %v2375 = vpop.f32.mrb[0].mxu0
        %v2376 = vadd.f32 0.0, %v2375
        %v2377 = vpop.f32.mrb[0].mxu0
        %2378 = vdwg.mxu0
        %v2379 = vld [vmem:[#allocation14 + $0x30] sm:$0xff]
        %v2380 = vld [vmem:[#allocation14 + $0x38] sm:$0xff]
        %v2382 = vsel %vm1486, %v2376, 0
        %2384 = vmatprep.subr.mxu0 0.0
        %2385 = vmatpush1.msra.mxu0 %v2379
        %2386 = vmatprep.subr.mxu0 0.0
        %2387 = vmatpush1.msra.mxu0 %v2380
        %2388 = vmatprep.subr.mxu0 0.0
        %2389 = vmatpush1.msra.mxu0 0.0
        %2390 = vmatprep.subr.mxu0 0.0
        %2391 = vmatpush1.msra.mxu0 0.0
        %2392 = vmatprep.subr.mxu0 0.0
        %2393 = vmatpush1.msra.mxu0 0.0
        %2394 = vmatprep.subr.mxu0 0.0
        %2395 = vmatpush1.msra.mxu0 0.0
        %2396 = vmatprep.subr.mxu0 0.0
        %2397 = vmatpush1.msra.mxu0 0.0
        %2398 = vmatprep.subr.mxu0 0.0
        %2399 = vmatpush1.msra.mxu0 0.0
        %2400 = vmatprep.subr.mxu0 0.0
        %2401 = vmatpush1.msra.mxu0 0.0
        %2402 = vmatprep.subr.mxu0 0.0
        %2403 = vmatpush1.msra.mxu0 0.0
        %2404 = vmatprep.subr.mxu0 0.0
        %2405 = vmatpush1.msra.mxu0 0.0
        %2406 = vmatprep.subr.mxu0 0.0
        %2407 = vmatpush1.msra.mxu0 0.0
        %2408 = vmatprep.subr.mxu0 0.0
        %2409 = vmatpush1.msra.mxu0 0.0
        %2410 = vmatprep.subr.mxu0 0.0
        %2411 = vmatpush1.msra.mxu0 0.0
        %2412 = vmatprep.subr.mxu0 0.0
        %2413 = vmatpush1.msra.mxu0 0.0
        %2414 = vmatprep.subr.mxu0 0.0
        %2415 = vmatpush1.msra.mxu0 0.0
        %2416 = vmatprep.subr.mxu0 0.0
        %2417 = vmatpush1.msra.mxu0 0.0
        %2418 = vmatprep.subr.mxu0 0.0
        %2419 = vmatpush1.msra.mxu0 0.0
        %2420 = vmatprep.subr.mxu0 0.0
        %2421 = vmatpush1.msra.mxu0 0.0
        %2422 = vmatprep.subr.mxu0 0.0
        %2423 = vmatpush1.msra.mxu0 0.0
        %2424 = vmatprep.subr.mxu0 0.0
        %2425 = vmatpush1.msra.mxu0 0.0
        %2426 = vmatprep.subr.mxu0 0.0
        %2427 = vmatpush1.msra.mxu0 0.0
        %2428 = vmatprep.subr.mxu0 0.0
        %2429 = vmatpush1.msra.mxu0 0.0
        %2430 = vmatprep.subr.mxu0 0.0
        %2431 = vmatpush1.msra.mxu0 0.0
        %2432 = vmatprep.subr.mxu0 0.0
        %2433 = vmatpush1.msra.mxu0 0.0
        %2434 = vmatprep.subr.mxu0 0.0
        %2435 = vmatpush1.msra.mxu0 0.0
        %2436 = vmatprep.subr.mxu0 0.0
        %2437 = vmatpush1.msra.mxu0 0.0
        %2438 = vmatprep.subr.mxu0 0.0
        %2439 = vmatpush1.msra.mxu0 0.0
        %2440 = vmatprep.subr.mxu0 0.0
        %2441 = vmatpush1.msra.mxu0 0.0
        %2442 = vmatprep.subr.mxu0 0.0
        %2443 = vmatpush1.msra.mxu0 0.0
        %2444 = vmatprep.subr.mxu0 0.0
        %2445 = vmatpush1.msra.mxu0 0.0
        %2446 = vmatprep.subr.mxu0 0.0
        %2447 = vmatpush1.msra.mxu0 0.0
        %2448 = vmatprep.mubr.f32.mxu0 0.0
        %2449 = vmatmul.mubr.f32.gmra.mrb[0].mxu0 %v2382
        %v2450 = vpop.f32.mrb[0].mxu0
        %v2451 = vadd.f32 0.0, %v2450
        %v2452 = vpop.f32.mrb[0].mxu0
        %2453 = vdwg.mxu0
        %v2454 = vadd.f32 %v2211, %v2451
        %2455 = vrot.lane.b32.xlu0 %v1297, 64
        %v2456 = vpop.permute.xlu0 %2455
        %2457 = vrot.lane.b32.xlu0 %v1390, 64
        %v2458 = vpop.permute.xlu0 %2457
        %v2459 = vsel %vm1486, %v2456, 0
        %v2461 = vsel %vm1486, %v2458, 0
        %2463 = vmatprep.subr.mxu0 0.0
        %2464 = vmatpush1.xpose.msra.mxu0 %v2461
        %2465 = vmatprep.subr.mxu0 0.0
        %2466 = vmatpush1.xpose.msra.mxu0 0.0
        %2467 = vmatprep.subr.mxu0 0.0
        %2468 = vmatpush1.xpose.msra.mxu0 0.0
        %2469 = vmatprep.subr.mxu0 0.0
        %2470 = vmatpush1.xpose.msra.mxu0 0.0
        %2471 = vmatprep.subr.mxu0 0.0
        %2472 = vmatpush1.xpose.msra.mxu0 0.0
        %2473 = vmatprep.subr.mxu0 0.0
        %2474 = vmatpush1.xpose.msra.mxu0 0.0
        %2475 = vmatprep.subr.mxu0 0.0
        %2476 = vmatpush1.xpose.msra.mxu0 0.0
        %2477 = vmatprep.subr.mxu0 0.0
        %2478 = vmatpush1.xpose.msra.mxu0 0.0
        %2479 = vmatprep.subr.mxu0 0.0
        %2480 = vmatpush1.xpose.msra.mxu0 0.0
        %2481 = vmatprep.subr.mxu0 0.0
        %2482 = vmatpush1.xpose.msra.mxu0 0.0
        %2483 = vmatprep.subr.mxu0 0.0
        %2484 = vmatpush1.xpose.msra.mxu0 0.0
        %2485 = vmatprep.subr.mxu0 0.0
        %2486 = vmatpush1.xpose.msra.mxu0 0.0
        %2487 = vmatprep.subr.mxu0 0.0
        %2488 = vmatpush1.xpose.msra.mxu0 0.0
        %2489 = vmatprep.subr.mxu0 0.0
        %2490 = vmatpush1.xpose.msra.mxu0 0.0
        %2491 = vmatprep.subr.mxu0 0.0
        %2492 = vmatpush1.xpose.msra.mxu0 0.0
        %2493 = vmatprep.subr.mxu0 0.0
        %2494 = vmatpush1.xpose.msra.mxu0 0.0
        %2495 = vmatprep.subr.mxu0 0.0
        %2496 = vmatpush1.xpose.msra.mxu0 0.0
        %2497 = vmatprep.subr.mxu0 0.0
        %2498 = vmatpush1.xpose.msra.mxu0 0.0
        %2499 = vmatprep.subr.mxu0 0.0
        %2500 = vmatpush1.xpose.msra.mxu0 0.0
        %2501 = vmatprep.subr.mxu0 0.0
        %2502 = vmatpush1.xpose.msra.mxu0 0.0
        %2503 = vmatprep.subr.mxu0 0.0
        %2504 = vmatpush1.xpose.msra.mxu0 0.0
        %2505 = vmatprep.subr.mxu0 0.0
        %2506 = vmatpush1.xpose.msra.mxu0 0.0
        %2507 = vmatprep.subr.mxu0 0.0
        %2508 = vmatpush1.xpose.msra.mxu0 0.0
        %2509 = vmatprep.subr.mxu0 0.0
        %2510 = vmatpush1.xpose.msra.mxu0 0.0
        %2511 = vmatprep.subr.mxu0 0.0
        %2512 = vmatpush1.xpose.msra.mxu0 0.0
        %2513 = vmatprep.subr.mxu0 0.0
        %2514 = vmatpush1.xpose.msra.mxu0 0.0
        %2515 = vmatprep.subr.mxu0 0.0
        %2516 = vmatpush1.xpose.msra.mxu0 0.0
        %2517 = vmatprep.subr.mxu0 0.0
        %2518 = vmatpush1.xpose.msra.mxu0 0.0
        %2519 = vmatprep.subr.mxu0 0.0
        %2520 = vmatpush1.xpose.msra.mxu0 0.0
        %2521 = vmatprep.subr.mxu0 0.0
        %2522 = vmatpush1.xpose.msra.mxu0 0.0
        %2523 = vmatprep.subr.mxu0 0.0
        %2524 = vmatpush1.xpose.msra.mxu0 0.0
        %2525 = vmatprep.subr.mxu0 0.0
        %2526 = vmatpush1.xpose.msra.mxu0 0.0
        %2527 = vmatprep.mubr.f32.mxu0 0.0
        %2528 = vmatmul.mubr.f32.gmra.mrb[0].mxu0 %v2459
        %v2529 = vpop.f32.mrb[0].mxu0
        %v2530 = vadd.f32 0.0, %v2529
        %v2531 = vpop.f32.mrb[0].mxu0
        %2532 = vdwg.mxu0
        %v2533 = vmul.f32 %v2530, 0.25
        %v2534 = vadd.f32 %v2533, %v1564
        %v2535 = vsel %vm1566, %v2534, -inf
        %2536 = vmax.xlane.f32.xlu0 %v2535
        %v2537 = vpop.xlane.xlu0 %2536
        %v2538 = vsub.f32 %v2534, %v2537
        %v2539 = vmul.f32 %v2538, 1.442695
        %v2540 = vpow.pop %v2539
        %v2541 = vsel %vm1566, %v2540, 0.0
        %2542 = vadd.xlane.f32.xlu0 %v2541
        %v2543 = vpop.xlane.xlu0 %2542
        %v2544 = vrcp.pop %v2543
        %v2545 = vmul.f32 %v2540, %v2544
        %2546 = vrot.lane.b32.xlu0 %v1483, 64
        %v2547 = vpop.permute.xlu0 %2546
        %v2550 = vsel %vm1566, %v2545, 0
        %2552 = vmatprep.subr.mxu0 0.0
        %2553 = vmatpush1.msra.mxu0 %v2547
        %2554 = vmatprep.subr.mxu0 0.0
        %2555 = vmatpush1.msra.mxu0 0.0
        %2556 = vmatprep.subr.mxu0 0.0
        %2557 = vmatpush1.msra.mxu0 0.0
        %2558 = vmatprep.subr.mxu0 0.0
        %2559 = vmatpush1.msra.mxu0 0.0
        %2560 = vmatprep.subr.mxu0 0.0
        %2561 = vmatpush1.msra.mxu0 0.0
        %2562 = vmatprep.subr.mxu0 0.0
        %2563 = vmatpush1.msra.mxu0 0.0
        %2564 = vmatprep.subr.mxu0 0.0
        %2565 = vmatpush1.msra.mxu0 0.0
        %2566 = vmatprep.subr.mxu0 0.0
        %2567 = vmatpush1.msra.mxu0 0.0
        %2568 = vmatprep.subr.mxu0 0.0
        %2569 = vmatpush1.msra.mxu0 0.0
        %2570 = vmatprep.subr.mxu0 0.0
        %2571 = vmatpush1.msra.mxu0 0.0
        %2572 = vmatprep.subr.mxu0 0.0
        %2573 = vmatpush1.msra.mxu0 0.0
        %2574 = vmatprep.subr.mxu0 0.0
        %2575 = vmatpush1.msra.mxu0 0.0
        %2576 = vmatprep.subr.mxu0 0.0
        %2577 = vmatpush1.msra.mxu0 0.0
        %2578 = vmatprep.subr.mxu0 0.0
        %2579 = vmatpush1.msra.mxu0 0.0
        %2580 = vmatprep.subr.mxu0 0.0
        %2581 = vmatpush1.msra.mxu0 0.0
        %2582 = vmatprep.subr.mxu0 0.0
        %2583 = vmatpush1.msra.mxu0 0.0
        %2584 = vmatprep.subr.mxu0 0.0
        %2585 = vmatpush1.msra.mxu0 0.0
        %2586 = vmatprep.subr.mxu0 0.0
        %2587 = vmatpush1.msra.mxu0 0.0
        %2588 = vmatprep.subr.mxu0 0.0
        %2589 = vmatpush1.msra.mxu0 0.0
        %2590 = vmatprep.subr.mxu0 0.0
        %2591 = vmatpush1.msra.mxu0 0.0
        %2592 = vmatprep.subr.mxu0 0.0
        %2593 = vmatpush1.msra.mxu0 0.0
        %2594 = vmatprep.subr.mxu0 0.0
        %2595 = vmatpush1.msra.mxu0 0.0
        %2596 = vmatprep.subr.mxu0 0.0
        %2597 = vmatpush1.msra.mxu0 0.0
        %2598 = vmatprep.subr.mxu0 0.0
        %2599 = vmatpush1.msra.mxu0 0.0
        %2600 = vmatprep.subr.mxu0 0.0
        %2601 = vmatpush1.msra.mxu0 0.0
        %2602 = vmatprep.subr.mxu0 0.0
        %2603 = vmatpush1.msra.mxu0 0.0
        %2604 = vmatprep.subr.mxu0 0.0
        %2605 = vmatpush1.msra.mxu0 0.0
        %2606 = vmatprep.subr.mxu0 0.0
        %2607 = vmatpush1.msra.mxu0 0.0
        %2608 = vmatprep.subr.mxu0 0.0
        %2609 = vmatpush1.msra.mxu0 0.0
        %2610 = vmatprep.subr.mxu0 0.0
        %2611 = vmatpush1.msra.mxu0 0.0
        %2612 = vmatprep.subr.mxu0 0.0
        %2613 = vmatpush1.msra.mxu0 0.0
        %2614 = vmatprep.subr.mxu0 0.0
        %2615 = vmatpush1.msra.mxu0 0.0
        %2616 = vmatprep.mubr.f32.mxu0 0.0
        %2617 = vmatmul.mubr.f32.gmra.mrb[0].mxu0 %v2550
        %v2618 = vpop.f32.mrb[0].mxu0
        %v2619 = vadd.f32 0.0, %v2618
        %v2620 = vpop.f32.mrb[0].mxu0
        %2621 = vdwg.mxu0
        %v2622 = vld [vmem:[#allocation14 + $0x40] sm:$0xff]
        %v2623 = vld [vmem:[#allocation14 + $0x48] sm:$0xff]
        %v2625 = vsel %vm1486, %v2619, 0
        %2627 = vmatprep.subr.mxu0 0.0
        %2628 = vmatpush1.msra.mxu0 %v2622
        %2629 = vmatprep.subr.mxu0 0.0
        %2630 = vmatpush1.msra.mxu0 %v2623
        %2631 = vmatprep.subr.mxu0 0.0
        %2632 = vmatpush1.msra.mxu0 0.0
        %2633 = vmatprep.subr.mxu0 0.0
        %2634 = vmatpush1.msra.mxu0 0.0
        %2635 = vmatprep.subr.mxu0 0.0
        %2636 = vmatpush1.msra.mxu0 0.0
        %2637 = vmatprep.subr.mxu0 0.0
        %2638 = vmatpush1.msra.mxu0 0.0
        %2639 = vmatprep.subr.mxu0 0.0
        %2640 = vmatpush1.msra.mxu0 0.0
        %2641 = vmatprep.subr.mxu0 0.0
        %2642 = vmatpush1.msra.mxu0 0.0
        %2643 = vmatprep.subr.mxu0 0.0
        %2644 = vmatpush1.msra.mxu0 0.0
        %2645 = vmatprep.subr.mxu0 0.0
        %2646 = vmatpush1.msra.mxu0 0.0
        %2647 = vmatprep.subr.mxu0 0.0
        %2648 = vmatpush1.msra.mxu0 0.0
        %2649 = vmatprep.subr.mxu0 0.0
        %2650 = vmatpush1.msra.mxu0 0.0
        %2651 = vmatprep.subr.mxu0 0.0
        %2652 = vmatpush1.msra.mxu0 0.0
        %2653 = vmatprep.subr.mxu0 0.0
        %2654 = vmatpush1.msra.mxu0 0.0
        %2655 = vmatprep.subr.mxu0 0.0
        %2656 = vmatpush1.msra.mxu0 0.0
        %2657 = vmatprep.subr.mxu0 0.0
        %2658 = vmatpush1.msra.mxu0 0.0
        %2659 = vmatprep.subr.mxu0 0.0
        %2660 = vmatpush1.msra.mxu0 0.0
        %2661 = vmatprep.subr.mxu0 0.0
        %2662 = vmatpush1.msra.mxu0 0.0
        %2663 = vmatprep.subr.mxu0 0.0
        %2664 = vmatpush1.msra.mxu0 0.0
        %2665 = vmatprep.subr.mxu0 0.0
        %2666 = vmatpush1.msra.mxu0 0.0
        %2667 = vmatprep.subr.mxu0 0.0
        %2668 = vmatpush1.msra.mxu0 0.0
        %2669 = vmatprep.subr.mxu0 0.0
        %2670 = vmatpush1.msra.mxu0 0.0
        %2671 = vmatprep.subr.mxu0 0.0
        %2672 = vmatpush1.msra.mxu0 0.0
        %2673 = vmatprep.subr.mxu0 0.0
        %2674 = vmatpush1.msra.mxu0 0.0
        %2675 = vmatprep.subr.mxu0 0.0
        %2676 = vmatpush1.msra.mxu0 0.0
        %2677 = vmatprep.subr.mxu0 0.0
        %2678 = vmatpush1.msra.mxu0 0.0
        %2679 = vmatprep.subr.mxu0 0.0
        %2680 = vmatpush1.msra.mxu0 0.0
        %2681 = vmatprep.subr.mxu0 0.0
        %2682 = vmatpush1.msra.mxu0 0.0
        %2683 = vmatprep.subr.mxu0 0.0
        %2684 = vmatpush1.msra.mxu0 0.0
        %2685 = vmatprep.subr.mxu0 0.0
        %2686 = vmatpush1.msra.mxu0 0.0
        %2687 = vmatprep.subr.mxu0 0.0
        %2688 = vmatpush1.msra.mxu0 0.0
        %2689 = vmatprep.subr.mxu0 0.0
        %2690 = vmatpush1.msra.mxu0 0.0
        %2691 = vmatprep.mubr.f32.mxu0 0.0
        %2692 = vmatmul.mubr.f32.gmra.mrb[0].mxu0 %v2625
        %v2693 = vpop.f32.mrb[0].mxu0
        %v2694 = vadd.f32 0.0, %v2693
        %v2695 = vpop.f32.mrb[0].mxu0
        %2696 = vdwg.mxu0
        %v2697 = vadd.f32 %v2454, %v2694
        %2698 = vrot.lane.b32.xlu0 %v1297, 48
        %v2699 = vpop.permute.xlu0 %2698
        %2700 = vrot.lane.b32.xlu0 %v1390, 48
        %v2701 = vpop.permute.xlu0 %2700
        %v2702 = vsel %vm1486, %v2699, 0
        %v2704 = vsel %vm1486, %v2701, 0
        %2706 = vmatprep.subr.mxu0 0.0
        %2707 = vmatpush1.xpose.msra.mxu0 %v2704
        %2708 = vmatprep.subr.mxu0 0.0
        %2709 = vmatpush1.xpose.msra.mxu0 0.0
        %2710 = vmatprep.subr.mxu0 0.0
        %2711 = vmatpush1.xpose.msra.mxu0 0.0
        %2712 = vmatprep.subr.mxu0 0.0
        %2713 = vmatpush1.xpose.msra.mxu0 0.0
        %2714 = vmatprep.subr.mxu0 0.0
        %2715 = vmatpush1.xpose.msra.mxu0 0.0
        %2716 = vmatprep.subr.mxu0 0.0
        %2717 = vmatpush1.xpose.msra.mxu0 0.0
        %2718 = vmatprep.subr.mxu0 0.0
        %2719 = vmatpush1.xpose.msra.mxu0 0.0
        %2720 = vmatprep.subr.mxu0 0.0
        %2721 = vmatpush1.xpose.msra.mxu0 0.0
        %2722 = vmatprep.subr.mxu0 0.0
        %2723 = vmatpush1.xpose.msra.mxu0 0.0
        %2724 = vmatprep.subr.mxu0 0.0
        %2725 = vmatpush1.xpose.msra.mxu0 0.0
        %2726 = vmatprep.subr.mxu0 0.0
        %2727 = vmatpush1.xpose.msra.mxu0 0.0
        %2728 = vmatprep.subr.mxu0 0.0
        %2729 = vmatpush1.xpose.msra.mxu0 0.0
        %2730 = vmatprep.subr.mxu0 0.0
        %2731 = vmatpush1.xpose.msra.mxu0 0.0
        %2732 = vmatprep.subr.mxu0 0.0
        %2733 = vmatpush1.xpose.msra.mxu0 0.0
        %2734 = vmatprep.subr.mxu0 0.0
        %2735 = vmatpush1.xpose.msra.mxu0 0.0
        %2736 = vmatprep.subr.mxu0 0.0
        %2737 = vmatpush1.xpose.msra.mxu0 0.0
        %2738 = vmatprep.subr.mxu0 0.0
        %2739 = vmatpush1.xpose.msra.mxu0 0.0
        %2740 = vmatprep.subr.mxu0 0.0
        %2741 = vmatpush1.xpose.msra.mxu0 0.0
        %2742 = vmatprep.subr.mxu0 0.0
        %2743 = vmatpush1.xpose.msra.mxu0 0.0
        %2744 = vmatprep.subr.mxu0 0.0
        %2745 = vmatpush1.xpose.msra.mxu0 0.0
        %2746 = vmatprep.subr.mxu0 0.0
        %2747 = vmatpush1.xpose.msra.mxu0 0.0
        %2748 = vmatprep.subr.mxu0 0.0
        %2749 = vmatpush1.xpose.msra.mxu0 0.0
        %2750 = vmatprep.subr.mxu0 0.0
        %2751 = vmatpush1.xpose.msra.mxu0 0.0
        %2752 = vmatprep.subr.mxu0 0.0
        %2753 = vmatpush1.xpose.msra.mxu0 0.0
        %2754 = vmatprep.subr.mxu0 0.0
        %2755 = vmatpush1.xpose.msra.mxu0 0.0
        %2756 = vmatprep.subr.mxu0 0.0
        %2757 = vmatpush1.xpose.msra.mxu0 0.0
        %2758 = vmatprep.subr.mxu0 0.0
        %2759 = vmatpush1.xpose.msra.mxu0 0.0
        %2760 = vmatprep.subr.mxu0 0.0
        %2761 = vmatpush1.xpose.msra.mxu0 0.0
        %2762 = vmatprep.subr.mxu0 0.0
        %2763 = vmatpush1.xpose.msra.mxu0 0.0
        %2764 = vmatprep.subr.mxu0 0.0
        %2765 = vmatpush1.xpose.msra.mxu0 0.0
        %2766 = vmatprep.subr.mxu0 0.0
        %2767 = vmatpush1.xpose.msra.mxu0 0.0
        %2768 = vmatprep.subr.mxu0 0.0
        %2769 = vmatpush1.xpose.msra.mxu0 0.0
        %2770 = vmatprep.mubr.f32.mxu0 0.0
        %2771 = vmatmul.mubr.f32.gmra.mrb[0].mxu0 %v2702
        %v2772 = vpop.f32.mrb[0].mxu0
        %v2773 = vadd.f32 0.0, %v2772
        %v2774 = vpop.f32.mrb[0].mxu0
        %2775 = vdwg.mxu0
        %v2776 = vmul.f32 %v2773, 0.25
        %v2777 = vadd.f32 %v2776, %v1564
        %v2778 = vsel %vm1566, %v2777, -inf
        %2779 = vmax.xlane.f32.xlu0 %v2778
        %v2780 = vpop.xlane.xlu0 %2779
        %v2781 = vsub.f32 %v2777, %v2780
        %v2782 = vmul.f32 %v2781, 1.442695
        %v2783 = vpow.pop %v2782
        %v2784 = vsel %vm1566, %v2783, 0.0
        %2785 = vadd.xlane.f32.xlu0 %v2784
        %v2786 = vpop.xlane.xlu0 %2785
        %v2787 = vrcp.pop %v2786
        %v2788 = vmul.f32 %v2783, %v2787
        %2789 = vrot.lane.b32.xlu0 %v1483, 48
        %v2790 = vpop.permute.xlu0 %2789
        %v2793 = vsel %vm1566, %v2788, 0
        %2795 = vmatprep.subr.mxu0 0.0
        %2796 = vmatpush1.msra.mxu0 %v2790
        %2797 = vmatprep.subr.mxu0 0.0
        %2798 = vmatpush1.msra.mxu0 0.0
        %2799 = vmatprep.subr.mxu0 0.0
        %2800 = vmatpush1.msra.mxu0 0.0
        %2801 = vmatprep.subr.mxu0 0.0
        %2802 = vmatpush1.msra.mxu0 0.0
        %2803 = vmatprep.subr.mxu0 0.0
        %2804 = vmatpush1.msra.mxu0 0.0
        %2805 = vmatprep.subr.mxu0 0.0
        %2806 = vmatpush1.msra.mxu0 0.0
        %2807 = vmatprep.subr.mxu0 0.0
        %2808 = vmatpush1.msra.mxu0 0.0
        %2809 = vmatprep.subr.mxu0 0.0
        %2810 = vmatpush1.msra.mxu0 0.0
        %2811 = vmatprep.subr.mxu0 0.0
        %2812 = vmatpush1.msra.mxu0 0.0
        %2813 = vmatprep.subr.mxu0 0.0
        %2814 = vmatpush1.msra.mxu0 0.0
        %2815 = vmatprep.subr.mxu0 0.0
        %2816 = vmatpush1.msra.mxu0 0.0
        %2817 = vmatprep.subr.mxu0 0.0
        %2818 = vmatpush1.msra.mxu0 0.0
        %2819 = vmatprep.subr.mxu0 0.0
        %2820 = vmatpush1.msra.mxu0 0.0
        %2821 = vmatprep.subr.mxu0 0.0
        %2822 = vmatpush1.msra.mxu0 0.0
        %2823 = vmatprep.subr.mxu0 0.0
        %2824 = vmatpush1.msra.mxu0 0.0
        %2825 = vmatprep.subr.mxu0 0.0
        %2826 = vmatpush1.msra.mxu0 0.0
        %2827 = vmatprep.subr.mxu0 0.0
        %2828 = vmatpush1.msra.mxu0 0.0
        %2829 = vmatprep.subr.mxu0 0.0
        %2830 = vmatpush1.msra.mxu0 0.0
        %2831 = vmatprep.subr.mxu0 0.0
        %2832 = vmatpush1.msra.mxu0 0.0
        %2833 = vmatprep.subr.mxu0 0.0
        %2834 = vmatpush1.msra.mxu0 0.0
        %2835 = vmatprep.subr.mxu0 0.0
        %2836 = vmatpush1.msra.mxu0 0.0
        %2837 = vmatprep.subr.mxu0 0.0
        %2838 = vmatpush1.msra.mxu0 0.0
        %2839 = vmatprep.subr.mxu0 0.0
        %2840 = vmatpush1.msra.mxu0 0.0
        %2841 = vmatprep.subr.mxu0 0.0
        %2842 = vmatpush1.msra.mxu0 0.0
        %2843 = vmatprep.subr.mxu0 0.0
        %2844 = vmatpush1.msra.mxu0 0.0
        %2845 = vmatprep.subr.mxu0 0.0
        %2846 = vmatpush1.msra.mxu0 0.0
        %2847 = vmatprep.subr.mxu0 0.0
        %2848 = vmatpush1.msra.mxu0 0.0
        %2849 = vmatprep.subr.mxu0 0.0
        %2850 = vmatpush1.msra.mxu0 0.0
        %2851 = vmatprep.subr.mxu0 0.0
        %2852 = vmatpush1.msra.mxu0 0.0
        %2853 = vmatprep.subr.mxu0 0.0
        %2854 = vmatpush1.msra.mxu0 0.0
        %2855 = vmatprep.subr.mxu0 0.0
        %2856 = vmatpush1.msra.mxu0 0.0
        %2857 = vmatprep.subr.mxu0 0.0
        %2858 = vmatpush1.msra.mxu0 0.0
        %2859 = vmatprep.mubr.f32.mxu0 0.0
        %2860 = vmatmul.mubr.f32.gmra.mrb[0].mxu0 %v2793
        %v2861 = vpop.f32.mrb[0].mxu0
        %v2862 = vadd.f32 0.0, %v2861
        %v2863 = vpop.f32.mrb[0].mxu0
        %2864 = vdwg.mxu0
        %v2865 = vld [vmem:[#allocation14 + $0x50] sm:$0xff]
        %v2866 = vld [vmem:[#allocation14 + $0x58] sm:$0xff]
        %v2868 = vsel %vm1486, %v2862, 0
        %2870 = vmatprep.subr.mxu0 0.0
        %2871 = vmatpush1.msra.mxu0 %v2865
        %2872 = vmatprep.subr.mxu0 0.0
        %2873 = vmatpush1.msra.mxu0 %v2866
        %2874 = vmatprep.subr.mxu0 0.0
        %2875 = vmatpush1.msra.mxu0 0.0
        %2876 = vmatprep.subr.mxu0 0.0
        %2877 = vmatpush1.msra.mxu0 0.0
        %2878 = vmatprep.subr.mxu0 0.0
        %2879 = vmatpush1.msra.mxu0 0.0
        %2880 = vmatprep.subr.mxu0 0.0
        %2881 = vmatpush1.msra.mxu0 0.0
        %2882 = vmatprep.subr.mxu0 0.0
        %2883 = vmatpush1.msra.mxu0 0.0
        %2884 = vmatprep.subr.mxu0 0.0
        %2885 = vmatpush1.msra.mxu0 0.0
        %2886 = vmatprep.subr.mxu0 0.0
        %2887 = vmatpush1.msra.mxu0 0.0
        %2888 = vmatprep.subr.mxu0 0.0
        %2889 = vmatpush1.msra.mxu0 0.0
        %2890 = vmatprep.subr.mxu0 0.0
        %2891 = vmatpush1.msra.mxu0 0.0
        %2892 = vmatprep.subr.mxu0 0.0
        %2893 = vmatpush1.msra.mxu0 0.0
        %2894 = vmatprep.subr.mxu0 0.0
        %2895 = vmatpush1.msra.mxu0 0.0
        %2896 = vmatprep.subr.mxu0 0.0
        %2897 = vmatpush1.msra.mxu0 0.0
        %2898 = vmatprep.subr.mxu0 0.0
        %2899 = vmatpush1.msra.mxu0 0.0
        %2900 = vmatprep.subr.mxu0 0.0
        %2901 = vmatpush1.msra.mxu0 0.0
        %2902 = vmatprep.subr.mxu0 0.0
        %2903 = vmatpush1.msra.mxu0 0.0
        %2904 = vmatprep.subr.mxu0 0.0
        %2905 = vmatpush1.msra.mxu0 0.0
        %2906 = vmatprep.subr.mxu0 0.0
        %2907 = vmatpush1.msra.mxu0 0.0
        %2908 = vmatprep.subr.mxu0 0.0
        %2909 = vmatpush1.msra.mxu0 0.0
        %2910 = vmatprep.subr.mxu0 0.0
        %2911 = vmatpush1.msra.mxu0 0.0
        %2912 = vmatprep.subr.mxu0 0.0
        %2913 = vmatpush1.msra.mxu0 0.0
        %2914 = vmatprep.subr.mxu0 0.0
        %2915 = vmatpush1.msra.mxu0 0.0
        %2916 = vmatprep.subr.mxu0 0.0
        %2917 = vmatpush1.msra.mxu0 0.0
        %2918 = vmatprep.subr.mxu0 0.0
        %2919 = vmatpush1.msra.mxu0 0.0
        %2920 = vmatprep.subr.mxu0 0.0
        %2921 = vmatpush1.msra.mxu0 0.0
        %2922 = vmatprep.subr.mxu0 0.0
        %2923 = vmatpush1.msra.mxu0 0.0
        %2924 = vmatprep.subr.mxu0 0.0
        %2925 = vmatpush1.msra.mxu0 0.0
        %2926 = vmatprep.subr.mxu0 0.0
        %2927 = vmatpush1.msra.mxu0 0.0
        %2928 = vmatprep.subr.mxu0 0.0
        %2929 = vmatpush1.msra.mxu0 0.0
        %2930 = vmatprep.subr.mxu0 0.0
        %2931 = vmatpush1.msra.mxu0 0.0
        %2932 = vmatprep.subr.mxu0 0.0
        %2933 = vmatpush1.msra.mxu0 0.0
        %2934 = vmatprep.mubr.f32.mxu0 0.0
        %2935 = vmatmul.mubr.f32.gmra.mrb[0].mxu0 %v2868
        %v2936 = vpop.f32.mrb[0].mxu0
        %v2937 = vadd.f32 0.0, %v2936
        %v2938 = vpop.f32.mrb[0].mxu0
        %2939 = vdwg.mxu0
        %v2940 = vadd.f32 %v2697, %v2937
        %2941 = vrot.lane.b32.xlu0 %v1297, 32
        %v2942 = vpop.permute.xlu0 %2941
        %2943 = vrot.lane.b32.xlu0 %v1390, 32
        %v2944 = vpop.permute.xlu0 %2943
        %v2945 = vsel %vm1486, %v2942, 0
        %v2947 = vsel %vm1486, %v2944, 0
        %2949 = vmatprep.subr.mxu0 0.0
        %2950 = vmatpush1.xpose.msra.mxu0 %v2947
        %2951 = vmatprep.subr.mxu0 0.0
        %2952 = vmatpush1.xpose.msra.mxu0 0.0
        %2953 = vmatprep.subr.mxu0 0.0
        %2954 = vmatpush1.xpose.msra.mxu0 0.0
        %2955 = vmatprep.subr.mxu0 0.0
        %2956 = vmatpush1.xpose.msra.mxu0 0.0
        %2957 = vmatprep.subr.mxu0 0.0
        %2958 = vmatpush1.xpose.msra.mxu0 0.0
        %2959 = vmatprep.subr.mxu0 0.0
        %2960 = vmatpush1.xpose.msra.mxu0 0.0
        %2961 = vmatprep.subr.mxu0 0.0
        %2962 = vmatpush1.xpose.msra.mxu0 0.0
        %2963 = vmatprep.subr.mxu0 0.0
        %2964 = vmatpush1.xpose.msra.mxu0 0.0
        %2965 = vmatprep.subr.mxu0 0.0
        %2966 = vmatpush1.xpose.msra.mxu0 0.0
        %2967 = vmatprep.subr.mxu0 0.0
        %2968 = vmatpush1.xpose.msra.mxu0 0.0
        %2969 = vmatprep.subr.mxu0 0.0
        %2970 = vmatpush1.xpose.msra.mxu0 0.0
        %2971 = vmatprep.subr.mxu0 0.0
        %2972 = vmatpush1.xpose.msra.mxu0 0.0
        %2973 = vmatprep.subr.mxu0 0.0
        %2974 = vmatpush1.xpose.msra.mxu0 0.0
        %2975 = vmatprep.subr.mxu0 0.0
        %2976 = vmatpush1.xpose.msra.mxu0 0.0
        %2977 = vmatprep.subr.mxu0 0.0
        %2978 = vmatpush1.xpose.msra.mxu0 0.0
        %2979 = vmatprep.subr.mxu0 0.0
        %2980 = vmatpush1.xpose.msra.mxu0 0.0
        %2981 = vmatprep.subr.mxu0 0.0
        %2982 = vmatpush1.xpose.msra.mxu0 0.0
        %2983 = vmatprep.subr.mxu0 0.0
        %2984 = vmatpush1.xpose.msra.mxu0 0.0
        %2985 = vmatprep.subr.mxu0 0.0
        %2986 = vmatpush1.xpose.msra.mxu0 0.0
        %2987 = vmatprep.subr.mxu0 0.0
        %2988 = vmatpush1.xpose.msra.mxu0 0.0
        %2989 = vmatprep.subr.mxu0 0.0
        %2990 = vmatpush1.xpose.msra.mxu0 0.0
        %2991 = vmatprep.subr.mxu0 0.0
        %2992 = vmatpush1.xpose.msra.mxu0 0.0
        %2993 = vmatprep.subr.mxu0 0.0
        %2994 = vmatpush1.xpose.msra.mxu0 0.0
        %2995 = vmatprep.subr.mxu0 0.0
        %2996 = vmatpush1.xpose.msra.mxu0 0.0
        %2997 = vmatprep.subr.mxu0 0.0
        %2998 = vmatpush1.xpose.msra.mxu0 0.0
        %2999 = vmatprep.subr.mxu0 0.0
        %3000 = vmatpush1.xpose.msra.mxu0 0.0
        %3001 = vmatprep.subr.mxu0 0.0
        %3002 = vmatpush1.xpose.msra.mxu0 0.0
        %3003 = vmatprep.subr.mxu0 0.0
        %3004 = vmatpush1.xpose.msra.mxu0 0.0
        %3005 = vmatprep.subr.mxu0 0.0
        %3006 = vmatpush1.xpose.msra.mxu0 0.0
        %3007 = vmatprep.subr.mxu0 0.0
        %3008 = vmatpush1.xpose.msra.mxu0 0.0
        %3009 = vmatprep.subr.mxu0 0.0
        %3010 = vmatpush1.xpose.msra.mxu0 0.0
        %3011 = vmatprep.subr.mxu0 0.0
        %3012 = vmatpush1.xpose.msra.mxu0 0.0
        %3013 = vmatprep.mubr.f32.mxu0 0.0
        %3014 = vmatmul.mubr.f32.gmra.mrb[0].mxu0 %v2945
        %v3015 = vpop.f32.mrb[0].mxu0
        %v3016 = vadd.f32 0.0, %v3015
        %v3017 = vpop.f32.mrb[0].mxu0
        %3018 = vdwg.mxu0
        %v3019 = vmul.f32 %v3016, 0.25
        %v3020 = vadd.f32 %v3019, %v1564
        %v3021 = vsel %vm1566, %v3020, -inf
        %3022 = vmax.xlane.f32.xlu0 %v3021
        %v3023 = vpop.xlane.xlu0 %3022
        %v3024 = vsub.f32 %v3020, %v3023
        %v3025 = vmul.f32 %v3024, 1.442695
        %v3026 = vpow.pop %v3025
        %v3027 = vsel %vm1566, %v3026, 0.0
        %3028 = vadd.xlane.f32.xlu0 %v3027
        %v3029 = vpop.xlane.xlu0 %3028
        %v3030 = vrcp.pop %v3029
        %v3031 = vmul.f32 %v3026, %v3030
        %3032 = vrot.lane.b32.xlu0 %v1483, 32
        %v3033 = vpop.permute.xlu0 %3032
        %v3036 = vsel %vm1566, %v3031, 0
        %3038 = vmatprep.subr.mxu0 0.0
        %3039 = vmatpush1.msra.mxu0 %v3033
        %3040 = vmatprep.subr.mxu0 0.0
        %3041 = vmatpush1.msra.mxu0 0.0
        %3042 = vmatprep.subr.mxu0 0.0
        %3043 = vmatpush1.msra.mxu0 0.0
        %3044 = vmatprep.subr.mxu0 0.0
        %3045 = vmatpush1.msra.mxu0 0.0
        %3046 = vmatprep.subr.mxu0 0.0
        %3047 = vmatpush1.msra.mxu0 0.0
        %3048 = vmatprep.subr.mxu0 0.0
        %3049 = vmatpush1.msra.mxu0 0.0
        %3050 = vmatprep.subr.mxu0 0.0
        %3051 = vmatpush1.msra.mxu0 0.0
        %3052 = vmatprep.subr.mxu0 0.0
        %3053 = vmatpush1.msra.mxu0 0.0
        %3054 = vmatprep.subr.mxu0 0.0
        %3055 = vmatpush1.msra.mxu0 0.0
        %3056 = vmatprep.subr.mxu0 0.0
        %3057 = vmatpush1.msra.mxu0 0.0
        %3058 = vmatprep.subr.mxu0 0.0
        %3059 = vmatpush1.msra.mxu0 0.0
        %3060 = vmatprep.subr.mxu0 0.0
        %3061 = vmatpush1.msra.mxu0 0.0
        %3062 = vmatprep.subr.mxu0 0.0
        %3063 = vmatpush1.msra.mxu0 0.0
        %3064 = vmatprep.subr.mxu0 0.0
        %3065 = vmatpush1.msra.mxu0 0.0
        %3066 = vmatprep.subr.mxu0 0.0
        %3067 = vmatpush1.msra.mxu0 0.0
        %3068 = vmatprep.subr.mxu0 0.0
        %3069 = vmatpush1.msra.mxu0 0.0
        %3070 = vmatprep.subr.mxu0 0.0
        %3071 = vmatpush1.msra.mxu0 0.0
        %3072 = vmatprep.subr.mxu0 0.0
        %3073 = vmatpush1.msra.mxu0 0.0
        %3074 = vmatprep.subr.mxu0 0.0
        %3075 = vmatpush1.msra.mxu0 0.0
        %3076 = vmatprep.subr.mxu0 0.0
        %3077 = vmatpush1.msra.mxu0 0.0
        %3078 = vmatprep.subr.mxu0 0.0
        %3079 = vmatpush1.msra.mxu0 0.0
        %3080 = vmatprep.subr.mxu0 0.0
        %3081 = vmatpush1.msra.mxu0 0.0
        %3082 = vmatprep.subr.mxu0 0.0
        %3083 = vmatpush1.msra.mxu0 0.0
        %3084 = vmatprep.subr.mxu0 0.0
        %3085 = vmatpush1.msra.mxu0 0.0
        %3086 = vmatprep.subr.mxu0 0.0
        %3087 = vmatpush1.msra.mxu0 0.0
        %3088 = vmatprep.subr.mxu0 0.0
        %3089 = vmatpush1.msra.mxu0 0.0
        %3090 = vmatprep.subr.mxu0 0.0
        %3091 = vmatpush1.msra.mxu0 0.0
        %3092 = vmatprep.subr.mxu0 0.0
        %3093 = vmatpush1.msra.mxu0 0.0
        %3094 = vmatprep.subr.mxu0 0.0
        %3095 = vmatpush1.msra.mxu0 0.0
        %3096 = vmatprep.subr.mxu0 0.0
        %3097 = vmatpush1.msra.mxu0 0.0
        %3098 = vmatprep.subr.mxu0 0.0
        %3099 = vmatpush1.msra.mxu0 0.0
        %3100 = vmatprep.subr.mxu0 0.0
        %3101 = vmatpush1.msra.mxu0 0.0
        %3102 = vmatprep.mubr.f32.mxu0 0.0
        %3103 = vmatmul.mubr.f32.gmra.mrb[0].mxu0 %v3036
        %v3104 = vpop.f32.mrb[0].mxu0
        %v3105 = vadd.f32 0.0, %v3104
        %v3106 = vpop.f32.mrb[0].mxu0
        %3107 = vdwg.mxu0
        %v3108 = vld [vmem:[#allocation14 + $0x60] sm:$0xff]
        %v3109 = vld [vmem:[#allocation14 + $0x68] sm:$0xff]
        %v3111 = vsel %vm1486, %v3105, 0
        %3113 = vmatprep.subr.mxu0 0.0
        %3114 = vmatpush1.msra.mxu0 %v3108
        %3115 = vmatprep.subr.mxu0 0.0
        %3116 = vmatpush1.msra.mxu0 %v3109
        %3117 = vmatprep.subr.mxu0 0.0
        %3118 = vmatpush1.msra.mxu0 0.0
        %3119 = vmatprep.subr.mxu0 0.0
        %3120 = vmatpush1.msra.mxu0 0.0
        %3121 = vmatprep.subr.mxu0 0.0
        %3122 = vmatpush1.msra.mxu0 0.0
        %3123 = vmatprep.subr.mxu0 0.0
        %3124 = vmatpush1.msra.mxu0 0.0
        %3125 = vmatprep.subr.mxu0 0.0
        %3126 = vmatpush1.msra.mxu0 0.0
        %3127 = vmatprep.subr.mxu0 0.0
        %3128 = vmatpush1.msra.mxu0 0.0
        %3129 = vmatprep.subr.mxu0 0.0
        %3130 = vmatpush1.msra.mxu0 0.0
        %3131 = vmatprep.subr.mxu0 0.0
        %3132 = vmatpush1.msra.mxu0 0.0
        %3133 = vmatprep.subr.mxu0 0.0
        %3134 = vmatpush1.msra.mxu0 0.0
        %3135 = vmatprep.subr.mxu0 0.0
        %3136 = vmatpush1.msra.mxu0 0.0
        %3137 = vmatprep.subr.mxu0 0.0
        %3138 = vmatpush1.msra.mxu0 0.0
        %3139 = vmatprep.subr.mxu0 0.0
        %3140 = vmatpush1.msra.mxu0 0.0
        %3141 = vmatprep.subr.mxu0 0.0
        %3142 = vmatpush1.msra.mxu0 0.0
        %3143 = vmatprep.subr.mxu0 0.0
        %3144 = vmatpush1.msra.mxu0 0.0
        %3145 = vmatprep.subr.mxu0 0.0
        %3146 = vmatpush1.msra.mxu0 0.0
        %3147 = vmatprep.subr.mxu0 0.0
        %3148 = vmatpush1.msra.mxu0 0.0
        %3149 = vmatprep.subr.mxu0 0.0
        %3150 = vmatpush1.msra.mxu0 0.0
        %3151 = vmatprep.subr.mxu0 0.0
        %3152 = vmatpush1.msra.mxu0 0.0
        %3153 = vmatprep.subr.mxu0 0.0
        %3154 = vmatpush1.msra.mxu0 0.0
        %3155 = vmatprep.subr.mxu0 0.0
        %3156 = vmatpush1.msra.mxu0 0.0
        %3157 = vmatprep.subr.mxu0 0.0
        %3158 = vmatpush1.msra.mxu0 0.0
        %3159 = vmatprep.subr.mxu0 0.0
        %3160 = vmatpush1.msra.mxu0 0.0
        %3161 = vmatprep.subr.mxu0 0.0
        %3162 = vmatpush1.msra.mxu0 0.0
        %3163 = vmatprep.subr.mxu0 0.0
        %3164 = vmatpush1.msra.mxu0 0.0
        %3165 = vmatprep.subr.mxu0 0.0
        %3166 = vmatpush1.msra.mxu0 0.0
        %3167 = vmatprep.subr.mxu0 0.0
        %3168 = vmatpush1.msra.mxu0 0.0
        %3169 = vmatprep.subr.mxu0 0.0
        %3170 = vmatpush1.msra.mxu0 0.0
        %3171 = vmatprep.subr.mxu0 0.0
        %3172 = vmatpush1.msra.mxu0 0.0
        %3173 = vmatprep.subr.mxu0 0.0
        %3174 = vmatpush1.msra.mxu0 0.0
        %3175 = vmatprep.subr.mxu0 0.0
        %3176 = vmatpush1.msra.mxu0 0.0
        %3177 = vmatprep.mubr.f32.mxu0 0.0
        %3178 = vmatmul.mubr.f32.gmra.mrb[0].mxu0 %v3111
        %v3179 = vpop.f32.mrb[0].mxu0
        %v3180 = vadd.f32 0.0, %v3179
        %v3181 = vpop.f32.mrb[0].mxu0
        %3182 = vdwg.mxu0
        %v3183 = vadd.f32 %v2940, %v3180
        %3184 = vrot.lane.b32.xlu0 %v1297, 16
        %v3185 = vpop.permute.xlu0 %3184
        %3186 = vrot.lane.b32.xlu0 %v1390, 16
        %v3187 = vpop.permute.xlu0 %3186
        %v3188 = vsel %vm1486, %v3185, 0
        %v3190 = vsel %vm1486, %v3187, 0
        %3192 = vmatprep.subr.mxu0 0.0
        %3193 = vmatpush1.xpose.msra.mxu0 %v3190
        %3194 = vmatprep.subr.mxu0 0.0
        %3195 = vmatpush1.xpose.msra.mxu0 0.0
        %3196 = vmatprep.subr.mxu0 0.0
        %3197 = vmatpush1.xpose.msra.mxu0 0.0
        %3198 = vmatprep.subr.mxu0 0.0
        %3199 = vmatpush1.xpose.msra.mxu0 0.0
        %3200 = vmatprep.subr.mxu0 0.0
        %3201 = vmatpush1.xpose.msra.mxu0 0.0
        %3202 = vmatprep.subr.mxu0 0.0
        %3203 = vmatpush1.xpose.msra.mxu0 0.0
        %3204 = vmatprep.subr.mxu0 0.0
        %3205 = vmatpush1.xpose.msra.mxu0 0.0
        %3206 = vmatprep.subr.mxu0 0.0
        %3207 = vmatpush1.xpose.msra.mxu0 0.0
        %3208 = vmatprep.subr.mxu0 0.0
        %3209 = vmatpush1.xpose.msra.mxu0 0.0
        %3210 = vmatprep.subr.mxu0 0.0
        %3211 = vmatpush1.xpose.msra.mxu0 0.0
        %3212 = vmatprep.subr.mxu0 0.0
        %3213 = vmatpush1.xpose.msra.mxu0 0.0
        %3214 = vmatprep.subr.mxu0 0.0
        %3215 = vmatpush1.xpose.msra.mxu0 0.0
        %3216 = vmatprep.subr.mxu0 0.0
        %3217 = vmatpush1.xpose.msra.mxu0 0.0
        %3218 = vmatprep.subr.mxu0 0.0
        %3219 = vmatpush1.xpose.msra.mxu0 0.0
        %3220 = vmatprep.subr.mxu0 0.0
        %3221 = vmatpush1.xpose.msra.mxu0 0.0
        %3222 = vmatprep.subr.mxu0 0.0
        %3223 = vmatpush1.xpose.msra.mxu0 0.0
        %3224 = vmatprep.subr.mxu0 0.0
        %3225 = vmatpush1.xpose.msra.mxu0 0.0
        %3226 = vmatprep.subr.mxu0 0.0
        %3227 = vmatpush1.xpose.msra.mxu0 0.0
        %3228 = vmatprep.subr.mxu0 0.0
        %3229 = vmatpush1.xpose.msra.mxu0 0.0
        %3230 = vmatprep.subr.mxu0 0.0
        %3231 = vmatpush1.xpose.msra.mxu0 0.0
        %3232 = vmatprep.subr.mxu0 0.0
        %3233 = vmatpush1.xpose.msra.mxu0 0.0
        %3234 = vmatprep.subr.mxu0 0.0
        %3235 = vmatpush1.xpose.msra.mxu0 0.0
        %3236 = vmatprep.subr.mxu0 0.0
        %3237 = vmatpush1.xpose.msra.mxu0 0.0
        %3238 = vmatprep.subr.mxu0 0.0
        %3239 = vmatpush1.xpose.msra.mxu0 0.0
        %3240 = vmatprep.subr.mxu0 0.0
        %3241 = vmatpush1.xpose.msra.mxu0 0.0
        %3242 = vmatprep.subr.mxu0 0.0
        %3243 = vmatpush1.xpose.msra.mxu0 0.0
        %3244 = vmatprep.subr.mxu0 0.0
        %3245 = vmatpush1.xpose.msra.mxu0 0.0
        %3246 = vmatprep.subr.mxu0 0.0
        %3247 = vmatpush1.xpose.msra.mxu0 0.0
        %3248 = vmatprep.subr.mxu0 0.0
        %3249 = vmatpush1.xpose.msra.mxu0 0.0
        %3250 = vmatprep.subr.mxu0 0.0
        %3251 = vmatpush1.xpose.msra.mxu0 0.0
        %3252 = vmatprep.subr.mxu0 0.0
        %3253 = vmatpush1.xpose.msra.mxu0 0.0
        %3254 = vmatprep.subr.mxu0 0.0
        %3255 = vmatpush1.xpose.msra.mxu0 0.0
        %3256 = vmatprep.mubr.f32.mxu0 0.0
        %3257 = vmatmul.mubr.f32.gmra.mrb[0].mxu0 %v3188
        %v3258 = vpop.f32.mrb[0].mxu0
        %v3259 = vadd.f32 0.0, %v3258
        %v3260 = vpop.f32.mrb[0].mxu0
        %3261 = vdwg.mxu0
        %v3262 = vmul.f32 %v3259, 0.25
        %v3263 = vadd.f32 %v3262, %v1564
        %v3264 = vsel %vm1566, %v3263, -inf
        %3265 = vmax.xlane.f32.xlu0 %v3264
        %v3266 = vpop.xlane.xlu0 %3265
        %v3267 = vsub.f32 %v3263, %v3266
        %v3268 = vmul.f32 %v3267, 1.442695
        %v3269 = vpow.pop %v3268
        %v3270 = vsel %vm1566, %v3269, 0.0
        %3271 = vadd.xlane.f32.xlu0 %v3270
        %v3272 = vpop.xlane.xlu0 %3271
        %v3273 = vrcp.pop %v3272
        %v3274 = vmul.f32 %v3269, %v3273
        %3275 = vrot.lane.b32.xlu0 %v1483, 16
        %v3276 = vpop.permute.xlu0 %3275
        %v3279 = vsel %vm1566, %v3274, 0
        %3281 = vmatprep.subr.mxu0 0.0
        %3282 = vmatpush1.msra.mxu0 %v3276
        %3283 = vmatprep.subr.mxu0 0.0
        %3284 = vmatpush1.msra.mxu0 0.0
        %3285 = vmatprep.subr.mxu0 0.0
        %3286 = vmatpush1.msra.mxu0 0.0
        %3287 = vmatprep.subr.mxu0 0.0
        %3288 = vmatpush1.msra.mxu0 0.0
        %3289 = vmatprep.subr.mxu0 0.0
        %3290 = vmatpush1.msra.mxu0 0.0
        %3291 = vmatprep.subr.mxu0 0.0
        %3292 = vmatpush1.msra.mxu0 0.0
        %3293 = vmatprep.subr.mxu0 0.0
        %3294 = vmatpush1.msra.mxu0 0.0
        %3295 = vmatprep.subr.mxu0 0.0
        %3296 = vmatpush1.msra.mxu0 0.0
        %3297 = vmatprep.subr.mxu0 0.0
        %3298 = vmatpush1.msra.mxu0 0.0
        %3299 = vmatprep.subr.mxu0 0.0
        %3300 = vmatpush1.msra.mxu0 0.0
        %3301 = vmatprep.subr.mxu0 0.0
        %3302 = vmatpush1.msra.mxu0 0.0
        %3303 = vmatprep.subr.mxu0 0.0
        %3304 = vmatpush1.msra.mxu0 0.0
        %3305 = vmatprep.subr.mxu0 0.0
        %3306 = vmatpush1.msra.mxu0 0.0
        %3307 = vmatprep.subr.mxu0 0.0
        %3308 = vmatpush1.msra.mxu0 0.0
        %3309 = vmatprep.subr.mxu0 0.0
        %3310 = vmatpush1.msra.mxu0 0.0
        %3311 = vmatprep.subr.mxu0 0.0
        %3312 = vmatpush1.msra.mxu0 0.0
        %3313 = vmatprep.subr.mxu0 0.0
        %3314 = vmatpush1.msra.mxu0 0.0
        %3315 = vmatprep.subr.mxu0 0.0
        %3316 = vmatpush1.msra.mxu0 0.0
        %3317 = vmatprep.subr.mxu0 0.0
        %3318 = vmatpush1.msra.mxu0 0.0
        %3319 = vmatprep.subr.mxu0 0.0
        %3320 = vmatpush1.msra.mxu0 0.0
        %3321 = vmatprep.subr.mxu0 0.0
        %3322 = vmatpush1.msra.mxu0 0.0
        %3323 = vmatprep.subr.mxu0 0.0
        %3324 = vmatpush1.msra.mxu0 0.0
        %3325 = vmatprep.subr.mxu0 0.0
        %3326 = vmatpush1.msra.mxu0 0.0
        %3327 = vmatprep.subr.mxu0 0.0
        %3328 = vmatpush1.msra.mxu0 0.0
        %3329 = vmatprep.subr.mxu0 0.0
        %3330 = vmatpush1.msra.mxu0 0.0
        %3331 = vmatprep.subr.mxu0 0.0
        %3332 = vmatpush1.msra.mxu0 0.0
        %3333 = vmatprep.subr.mxu0 0.0
        %3334 = vmatpush1.msra.mxu0 0.0
        %3335 = vmatprep.subr.mxu0 0.0
        %3336 = vmatpush1.msra.mxu0 0.0
        %3337 = vmatprep.subr.mxu0 0.0
        %3338 = vmatpush1.msra.mxu0 0.0
        %3339 = vmatprep.subr.mxu0 0.0
        %3340 = vmatpush1.msra.mxu0 0.0
        %3341 = vmatprep.subr.mxu0 0.0
        %3342 = vmatpush1.msra.mxu0 0.0
        %3343 = vmatprep.subr.mxu0 0.0
        %3344 = vmatpush1.msra.mxu0 0.0
        %3345 = vmatprep.mubr.f32.mxu0 0.0
        %3346 = vmatmul.mubr.f32.gmra.mrb[0].mxu0 %v3279
        %v3347 = vpop.f32.mrb[0].mxu0
        %v3348 = vadd.f32 0.0, %v3347
        %v3349 = vpop.f32.mrb[0].mxu0
        %3350 = vdwg.mxu0
        %v3351 = vld [vmem:[#allocation14 + $0x70] sm:$0xff]
        %v3352 = vld [vmem:[#allocation14 + $0x78] sm:$0xff]
        %v3354 = vsel %vm1486, %v3348, 0
        %3356 = vmatprep.subr.mxu0 0.0
        %3357 = vmatpush1.msra.mxu0 %v3351
        %3358 = vmatprep.subr.mxu0 0.0
        %3359 = vmatpush1.msra.mxu0 %v3352
        %3360 = vmatprep.subr.mxu0 0.0
        %3361 = vmatpush1.msra.mxu0 0.0
        %3362 = vmatprep.subr.mxu0 0.0
        %3363 = vmatpush1.msra.mxu0 0.0
        %3364 = vmatprep.subr.mxu0 0.0
        %3365 = vmatpush1.msra.mxu0 0.0
        %3366 = vmatprep.subr.mxu0 0.0
        %3367 = vmatpush1.msra.mxu0 0.0
        %3368 = vmatprep.subr.mxu0 0.0
        %3369 = vmatpush1.msra.mxu0 0.0
        %3370 = vmatprep.subr.mxu0 0.0
        %3371 = vmatpush1.msra.mxu0 0.0
        %3372 = vmatprep.subr.mxu0 0.0
        %3373 = vmatpush1.msra.mxu0 0.0
        %3374 = vmatprep.subr.mxu0 0.0
        %3375 = vmatpush1.msra.mxu0 0.0
        %3376 = vmatprep.subr.mxu0 0.0
        %3377 = vmatpush1.msra.mxu0 0.0
        %3378 = vmatprep.subr.mxu0 0.0
        %3379 = vmatpush1.msra.mxu0 0.0
        %3380 = vmatprep.subr.mxu0 0.0
        %3381 = vmatpush1.msra.mxu0 0.0
        %3382 = vmatprep.subr.mxu0 0.0
        %3383 = vmatpush1.msra.mxu0 0.0
        %3384 = vmatprep.subr.mxu0 0.0
        %3385 = vmatpush1.msra.mxu0 0.0
        %3386 = vmatprep.subr.mxu0 0.0
        %3387 = vmatpush1.msra.mxu0 0.0
        %3388 = vmatprep.subr.mxu0 0.0
        %3389 = vmatpush1.msra.mxu0 0.0
        %3390 = vmatprep.subr.mxu0 0.0
        %3391 = vmatpush1.msra.mxu0 0.0
        %3392 = vmatprep.subr.mxu0 0.0
        %3393 = vmatpush1.msra.mxu0 0.0
        %3394 = vmatprep.subr.mxu0 0.0
        %3395 = vmatpush1.msra.mxu0 0.0
        %3396 = vmatprep.subr.mxu0 0.0
        %3397 = vmatpush1.msra.mxu0 0.0
        %3398 = vmatprep.subr.mxu0 0.0
        %3399 = vmatpush1.msra.mxu0 0.0
        %3400 = vmatprep.subr.mxu0 0.0
        %3401 = vmatpush1.msra.mxu0 0.0
        %3402 = vmatprep.subr.mxu0 0.0
        %3403 = vmatpush1.msra.mxu0 0.0
        %3404 = vmatprep.subr.mxu0 0.0
        %3405 = vmatpush1.msra.mxu0 0.0
        %3406 = vmatprep.subr.mxu0 0.0
        %3407 = vmatpush1.msra.mxu0 0.0
        %3408 = vmatprep.subr.mxu0 0.0
        %3409 = vmatpush1.msra.mxu0 0.0
        %3410 = vmatprep.subr.mxu0 0.0
        %3411 = vmatpush1.msra.mxu0 0.0
        %3412 = vmatprep.subr.mxu0 0.0
        %3413 = vmatpush1.msra.mxu0 0.0
        %3414 = vmatprep.subr.mxu0 0.0
        %3415 = vmatpush1.msra.mxu0 0.0
        %3416 = vmatprep.subr.mxu0 0.0
        %3417 = vmatpush1.msra.mxu0 0.0
        %3418 = vmatprep.subr.mxu0 0.0
        %3419 = vmatpush1.msra.mxu0 0.0
        %3420 = vmatprep.mubr.f32.mxu0 0.0
        %3421 = vmatmul.mubr.f32.gmra.mrb[0].mxu0 %v3354
        %v3422 = vpop.f32.mrb[0].mxu0
        %v3423 = vadd.f32 0.0, %v3422
        %v3424 = vpop.f32.mrb[0].mxu0
        %3425 = vdwg.mxu0
        %v3426 = vadd.f32 %v3183, %v3423
        %v3427 = vld [vmem:[%s23] sm:$0x1]
        %v3429 = vlaneseq
        %v3430 = vshrl.u32 %v3429, 7
        %v3431 = vsub.s32 0, %v3430
        %v3432 = vrot.slane %v3427, %v3431
        %v3434 = vadd.f32 %v3426, %v3432
        %v3435 = vadd.f32 %v1202, %v3434
        %3436 = vadd.xlane.f32.xlu0 %v3435
        %v3437 = vpop.xlane.xlu0 %3436
        %v3438 = vmul.f32 %v3437, 0.0078125
        %v3439 = vmul.f32 %v3435, %v3435
        %3440 = vadd.xlane.f32.xlu0 %v3439
        %v3441 = vpop.xlane.xlu0 %3440
        %v3442 = vmul.f32 %v3441, 0.0078125
        %v3443 = vmul.f32 %v3438, %v3438
        %v3444 = vsub.f32 %v3442, %v3443
        %v3445 = vsub.f32 %v3435, %v3438
        %v3446 = vadd.f32 %v3444, 1e-06
        %v3447 = vrsqrt.pop %v3446
        %v3448 = vmul.f32 %v3445, %v3447
        %v3449 = vld [vmem:[%s25] sm:$0x1]
        %v3451 = vlaneseq
        %v3452 = vshrl.u32 %v3451, 7
        %v3453 = vsub.s32 0, %v3452
        %v3454 = vrot.slane %v3449, %v3453
        %v3456 = vmul.f32 %v3448, %v3454
        %v3457 = vld [vmem:[%s27] sm:$0x1]
        %v3459 = vlaneseq
        %v3460 = vshrl.u32 %v3459, 7
        %v3461 = vsub.s32 0, %v3460
        %v3462 = vrot.slane %v3457, %v3461
        %v3464 = vadd.f32 %v3456, %v3462
        %v3465 = vld [vmem:[#allocation16] sm:$0xff]
        %v3466 = vld [vmem:[#allocation16 + $0x8] sm:$0xff]
        %v3467 = vld [vmem:[#allocation16 + $0x10] sm:$0xff]
        %v3468 = vld [vmem:[#allocation16 + $0x18] sm:$0xff]
        %v3469 = vld [vmem:[#allocation16 + $0x20] sm:$0xff]
        %v3470 = vld [vmem:[#allocation16 + $0x28] sm:$0xff]
        %v3471 = vld [vmem:[#allocation16 + $0x30] sm:$0xff]
        %v3472 = vld [vmem:[#allocation16 + $0x38] sm:$0xff]
        %v3473 = vld [vmem:[#allocation16 + $0x40] sm:$0xff]
        %v3474 = vld [vmem:[#allocation16 + $0x48] sm:$0xff]
        %v3475 = vld [vmem:[#allocation16 + $0x50] sm:$0xff]
        %v3476 = vld [vmem:[#allocation16 + $0x58] sm:$0xff]
        %v3477 = vld [vmem:[#allocation16 + $0x60] sm:$0xff]
        %v3478 = vld [vmem:[#allocation16 + $0x68] sm:$0xff]
        %v3479 = vld [vmem:[#allocation16 + $0x70] sm:$0xff]
        %v3480 = vld [vmem:[#allocation16 + $0x78] sm:$0xff]
        %v3481 = vld [vmem:[%s31] sm:$0x1]
        %v3483 = vlaneseq
        %v3484 = vshrl.u32 %v3483, 7
        %v3485 = vsub.s32 0, %v3484
        %v3486 = vrot.slane %v3481, %v3485
        %3488 = vmatprep.subr.mxu0 0.0
        %3489 = vmatpush1.msra.mxu0 %v3465
        %3490 = vmatprep.subr.mxu0 0.0
        %3491 = vmatpush1.msra.mxu0 %v3466
        %3492 = vmatprep.subr.mxu0 0.0
        %3493 = vmatpush1.msra.mxu0 %v3467
        %3494 = vmatprep.subr.mxu0 0.0
        %3495 = vmatpush1.msra.mxu0 %v3468
        %3496 = vmatprep.subr.mxu0 0.0
        %3497 = vmatpush1.msra.mxu0 %v3469
        %3498 = vmatprep.subr.mxu0 0.0
        %3499 = vmatpush1.msra.mxu0 %v3470
        %3500 = vmatprep.subr.mxu0 0.0
        %3501 = vmatpush1.msra.mxu0 %v3471
        %3502 = vmatprep.subr.mxu0 0.0
        %3503 = vmatpush1.msra.mxu0 %v3472
        %3504 = vmatprep.subr.mxu0 0.0
        %3505 = vmatpush1.msra.mxu0 %v3473
        %3506 = vmatprep.subr.mxu0 0.0
        %3507 = vmatpush1.msra.mxu0 %v3474
        %3508 = vmatprep.subr.mxu0 0.0
        %3509 = vmatpush1.msra.mxu0 %v3475
        %3510 = vmatprep.subr.mxu0 0.0
        %3511 = vmatpush1.msra.mxu0 %v3476
        %3512 = vmatprep.subr.mxu0 0.0
        %3513 = vmatpush1.msra.mxu0 %v3477
        %3514 = vmatprep.subr.mxu0 0.0
        %3515 = vmatpush1.msra.mxu0 %v3478
        %3516 = vmatprep.subr.mxu0 0.0
        %3517 = vmatpush1.msra.mxu0 %v3479
        %3518 = vmatprep.subr.mxu0 0.0
        %3519 = vmatpush1.msra.mxu0 %v3480
        %3520 = vmatprep.subr.mxu0 0.0
        %3521 = vmatpush1.msra.mxu0 0.0
        %3522 = vmatprep.subr.mxu0 0.0
        %3523 = vmatpush1.msra.mxu0 0.0
        %3524 = vmatprep.subr.mxu0 0.0
        %3525 = vmatpush1.msra.mxu0 0.0
        %3526 = vmatprep.subr.mxu0 0.0
        %3527 = vmatpush1.msra.mxu0 0.0
        %3528 = vmatprep.subr.mxu0 0.0
        %3529 = vmatpush1.msra.mxu0 0.0
        %3530 = vmatprep.subr.mxu0 0.0
        %3531 = vmatpush1.msra.mxu0 0.0
        %3532 = vmatprep.subr.mxu0 0.0
        %3533 = vmatpush1.msra.mxu0 0.0
        %3534 = vmatprep.subr.mxu0 0.0
        %3535 = vmatpush1.msra.mxu0 0.0
        %3536 = vmatprep.subr.mxu0 0.0
        %3537 = vmatpush1.msra.mxu0 0.0
        %3538 = vmatprep.subr.mxu0 0.0
        %3539 = vmatpush1.msra.mxu0 0.0
        %3540 = vmatprep.subr.mxu0 0.0
        %3541 = vmatpush1.msra.mxu0 0.0
        %3542 = vmatprep.subr.mxu0 0.0
        %3543 = vmatpush1.msra.mxu0 0.0
        %3544 = vmatprep.subr.mxu0 0.0
        %3545 = vmatpush1.msra.mxu0 0.0
        %3546 = vmatprep.subr.mxu0 0.0
        %3547 = vmatpush1.msra.mxu0 0.0
        %3548 = vmatprep.subr.mxu0 0.0
        %3549 = vmatpush1.msra.mxu0 0.0
        %3550 = vmatprep.subr.mxu0 0.0
        %3551 = vmatpush1.msra.mxu0 0.0
        %3552 = vmatprep.mubr.f32.mxu0 0.0
        %3553 = vmatmul.mubr.f32.gmra.mrb[0].mxu0 %v3464
        %v3554 = vpop.f32.mrb[0].mxu0
        %v3555 = vadd.f32 %v3486, %v3554
        %v3556 = vpop.f32.mrb[0].mxu0
        %3557 = vdwg.mxu0
        %v3558 = vld [vmem:[#allocation17] sm:$0xff]
        %v3559 = vld [vmem:[#allocation17 + $0x8] sm:$0xff]
        %v3560 = vld [vmem:[#allocation17 + $0x10] sm:$0xff]
        %v3561 = vld [vmem:[#allocation17 + $0x18] sm:$0xff]
        %v3562 = vld [vmem:[#allocation17 + $0x20] sm:$0xff]
        %v3563 = vld [vmem:[#allocation17 + $0x28] sm:$0xff]
        %v3564 = vld [vmem:[#allocation17 + $0x30] sm:$0xff]
        %v3565 = vld [vmem:[#allocation17 + $0x38] sm:$0xff]
        %v3566 = vld [vmem:[#allocation17 + $0x40] sm:$0xff]
        %v3567 = vld [vmem:[#allocation17 + $0x48] sm:$0xff]
        %v3568 = vld [vmem:[#allocation17 + $0x50] sm:$0xff]
        %v3569 = vld [vmem:[#allocation17 + $0x58] sm:$0xff]
        %v3570 = vld [vmem:[#allocation17 + $0x60] sm:$0xff]
        %v3571 = vld [vmem:[#allocation17 + $0x68] sm:$0xff]
        %v3572 = vld [vmem:[#allocation17 + $0x70] sm:$0xff]
        %v3573 = vld [vmem:[#allocation17 + $0x78] sm:$0xff]
        %v3574 = vld [vmem:[%s35] sm:$0x1]
        %v3576 = vlaneseq
        %v3577 = vshrl.u32 %v3576, 7
        %v3578 = vsub.s32 0, %v3577
        %v3579 = vrot.slane %v3574, %v3578
        %3581 = vmatprep.subr.mxu0 0.0
        %3582 = vmatpush1.msra.mxu0 %v3558
        %3583 = vmatprep.subr.mxu0 0.0
        %3584 = vmatpush1.msra.mxu0 %v3559
        %3585 = vmatprep.subr.mxu0 0.0
        %3586 = vmatpush1.msra.mxu0 %v3560
        %3587 = vmatprep.subr.mxu0 0.0
        %3588 = vmatpush1.msra.mxu0 %v3561
        %3589 = vmatprep.subr.mxu0 0.0
        %3590 = vmatpush1.msra.mxu0 %v3562
        %3591 = vmatprep.subr.mxu0 0.0
        %3592 = vmatpush1.msra.mxu0 %v3563
        %3593 = vmatprep.subr.mxu0 0.0
        %3594 = vmatpush1.msra.mxu0 %v3564
        %3595 = vmatprep.subr.mxu0 0.0
        %3596 = vmatpush1.msra.mxu0 %v3565
        %3597 = vmatprep.subr.mxu0 0.0
        %3598 = vmatpush1.msra.mxu0 %v3566
        %3599 = vmatprep.subr.mxu0 0.0
        %3600 = vmatpush1.msra.mxu0 %v3567
        %3601 = vmatprep.subr.mxu0 0.0
        %3602 = vmatpush1.msra.mxu0 %v3568
        %3603 = vmatprep.subr.mxu0 0.0
        %3604 = vmatpush1.msra.mxu0 %v3569
        %3605 = vmatprep.subr.mxu0 0.0
        %3606 = vmatpush1.msra.mxu0 %v3570
        %3607 = vmatprep.subr.mxu0 0.0
        %3608 = vmatpush1.msra.mxu0 %v3571
        %3609 = vmatprep.subr.mxu0 0.0
        %3610 = vmatpush1.msra.mxu0 %v3572
        %3611 = vmatprep.subr.mxu0 0.0
        %3612 = vmatpush1.msra.mxu0 %v3573
        %3613 = vmatprep.subr.mxu0 0.0
        %3614 = vmatpush1.msra.mxu0 0.0
        %3615 = vmatprep.subr.mxu0 0.0
        %3616 = vmatpush1.msra.mxu0 0.0
        %3617 = vmatprep.subr.mxu0 0.0
        %3618 = vmatpush1.msra.mxu0 0.0
        %3619 = vmatprep.subr.mxu0 0.0
        %3620 = vmatpush1.msra.mxu0 0.0
        %3621 = vmatprep.subr.mxu0 0.0
        %3622 = vmatpush1.msra.mxu0 0.0
        %3623 = vmatprep.subr.mxu0 0.0
        %3624 = vmatpush1.msra.mxu0 0.0
        %3625 = vmatprep.subr.mxu0 0.0
        %3626 = vmatpush1.msra.mxu0 0.0
        %3627 = vmatprep.subr.mxu0 0.0
        %3628 = vmatpush1.msra.mxu0 0.0
        %3629 = vmatprep.subr.mxu0 0.0
        %3630 = vmatpush1.msra.mxu0 0.0
        %3631 = vmatprep.subr.mxu0 0.0
        %3632 = vmatpush1.msra.mxu0 0.0
        %3633 = vmatprep.subr.mxu0 0.0
        %3634 = vmatpush1.msra.mxu0 0.0
        %3635 = vmatprep.subr.mxu0 0.0
        %3636 = vmatpush1.msra.mxu0 0.0
        %3637 = vmatprep.subr.mxu0 0.0
        %3638 = vmatpush1.msra.mxu0 0.0
        %3639 = vmatprep.subr.mxu0 0.0
        %3640 = vmatpush1.msra.mxu0 0.0
        %3641 = vmatprep.subr.mxu0 0.0
        %3642 = vmatpush1.msra.mxu0 0.0
        %3643 = vmatprep.subr.mxu0 0.0
        %3644 = vmatpush1.msra.mxu0 0.0
        %3645 = vmatprep.mubr.f32.mxu0 0.0
        %3646 = vmatmul.mubr.f32.gmra.mrb[0].mxu0 %v1203
        %v3647 = vpop.f32.mrb[0].mxu0
        %v3648 = vadd.f32 %v3579, %v3647
        %v3649 = vpop.f32.mrb[0].mxu0
        %3650 = vmatprep.mubr.f32.mxu0 0.0
        %3651 = vmatmul.mubr.f32.gmra.mrb[0].mxu0 %v1204
        %v3652 = vpop.f32.mrb[0].mxu0
        %v3653 = vadd.f32 %v3579, %v3652
        %v3654 = vpop.f32.mrb[0].mxu0
        %3655 = vdwg.mxu0
        %v3656 = vld [vmem:[#allocation19] sm:$0xff]
        %v3657 = vld [vmem:[#allocation19 + $0x8] sm:$0xff]
        %v3658 = vld [vmem:[#allocation19 + $0x10] sm:$0xff]
        %v3659 = vld [vmem:[#allocation19 + $0x18] sm:$0xff]
        %v3660 = vld [vmem:[#allocation19 + $0x20] sm:$0xff]
        %v3661 = vld [vmem:[#allocation19 + $0x28] sm:$0xff]
        %v3662 = vld [vmem:[#allocation19 + $0x30] sm:$0xff]
        %v3663 = vld [vmem:[#allocation19 + $0x38] sm:$0xff]
        %v3664 = vld [vmem:[#allocation19 + $0x40] sm:$0xff]
        %v3665 = vld [vmem:[#allocation19 + $0x48] sm:$0xff]
        %v3666 = vld [vmem:[#allocation19 + $0x50] sm:$0xff]
        %v3667 = vld [vmem:[#allocation19 + $0x58] sm:$0xff]
        %v3668 = vld [vmem:[#allocation19 + $0x60] sm:$0xff]
        %v3669 = vld [vmem:[#allocation19 + $0x68] sm:$0xff]
        %v3670 = vld [vmem:[#allocation19 + $0x70] sm:$0xff]
        %v3671 = vld [vmem:[#allocation19 + $0x78] sm:$0xff]
        %v3672 = vld [vmem:[%s39] sm:$0x1]
        %v3674 = vlaneseq
        %v3675 = vshrl.u32 %v3674, 7
        %v3676 = vsub.s32 0, %v3675
        %v3677 = vrot.slane %v3672, %v3676
        %3679 = vmatprep.subr.mxu0 0.0
        %3680 = vmatpush1.msra.mxu0 %v3656
        %3681 = vmatprep.subr.mxu0 0.0
        %3682 = vmatpush1.msra.mxu0 %v3657
        %3683 = vmatprep.subr.mxu0 0.0
        %3684 = vmatpush1.msra.mxu0 %v3658
        %3685 = vmatprep.subr.mxu0 0.0
        %3686 = vmatpush1.msra.mxu0 %v3659
        %3687 = vmatprep.subr.mxu0 0.0
        %3688 = vmatpush1.msra.mxu0 %v3660
        %3689 = vmatprep.subr.mxu0 0.0
        %3690 = vmatpush1.msra.mxu0 %v3661
        %3691 = vmatprep.subr.mxu0 0.0
        %3692 = vmatpush1.msra.mxu0 %v3662
        %3693 = vmatprep.subr.mxu0 0.0
        %3694 = vmatpush1.msra.mxu0 %v3663
        %3695 = vmatprep.subr.mxu0 0.0
        %3696 = vmatpush1.msra.mxu0 %v3664
        %3697 = vmatprep.subr.mxu0 0.0
        %3698 = vmatpush1.msra.mxu0 %v3665
        %3699 = vmatprep.subr.mxu0 0.0
        %3700 = vmatpush1.msra.mxu0 %v3666
        %3701 = vmatprep.subr.mxu0 0.0
        %3702 = vmatpush1.msra.mxu0 %v3667
        %3703 = vmatprep.subr.mxu0 0.0
        %3704 = vmatpush1.msra.mxu0 %v3668
        %3705 = vmatprep.subr.mxu0 0.0
        %3706 = vmatpush1.msra.mxu0 %v3669
        %3707 = vmatprep.subr.mxu0 0.0
        %3708 = vmatpush1.msra.mxu0 %v3670
        %3709 = vmatprep.subr.mxu0 0.0
        %3710 = vmatpush1.msra.mxu0 %v3671
        %3711 = vmatprep.subr.mxu0 0.0
        %3712 = vmatpush1.msra.mxu0 0.0
        %3713 = vmatprep.subr.mxu0 0.0
        %3714 = vmatpush1.msra.mxu0 0.0
        %3715 = vmatprep.subr.mxu0 0.0
        %3716 = vmatpush1.msra.mxu0 0.0
        %3717 = vmatprep.subr.mxu0 0.0
        %3718 = vmatpush1.msra.mxu0 0.0
        %3719 = vmatprep.subr.mxu0 0.0
        %3720 = vmatpush1.msra.mxu0 0.0
        %3721 = vmatprep.subr.mxu0 0.0
        %3722 = vmatpush1.msra.mxu0 0.0
        %3723 = vmatprep.subr.mxu0 0.0
        %3724 = vmatpush1.msra.mxu0 0.0
        %3725 = vmatprep.subr.mxu0 0.0
        %3726 = vmatpush1.msra.mxu0 0.0
        %3727 = vmatprep.subr.mxu0 0.0
        %3728 = vmatpush1.msra.mxu0 0.0
        %3729 = vmatprep.subr.mxu0 0.0
        %3730 = vmatpush1.msra.mxu0 0.0
        %3731 = vmatprep.subr.mxu0 0.0
        %3732 = vmatpush1.msra.mxu0 0.0
        %3733 = vmatprep.subr.mxu0 0.0
        %3734 = vmatpush1.msra.mxu0 0.0
        %3735 = vmatprep.subr.mxu0 0.0
        %3736 = vmatpush1.msra.mxu0 0.0
        %3737 = vmatprep.subr.mxu0 0.0
        %3738 = vmatpush1.msra.mxu0 0.0
        %3739 = vmatprep.subr.mxu0 0.0
        %3740 = vmatpush1.msra.mxu0 0.0
        %3741 = vmatprep.subr.mxu0 0.0
        %3742 = vmatpush1.msra.mxu0 0.0
        %3743 = vmatprep.mubr.f32.mxu0 0.0
        %3744 = vmatmul.mubr.f32.gmra.mrb[0].mxu0 %v1203
        %v3745 = vpop.f32.mrb[0].mxu0
        %v3746 = vadd.f32 %v3677, %v3745
        %v3747 = vpop.f32.mrb[0].mxu0
        %3748 = vmatprep.mubr.f32.mxu0 0.0
        %3749 = vmatmul.mubr.f32.gmra.mrb[0].mxu0 %v1204
        %v3750 = vpop.f32.mrb[0].mxu0
        %v3751 = vadd.f32 %v3677, %v3750
        %v3752 = vpop.f32.mrb[0].mxu0
        %3753 = vdwg.mxu0
        %v3755 = vsel %vm1486, %v3555, 0
        %v3758 = vsel %vm1486, %v3648, 0
        %v3761 = vsel %vm1486, %v3653, 0
        %3763 = vmatprep.subr.mxu0 0.0
        %3764 = vmatpush1.xpose.msra.mxu0 %v3758
        %3765 = vmatprep.subr.mxu0 0.0
        %3766 = vmatpush1.xpose.msra.mxu0 %v3761
        %3767 = vmatprep.subr.mxu0 0.0
        %3768 = vmatpush1.xpose.msra.mxu0 0.0
        %3769 = vmatprep.subr.mxu0 0.0
        %3770 = vmatpush1.xpose.msra.mxu0 0.0
        %3771 = vmatprep.subr.mxu0 0.0
        %3772 = vmatpush1.xpose.msra.mxu0 0.0
        %3773 = vmatprep.subr.mxu0 0.0
        %3774 = vmatpush1.xpose.msra.mxu0 0.0
        %3775 = vmatprep.subr.mxu0 0.0
        %3776 = vmatpush1.xpose.msra.mxu0 0.0
        %3777 = vmatprep.subr.mxu0 0.0
        %3778 = vmatpush1.xpose.msra.mxu0 0.0
        %3779 = vmatprep.subr.mxu0 0.0
        %3780 = vmatpush1.xpose.msra.mxu0 0.0
        %3781 = vmatprep.subr.mxu0 0.0
        %3782 = vmatpush1.xpose.msra.mxu0 0.0
        %3783 = vmatprep.subr.mxu0 0.0
        %3784 = vmatpush1.xpose.msra.mxu0 0.0
        %3785 = vmatprep.subr.mxu0 0.0
        %3786 = vmatpush1.xpose.msra.mxu0 0.0
        %3787 = vmatprep.subr.mxu0 0.0
        %3788 = vmatpush1.xpose.msra.mxu0 0.0
        %3789 = vmatprep.subr.mxu0 0.0
        %3790 = vmatpush1.xpose.msra.mxu0 0.0
        %3791 = vmatprep.subr.mxu0 0.0
        %3792 = vmatpush1.xpose.msra.mxu0 0.0
        %3793 = vmatprep.subr.mxu0 0.0
        %3794 = vmatpush1.xpose.msra.mxu0 0.0
        %3795 = vmatprep.subr.mxu0 0.0
        %3796 = vmatpush1.xpose.msra.mxu0 0.0
        %3797 = vmatprep.subr.mxu0 0.0
        %3798 = vmatpush1.xpose.msra.mxu0 0.0
        %3799 = vmatprep.subr.mxu0 0.0
        %3800 = vmatpush1.xpose.msra.mxu0 0.0
        %3801 = vmatprep.subr.mxu0 0.0
        %3802 = vmatpush1.xpose.msra.mxu0 0.0
        %3803 = vmatprep.subr.mxu0 0.0
        %3804 = vmatpush1.xpose.msra.mxu0 0.0
        %3805 = vmatprep.subr.mxu0 0.0
        %3806 = vmatpush1.xpose.msra.mxu0 0.0
        %3807 = vmatprep.subr.mxu0 0.0
        %3808 = vmatpush1.xpose.msra.mxu0 0.0
        %3809 = vmatprep.subr.mxu0 0.0
        %3810 = vmatpush1.xpose.msra.mxu0 0.0
        %3811 = vmatprep.subr.mxu0 0.0
        %3812 = vmatpush1.xpose.msra.mxu0 0.0
        %3813 = vmatprep.subr.mxu0 0.0
        %3814 = vmatpush1.xpose.msra.mxu0 0.0
        %3815 = vmatprep.subr.mxu0 0.0
        %3816 = vmatpush1.xpose.msra.mxu0 0.0
        %3817 = vmatprep.subr.mxu0 0.0
        %3818 = vmatpush1.xpose.msra.mxu0 0.0
        %3819 = vmatprep.subr.mxu0 0.0
        %3820 = vmatpush1.xpose.msra.mxu0 0.0
        %3821 = vmatprep.subr.mxu0 0.0
        %3822 = vmatpush1.xpose.msra.mxu0 0.0
        %3823 = vmatprep.subr.mxu0 0.0
        %3824 = vmatpush1.xpose.msra.mxu0 0.0
        %3825 = vmatprep.subr.mxu0 0.0
        %3826 = vmatpush1.xpose.msra.mxu0 0.0
        %3827 = vmatprep.mubr.f32.mxu0 0.0
        %3828 = vmatmul.mubr.f32.gmra.mrb[0].mxu0 %v3755
        %v3829 = vpop.f32.mrb[0].mxu0
        %v3830 = vadd.f32 0.0, %v3829
        %v3831 = vpop.f32.mrb[0].mxu0
        %3832 = vdwg.mxu0
        %v3833 = vmul.f32 %v3830, 0.25
        %v3834 = vmul.f32 %v1206, -1e+09
        %v3835 = vadd.f32 %v3833, %v3834
        %v3836 = vsel %vm1486, %v3835, -inf
        %3837 = vmax.xlane.f32.xlu0 %v3836
        %v3838 = vpop.xlane.xlu0 %3837
        %v3839 = vsub.f32 %v3835, %v3838
        %v3840 = vmul.f32 %v3839, 1.442695
        %v3841 = vpow.pop %v3840
        %v3842 = vsel %vm1486, %v3841, 0.0
        %3843 = vadd.xlane.f32.xlu0 %v3842
        %v3844 = vpop.xlane.xlu0 %3843
        %v3845 = vrcp.pop %v3844
        %v3846 = vmul.f32 %v3841, %v3845
        %v3848 = vsel %vm1486, %v3846, 0
        %3850 = vmatprep.subr.mxu0 0.0
        %3851 = vmatpush1.msra.mxu0 %v3746
        %3852 = vmatprep.subr.mxu0 0.0
        %3853 = vmatpush1.msra.mxu0 %v3751
        %3854 = vmatprep.subr.mxu0 0.0
        %3855 = vmatpush1.msra.mxu0 0.0
        %3856 = vmatprep.subr.mxu0 0.0
        %3857 = vmatpush1.msra.mxu0 0.0
        %3858 = vmatprep.subr.mxu0 0.0
        %3859 = vmatpush1.msra.mxu0 0.0
        %3860 = vmatprep.subr.mxu0 0.0
        %3861 = vmatpush1.msra.mxu0 0.0
        %3862 = vmatprep.subr.mxu0 0.0
        %3863 = vmatpush1.msra.mxu0 0.0
        %3864 = vmatprep.subr.mxu0 0.0
        %3865 = vmatpush1.msra.mxu0 0.0
        %3866 = vmatprep.subr.mxu0 0.0
        %3867 = vmatpush1.msra.mxu0 0.0
        %3868 = vmatprep.subr.mxu0 0.0
        %3869 = vmatpush1.msra.mxu0 0.0
        %3870 = vmatprep.subr.mxu0 0.0
        %3871 = vmatpush1.msra.mxu0 0.0
        %3872 = vmatprep.subr.mxu0 0.0
        %3873 = vmatpush1.msra.mxu0 0.0
        %3874 = vmatprep.subr.mxu0 0.0
        %3875 = vmatpush1.msra.mxu0 0.0
        %3876 = vmatprep.subr.mxu0 0.0
        %3877 = vmatpush1.msra.mxu0 0.0
        %3878 = vmatprep.subr.mxu0 0.0
        %3879 = vmatpush1.msra.mxu0 0.0
        %3880 = vmatprep.subr.mxu0 0.0
        %3881 = vmatpush1.msra.mxu0 0.0
        %3882 = vmatprep.subr.mxu0 0.0
        %3883 = vmatpush1.msra.mxu0 0.0
        %3884 = vmatprep.subr.mxu0 0.0
        %3885 = vmatpush1.msra.mxu0 0.0
        %3886 = vmatprep.subr.mxu0 0.0
        %3887 = vmatpush1.msra.mxu0 0.0
        %3888 = vmatprep.subr.mxu0 0.0
        %3889 = vmatpush1.msra.mxu0 0.0
        %3890 = vmatprep.subr.mxu0 0.0
        %3891 = vmatpush1.msra.mxu0 0.0
        %3892 = vmatprep.subr.mxu0 0.0
        %3893 = vmatpush1.msra.mxu0 0.0
        %3894 = vmatprep.subr.mxu0 0.0
        %3895 = vmatpush1.msra.mxu0 0.0
        %3896 = vmatprep.subr.mxu0 0.0
        %3897 = vmatpush1.msra.mxu0 0.0
        %3898 = vmatprep.subr.mxu0 0.0
        %3899 = vmatpush1.msra.mxu0 0.0
        %3900 = vmatprep.subr.mxu0 0.0
        %3901 = vmatpush1.msra.mxu0 0.0
        %3902 = vmatprep.subr.mxu0 0.0
        %3903 = vmatpush1.msra.mxu0 0.0
        %3904 = vmatprep.subr.mxu0 0.0
        %3905 = vmatpush1.msra.mxu0 0.0
        %3906 = vmatprep.subr.mxu0 0.0
        %3907 = vmatpush1.msra.mxu0 0.0
        %3908 = vmatprep.subr.mxu0 0.0
        %3909 = vmatpush1.msra.mxu0 0.0
        %3910 = vmatprep.subr.mxu0 0.0
        %3911 = vmatpush1.msra.mxu0 0.0
        %3912 = vmatprep.subr.mxu0 0.0
        %3913 = vmatpush1.msra.mxu0 0.0
        %3914 = vmatprep.mubr.f32.mxu0 0.0
        %3915 = vmatmul.mubr.f32.gmra.mrb[0].mxu0 %v3848
        %v3916 = vpop.f32.mrb[0].mxu0
        %v3917 = vadd.f32 0.0, %v3916
        %v3918 = vpop.f32.mrb[0].mxu0
        %3919 = vdwg.mxu0
        %v3920 = vld [vmem:[#allocation20] sm:$0xff]
        %v3921 = vld [vmem:[#allocation20 + $0x8] sm:$0xff]
        %3922 = vrot.lane.b32.xlu0 %v3555, 112
        %v3923 = vpop.permute.xlu0 %3922
        %3924 = vrot.lane.b32.xlu0 %v3648, 112
        %v3925 = vpop.permute.xlu0 %3924
        %3926 = vrot.lane.b32.xlu0 %v3653, 112
        %v3927 = vpop.permute.xlu0 %3926
        %v3928 = vsel %vm1486, %v3923, 0
        %v3930 = vsel %vm1486, %v3925, 0
        %v3932 = vsel %vm1486, %v3927, 0
        %3934 = vmatprep.subr.mxu0 0.0
        %3935 = vmatpush1.xpose.msra.mxu0 %v3930
        %3936 = vmatprep.subr.mxu0 0.0
        %3937 = vmatpush1.xpose.msra.mxu0 %v3932
        %3938 = vmatprep.subr.mxu0 0.0
        %3939 = vmatpush1.xpose.msra.mxu0 0.0
        %3940 = vmatprep.subr.mxu0 0.0
        %3941 = vmatpush1.xpose.msra.mxu0 0.0
        %3942 = vmatprep.subr.mxu0 0.0
        %3943 = vmatpush1.xpose.msra.mxu0 0.0
        %3944 = vmatprep.subr.mxu0 0.0
        %3945 = vmatpush1.xpose.msra.mxu0 0.0
        %3946 = vmatprep.subr.mxu0 0.0
        %3947 = vmatpush1.xpose.msra.mxu0 0.0
        %3948 = vmatprep.subr.mxu0 0.0
        %3949 = vmatpush1.xpose.msra.mxu0 0.0
        %3950 = vmatprep.subr.mxu0 0.0
        %3951 = vmatpush1.xpose.msra.mxu0 0.0
        %3952 = vmatprep.subr.mxu0 0.0
        %3953 = vmatpush1.xpose.msra.mxu0 0.0
        %3954 = vmatprep.subr.mxu0 0.0
        %3955 = vmatpush1.xpose.msra.mxu0 0.0
        %3956 = vmatprep.subr.mxu0 0.0
        %3957 = vmatpush1.xpose.msra.mxu0 0.0
        %3958 = vmatprep.subr.mxu0 0.0
        %3959 = vmatpush1.xpose.msra.mxu0 0.0
        %3960 = vmatprep.subr.mxu0 0.0
        %3961 = vmatpush1.xpose.msra.mxu0 0.0
        %3962 = vmatprep.subr.mxu0 0.0
        %3963 = vmatpush1.xpose.msra.mxu0 0.0
        %3964 = vmatprep.subr.mxu0 0.0
        %3965 = vmatpush1.xpose.msra.mxu0 0.0
        %3966 = vmatprep.subr.mxu0 0.0
        %3967 = vmatpush1.xpose.msra.mxu0 0.0
        %3968 = vmatprep.subr.mxu0 0.0
        %3969 = vmatpush1.xpose.msra.mxu0 0.0
        %3970 = vmatprep.subr.mxu0 0.0
        %3971 = vmatpush1.xpose.msra.mxu0 0.0
        %3972 = vmatprep.subr.mxu0 0.0
        %3973 = vmatpush1.xpose.msra.mxu0 0.0
        %3974 = vmatprep.subr.mxu0 0.0
        %3975 = vmatpush1.xpose.msra.mxu0 0.0
        %3976 = vmatprep.subr.mxu0 0.0
        %3977 = vmatpush1.xpose.msra.mxu0 0.0
        %3978 = vmatprep.subr.mxu0 0.0
        %3979 = vmatpush1.xpose.msra.mxu0 0.0
        %3980 = vmatprep.subr.mxu0 0.0
        %3981 = vmatpush1.xpose.msra.mxu0 0.0
        %3982 = vmatprep.subr.mxu0 0.0
        %3983 = vmatpush1.xpose.msra.mxu0 0.0
        %3984 = vmatprep.subr.mxu0 0.0
        %3985 = vmatpush1.xpose.msra.mxu0 0.0
        %3986 = vmatprep.subr.mxu0 0.0
        %3987 = vmatpush1.xpose.msra.mxu0 0.0
        %3988 = vmatprep.subr.mxu0 0.0
        %3989 = vmatpush1.xpose.msra.mxu0 0.0
        %3990 = vmatprep.subr.mxu0 0.0
        %3991 = vmatpush1.xpose.msra.mxu0 0.0
        %3992 = vmatprep.subr.mxu0 0.0
        %3993 = vmatpush1.xpose.msra.mxu0 0.0
        %3994 = vmatprep.subr.mxu0 0.0
        %3995 = vmatpush1.xpose.msra.mxu0 0.0
        %3996 = vmatprep.subr.mxu0 0.0
        %3997 = vmatpush1.xpose.msra.mxu0 0.0
        %3998 = vmatprep.mubr.f32.mxu0 0.0
        %3999 = vmatmul.mubr.f32.gmra.mrb[0].mxu0 %v3928
        %v4000 = vpop.f32.mrb[0].mxu0
        %v4001 = vadd.f32 0.0, %v4000
        %v4002 = vpop.f32.mrb[0].mxu0
        %4003 = vdwg.mxu0
        %v4004 = vmul.f32 %v4001, 0.25
        %v4005 = vadd.f32 %v4004, %v3834
        %v4006 = vsel %vm1486, %v4005, -inf
        %4007 = vmax.xlane.f32.xlu0 %v4006
        %v4008 = vpop.xlane.xlu0 %4007
        %v4009 = vsub.f32 %v4005, %v4008
        %v4010 = vmul.f32 %v4009, 1.442695
        %v4011 = vpow.pop %v4010
        %v4012 = vsel %vm1486, %v4011, 0.0
        %4013 = vadd.xlane.f32.xlu0 %v4012
        %v4014 = vpop.xlane.xlu0 %4013
        %v4015 = vrcp.pop %v4014
        %v4016 = vmul.f32 %v4011, %v4015
        %4019 = vrot.lane.b32.xlu0 %v3746, 112
        %v4020 = vpop.permute.xlu0 %4019
        %4021 = vrot.lane.b32.xlu0 %v3751, 112
        %v4022 = vpop.permute.xlu0 %4021
        %v4026 = vsel %vm1486, %v4016, 0
        %4028 = vmatprep.subr.mxu0 0.0
        %4029 = vmatpush1.msra.mxu0 %v4020
        %4030 = vmatprep.subr.mxu0 0.0
        %4031 = vmatpush1.msra.mxu0 %v4022
        %4032 = vmatprep.subr.mxu0 0.0
        %4033 = vmatpush1.msra.mxu0 0.0
        %4034 = vmatprep.subr.mxu0 0.0
        %4035 = vmatpush1.msra.mxu0 0.0
        %4036 = vmatprep.subr.mxu0 0.0
        %4037 = vmatpush1.msra.mxu0 0.0
        %4038 = vmatprep.subr.mxu0 0.0
        %4039 = vmatpush1.msra.mxu0 0.0
        %4040 = vmatprep.subr.mxu0 0.0
        %4041 = vmatpush1.msra.mxu0 0.0
        %4042 = vmatprep.subr.mxu0 0.0
        %4043 = vmatpush1.msra.mxu0 0.0
        %4044 = vmatprep.subr.mxu0 0.0
        %4045 = vmatpush1.msra.mxu0 0.0
        %4046 = vmatprep.subr.mxu0 0.0
        %4047 = vmatpush1.msra.mxu0 0.0
        %4048 = vmatprep.subr.mxu0 0.0
        %4049 = vmatpush1.msra.mxu0 0.0
        %4050 = vmatprep.subr.mxu0 0.0
        %4051 = vmatpush1.msra.mxu0 0.0
        %4052 = vmatprep.subr.mxu0 0.0
        %4053 = vmatpush1.msra.mxu0 0.0
        %4054 = vmatprep.subr.mxu0 0.0
        %4055 = vmatpush1.msra.mxu0 0.0
        %4056 = vmatprep.subr.mxu0 0.0
        %4057 = vmatpush1.msra.mxu0 0.0
        %4058 = vmatprep.subr.mxu0 0.0
        %4059 = vmatpush1.msra.mxu0 0.0
        %4060 = vmatprep.subr.mxu0 0.0
        %4061 = vmatpush1.msra.mxu0 0.0
        %4062 = vmatprep.subr.mxu0 0.0
        %4063 = vmatpush1.msra.mxu0 0.0
        %4064 = vmatprep.subr.mxu0 0.0
        %4065 = vmatpush1.msra.mxu0 0.0
        %4066 = vmatprep.subr.mxu0 0.0
        %4067 = vmatpush1.msra.mxu0 0.0
        %4068 = vmatprep.subr.mxu0 0.0
        %4069 = vmatpush1.msra.mxu0 0.0
        %4070 = vmatprep.subr.mxu0 0.0
        %4071 = vmatpush1.msra.mxu0 0.0
        %4072 = vmatprep.subr.mxu0 0.0
        %4073 = vmatpush1.msra.mxu0 0.0
        %4074 = vmatprep.subr.mxu0 0.0
        %4075 = vmatpush1.msra.mxu0 0.0
        %4076 = vmatprep.subr.mxu0 0.0
        %4077 = vmatpush1.msra.mxu0 0.0
        %4078 = vmatprep.subr.mxu0 0.0
        %4079 = vmatpush1.msra.mxu0 0.0
        %4080 = vmatprep.subr.mxu0 0.0
        %4081 = vmatpush1.msra.mxu0 0.0
        %4082 = vmatprep.subr.mxu0 0.0
        %4083 = vmatpush1.msra.mxu0 0.0
        %4084 = vmatprep.subr.mxu0 0.0
        %4085 = vmatpush1.msra.mxu0 0.0
        %4086 = vmatprep.subr.mxu0 0.0
        %4087 = vmatpush1.msra.mxu0 0.0
        %4088 = vmatprep.subr.mxu0 0.0
        %4089 = vmatpush1.msra.mxu0 0.0
        %4090 = vmatprep.subr.mxu0 0.0
        %4091 = vmatpush1.msra.mxu0 0.0
        %4092 = vmatprep.mubr.f32.mxu0 0.0
        %4093 = vmatmul.mubr.f32.gmra.mrb[0].mxu0 %v4026
        %v4094 = vpop.f32.mrb[0].mxu0
        %v4095 = vadd.f32 0.0, %v4094
        %v4096 = vpop.f32.mrb[0].mxu0
        %4097 = vdwg.mxu0
        %v4098 = vld [vmem:[#allocation20 + $0x10] sm:$0xff]
        %v4099 = vld [vmem:[#allocation20 + $0x18] sm:$0xff]
        %v4101 = vsel %vm1486, %v4095, 0
        %4103 = vmatprep.subr.mxu0 0.0
        %4104 = vmatpush1.msra.mxu0 %v4098
        %4105 = vmatprep.subr.mxu0 0.0
        %4106 = vmatpush1.msra.mxu0 %v4099
        %4107 = vmatprep.subr.mxu0 0.0
        %4108 = vmatpush1.msra.mxu0 0.0
        %4109 = vmatprep.subr.mxu0 0.0
        %4110 = vmatpush1.msra.mxu0 0.0
        %4111 = vmatprep.subr.mxu0 0.0
        %4112 = vmatpush1.msra.mxu0 0.0
        %4113 = vmatprep.subr.mxu0 0.0
        %4114 = vmatpush1.msra.mxu0 0.0
        %4115 = vmatprep.subr.mxu0 0.0
        %4116 = vmatpush1.msra.mxu0 0.0
        %4117 = vmatprep.subr.mxu0 0.0
        %4118 = vmatpush1.msra.mxu0 0.0
        %4119 = vmatprep.subr.mxu0 0.0
        %4120 = vmatpush1.msra.mxu0 0.0
        %4121 = vmatprep.subr.mxu0 0.0
        %4122 = vmatpush1.msra.mxu0 0.0
        %4123 = vmatprep.subr.mxu0 0.0
        %4124 = vmatpush1.msra.mxu0 0.0
        %4125 = vmatprep.subr.mxu0 0.0
        %4126 = vmatpush1.msra.mxu0 0.0
        %4127 = vmatprep.subr.mxu0 0.0
        %4128 = vmatpush1.msra.mxu0 0.0
        %4129 = vmatprep.subr.mxu0 0.0
        %4130 = vmatpush1.msra.mxu0 0.0
        %4131 = vmatprep.subr.mxu0 0.0
        %4132 = vmatpush1.msra.mxu0 0.0
        %4133 = vmatprep.subr.mxu0 0.0
        %4134 = vmatpush1.msra.mxu0 0.0
        %4135 = vmatprep.subr.mxu0 0.0
        %4136 = vmatpush1.msra.mxu0 0.0
        %4137 = vmatprep.subr.mxu0 0.0
        %4138 = vmatpush1.msra.mxu0 0.0
        %4139 = vmatprep.subr.mxu0 0.0
        %4140 = vmatpush1.msra.mxu0 0.0
        %4141 = vmatprep.subr.mxu0 0.0
        %4142 = vmatpush1.msra.mxu0 0.0
        %4143 = vmatprep.subr.mxu0 0.0
        %4144 = vmatpush1.msra.mxu0 0.0
        %4145 = vmatprep.subr.mxu0 0.0
        %4146 = vmatpush1.msra.mxu0 0.0
        %4147 = vmatprep.subr.mxu0 0.0
        %4148 = vmatpush1.msra.mxu0 0.0
        %4149 = vmatprep.subr.mxu0 0.0
        %4150 = vmatpush1.msra.mxu0 0.0
        %4151 = vmatprep.subr.mxu0 0.0
        %4152 = vmatpush1.msra.mxu0 0.0
        %4153 = vmatprep.subr.mxu0 0.0
        %4154 = vmatpush1.msra.mxu0 0.0
        %4155 = vmatprep.subr.mxu0 0.0
        %4156 = vmatpush1.msra.mxu0 0.0
        %4157 = vmatprep.subr.mxu0 0.0
        %4158 = vmatpush1.msra.mxu0 0.0
        %4159 = vmatprep.subr.mxu0 0.0
        %4160 = vmatpush1.msra.mxu0 0.0
        %4161 = vmatprep.subr.mxu0 0.0
        %4162 = vmatpush1.msra.mxu0 0.0
        %4163 = vmatprep.subr.mxu0 0.0
        %4164 = vmatpush1.msra.mxu0 0.0
        %4165 = vmatprep.subr.mxu0 0.0
        %4166 = vmatpush1.msra.mxu0 0.0
        %4167 = vmatprep.mubr.f32.mxu0 0.0
        %4168 = vmatmul.mubr.f32.gmra.mrb[0].mxu0 %v4101
        %v4169 = vpop.f32.mrb[0].mxu0
        %v4170 = vadd.f32 0.0, %v4169
        %v4171 = vpop.f32.mrb[0].mxu0
        %4172 = vdwg.mxu0
        %v4174 = vsel %vm1486, %v3917, 0
        %4176 = vmatprep.subr.mxu0 0.0
        %4177 = vmatpush1.msra.mxu0 %v3920
        %4178 = vmatprep.subr.mxu0 0.0
        %4179 = vmatpush1.msra.mxu0 %v3921
        %4180 = vmatprep.subr.mxu0 0.0
        %4181 = vmatpush1.msra.mxu0 0.0
        %4182 = vmatprep.subr.mxu0 0.0
        %4183 = vmatpush1.msra.mxu0 0.0
        %4184 = vmatprep.subr.mxu0 0.0
        %4185 = vmatpush1.msra.mxu0 0.0
        %4186 = vmatprep.subr.mxu0 0.0
        %4187 = vmatpush1.msra.mxu0 0.0
        %4188 = vmatprep.subr.mxu0 0.0
        %4189 = vmatpush1.msra.mxu0 0.0
        %4190 = vmatprep.subr.mxu0 0.0
        %4191 = vmatpush1.msra.mxu0 0.0
        %4192 = vmatprep.subr.mxu0 0.0
        %4193 = vmatpush1.msra.mxu0 0.0
        %4194 = vmatprep.subr.mxu0 0.0
        %4195 = vmatpush1.msra.mxu0 0.0
        %4196 = vmatprep.subr.mxu0 0.0
        %4197 = vmatpush1.msra.mxu0 0.0
        %4198 = vmatprep.subr.mxu0 0.0
        %4199 = vmatpush1.msra.mxu0 0.0
        %4200 = vmatprep.subr.mxu0 0.0
        %4201 = vmatpush1.msra.mxu0 0.0
        %4202 = vmatprep.subr.mxu0 0.0
        %4203 = vmatpush1.msra.mxu0 0.0
        %4204 = vmatprep.subr.mxu0 0.0
        %4205 = vmatpush1.msra.mxu0 0.0
        %4206 = vmatprep.subr.mxu0 0.0
        %4207 = vmatpush1.msra.mxu0 0.0
        %4208 = vmatprep.subr.mxu0 0.0
        %4209 = vmatpush1.msra.mxu0 0.0
        %4210 = vmatprep.subr.mxu0 0.0
        %4211 = vmatpush1.msra.mxu0 0.0
        %4212 = vmatprep.subr.mxu0 0.0
        %4213 = vmatpush1.msra.mxu0 0.0
        %4214 = vmatprep.subr.mxu0 0.0
        %4215 = vmatpush1.msra.mxu0 0.0
        %4216 = vmatprep.subr.mxu0 0.0
        %4217 = vmatpush1.msra.mxu0 0.0
        %4218 = vmatprep.subr.mxu0 0.0
        %4219 = vmatpush1.msra.mxu0 0.0
        %4220 = vmatprep.subr.mxu0 0.0
        %4221 = vmatpush1.msra.mxu0 0.0
        %4222 = vmatprep.subr.mxu0 0.0
        %4223 = vmatpush1.msra.mxu0 0.0
        %4224 = vmatprep.subr.mxu0 0.0
        %4225 = vmatpush1.msra.mxu0 0.0
        %4226 = vmatprep.subr.mxu0 0.0
        %4227 = vmatpush1.msra.mxu0 0.0
        %4228 = vmatprep.subr.mxu0 0.0
        %4229 = vmatpush1.msra.mxu0 0.0
        %4230 = vmatprep.subr.mxu0 0.0
        %4231 = vmatpush1.msra.mxu0 0.0
        %4232 = vmatprep.subr.mxu0 0.0
        %4233 = vmatpush1.msra.mxu0 0.0
        %4234 = vmatprep.subr.mxu0 0.0
        %4235 = vmatpush1.msra.mxu0 0.0
        %4236 = vmatprep.subr.mxu0 0.0
        %4237 = vmatpush1.msra.mxu0 0.0
        %4238 = vmatprep.subr.mxu0 0.0
        %4239 = vmatpush1.msra.mxu0 0.0
        %4240 = vmatprep.mubr.f32.mxu0 0.0
        %4241 = vmatmul.mubr.f32.gmra.mrb[0].mxu0 %v4174
        %v4242 = vpop.f32.mrb[0].mxu0
        %v4243 = vadd.f32 %v4170, %v4242
        %v4244 = vpop.f32.mrb[0].mxu0
        %4245 = vdwg.mxu0
        %4246 = vrot.lane.b32.xlu0 %v3555, 96
        %v4247 = vpop.permute.xlu0 %4246
        %4248 = vrot.lane.b32.xlu0 %v3648, 96
        %v4249 = vpop.permute.xlu0 %4248
        %4250 = vrot.lane.b32.xlu0 %v3653, 96
        %v4251 = vpop.permute.xlu0 %4250
        %v4252 = vsel %vm1486, %v4247, 0
        %v4254 = vsel %vm1486, %v4249, 0
        %v4256 = vsel %vm1486, %v4251, 0
        %4258 = vmatprep.subr.mxu0 0.0
        %4259 = vmatpush1.xpose.msra.mxu0 %v4254
        %4260 = vmatprep.subr.mxu0 0.0
        %4261 = vmatpush1.xpose.msra.mxu0 %v4256
        %4262 = vmatprep.subr.mxu0 0.0
        %4263 = vmatpush1.xpose.msra.mxu0 0.0
        %4264 = vmatprep.subr.mxu0 0.0
        %4265 = vmatpush1.xpose.msra.mxu0 0.0
        %4266 = vmatprep.subr.mxu0 0.0
        %4267 = vmatpush1.xpose.msra.mxu0 0.0
        %4268 = vmatprep.subr.mxu0 0.0
        %4269 = vmatpush1.xpose.msra.mxu0 0.0
        %4270 = vmatprep.subr.mxu0 0.0
        %4271 = vmatpush1.xpose.msra.mxu0 0.0
        %4272 = vmatprep.subr.mxu0 0.0
        %4273 = vmatpush1.xpose.msra.mxu0 0.0
        %4274 = vmatprep.subr.mxu0 0.0
        %4275 = vmatpush1.xpose.msra.mxu0 0.0
        %4276 = vmatprep.subr.mxu0 0.0
        %4277 = vmatpush1.xpose.msra.mxu0 0.0
        %4278 = vmatprep.subr.mxu0 0.0
        %4279 = vmatpush1.xpose.msra.mxu0 0.0
        %4280 = vmatprep.subr.mxu0 0.0
        %4281 = vmatpush1.xpose.msra.mxu0 0.0
        %4282 = vmatprep.subr.mxu0 0.0
        %4283 = vmatpush1.xpose.msra.mxu0 0.0
        %4284 = vmatprep.subr.mxu0 0.0
        %4285 = vmatpush1.xpose.msra.mxu0 0.0
        %4286 = vmatprep.subr.mxu0 0.0
        %4287 = vmatpush1.xpose.msra.mxu0 0.0
        %4288 = vmatprep.subr.mxu0 0.0
        %4289 = vmatpush1.xpose.msra.mxu0 0.0
        %4290 = vmatprep.subr.mxu0 0.0
        %4291 = vmatpush1.xpose.msra.mxu0 0.0
        %4292 = vmatprep.subr.mxu0 0.0
        %4293 = vmatpush1.xpose.msra.mxu0 0.0
        %4294 = vmatprep.subr.mxu0 0.0
        %4295 = vmatpush1.xpose.msra.mxu0 0.0
        %4296 = vmatprep.subr.mxu0 0.0
        %4297 = vmatpush1.xpose.msra.mxu0 0.0
        %4298 = vmatprep.subr.mxu0 0.0
        %4299 = vmatpush1.xpose.msra.mxu0 0.0
        %4300 = vmatprep.subr.mxu0 0.0
        %4301 = vmatpush1.xpose.msra.mxu0 0.0
        %4302 = vmatprep.subr.mxu0 0.0
        %4303 = vmatpush1.xpose.msra.mxu0 0.0
        %4304 = vmatprep.subr.mxu0 0.0
        %4305 = vmatpush1.xpose.msra.mxu0 0.0
        %4306 = vmatprep.subr.mxu0 0.0
        %4307 = vmatpush1.xpose.msra.mxu0 0.0
        %4308 = vmatprep.subr.mxu0 0.0
        %4309 = vmatpush1.xpose.msra.mxu0 0.0
        %4310 = vmatprep.subr.mxu0 0.0
        %4311 = vmatpush1.xpose.msra.mxu0 0.0
        %4312 = vmatprep.subr.mxu0 0.0
        %4313 = vmatpush1.xpose.msra.mxu0 0.0
        %4314 = vmatprep.subr.mxu0 0.0
        %4315 = vmatpush1.xpose.msra.mxu0 0.0
        %4316 = vmatprep.subr.mxu0 0.0
        %4317 = vmatpush1.xpose.msra.mxu0 0.0
        %4318 = vmatprep.subr.mxu0 0.0
        %4319 = vmatpush1.xpose.msra.mxu0 0.0
        %4320 = vmatprep.subr.mxu0 0.0
        %4321 = vmatpush1.xpose.msra.mxu0 0.0
        %4322 = vmatprep.mubr.f32.mxu0 0.0
        %4323 = vmatmul.mubr.f32.gmra.mrb[0].mxu0 %v4252
        %v4324 = vpop.f32.mrb[0].mxu0
        %v4325 = vadd.f32 0.0, %v4324
        %v4326 = vpop.f32.mrb[0].mxu0
        %4327 = vdwg.mxu0
        %v4328 = vmul.f32 %v4325, 0.25
        %v4329 = vadd.f32 %v4328, %v3834
        %v4330 = vsel %vm1486, %v4329, -inf
        %4331 = vmax.xlane.f32.xlu0 %v4330
        %v4332 = vpop.xlane.xlu0 %4331
        %v4333 = vsub.f32 %v4329, %v4332
        %v4334 = vmul.f32 %v4333, 1.442695
        %v4335 = vpow.pop %v4334
        %v4336 = vsel %vm1486, %v4335, 0.0
        %4337 = vadd.xlane.f32.xlu0 %v4336
        %v4338 = vpop.xlane.xlu0 %4337
        %v4339 = vrcp.pop %v4338
        %v4340 = vmul.f32 %v4335, %v4339
        %4341 = vrot.lane.b32.xlu0 %v3746, 96
        %v4342 = vpop.permute.xlu0 %4341
        %4343 = vrot.lane.b32.xlu0 %v3751, 96
        %v4344 = vpop.permute.xlu0 %4343
        %v4348 = vsel %vm1486, %v4340, 0
        %4350 = vmatprep.subr.mxu0 0.0
        %4351 = vmatpush1.msra.mxu0 %v4342
        %4352 = vmatprep.subr.mxu0 0.0
        %4353 = vmatpush1.msra.mxu0 %v4344
        %4354 = vmatprep.subr.mxu0 0.0
        %4355 = vmatpush1.msra.mxu0 0.0
        %4356 = vmatprep.subr.mxu0 0.0
        %4357 = vmatpush1.msra.mxu0 0.0
        %4358 = vmatprep.subr.mxu0 0.0
        %4359 = vmatpush1.msra.mxu0 0.0
        %4360 = vmatprep.subr.mxu0 0.0
        %4361 = vmatpush1.msra.mxu0 0.0
        %4362 = vmatprep.subr.mxu0 0.0
        %4363 = vmatpush1.msra.mxu0 0.0
        %4364 = vmatprep.subr.mxu0 0.0
        %4365 = vmatpush1.msra.mxu0 0.0
        %4366 = vmatprep.subr.mxu0 0.0
        %4367 = vmatpush1.msra.mxu0 0.0
        %4368 = vmatprep.subr.mxu0 0.0
        %4369 = vmatpush1.msra.mxu0 0.0
        %4370 = vmatprep.subr.mxu0 0.0
        %4371 = vmatpush1.msra.mxu0 0.0
        %4372 = vmatprep.subr.mxu0 0.0
        %4373 = vmatpush1.msra.mxu0 0.0
        %4374 = vmatprep.subr.mxu0 0.0
        %4375 = vmatpush1.msra.mxu0 0.0
        %4376 = vmatprep.subr.mxu0 0.0
        %4377 = vmatpush1.msra.mxu0 0.0
        %4378 = vmatprep.subr.mxu0 0.0
        %4379 = vmatpush1.msra.mxu0 0.0
        %4380 = vmatprep.subr.mxu0 0.0
        %4381 = vmatpush1.msra.mxu0 0.0
        %4382 = vmatprep.subr.mxu0 0.0
        %4383 = vmatpush1.msra.mxu0 0.0
        %4384 = vmatprep.subr.mxu0 0.0
        %4385 = vmatpush1.msra.mxu0 0.0
        %4386 = vmatprep.subr.mxu0 0.0
        %4387 = vmatpush1.msra.mxu0 0.0
        %4388 = vmatprep.subr.mxu0 0.0
        %4389 = vmatpush1.msra.mxu0 0.0
        %4390 = vmatprep.subr.mxu0 0.0
        %4391 = vmatpush1.msra.mxu0 0.0
        %4392 = vmatprep.subr.mxu0 0.0
        %4393 = vmatpush1.msra.mxu0 0.0
        %4394 = vmatprep.subr.mxu0 0.0
        %4395 = vmatpush1.msra.mxu0 0.0
        %4396 = vmatprep.subr.mxu0 0.0
        %4397 = vmatpush1.msra.mxu0 0.0
        %4398 = vmatprep.subr.mxu0 0.0
        %4399 = vmatpush1.msra.mxu0 0.0
        %4400 = vmatprep.subr.mxu0 0.0
        %4401 = vmatpush1.msra.mxu0 0.0
        %4402 = vmatprep.subr.mxu0 0.0
        %4403 = vmatpush1.msra.mxu0 0.0
        %4404 = vmatprep.subr.mxu0 0.0
        %4405 = vmatpush1.msra.mxu0 0.0
        %4406 = vmatprep.subr.mxu0 0.0
        %4407 = vmatpush1.msra.mxu0 0.0
        %4408 = vmatprep.subr.mxu0 0.0
        %4409 = vmatpush1.msra.mxu0 0.0
        %4410 = vmatprep.subr.mxu0 0.0
        %4411 = vmatpush1.msra.mxu0 0.0
        %4412 = vmatprep.subr.mxu0 0.0
        %4413 = vmatpush1.msra.mxu0 0.0
        %4414 = vmatprep.mubr.f32.mxu0 0.0
        %4415 = vmatmul.mubr.f32.gmra.mrb[0].mxu0 %v4348
        %v4416 = vpop.f32.mrb[0].mxu0
        %v4417 = vadd.f32 0.0, %v4416
        %v4418 = vpop.f32.mrb[0].mxu0
        %4419 = vdwg.mxu0
        %v4420 = vld [vmem:[#allocation20 + $0x20] sm:$0xff]
        %v4421 = vld [vmem:[#allocation20 + $0x28] sm:$0xff]
        %v4423 = vsel %vm1486, %v4417, 0
        %4425 = vmatprep.subr.mxu0 0.0
        %4426 = vmatpush1.msra.mxu0 %v4420
        %4427 = vmatprep.subr.mxu0 0.0
        %4428 = vmatpush1.msra.mxu0 %v4421
        %4429 = vmatprep.subr.mxu0 0.0
        %4430 = vmatpush1.msra.mxu0 0.0
        %4431 = vmatprep.subr.mxu0 0.0
        %4432 = vmatpush1.msra.mxu0 0.0
        %4433 = vmatprep.subr.mxu0 0.0
        %4434 = vmatpush1.msra.mxu0 0.0
        %4435 = vmatprep.subr.mxu0 0.0
        %4436 = vmatpush1.msra.mxu0 0.0
        %4437 = vmatprep.subr.mxu0 0.0
        %4438 = vmatpush1.msra.mxu0 0.0
        %4439 = vmatprep.subr.mxu0 0.0
        %4440 = vmatpush1.msra.mxu0 0.0
        %4441 = vmatprep.subr.mxu0 0.0
        %4442 = vmatpush1.msra.mxu0 0.0
        %4443 = vmatprep.subr.mxu0 0.0
        %4444 = vmatpush1.msra.mxu0 0.0
        %4445 = vmatprep.subr.mxu0 0.0
        %4446 = vmatpush1.msra.mxu0 0.0
        %4447 = vmatprep.subr.mxu0 0.0
        %4448 = vmatpush1.msra.mxu0 0.0
        %4449 = vmatprep.subr.mxu0 0.0
        %4450 = vmatpush1.msra.mxu0 0.0
        %4451 = vmatprep.subr.mxu0 0.0
        %4452 = vmatpush1.msra.mxu0 0.0
        %4453 = vmatprep.subr.mxu0 0.0
        %4454 = vmatpush1.msra.mxu0 0.0
        %4455 = vmatprep.subr.mxu0 0.0
        %4456 = vmatpush1.msra.mxu0 0.0
        %4457 = vmatprep.subr.mxu0 0.0
        %4458 = vmatpush1.msra.mxu0 0.0
        %4459 = vmatprep.subr.mxu0 0.0
        %4460 = vmatpush1.msra.mxu0 0.0
        %4461 = vmatprep.subr.mxu0 0.0
        %4462 = vmatpush1.msra.mxu0 0.0
        %4463 = vmatprep.subr.mxu0 0.0
        %4464 = vmatpush1.msra.mxu0 0.0
        %4465 = vmatprep.subr.mxu0 0.0
        %4466 = vmatpush1.msra.mxu0 0.0
        %4467 = vmatprep.subr.mxu0 0.0
        %4468 = vmatpush1.msra.mxu0 0.0
        %4469 = vmatprep.subr.mxu0 0.0
        %4470 = vmatpush1.msra.mxu0 0.0
        %4471 = vmatprep.subr.mxu0 0.0
        %4472 = vmatpush1.msra.mxu0 0.0
        %4473 = vmatprep.subr.mxu0 0.0
        %4474 = vmatpush1.msra.mxu0 0.0
        %4475 = vmatprep.subr.mxu0 0.0
        %4476 = vmatpush1.msra.mxu0 0.0
        %4477 = vmatprep.subr.mxu0 0.0
        %4478 = vmatpush1.msra.mxu0 0.0
        %4479 = vmatprep.subr.mxu0 0.0
        %4480 = vmatpush1.msra.mxu0 0.0
        %4481 = vmatprep.subr.mxu0 0.0
        %4482 = vmatpush1.msra.mxu0 0.0
        %4483 = vmatprep.subr.mxu0 0.0
        %4484 = vmatpush1.msra.mxu0 0.0
        %4485 = vmatprep.subr.mxu0 0.0
        %4486 = vmatpush1.msra.mxu0 0.0
        %4487 = vmatprep.subr.mxu0 0.0
        %4488 = vmatpush1.msra.mxu0 0.0
        %4489 = vmatprep.mubr.f32.mxu0 0.0
        %4490 = vmatmul.mubr.f32.gmra.mrb[0].mxu0 %v4423
        %v4491 = vpop.f32.mrb[0].mxu0
        %v4492 = vadd.f32 0.0, %v4491
        %v4493 = vpop.f32.mrb[0].mxu0
        %4494 = vdwg.mxu0
        %v4495 = vadd.f32 %v4243, %v4492
        %4496 = vrot.lane.b32.xlu0 %v3555, 80
        %v4497 = vpop.permute.xlu0 %4496
        %4498 = vrot.lane.b32.xlu0 %v3648, 80
        %v4499 = vpop.permute.xlu0 %4498
        %4500 = vrot.lane.b32.xlu0 %v3653, 80
        %v4501 = vpop.permute.xlu0 %4500
        %v4502 = vsel %vm1486, %v4497, 0
        %v4504 = vsel %vm1486, %v4499, 0
        %v4506 = vsel %vm1486, %v4501, 0
        %4508 = vmatprep.subr.mxu0 0.0
        %4509 = vmatpush1.xpose.msra.mxu0 %v4504
        %4510 = vmatprep.subr.mxu0 0.0
        %4511 = vmatpush1.xpose.msra.mxu0 %v4506
        %4512 = vmatprep.subr.mxu0 0.0
        %4513 = vmatpush1.xpose.msra.mxu0 0.0
        %4514 = vmatprep.subr.mxu0 0.0
        %4515 = vmatpush1.xpose.msra.mxu0 0.0
        %4516 = vmatprep.subr.mxu0 0.0
        %4517 = vmatpush1.xpose.msra.mxu0 0.0
        %4518 = vmatprep.subr.mxu0 0.0
        %4519 = vmatpush1.xpose.msra.mxu0 0.0
        %4520 = vmatprep.subr.mxu0 0.0
        %4521 = vmatpush1.xpose.msra.mxu0 0.0
        %4522 = vmatprep.subr.mxu0 0.0
        %4523 = vmatpush1.xpose.msra.mxu0 0.0
        %4524 = vmatprep.subr.mxu0 0.0
        %4525 = vmatpush1.xpose.msra.mxu0 0.0
        %4526 = vmatprep.subr.mxu0 0.0
        %4527 = vmatpush1.xpose.msra.mxu0 0.0
        %4528 = vmatprep.subr.mxu0 0.0
        %4529 = vmatpush1.xpose.msra.mxu0 0.0
        %4530 = vmatprep.subr.mxu0 0.0
        %4531 = vmatpush1.xpose.msra.mxu0 0.0
        %4532 = vmatprep.subr.mxu0 0.0
        %4533 = vmatpush1.xpose.msra.mxu0 0.0
        %4534 = vmatprep.subr.mxu0 0.0
        %4535 = vmatpush1.xpose.msra.mxu0 0.0
        %4536 = vmatprep.subr.mxu0 0.0
        %4537 = vmatpush1.xpose.msra.mxu0 0.0
        %4538 = vmatprep.subr.mxu0 0.0
        %4539 = vmatpush1.xpose.msra.mxu0 0.0
        %4540 = vmatprep.subr.mxu0 0.0
        %4541 = vmatpush1.xpose.msra.mxu0 0.0
        %4542 = vmatprep.subr.mxu0 0.0
        %4543 = vmatpush1.xpose.msra.mxu0 0.0
        %4544 = vmatprep.subr.mxu0 0.0
        %4545 = vmatpush1.xpose.msra.mxu0 0.0
        %4546 = vmatprep.subr.mxu0 0.0
        %4547 = vmatpush1.xpose.msra.mxu0 0.0
        %4548 = vmatprep.subr.mxu0 0.0
        %4549 = vmatpush1.xpose.msra.mxu0 0.0
        %4550 = vmatprep.subr.mxu0 0.0
        %4551 = vmatpush1.xpose.msra.mxu0 0.0
        %4552 = vmatprep.subr.mxu0 0.0
        %4553 = vmatpush1.xpose.msra.mxu0 0.0
        %4554 = vmatprep.subr.mxu0 0.0
        %4555 = vmatpush1.xpose.msra.mxu0 0.0
        %4556 = vmatprep.subr.mxu0 0.0
        %4557 = vmatpush1.xpose.msra.mxu0 0.0
        %4558 = vmatprep.subr.mxu0 0.0
        %4559 = vmatpush1.xpose.msra.mxu0 0.0
        %4560 = vmatprep.subr.mxu0 0.0
        %4561 = vmatpush1.xpose.msra.mxu0 0.0
        %4562 = vmatprep.subr.mxu0 0.0
        %4563 = vmatpush1.xpose.msra.mxu0 0.0
        %4564 = vmatprep.subr.mxu0 0.0
        %4565 = vmatpush1.xpose.msra.mxu0 0.0
        %4566 = vmatprep.subr.mxu0 0.0
        %4567 = vmatpush1.xpose.msra.mxu0 0.0
        %4568 = vmatprep.subr.mxu0 0.0
        %4569 = vmatpush1.xpose.msra.mxu0 0.0
        %4570 = vmatprep.subr.mxu0 0.0
        %4571 = vmatpush1.xpose.msra.mxu0 0.0
        %4572 = vmatprep.mubr.f32.mxu0 0.0
        %4573 = vmatmul.mubr.f32.gmra.mrb[0].mxu0 %v4502
        %v4574 = vpop.f32.mrb[0].mxu0
        %v4575 = vadd.f32 0.0, %v4574
        %v4576 = vpop.f32.mrb[0].mxu0
        %4577 = vdwg.mxu0
        %v4578 = vmul.f32 %v4575, 0.25
        %v4579 = vadd.f32 %v4578, %v3834
        %v4580 = vsel %vm1486, %v4579, -inf
        %4581 = vmax.xlane.f32.xlu0 %v4580
        %v4582 = vpop.xlane.xlu0 %4581
        %v4583 = vsub.f32 %v4579, %v4582
        %v4584 = vmul.f32 %v4583, 1.442695
        %v4585 = vpow.pop %v4584
        %v4586 = vsel %vm1486, %v4585, 0.0
        %4587 = vadd.xlane.f32.xlu0 %v4586
        %v4588 = vpop.xlane.xlu0 %4587
        %v4589 = vrcp.pop %v4588
        %v4590 = vmul.f32 %v4585, %v4589
        %4591 = vrot.lane.b32.xlu0 %v3746, 80
        %v4592 = vpop.permute.xlu0 %4591
        %4593 = vrot.lane.b32.xlu0 %v3751, 80
        %v4594 = vpop.permute.xlu0 %4593
        %v4598 = vsel %vm1486, %v4590, 0
        %4600 = vmatprep.subr.mxu0 0.0
        %4601 = vmatpush1.msra.mxu0 %v4592
        %4602 = vmatprep.subr.mxu0 0.0
        %4603 = vmatpush1.msra.mxu0 %v4594
        %4604 = vmatprep.subr.mxu0 0.0
        %4605 = vmatpush1.msra.mxu0 0.0
        %4606 = vmatprep.subr.mxu0 0.0
        %4607 = vmatpush1.msra.mxu0 0.0
        %4608 = vmatprep.subr.mxu0 0.0
        %4609 = vmatpush1.msra.mxu0 0.0
        %4610 = vmatprep.subr.mxu0 0.0
        %4611 = vmatpush1.msra.mxu0 0.0
        %4612 = vmatprep.subr.mxu0 0.0
        %4613 = vmatpush1.msra.mxu0 0.0
        %4614 = vmatprep.subr.mxu0 0.0
        %4615 = vmatpush1.msra.mxu0 0.0
        %4616 = vmatprep.subr.mxu0 0.0
        %4617 = vmatpush1.msra.mxu0 0.0
        %4618 = vmatprep.subr.mxu0 0.0
        %4619 = vmatpush1.msra.mxu0 0.0
        %4620 = vmatprep.subr.mxu0 0.0
        %4621 = vmatpush1.msra.mxu0 0.0
        %4622 = vmatprep.subr.mxu0 0.0
        %4623 = vmatpush1.msra.mxu0 0.0
        %4624 = vmatprep.subr.mxu0 0.0
        %4625 = vmatpush1.msra.mxu0 0.0
        %4626 = vmatprep.subr.mxu0 0.0
        %4627 = vmatpush1.msra.mxu0 0.0
        %4628 = vmatprep.subr.mxu0 0.0
        %4629 = vmatpush1.msra.mxu0 0.0
        %4630 = vmatprep.subr.mxu0 0.0
        %4631 = vmatpush1.msra.mxu0 0.0
        %4632 = vmatprep.subr.mxu0 0.0
        %4633 = vmatpush1.msra.mxu0 0.0
        %4634 = vmatprep.subr.mxu0 0.0
        %4635 = vmatpush1.msra.mxu0 0.0
        %4636 = vmatprep.subr.mxu0 0.0
        %4637 = vmatpush1.msra.mxu0 0.0
        %4638 = vmatprep.subr.mxu0 0.0
        %4639 = vmatpush1.msra.mxu0 0.0
        %4640 = vmatprep.subr.mxu0 0.0
        %4641 = vmatpush1.msra.mxu0 0.0
        %4642 = vmatprep.subr.mxu0 0.0
        %4643 = vmatpush1.msra.mxu0 0.0
        %4644 = vmatprep.subr.mxu0 0.0
        %4645 = vmatpush1.msra.mxu0 0.0
        %4646 = vmatprep.subr.mxu0 0.0
        %4647 = vmatpush1.msra.mxu0 0.0
        %4648 = vmatprep.subr.mxu0 0.0
        %4649 = vmatpush1.msra.mxu0 0.0
        %4650 = vmatprep.subr.mxu0 0.0
        %4651 = vmatpush1.msra.mxu0 0.0
        %4652 = vmatprep.subr.mxu0 0.0
        %4653 = vmatpush1.msra.mxu0 0.0
        %4654 = vmatprep.subr.mxu0 0.0
        %4655 = vmatpush1.msra.mxu0 0.0
        %4656 = vmatprep.subr.mxu0 0.0
        %4657 = vmatpush1.msra.mxu0 0.0
        %4658 = vmatprep.subr.mxu0 0.0
        %4659 = vmatpush1.msra.mxu0 0.0
        %4660 = vmatprep.subr.mxu0 0.0
        %4661 = vmatpush1.msra.mxu0 0.0
        %4662 = vmatprep.subr.mxu0 0.0
        %4663 = vmatpush1.msra.mxu0 0.0
        %4664 = vmatprep.mubr.f32.mxu0 0.0
        %4665 = vmatmul.mubr.f32.gmra.mrb[0].mxu0 %v4598
        %v4666 = vpop.f32.mrb[0].mxu0
        %v4667 = vadd.f32 0.0, %v4666
        %v4668 = vpop.f32.mrb[0].mxu0
        %4669 = vdwg.mxu0
        %v4670 = vld [vmem:[#allocation20 + $0x30] sm:$0xff]
        %v4671 = vld [vmem:[#allocation20 + $0x38] sm:$0xff]
        %v4673 = vsel %vm1486, %v4667, 0
        %4675 = vmatprep.subr.mxu0 0.0
        %4676 = vmatpush1.msra.mxu0 %v4670
        %4677 = vmatprep.subr.mxu0 0.0
        %4678 = vmatpush1.msra.mxu0 %v4671
        %4679 = vmatprep.subr.mxu0 0.0
        %4680 = vmatpush1.msra.mxu0 0.0
        %4681 = vmatprep.subr.mxu0 0.0
        %4682 = vmatpush1.msra.mxu0 0.0
        %4683 = vmatprep.subr.mxu0 0.0
        %4684 = vmatpush1.msra.mxu0 0.0
        %4685 = vmatprep.subr.mxu0 0.0
        %4686 = vmatpush1.msra.mxu0 0.0
        %4687 = vmatprep.subr.mxu0 0.0
        %4688 = vmatpush1.msra.mxu0 0.0
        %4689 = vmatprep.subr.mxu0 0.0
        %4690 = vmatpush1.msra.mxu0 0.0
        %4691 = vmatprep.subr.mxu0 0.0
        %4692 = vmatpush1.msra.mxu0 0.0
        %4693 = vmatprep.subr.mxu0 0.0
        %4694 = vmatpush1.msra.mxu0 0.0
        %4695 = vmatprep.subr.mxu0 0.0
        %4696 = vmatpush1.msra.mxu0 0.0
        %4697 = vmatprep.subr.mxu0 0.0
        %4698 = vmatpush1.msra.mxu0 0.0
        %4699 = vmatprep.subr.mxu0 0.0
        %4700 = vmatpush1.msra.mxu0 0.0
        %4701 = vmatprep.subr.mxu0 0.0
        %4702 = vmatpush1.msra.mxu0 0.0
        %4703 = vmatprep.subr.mxu0 0.0
        %4704 = vmatpush1.msra.mxu0 0.0
        %4705 = vmatprep.subr.mxu0 0.0
        %4706 = vmatpush1.msra.mxu0 0.0
        %4707 = vmatprep.subr.mxu0 0.0
        %4708 = vmatpush1.msra.mxu0 0.0
        %4709 = vmatprep.subr.mxu0 0.0
        %4710 = vmatpush1.msra.mxu0 0.0
        %4711 = vmatprep.subr.mxu0 0.0
        %4712 = vmatpush1.msra.mxu0 0.0
        %4713 = vmatprep.subr.mxu0 0.0
        %4714 = vmatpush1.msra.mxu0 0.0
        %4715 = vmatprep.subr.mxu0 0.0
        %4716 = vmatpush1.msra.mxu0 0.0
        %4717 = vmatprep.subr.mxu0 0.0
        %4718 = vmatpush1.msra.mxu0 0.0
        %4719 = vmatprep.subr.mxu0 0.0
        %4720 = vmatpush1.msra.mxu0 0.0
        %4721 = vmatprep.subr.mxu0 0.0
        %4722 = vmatpush1.msra.mxu0 0.0
        %4723 = vmatprep.subr.mxu0 0.0
        %4724 = vmatpush1.msra.mxu0 0.0
        %4725 = vmatprep.subr.mxu0 0.0
        %4726 = vmatpush1.msra.mxu0 0.0
        %4727 = vmatprep.subr.mxu0 0.0
        %4728 = vmatpush1.msra.mxu0 0.0
        %4729 = vmatprep.subr.mxu0 0.0
        %4730 = vmatpush1.msra.mxu0 0.0
        %4731 = vmatprep.subr.mxu0 0.0
        %4732 = vmatpush1.msra.mxu0 0.0
        %4733 = vmatprep.subr.mxu0 0.0
        %4734 = vmatpush1.msra.mxu0 0.0
        %4735 = vmatprep.subr.mxu0 0.0
        %4736 = vmatpush1.msra.mxu0 0.0
        %4737 = vmatprep.subr.mxu0 0.0
        %4738 = vmatpush1.msra.mxu0 0.0
        %4739 = vmatprep.mubr.f32.mxu0 0.0
        %4740 = vmatmul.mubr.f32.gmra.mrb[0].mxu0 %v4673
        %v4741 = vpop.f32.mrb[0].mxu0
        %v4742 = vadd.f32 0.0, %v4741
        %v4743 = vpop.f32.mrb[0].mxu0
        %4744 = vdwg.mxu0
        %v4745 = vadd.f32 %v4495, %v4742
        %4746 = vrot.lane.b32.xlu0 %v3555, 64
        %v4747 = vpop.permute.xlu0 %4746
        %4748 = vrot.lane.b32.xlu0 %v3648, 64
        %v4749 = vpop.permute.xlu0 %4748
        %4750 = vrot.lane.b32.xlu0 %v3653, 64
        %v4751 = vpop.permute.xlu0 %4750
        %v4752 = vsel %vm1486, %v4747, 0
        %v4754 = vsel %vm1486, %v4749, 0
        %v4756 = vsel %vm1486, %v4751, 0
        %4758 = vmatprep.subr.mxu0 0.0
        %4759 = vmatpush1.xpose.msra.mxu0 %v4754
        %4760 = vmatprep.subr.mxu0 0.0
        %4761 = vmatpush1.xpose.msra.mxu0 %v4756
        %4762 = vmatprep.subr.mxu0 0.0
        %4763 = vmatpush1.xpose.msra.mxu0 0.0
        %4764 = vmatprep.subr.mxu0 0.0
        %4765 = vmatpush1.xpose.msra.mxu0 0.0
        %4766 = vmatprep.subr.mxu0 0.0
        %4767 = vmatpush1.xpose.msra.mxu0 0.0
        %4768 = vmatprep.subr.mxu0 0.0
        %4769 = vmatpush1.xpose.msra.mxu0 0.0
        %4770 = vmatprep.subr.mxu0 0.0
        %4771 = vmatpush1.xpose.msra.mxu0 0.0
        %4772 = vmatprep.subr.mxu0 0.0
        %4773 = vmatpush1.xpose.msra.mxu0 0.0
        %4774 = vmatprep.subr.mxu0 0.0
        %4775 = vmatpush1.xpose.msra.mxu0 0.0
        %4776 = vmatprep.subr.mxu0 0.0
        %4777 = vmatpush1.xpose.msra.mxu0 0.0
        %4778 = vmatprep.subr.mxu0 0.0
        %4779 = vmatpush1.xpose.msra.mxu0 0.0
        %4780 = vmatprep.subr.mxu0 0.0
        %4781 = vmatpush1.xpose.msra.mxu0 0.0
        %4782 = vmatprep.subr.mxu0 0.0
        %4783 = vmatpush1.xpose.msra.mxu0 0.0
        %4784 = vmatprep.subr.mxu0 0.0
        %4785 = vmatpush1.xpose.msra.mxu0 0.0
        %4786 = vmatprep.subr.mxu0 0.0
        %4787 = vmatpush1.xpose.msra.mxu0 0.0
        %4788 = vmatprep.subr.mxu0 0.0
        %4789 = vmatpush1.xpose.msra.mxu0 0.0
        %4790 = vmatprep.subr.mxu0 0.0
        %4791 = vmatpush1.xpose.msra.mxu0 0.0
        %4792 = vmatprep.subr.mxu0 0.0
        %4793 = vmatpush1.xpose.msra.mxu0 0.0
        %4794 = vmatprep.subr.mxu0 0.0
        %4795 = vmatpush1.xpose.msra.mxu0 0.0
        %4796 = vmatprep.subr.mxu0 0.0
        %4797 = vmatpush1.xpose.msra.mxu0 0.0
        %4798 = vmatprep.subr.mxu0 0.0
        %4799 = vmatpush1.xpose.msra.mxu0 0.0
        %4800 = vmatprep.subr.mxu0 0.0
        %4801 = vmatpush1.xpose.msra.mxu0 0.0
        %4802 = vmatprep.subr.mxu0 0.0
        %4803 = vmatpush1.xpose.msra.mxu0 0.0
        %4804 = vmatprep.subr.mxu0 0.0
        %4805 = vmatpush1.xpose.msra.mxu0 0.0
        %4806 = vmatprep.subr.mxu0 0.0
        %4807 = vmatpush1.xpose.msra.mxu0 0.0
        %4808 = vmatprep.subr.mxu0 0.0
        %4809 = vmatpush1.xpose.msra.mxu0 0.0
        %4810 = vmatprep.subr.mxu0 0.0
        %4811 = vmatpush1.xpose.msra.mxu0 0.0
        %4812 = vmatprep.subr.mxu0 0.0
        %4813 = vmatpush1.xpose.msra.mxu0 0.0
        %4814 = vmatprep.subr.mxu0 0.0
        %4815 = vmatpush1.xpose.msra.mxu0 0.0
        %4816 = vmatprep.subr.mxu0 0.0
        %4817 = vmatpush1.xpose.msra.mxu0 0.0
        %4818 = vmatprep.subr.mxu0 0.0
        %4819 = vmatpush1.xpose.msra.mxu0 0.0
        %4820 = vmatprep.subr.mxu0 0.0
        %4821 = vmatpush1.xpose.msra.mxu0 0.0
        %4822 = vmatprep.mubr.f32.mxu0 0.0
        %4823 = vmatmul.mubr.f32.gmra.mrb[0].mxu0 %v4752
        %v4824 = vpop.f32.mrb[0].mxu0
        %v4825 = vadd.f32 0.0, %v4824
        %v4826 = vpop.f32.mrb[0].mxu0
        %4827 = vdwg.mxu0
        %v4828 = vmul.f32 %v4825, 0.25
        %v4829 = vadd.f32 %v4828, %v3834
        %v4830 = vsel %vm1486, %v4829, -inf
        %4831 = vmax.xlane.f32.xlu0 %v4830
        %v4832 = vpop.xlane.xlu0 %4831
        %v4833 = vsub.f32 %v4829, %v4832
        %v4834 = vmul.f32 %v4833, 1.442695
        %v4835 = vpow.pop %v4834
        %v4836 = vsel %vm1486, %v4835, 0.0
        %4837 = vadd.xlane.f32.xlu0 %v4836
        %v4838 = vpop.xlane.xlu0 %4837
        %v4839 = vrcp.pop %v4838
        %v4840 = vmul.f32 %v4835, %v4839
        %4841 = vrot.lane.b32.xlu0 %v3746, 64
        %v4842 = vpop.permute.xlu0 %4841
        %4843 = vrot.lane.b32.xlu0 %v3751, 64
        %v4844 = vpop.permute.xlu0 %4843
        %v4848 = vsel %vm1486, %v4840, 0
        %4850 = vmatprep.subr.mxu0 0.0
        %4851 = vmatpush1.msra.mxu0 %v4842
        %4852 = vmatprep.subr.mxu0 0.0
        %4853 = vmatpush1.msra.mxu0 %v4844
        %4854 = vmatprep.subr.mxu0 0.0
        %4855 = vmatpush1.msra.mxu0 0.0
        %4856 = vmatprep.subr.mxu0 0.0
        %4857 = vmatpush1.msra.mxu0 0.0
        %4858 = vmatprep.subr.mxu0 0.0
        %4859 = vmatpush1.msra.mxu0 0.0
        %4860 = vmatprep.subr.mxu0 0.0
        %4861 = vmatpush1.msra.mxu0 0.0
        %4862 = vmatprep.subr.mxu0 0.0
        %4863 = vmatpush1.msra.mxu0 0.0
        %4864 = vmatprep.subr.mxu0 0.0
        %4865 = vmatpush1.msra.mxu0 0.0
        %4866 = vmatprep.subr.mxu0 0.0
        %4867 = vmatpush1.msra.mxu0 0.0
        %4868 = vmatprep.subr.mxu0 0.0
        %4869 = vmatpush1.msra.mxu0 0.0
        %4870 = vmatprep.subr.mxu0 0.0
        %4871 = vmatpush1.msra.mxu0 0.0
        %4872 = vmatprep.subr.mxu0 0.0
        %4873 = vmatpush1.msra.mxu0 0.0
        %4874 = vmatprep.subr.mxu0 0.0
        %4875 = vmatpush1.msra.mxu0 0.0
        %4876 = vmatprep.subr.mxu0 0.0
        %4877 = vmatpush1.msra.mxu0 0.0
        %4878 = vmatprep.subr.mxu0 0.0
        %4879 = vmatpush1.msra.mxu0 0.0
        %4880 = vmatprep.subr.mxu0 0.0
        %4881 = vmatpush1.msra.mxu0 0.0
        %4882 = vmatprep.subr.mxu0 0.0
        %4883 = vmatpush1.msra.mxu0 0.0
        %4884 = vmatprep.subr.mxu0 0.0
        %4885 = vmatpush1.msra.mxu0 0.0
        %4886 = vmatprep.subr.mxu0 0.0
        %4887 = vmatpush1.msra.mxu0 0.0
        %4888 = vmatprep.subr.mxu0 0.0
        %4889 = vmatpush1.msra.mxu0 0.0
        %4890 = vmatprep.subr.mxu0 0.0
        %4891 = vmatpush1.msra.mxu0 0.0
        %4892 = vmatprep.subr.mxu0 0.0
        %4893 = vmatpush1.msra.mxu0 0.0
        %4894 = vmatprep.subr.mxu0 0.0
        %4895 = vmatpush1.msra.mxu0 0.0
        %4896 = vmatprep.subr.mxu0 0.0
        %4897 = vmatpush1.msra.mxu0 0.0
        %4898 = vmatprep.subr.mxu0 0.0
        %4899 = vmatpush1.msra.mxu0 0.0
        %4900 = vmatprep.subr.mxu0 0.0
        %4901 = vmatpush1.msra.mxu0 0.0
        %4902 = vmatprep.subr.mxu0 0.0
        %4903 = vmatpush1.msra.mxu0 0.0
        %4904 = vmatprep.subr.mxu0 0.0
        %4905 = vmatpush1.msra.mxu0 0.0
        %4906 = vmatprep.subr.mxu0 0.0
        %4907 = vmatpush1.msra.mxu0 0.0
        %4908 = vmatprep.subr.mxu0 0.0
        %4909 = vmatpush1.msra.mxu0 0.0
        %4910 = vmatprep.subr.mxu0 0.0
        %4911 = vmatpush1.msra.mxu0 0.0
        %4912 = vmatprep.subr.mxu0 0.0
        %4913 = vmatpush1.msra.mxu0 0.0
        %4914 = vmatprep.mubr.f32.mxu0 0.0
        %4915 = vmatmul.mubr.f32.gmra.mrb[0].mxu0 %v4848
        %v4916 = vpop.f32.mrb[0].mxu0
        %v4917 = vadd.f32 0.0, %v4916
        %v4918 = vpop.f32.mrb[0].mxu0
        %4919 = vdwg.mxu0
        %v4920 = vld [vmem:[#allocation20 + $0x40] sm:$0xff]
        %v4921 = vld [vmem:[#allocation20 + $0x48] sm:$0xff]
        %v4923 = vsel %vm1486, %v4917, 0
        %4925 = vmatprep.subr.mxu0 0.0
        %4926 = vmatpush1.msra.mxu0 %v4920
        %4927 = vmatprep.subr.mxu0 0.0
        %4928 = vmatpush1.msra.mxu0 %v4921
        %4929 = vmatprep.subr.mxu0 0.0
        %4930 = vmatpush1.msra.mxu0 0.0
        %4931 = vmatprep.subr.mxu0 0.0
        %4932 = vmatpush1.msra.mxu0 0.0
        %4933 = vmatprep.subr.mxu0 0.0
        %4934 = vmatpush1.msra.mxu0 0.0
        %4935 = vmatprep.subr.mxu0 0.0
        %4936 = vmatpush1.msra.mxu0 0.0
        %4937 = vmatprep.subr.mxu0 0.0
        %4938 = vmatpush1.msra.mxu0 0.0
        %4939 = vmatprep.subr.mxu0 0.0
        %4940 = vmatpush1.msra.mxu0 0.0
        %4941 = vmatprep.subr.mxu0 0.0
        %4942 = vmatpush1.msra.mxu0 0.0
        %4943 = vmatprep.subr.mxu0 0.0
        %4944 = vmatpush1.msra.mxu0 0.0
        %4945 = vmatprep.subr.mxu0 0.0
        %4946 = vmatpush1.msra.mxu0 0.0
        %4947 = vmatprep.subr.mxu0 0.0
        %4948 = vmatpush1.msra.mxu0 0.0
        %4949 = vmatprep.subr.mxu0 0.0
        %4950 = vmatpush1.msra.mxu0 0.0
        %4951 = vmatprep.subr.mxu0 0.0
        %4952 = vmatpush1.msra.mxu0 0.0
        %4953 = vmatprep.subr.mxu0 0.0
        %4954 = vmatpush1.msra.mxu0 0.0
        %4955 = vmatprep.subr.mxu0 0.0
        %4956 = vmatpush1.msra.mxu0 0.0
        %4957 = vmatprep.subr.mxu0 0.0
        %4958 = vmatpush1.msra.mxu0 0.0
        %4959 = vmatprep.subr.mxu0 0.0
        %4960 = vmatpush1.msra.mxu0 0.0
        %4961 = vmatprep.subr.mxu0 0.0
        %4962 = vmatpush1.msra.mxu0 0.0
        %4963 = vmatprep.subr.mxu0 0.0
        %4964 = vmatpush1.msra.mxu0 0.0
        %4965 = vmatprep.subr.mxu0 0.0
        %4966 = vmatpush1.msra.mxu0 0.0
        %4967 = vmatprep.subr.mxu0 0.0
        %4968 = vmatpush1.msra.mxu0 0.0
        %4969 = vmatprep.subr.mxu0 0.0
        %4970 = vmatpush1.msra.mxu0 0.0
        %4971 = vmatprep.subr.mxu0 0.0
        %4972 = vmatpush1.msra.mxu0 0.0
        %4973 = vmatprep.subr.mxu0 0.0
        %4974 = vmatpush1.msra.mxu0 0.0
        %4975 = vmatprep.subr.mxu0 0.0
        %4976 = vmatpush1.msra.mxu0 0.0
        %4977 = vmatprep.subr.mxu0 0.0
        %4978 = vmatpush1.msra.mxu0 0.0
        %4979 = vmatprep.subr.mxu0 0.0
        %4980 = vmatpush1.msra.mxu0 0.0
        %4981 = vmatprep.subr.mxu0 0.0
        %4982 = vmatpush1.msra.mxu0 0.0
        %4983 = vmatprep.subr.mxu0 0.0
        %4984 = vmatpush1.msra.mxu0 0.0
        %4985 = vmatprep.subr.mxu0 0.0
        %4986 = vmatpush1.msra.mxu0 0.0
        %4987 = vmatprep.subr.mxu0 0.0
        %4988 = vmatpush1.msra.mxu0 0.0
        %4989 = vmatprep.mubr.f32.mxu0 0.0
        %4990 = vmatmul.mubr.f32.gmra.mrb[0].mxu0 %v4923
        %v4991 = vpop.f32.mrb[0].mxu0
        %v4992 = vadd.f32 0.0, %v4991
        %v4993 = vpop.f32.mrb[0].mxu0
        %4994 = vdwg.mxu0
        %v4995 = vadd.f32 %v4745, %v4992
        %4996 = vrot.lane.b32.xlu0 %v3555, 48
        %v4997 = vpop.permute.xlu0 %4996
        %4998 = vrot.lane.b32.xlu0 %v3648, 48
        %v4999 = vpop.permute.xlu0 %4998
        %5000 = vrot.lane.b32.xlu0 %v3653, 48
        %v5001 = vpop.permute.xlu0 %5000
        %v5002 = vsel %vm1486, %v4997, 0
        %v5004 = vsel %vm1486, %v4999, 0
        %v5006 = vsel %vm1486, %v5001, 0
        %5008 = vmatprep.subr.mxu0 0.0
        %5009 = vmatpush1.xpose.msra.mxu0 %v5004
        %5010 = vmatprep.subr.mxu0 0.0
        %5011 = vmatpush1.xpose.msra.mxu0 %v5006
        %5012 = vmatprep.subr.mxu0 0.0
        %5013 = vmatpush1.xpose.msra.mxu0 0.0
        %5014 = vmatprep.subr.mxu0 0.0
        %5015 = vmatpush1.xpose.msra.mxu0 0.0
        %5016 = vmatprep.subr.mxu0 0.0
        %5017 = vmatpush1.xpose.msra.mxu0 0.0
        %5018 = vmatprep.subr.mxu0 0.0
        %5019 = vmatpush1.xpose.msra.mxu0 0.0
        %5020 = vmatprep.subr.mxu0 0.0
        %5021 = vmatpush1.xpose.msra.mxu0 0.0
        %5022 = vmatprep.subr.mxu0 0.0
        %5023 = vmatpush1.xpose.msra.mxu0 0.0
        %5024 = vmatprep.subr.mxu0 0.0
        %5025 = vmatpush1.xpose.msra.mxu0 0.0
        %5026 = vmatprep.subr.mxu0 0.0
        %5027 = vmatpush1.xpose.msra.mxu0 0.0
        %5028 = vmatprep.subr.mxu0 0.0
        %5029 = vmatpush1.xpose.msra.mxu0 0.0
        %5030 = vmatprep.subr.mxu0 0.0
        %5031 = vmatpush1.xpose.msra.mxu0 0.0
        %5032 = vmatprep.subr.mxu0 0.0
        %5033 = vmatpush1.xpose.msra.mxu0 0.0
        %5034 = vmatprep.subr.mxu0 0.0
        %5035 = vmatpush1.xpose.msra.mxu0 0.0
        %5036 = vmatprep.subr.mxu0 0.0
        %5037 = vmatpush1.xpose.msra.mxu0 0.0
        %5038 = vmatprep.subr.mxu0 0.0
        %5039 = vmatpush1.xpose.msra.mxu0 0.0
        %5040 = vmatprep.subr.mxu0 0.0
        %5041 = vmatpush1.xpose.msra.mxu0 0.0
        %5042 = vmatprep.subr.mxu0 0.0
        %5043 = vmatpush1.xpose.msra.mxu0 0.0
        %5044 = vmatprep.subr.mxu0 0.0
        %5045 = vmatpush1.xpose.msra.mxu0 0.0
        %5046 = vmatprep.subr.mxu0 0.0
        %5047 = vmatpush1.xpose.msra.mxu0 0.0
        %5048 = vmatprep.subr.mxu0 0.0
        %5049 = vmatpush1.xpose.msra.mxu0 0.0
        %5050 = vmatprep.subr.mxu0 0.0
        %5051 = vmatpush1.xpose.msra.mxu0 0.0
        %5052 = vmatprep.subr.mxu0 0.0
        %5053 = vmatpush1.xpose.msra.mxu0 0.0
        %5054 = vmatprep.subr.mxu0 0.0
        %5055 = vmatpush1.xpose.msra.mxu0 0.0
        %5056 = vmatprep.subr.mxu0 0.0
        %5057 = vmatpush1.xpose.msra.mxu0 0.0
        %5058 = vmatprep.subr.mxu0 0.0
        %5059 = vmatpush1.xpose.msra.mxu0 0.0
        %5060 = vmatprep.subr.mxu0 0.0
        %5061 = vmatpush1.xpose.msra.mxu0 0.0
        %5062 = vmatprep.subr.mxu0 0.0
        %5063 = vmatpush1.xpose.msra.mxu0 0.0
        %5064 = vmatprep.subr.mxu0 0.0
        %5065 = vmatpush1.xpose.msra.mxu0 0.0
        %5066 = vmatprep.subr.mxu0 0.0
        %5067 = vmatpush1.xpose.msra.mxu0 0.0
        %5068 = vmatprep.subr.mxu0 0.0
        %5069 = vmatpush1.xpose.msra.mxu0 0.0
        %5070 = vmatprep.subr.mxu0 0.0
        %5071 = vmatpush1.xpose.msra.mxu0 0.0
        %5072 = vmatprep.mubr.f32.mxu0 0.0
        %5073 = vmatmul.mubr.f32.gmra.mrb[0].mxu0 %v5002
        %v5074 = vpop.f32.mrb[0].mxu0
        %v5075 = vadd.f32 0.0, %v5074
        %v5076 = vpop.f32.mrb[0].mxu0
        %5077 = vdwg.mxu0
        %v5078 = vmul.f32 %v5075, 0.25
        %v5079 = vadd.f32 %v5078, %v3834
        %v5080 = vsel %vm1486, %v5079, -inf
        %5081 = vmax.xlane.f32.xlu0 %v5080
        %v5082 = vpop.xlane.xlu0 %5081
        %v5083 = vsub.f32 %v5079, %v5082
        %v5084 = vmul.f32 %v5083, 1.442695
        %v5085 = vpow.pop %v5084
        %v5086 = vsel %vm1486, %v5085, 0.0
        %5087 = vadd.xlane.f32.xlu0 %v5086
        %v5088 = vpop.xlane.xlu0 %5087
        %v5089 = vrcp.pop %v5088
        %v5090 = vmul.f32 %v5085, %v5089
        %5091 = vrot.lane.b32.xlu0 %v3746, 48
        %v5092 = vpop.permute.xlu0 %5091
        %5093 = vrot.lane.b32.xlu0 %v3751, 48
        %v5094 = vpop.permute.xlu0 %5093
        %v5098 = vsel %vm1486, %v5090, 0
        %5100 = vmatprep.subr.mxu0 0.0
        %5101 = vmatpush1.msra.mxu0 %v5092
        %5102 = vmatprep.subr.mxu0 0.0
        %5103 = vmatpush1.msra.mxu0 %v5094
        %5104 = vmatprep.subr.mxu0 0.0
        %5105 = vmatpush1.msra.mxu0 0.0
        %5106 = vmatprep.subr.mxu0 0.0
        %5107 = vmatpush1.msra.mxu0 0.0
        %5108 = vmatprep.subr.mxu0 0.0
        %5109 = vmatpush1.msra.mxu0 0.0
        %5110 = vmatprep.subr.mxu0 0.0
        %5111 = vmatpush1.msra.mxu0 0.0
        %5112 = vmatprep.subr.mxu0 0.0
        %5113 = vmatpush1.msra.mxu0 0.0
        %5114 = vmatprep.subr.mxu0 0.0
        %5115 = vmatpush1.msra.mxu0 0.0
        %5116 = vmatprep.subr.mxu0 0.0
        %5117 = vmatpush1.msra.mxu0 0.0
        %5118 = vmatprep.subr.mxu0 0.0
        %5119 = vmatpush1.msra.mxu0 0.0
        %5120 = vmatprep.subr.mxu0 0.0
        %5121 = vmatpush1.msra.mxu0 0.0
        %5122 = vmatprep.subr.mxu0 0.0
        %5123 = vmatpush1.msra.mxu0 0.0
        %5124 = vmatprep.subr.mxu0 0.0
        %5125 = vmatpush1.msra.mxu0 0.0
        %5126 = vmatprep.subr.mxu0 0.0
        %5127 = vmatpush1.msra.mxu0 0.0
        %5128 = vmatprep.subr.mxu0 0.0
        %5129 = vmatpush1.msra.mxu0 0.0
        %5130 = vmatprep.subr.mxu0 0.0
        %5131 = vmatpush1.msra.mxu0 0.0
        %5132 = vmatprep.subr.mxu0 0.0
        %5133 = vmatpush1.msra.mxu0 0.0
        %5134 = vmatprep.subr.mxu0 0.0
        %5135 = vmatpush1.msra.mxu0 0.0
        %5136 = vmatprep.subr.mxu0 0.0
        %5137 = vmatpush1.msra.mxu0 0.0
        %5138 = vmatprep.subr.mxu0 0.0
        %5139 = vmatpush1.msra.mxu0 0.0
        %5140 = vmatprep.subr.mxu0 0.0
        %5141 = vmatpush1.msra.mxu0 0.0
        %5142 = vmatprep.subr.mxu0 0.0
        %5143 = vmatpush1.msra.mxu0 0.0
        %5144 = vmatprep.subr.mxu0 0.0
        %5145 = vmatpush1.msra.mxu0 0.0
        %5146 = vmatprep.subr.mxu0 0.0
        %5147 = vmatpush1.msra.mxu0 0.0
        %5148 = vmatprep.subr.mxu0 0.0
        %5149 = vmatpush1.msra.mxu0 0.0
        %5150 = vmatprep.subr.mxu0 0.0
        %5151 = vmatpush1.msra.mxu0 0.0
        %5152 = vmatprep.subr.mxu0 0.0
        %5153 = vmatpush1.msra.mxu0 0.0
        %5154 = vmatprep.subr.mxu0 0.0
        %5155 = vmatpush1.msra.mxu0 0.0
        %5156 = vmatprep.subr.mxu0 0.0
        %5157 = vmatpush1.msra.mxu0 0.0
        %5158 = vmatprep.subr.mxu0 0.0
        %5159 = vmatpush1.msra.mxu0 0.0
        %5160 = vmatprep.subr.mxu0 0.0
        %5161 = vmatpush1.msra.mxu0 0.0
        %5162 = vmatprep.subr.mxu0 0.0
        %5163 = vmatpush1.msra.mxu0 0.0
        %5164 = vmatprep.mubr.f32.mxu0 0.0
        %5165 = vmatmul.mubr.f32.gmra.mrb[0].mxu0 %v5098
        %v5166 = vpop.f32.mrb[0].mxu0
        %v5167 = vadd.f32 0.0, %v5166
        %v5168 = vpop.f32.mrb[0].mxu0
        %5169 = vdwg.mxu0
        %v5170 = vld [vmem:[#allocation20 + $0x50] sm:$0xff]
        %v5171 = vld [vmem:[#allocation20 + $0x58] sm:$0xff]
        %v5173 = vsel %vm1486, %v5167, 0
        %5175 = vmatprep.subr.mxu0 0.0
        %5176 = vmatpush1.msra.mxu0 %v5170
        %5177 = vmatprep.subr.mxu0 0.0
        %5178 = vmatpush1.msra.mxu0 %v5171
        %5179 = vmatprep.subr.mxu0 0.0
        %5180 = vmatpush1.msra.mxu0 0.0
        %5181 = vmatprep.subr.mxu0 0.0
        %5182 = vmatpush1.msra.mxu0 0.0
        %5183 = vmatprep.subr.mxu0 0.0
        %5184 = vmatpush1.msra.mxu0 0.0
        %5185 = vmatprep.subr.mxu0 0.0
        %5186 = vmatpush1.msra.mxu0 0.0
        %5187 = vmatprep.subr.mxu0 0.0
        %5188 = vmatpush1.msra.mxu0 0.0
        %5189 = vmatprep.subr.mxu0 0.0
        %5190 = vmatpush1.msra.mxu0 0.0
        %5191 = vmatprep.subr.mxu0 0.0
        %5192 = vmatpush1.msra.mxu0 0.0
        %5193 = vmatprep.subr.mxu0 0.0
        %5194 = vmatpush1.msra.mxu0 0.0
        %5195 = vmatprep.subr.mxu0 0.0
        %5196 = vmatpush1.msra.mxu0 0.0
        %5197 = vmatprep.subr.mxu0 0.0
        %5198 = vmatpush1.msra.mxu0 0.0
        %5199 = vmatprep.subr.mxu0 0.0
        %5200 = vmatpush1.msra.mxu0 0.0
        %5201 = vmatprep.subr.mxu0 0.0
        %5202 = vmatpush1.msra.mxu0 0.0
        %5203 = vmatprep.subr.mxu0 0.0
        %5204 = vmatpush1.msra.mxu0 0.0
        %5205 = vmatprep.subr.mxu0 0.0
        %5206 = vmatpush1.msra.mxu0 0.0
        %5207 = vmatprep.subr.mxu0 0.0
        %5208 = vmatpush1.msra.mxu0 0.0
        %5209 = vmatprep.subr.mxu0 0.0
        %5210 = vmatpush1.msra.mxu0 0.0
        %5211 = vmatprep.subr.mxu0 0.0
        %5212 = vmatpush1.msra.mxu0 0.0
        %5213 = vmatprep.subr.mxu0 0.0
        %5214 = vmatpush1.msra.mxu0 0.0
        %5215 = vmatprep.subr.mxu0 0.0
        %5216 = vmatpush1.msra.mxu0 0.0
        %5217 = vmatprep.subr.mxu0 0.0
        %5218 = vmatpush1.msra.mxu0 0.0
        %5219 = vmatprep.subr.mxu0 0.0
        %5220 = vmatpush1.msra.mxu0 0.0
        %5221 = vmatprep.subr.mxu0 0.0
        %5222 = vmatpush1.msra.mxu0 0.0
        %5223 = vmatprep.subr.mxu0 0.0
        %5224 = vmatpush1.msra.mxu0 0.0
        %5225 = vmatprep.subr.mxu0 0.0
        %5226 = vmatpush1.msra.mxu0 0.0
        %5227 = vmatprep.subr.mxu0 0.0
        %5228 = vmatpush1.msra.mxu0 0.0
        %5229 = vmatprep.subr.mxu0 0.0
        %5230 = vmatpush1.msra.mxu0 0.0
        %5231 = vmatprep.subr.mxu0 0.0
        %5232 = vmatpush1.msra.mxu0 0.0
        %5233 = vmatprep.subr.mxu0 0.0
        %5234 = vmatpush1.msra.mxu0 0.0
        %5235 = vmatprep.subr.mxu0 0.0
        %5236 = vmatpush1.msra.mxu0 0.0
        %5237 = vmatprep.subr.mxu0 0.0
        %5238 = vmatpush1.msra.mxu0 0.0
        %5239 = vmatprep.mubr.f32.mxu0 0.0
        %5240 = vmatmul.mubr.f32.gmra.mrb[0].mxu0 %v5173
        %v5241 = vpop.f32.mrb[0].mxu0
        %v5242 = vadd.f32 0.0, %v5241
        %v5243 = vpop.f32.mrb[0].mxu0
        %5244 = vdwg.mxu0
        %v5245 = vadd.f32 %v4995, %v5242
        %5246 = vrot.lane.b32.xlu0 %v3555, 32
        %v5247 = vpop.permute.xlu0 %5246
        %5248 = vrot.lane.b32.xlu0 %v3648, 32
        %v5249 = vpop.permute.xlu0 %5248
        %5250 = vrot.lane.b32.xlu0 %v3653, 32
        %v5251 = vpop.permute.xlu0 %5250
        %v5252 = vsel %vm1486, %v5247, 0
        %v5254 = vsel %vm1486, %v5249, 0
        %v5256 = vsel %vm1486, %v5251, 0
        %5258 = vmatprep.subr.mxu0 0.0
        %5259 = vmatpush1.xpose.msra.mxu0 %v5254
        %5260 = vmatprep.subr.mxu0 0.0
        %5261 = vmatpush1.xpose.msra.mxu0 %v5256
        %5262 = vmatprep.subr.mxu0 0.0
        %5263 = vmatpush1.xpose.msra.mxu0 0.0
        %5264 = vmatprep.subr.mxu0 0.0
        %5265 = vmatpush1.xpose.msra.mxu0 0.0
        %5266 = vmatprep.subr.mxu0 0.0
        %5267 = vmatpush1.xpose.msra.mxu0 0.0
        %5268 = vmatprep.subr.mxu0 0.0
        %5269 = vmatpush1.xpose.msra.mxu0 0.0
        %5270 = vmatprep.subr.mxu0 0.0
        %5271 = vmatpush1.xpose.msra.mxu0 0.0
        %5272 = vmatprep.subr.mxu0 0.0
        %5273 = vmatpush1.xpose.msra.mxu0 0.0
        %5274 = vmatprep.subr.mxu0 0.0
        %5275 = vmatpush1.xpose.msra.mxu0 0.0
        %5276 = vmatprep.subr.mxu0 0.0
        %5277 = vmatpush1.xpose.msra.mxu0 0.0
        %5278 = vmatprep.subr.mxu0 0.0
        %5279 = vmatpush1.xpose.msra.mxu0 0.0
        %5280 = vmatprep.subr.mxu0 0.0
        %5281 = vmatpush1.xpose.msra.mxu0 0.0
        %5282 = vmatprep.subr.mxu0 0.0
        %5283 = vmatpush1.xpose.msra.mxu0 0.0
        %5284 = vmatprep.subr.mxu0 0.0
        %5285 = vmatpush1.xpose.msra.mxu0 0.0
        %5286 = vmatprep.subr.mxu0 0.0
        %5287 = vmatpush1.xpose.msra.mxu0 0.0
        %5288 = vmatprep.subr.mxu0 0.0
        %5289 = vmatpush1.xpose.msra.mxu0 0.0
        %5290 = vmatprep.subr.mxu0 0.0
        %5291 = vmatpush1.xpose.msra.mxu0 0.0
        %5292 = vmatprep.subr.mxu0 0.0
        %5293 = vmatpush1.xpose.msra.mxu0 0.0
        %5294 = vmatprep.subr.mxu0 0.0
        %5295 = vmatpush1.xpose.msra.mxu0 0.0
        %5296 = vmatprep.subr.mxu0 0.0
        %5297 = vmatpush1.xpose.msra.mxu0 0.0
        %5298 = vmatprep.subr.mxu0 0.0
        %5299 = vmatpush1.xpose.msra.mxu0 0.0
        %5300 = vmatprep.subr.mxu0 0.0
        %5301 = vmatpush1.xpose.msra.mxu0 0.0
        %5302 = vmatprep.subr.mxu0 0.0
        %5303 = vmatpush1.xpose.msra.mxu0 0.0
        %5304 = vmatprep.subr.mxu0 0.0
        %5305 = vmatpush1.xpose.msra.mxu0 0.0
        %5306 = vmatprep.subr.mxu0 0.0
        %5307 = vmatpush1.xpose.msra.mxu0 0.0
        %5308 = vmatprep.subr.mxu0 0.0
        %5309 = vmatpush1.xpose.msra.mxu0 0.0
        %5310 = vmatprep.subr.mxu0 0.0
        %5311 = vmatpush1.xpose.msra.mxu0 0.0
        %5312 = vmatprep.subr.mxu0 0.0
        %5313 = vmatpush1.xpose.msra.mxu0 0.0
        %5314 = vmatprep.subr.mxu0 0.0
        %5315 = vmatpush1.xpose.msra.mxu0 0.0
        %5316 = vmatprep.subr.mxu0 0.0
        %5317 = vmatpush1.xpose.msra.mxu0 0.0
        %5318 = vmatprep.subr.mxu0 0.0
        %5319 = vmatpush1.xpose.msra.mxu0 0.0
        %5320 = vmatprep.subr.mxu0 0.0
        %5321 = vmatpush1.xpose.msra.mxu0 0.0
        %5322 = vmatprep.mubr.f32.mxu0 0.0
        %5323 = vmatmul.mubr.f32.gmra.mrb[0].mxu0 %v5252
        %v5324 = vpop.f32.mrb[0].mxu0
        %v5325 = vadd.f32 0.0, %v5324
        %v5326 = vpop.f32.mrb[0].mxu0
        %5327 = vdwg.mxu0
        %v5328 = vmul.f32 %v5325, 0.25
        %v5329 = vadd.f32 %v5328, %v3834
        %v5330 = vsel %vm1486, %v5329, -inf
        %5331 = vmax.xlane.f32.xlu0 %v5330
        %v5332 = vpop.xlane.xlu0 %5331
        %v5333 = vsub.f32 %v5329, %v5332
        %v5334 = vmul.f32 %v5333, 1.442695
        %v5335 = vpow.pop %v5334
        %v5336 = vsel %vm1486, %v5335, 0.0
        %5337 = vadd.xlane.f32.xlu0 %v5336
        %v5338 = vpop.xlane.xlu0 %5337
        %v5339 = vrcp.pop %v5338
        %v5340 = vmul.f32 %v5335, %v5339
        %5341 = vrot.lane.b32.xlu0 %v3746, 32
        %v5342 = vpop.permute.xlu0 %5341
        %5343 = vrot.lane.b32.xlu0 %v3751, 32
        %v5344 = vpop.permute.xlu0 %5343
        %v5348 = vsel %vm1486, %v5340, 0
        %5350 = vmatprep.subr.mxu0 0.0
        %5351 = vmatpush1.msra.mxu0 %v5342
        %5352 = vmatprep.subr.mxu0 0.0
        %5353 = vmatpush1.msra.mxu0 %v5344
        %5354 = vmatprep.subr.mxu0 0.0
        %5355 = vmatpush1.msra.mxu0 0.0
        %5356 = vmatprep.subr.mxu0 0.0
        %5357 = vmatpush1.msra.mxu0 0.0
        %5358 = vmatprep.subr.mxu0 0.0
        %5359 = vmatpush1.msra.mxu0 0.0
        %5360 = vmatprep.subr.mxu0 0.0
        %5361 = vmatpush1.msra.mxu0 0.0
        %5362 = vmatprep.subr.mxu0 0.0
        %5363 = vmatpush1.msra.mxu0 0.0
        %5364 = vmatprep.subr.mxu0 0.0
        %5365 = vmatpush1.msra.mxu0 0.0
        %5366 = vmatprep.subr.mxu0 0.0
        %5367 = vmatpush1.msra.mxu0 0.0
        %5368 = vmatprep.subr.mxu0 0.0
        %5369 = vmatpush1.msra.mxu0 0.0
        %5370 = vmatprep.subr.mxu0 0.0
        %5371 = vmatpush1.msra.mxu0 0.0
        %5372 = vmatprep.subr.mxu0 0.0
        %5373 = vmatpush1.msra.mxu0 0.0
        %5374 = vmatprep.subr.mxu0 0.0
        %5375 = vmatpush1.msra.mxu0 0.0
        %5376 = vmatprep.subr.mxu0 0.0
        %5377 = vmatpush1.msra.mxu0 0.0
        %5378 = vmatprep.subr.mxu0 0.0
        %5379 = vmatpush1.msra.mxu0 0.0
        %5380 = vmatprep.subr.mxu0 0.0
        %5381 = vmatpush1.msra.mxu0 0.0
        %5382 = vmatprep.subr.mxu0 0.0
        %5383 = vmatpush1.msra.mxu0 0.0
        %5384 = vmatprep.subr.mxu0 0.0
        %5385 = vmatpush1.msra.mxu0 0.0
        %5386 = vmatprep.subr.mxu0 0.0
        %5387 = vmatpush1.msra.mxu0 0.0
        %5388 = vmatprep.subr.mxu0 0.0
        %5389 = vmatpush1.msra.mxu0 0.0
        %5390 = vmatprep.subr.mxu0 0.0
        %5391 = vmatpush1.msra.mxu0 0.0
        %5392 = vmatprep.subr.mxu0 0.0
        %5393 = vmatpush1.msra.mxu0 0.0
        %5394 = vmatprep.subr.mxu0 0.0
        %5395 = vmatpush1.msra.mxu0 0.0
        %5396 = vmatprep.subr.mxu0 0.0
        %5397 = vmatpush1.msra.mxu0 0.0
        %5398 = vmatprep.subr.mxu0 0.0
        %5399 = vmatpush1.msra.mxu0 0.0
        %5400 = vmatprep.subr.mxu0 0.0
        %5401 = vmatpush1.msra.mxu0 0.0
        %5402 = vmatprep.subr.mxu0 0.0
        %5403 = vmatpush1.msra.mxu0 0.0
        %5404 = vmatprep.subr.mxu0 0.0
        %5405 = vmatpush1.msra.mxu0 0.0
        %5406 = vmatprep.subr.mxu0 0.0
        %5407 = vmatpush1.msra.mxu0 0.0
        %5408 = vmatprep.subr.mxu0 0.0
        %5409 = vmatpush1.msra.mxu0 0.0
        %5410 = vmatprep.subr.mxu0 0.0
        %5411 = vmatpush1.msra.mxu0 0.0
        %5412 = vmatprep.subr.mxu0 0.0
        %5413 = vmatpush1.msra.mxu0 0.0
        %5414 = vmatprep.mubr.f32.mxu0 0.0
        %5415 = vmatmul.mubr.f32.gmra.mrb[0].mxu0 %v5348
        %v5416 = vpop.f32.mrb[0].mxu0
        %v5417 = vadd.f32 0.0, %v5416
        %v5418 = vpop.f32.mrb[0].mxu0
        %5419 = vdwg.mxu0
        %v5420 = vld [vmem:[#allocation20 + $0x60] sm:$0xff]
        %v5421 = vld [vmem:[#allocation20 + $0x68] sm:$0xff]
        %v5423 = vsel %vm1486, %v5417, 0
        %5425 = vmatprep.subr.mxu0 0.0
        %5426 = vmatpush1.msra.mxu0 %v5420
        %5427 = vmatprep.subr.mxu0 0.0
        %5428 = vmatpush1.msra.mxu0 %v5421
        %5429 = vmatprep.subr.mxu0 0.0
        %5430 = vmatpush1.msra.mxu0 0.0
        %5431 = vmatprep.subr.mxu0 0.0
        %5432 = vmatpush1.msra.mxu0 0.0
        %5433 = vmatprep.subr.mxu0 0.0
        %5434 = vmatpush1.msra.mxu0 0.0
        %5435 = vmatprep.subr.mxu0 0.0
        %5436 = vmatpush1.msra.mxu0 0.0
        %5437 = vmatprep.subr.mxu0 0.0
        %5438 = vmatpush1.msra.mxu0 0.0
        %5439 = vmatprep.subr.mxu0 0.0
        %5440 = vmatpush1.msra.mxu0 0.0
        %5441 = vmatprep.subr.mxu0 0.0
        %5442 = vmatpush1.msra.mxu0 0.0
        %5443 = vmatprep.subr.mxu0 0.0
        %5444 = vmatpush1.msra.mxu0 0.0
        %5445 = vmatprep.subr.mxu0 0.0
        %5446 = vmatpush1.msra.mxu0 0.0
        %5447 = vmatprep.subr.mxu0 0.0
        %5448 = vmatpush1.msra.mxu0 0.0
        %5449 = vmatprep.subr.mxu0 0.0
        %5450 = vmatpush1.msra.mxu0 0.0
        %5451 = vmatprep.subr.mxu0 0.0
        %5452 = vmatpush1.msra.mxu0 0.0
        %5453 = vmatprep.subr.mxu0 0.0
        %5454 = vmatpush1.msra.mxu0 0.0
        %5455 = vmatprep.subr.mxu0 0.0
        %5456 = vmatpush1.msra.mxu0 0.0
        %5457 = vmatprep.subr.mxu0 0.0
        %5458 = vmatpush1.msra.mxu0 0.0
        %5459 = vmatprep.subr.mxu0 0.0
        %5460 = vmatpush1.msra.mxu0 0.0
        %5461 = vmatprep.subr.mxu0 0.0
        %5462 = vmatpush1.msra.mxu0 0.0
        %5463 = vmatprep.subr.mxu0 0.0
        %5464 = vmatpush1.msra.mxu0 0.0
        %5465 = vmatprep.subr.mxu0 0.0
        %5466 = vmatpush1.msra.mxu0 0.0
        %5467 = vmatprep.subr.mxu0 0.0
        %5468 = vmatpush1.msra.mxu0 0.0
        %5469 = vmatprep.subr.mxu0 0.0
        %5470 = vmatpush1.msra.mxu0 0.0
        %5471 = vmatprep.subr.mxu0 0.0
        %5472 = vmatpush1.msra.mxu0 0.0
        %5473 = vmatprep.subr.mxu0 0.0
        %5474 = vmatpush1.msra.mxu0 0.0
        %5475 = vmatprep.subr.mxu0 0.0
        %5476 = vmatpush1.msra.mxu0 0.0
        %5477 = vmatprep.subr.mxu0 0.0
        %5478 = vmatpush1.msra.mxu0 0.0
        %5479 = vmatprep.subr.mxu0 0.0
        %5480 = vmatpush1.msra.mxu0 0.0
        %5481 = vmatprep.subr.mxu0 0.0
        %5482 = vmatpush1.msra.mxu0 0.0
        %5483 = vmatprep.subr.mxu0 0.0
        %5484 = vmatpush1.msra.mxu0 0.0
        %5485 = vmatprep.subr.mxu0 0.0
        %5486 = vmatpush1.msra.mxu0 0.0
        %5487 = vmatprep.subr.mxu0 0.0
        %5488 = vmatpush1.msra.mxu0 0.0
        %5489 = vmatprep.mubr.f32.mxu0 0.0
        %5490 = vmatmul.mubr.f32.gmra.mrb[0].mxu0 %v5423
        %v5491 = vpop.f32.mrb[0].mxu0
        %v5492 = vadd.f32 0.0, %v5491
        %v5493 = vpop.f32.mrb[0].mxu0
        %5494 = vdwg.mxu0
        %v5495 = vadd.f32 %v5245, %v5492
        %5496 = vrot.lane.b32.xlu0 %v3555, 16
        %v5497 = vpop.permute.xlu0 %5496
        %5498 = vrot.lane.b32.xlu0 %v3648, 16
        %v5499 = vpop.permute.xlu0 %5498
        %5500 = vrot.lane.b32.xlu0 %v3653, 16
        %v5501 = vpop.permute.xlu0 %5500
        %v5502 = vsel %vm1486, %v5497, 0
        %v5504 = vsel %vm1486, %v5499, 0
        %v5506 = vsel %vm1486, %v5501, 0
        %5508 = vmatprep.subr.mxu0 0.0
        %5509 = vmatpush1.xpose.msra.mxu0 %v5504
        %5510 = vmatprep.subr.mxu0 0.0
        %5511 = vmatpush1.xpose.msra.mxu0 %v5506
        %5512 = vmatprep.subr.mxu0 0.0
        %5513 = vmatpush1.xpose.msra.mxu0 0.0
        %5514 = vmatprep.subr.mxu0 0.0
        %5515 = vmatpush1.xpose.msra.mxu0 0.0
        %5516 = vmatprep.subr.mxu0 0.0
        %5517 = vmatpush1.xpose.msra.mxu0 0.0
        %5518 = vmatprep.subr.mxu0 0.0
        %5519 = vmatpush1.xpose.msra.mxu0 0.0
        %5520 = vmatprep.subr.mxu0 0.0
        %5521 = vmatpush1.xpose.msra.mxu0 0.0
        %5522 = vmatprep.subr.mxu0 0.0
        %5523 = vmatpush1.xpose.msra.mxu0 0.0
        %5524 = vmatprep.subr.mxu0 0.0
        %5525 = vmatpush1.xpose.msra.mxu0 0.0
        %5526 = vmatprep.subr.mxu0 0.0
        %5527 = vmatpush1.xpose.msra.mxu0 0.0
        %5528 = vmatprep.subr.mxu0 0.0
        %5529 = vmatpush1.xpose.msra.mxu0 0.0
        %5530 = vmatprep.subr.mxu0 0.0
        %5531 = vmatpush1.xpose.msra.mxu0 0.0
        %5532 = vmatprep.subr.mxu0 0.0
        %5533 = vmatpush1.xpose.msra.mxu0 0.0
        %5534 = vmatprep.subr.mxu0 0.0
        %5535 = vmatpush1.xpose.msra.mxu0 0.0
        %5536 = vmatprep.subr.mxu0 0.0
        %5537 = vmatpush1.xpose.msra.mxu0 0.0
        %5538 = vmatprep.subr.mxu0 0.0
        %5539 = vmatpush1.xpose.msra.mxu0 0.0
        %5540 = vmatprep.subr.mxu0 0.0
        %5541 = vmatpush1.xpose.msra.mxu0 0.0
        %5542 = vmatprep.subr.mxu0 0.0
        %5543 = vmatpush1.xpose.msra.mxu0 0.0
        %5544 = vmatprep.subr.mxu0 0.0
        %5545 = vmatpush1.xpose.msra.mxu0 0.0
        %5546 = vmatprep.subr.mxu0 0.0
        %5547 = vmatpush1.xpose.msra.mxu0 0.0
        %5548 = vmatprep.subr.mxu0 0.0
        %5549 = vmatpush1.xpose.msra.mxu0 0.0
        %5550 = vmatprep.subr.mxu0 0.0
        %5551 = vmatpush1.xpose.msra.mxu0 0.0
        %5552 = vmatprep.subr.mxu0 0.0
        %5553 = vmatpush1.xpose.msra.mxu0 0.0
        %5554 = vmatprep.subr.mxu0 0.0
        %5555 = vmatpush1.xpose.msra.mxu0 0.0
        %5556 = vmatprep.subr.mxu0 0.0
        %5557 = vmatpush1.xpose.msra.mxu0 0.0
        %5558 = vmatprep.subr.mxu0 0.0
        %5559 = vmatpush1.xpose.msra.mxu0 0.0
        %5560 = vmatprep.subr.mxu0 0.0
        %5561 = vmatpush1.xpose.msra.mxu0 0.0
        %5562 = vmatprep.subr.mxu0 0.0
        %5563 = vmatpush1.xpose.msra.mxu0 0.0
        %5564 = vmatprep.subr.mxu0 0.0
        %5565 = vmatpush1.xpose.msra.mxu0 0.0
        %5566 = vmatprep.subr.mxu0 0.0
        %5567 = vmatpush1.xpose.msra.mxu0 0.0
        %5568 = vmatprep.subr.mxu0 0.0
        %5569 = vmatpush1.xpose.msra.mxu0 0.0
        %5570 = vmatprep.subr.mxu0 0.0
        %5571 = vmatpush1.xpose.msra.mxu0 0.0
        %5572 = vmatprep.mubr.f32.mxu0 0.0
        %5573 = vmatmul.mubr.f32.gmra.mrb[0].mxu0 %v5502
        %v5574 = vpop.f32.mrb[0].mxu0
        %v5575 = vadd.f32 0.0, %v5574
        %v5576 = vpop.f32.mrb[0].mxu0
        %5577 = vdwg.mxu0
        %v5578 = vmul.f32 %v5575, 0.25
        %v5579 = vadd.f32 %v5578, %v3834
        %v5580 = vsel %vm1486, %v5579, -inf
        %5581 = vmax.xlane.f32.xlu0 %v5580
        %v5582 = vpop.xlane.xlu0 %5581
        %v5583 = vsub.f32 %v5579, %v5582
        %v5584 = vmul.f32 %v5583, 1.442695
        %v5585 = vpow.pop %v5584
        %v5586 = vsel %vm1486, %v5585, 0.0
        %5587 = vadd.xlane.f32.xlu0 %v5586
        %v5588 = vpop.xlane.xlu0 %5587
        %v5589 = vrcp.pop %v5588
        %v5590 = vmul.f32 %v5585, %v5589
        %5591 = vrot.lane.b32.xlu0 %v3746, 16
        %v5592 = vpop.permute.xlu0 %5591
        %5593 = vrot.lane.b32.xlu0 %v3751, 16
        %v5594 = vpop.permute.xlu0 %5593
        %v5598 = vsel %vm1486, %v5590, 0
        %5600 = vmatprep.subr.mxu0 0.0
        %5601 = vmatpush1.msra.mxu0 %v5592
        %5602 = vmatprep.subr.mxu0 0.0
        %5603 = vmatpush1.msra.mxu0 %v5594
        %5604 = vmatprep.subr.mxu0 0.0
        %5605 = vmatpush1.msra.mxu0 0.0
        %5606 = vmatprep.subr.mxu0 0.0
        %5607 = vmatpush1.msra.mxu0 0.0
        %5608 = vmatprep.subr.mxu0 0.0
        %5609 = vmatpush1.msra.mxu0 0.0
        %5610 = vmatprep.subr.mxu0 0.0
        %5611 = vmatpush1.msra.mxu0 0.0
        %5612 = vmatprep.subr.mxu0 0.0
        %5613 = vmatpush1.msra.mxu0 0.0
        %5614 = vmatprep.subr.mxu0 0.0
        %5615 = vmatpush1.msra.mxu0 0.0
        %5616 = vmatprep.subr.mxu0 0.0
        %5617 = vmatpush1.msra.mxu0 0.0
        %5618 = vmatprep.subr.mxu0 0.0
        %5619 = vmatpush1.msra.mxu0 0.0
        %5620 = vmatprep.subr.mxu0 0.0
        %5621 = vmatpush1.msra.mxu0 0.0
        %5622 = vmatprep.subr.mxu0 0.0
        %5623 = vmatpush1.msra.mxu0 0.0
        %5624 = vmatprep.subr.mxu0 0.0
        %5625 = vmatpush1.msra.mxu0 0.0
        %5626 = vmatprep.subr.mxu0 0.0
        %5627 = vmatpush1.msra.mxu0 0.0
        %5628 = vmatprep.subr.mxu0 0.0
        %5629 = vmatpush1.msra.mxu0 0.0
        %5630 = vmatprep.subr.mxu0 0.0
        %5631 = vmatpush1.msra.mxu0 0.0
        %5632 = vmatprep.subr.mxu0 0.0
        %5633 = vmatpush1.msra.mxu0 0.0
        %5634 = vmatprep.subr.mxu0 0.0
        %5635 = vmatpush1.msra.mxu0 0.0
        %5636 = vmatprep.subr.mxu0 0.0
        %5637 = vmatpush1.msra.mxu0 0.0
        %5638 = vmatprep.subr.mxu0 0.0
        %5639 = vmatpush1.msra.mxu0 0.0
        %5640 = vmatprep.subr.mxu0 0.0
        %5641 = vmatpush1.msra.mxu0 0.0
        %5642 = vmatprep.subr.mxu0 0.0
        %5643 = vmatpush1.msra.mxu0 0.0
        %5644 = vmatprep.subr.mxu0 0.0
        %5645 = vmatpush1.msra.mxu0 0.0
        %5646 = vmatprep.subr.mxu0 0.0
        %5647 = vmatpush1.msra.mxu0 0.0
        %5648 = vmatprep.subr.mxu0 0.0
        %5649 = vmatpush1.msra.mxu0 0.0
        %5650 = vmatprep.subr.mxu0 0.0
        %5651 = vmatpush1.msra.mxu0 0.0
        %5652 = vmatprep.subr.mxu0 0.0
        %5653 = vmatpush1.msra.mxu0 0.0
        %5654 = vmatprep.subr.mxu0 0.0
        %5655 = vmatpush1.msra.mxu0 0.0
        %5656 = vmatprep.subr.mxu0 0.0
        %5657 = vmatpush1.msra.mxu0 0.0
        %5658 = vmatprep.subr.mxu0 0.0
        %5659 = vmatpush1.msra.mxu0 0.0
        %5660 = vmatprep.subr.mxu0 0.0
        %5661 = vmatpush1.msra.mxu0 0.0
        %5662 = vmatprep.subr.mxu0 0.0
        %5663 = vmatpush1.msra.mxu0 0.0
        %5664 = vmatprep.mubr.f32.mxu0 0.0
        %5665 = vmatmul.mubr.f32.gmra.mrb[0].mxu0 %v5598
        %v5666 = vpop.f32.mrb[0].mxu0
        %v5667 = vadd.f32 0.0, %v5666
        %v5668 = vpop.f32.mrb[0].mxu0
        %5669 = vdwg.mxu0
        %v5670 = vld [vmem:[#allocation20 + $0x70] sm:$0xff]
        %v5671 = vld [vmem:[#allocation20 + $0x78] sm:$0xff]
        %v5673 = vsel %vm1486, %v5667, 0
        %5675 = vmatprep.subr.mxu0 0.0
        %5676 = vmatpush1.msra.mxu0 %v5670
        %5677 = vmatprep.subr.mxu0 0.0
        %5678 = vmatpush1.msra.mxu0 %v5671
        %5679 = vmatprep.subr.mxu0 0.0
        %5680 = vmatpush1.msra.mxu0 0.0
        %5681 = vmatprep.subr.mxu0 0.0
        %5682 = vmatpush1.msra.mxu0 0.0
        %5683 = vmatprep.subr.mxu0 0.0
        %5684 = vmatpush1.msra.mxu0 0.0
        %5685 = vmatprep.subr.mxu0 0.0
        %5686 = vmatpush1.msra.mxu0 0.0
        %5687 = vmatprep.subr.mxu0 0.0
        %5688 = vmatpush1.msra.mxu0 0.0
        %5689 = vmatprep.subr.mxu0 0.0
        %5690 = vmatpush1.msra.mxu0 0.0
        %5691 = vmatprep.subr.mxu0 0.0
        %5692 = vmatpush1.msra.mxu0 0.0
        %5693 = vmatprep.subr.mxu0 0.0
        %5694 = vmatpush1.msra.mxu0 0.0
        %5695 = vmatprep.subr.mxu0 0.0
        %5696 = vmatpush1.msra.mxu0 0.0
        %5697 = vmatprep.subr.mxu0 0.0
        %5698 = vmatpush1.msra.mxu0 0.0
        %5699 = vmatprep.subr.mxu0 0.0
        %5700 = vmatpush1.msra.mxu0 0.0
        %5701 = vmatprep.subr.mxu0 0.0
        %5702 = vmatpush1.msra.mxu0 0.0
        %5703 = vmatprep.subr.mxu0 0.0
        %5704 = vmatpush1.msra.mxu0 0.0
        %5705 = vmatprep.subr.mxu0 0.0
        %5706 = vmatpush1.msra.mxu0 0.0
        %5707 = vmatprep.subr.mxu0 0.0
        %5708 = vmatpush1.msra.mxu0 0.0
        %5709 = vmatprep.subr.mxu0 0.0
        %5710 = vmatpush1.msra.mxu0 0.0
        %5711 = vmatprep.subr.mxu0 0.0
        %5712 = vmatpush1.msra.mxu0 0.0
        %5713 = vmatprep.subr.mxu0 0.0
        %5714 = vmatpush1.msra.mxu0 0.0
        %5715 = vmatprep.subr.mxu0 0.0
        %5716 = vmatpush1.msra.mxu0 0.0
        %5717 = vmatprep.subr.mxu0 0.0
        %5718 = vmatpush1.msra.mxu0 0.0
        %5719 = vmatprep.subr.mxu0 0.0
        %5720 = vmatpush1.msra.mxu0 0.0
        %5721 = vmatprep.subr.mxu0 0.0
        %5722 = vmatpush1.msra.mxu0 0.0
        %5723 = vmatprep.subr.mxu0 0.0
        %5724 = vmatpush1.msra.mxu0 0.0
        %5725 = vmatprep.subr.mxu0 0.0
        %5726 = vmatpush1.msra.mxu0 0.0
        %5727 = vmatprep.subr.mxu0 0.0
        %5728 = vmatpush1.msra.mxu0 0.0
        %5729 = vmatprep.subr.mxu0 0.0
        %5730 = vmatpush1.msra.mxu0 0.0
        %5731 = vmatprep.subr.mxu0 0.0
        %5732 = vmatpush1.msra.mxu0 0.0
        %5733 = vmatprep.subr.mxu0 0.0
        %5734 = vmatpush1.msra.mxu0 0.0
        %5735 = vmatprep.subr.mxu0 0.0
        %5736 = vmatpush1.msra.mxu0 0.0
        %5737 = vmatprep.subr.mxu0 0.0
        %5738 = vmatpush1.msra.mxu0 0.0
        %5739 = vmatprep.mubr.f32.mxu0 0.0
        %5740 = vmatmul.mubr.f32.gmra.mrb[0].mxu0 %v5673
        %v5741 = vpop.f32.mrb[0].mxu0
        %v5742 = vadd.f32 0.0, %v5741
        %v5743 = vpop.f32.mrb[0].mxu0
        %5744 = vdwg.mxu0
        %v5745 = vadd.f32 %v5495, %v5742
        %v5746 = vld [vmem:[%s43] sm:$0x1]
        %v5748 = vlaneseq
        %v5749 = vshrl.u32 %v5748, 7
        %v5750 = vsub.s32 0, %v5749
        %v5751 = vrot.slane %v5746, %v5750
        %v5753 = vadd.f32 %v5745, %v5751
        %v5754 = vadd.f32 %v3464, %v5753
        %5755 = vadd.xlane.f32.xlu0 %v5754
        %v5756 = vpop.xlane.xlu0 %5755
        %v5757 = vmul.f32 %v5756, 0.0078125
        %v5758 = vmul.f32 %v5754, %v5754
        %5759 = vadd.xlane.f32.xlu0 %v5758
        %v5760 = vpop.xlane.xlu0 %5759
        %v5761 = vmul.f32 %v5760, 0.0078125
        %v5762 = vmul.f32 %v5757, %v5757
        %v5763 = vsub.f32 %v5761, %v5762
        %v5764 = vsub.f32 %v5754, %v5757
        %v5765 = vadd.f32 %v5763, 1e-06
        %v5766 = vrsqrt.pop %v5765
        %v5767 = vmul.f32 %v5764, %v5766
        %v5768 = vld [vmem:[%s45] sm:$0x1]
        %v5770 = vlaneseq
        %v5771 = vshrl.u32 %v5770, 7
        %v5772 = vsub.s32 0, %v5771
        %v5773 = vrot.slane %v5768, %v5772
        %v5775 = vmul.f32 %v5767, %v5773
        %v5776 = vld [vmem:[%s47] sm:$0x1]
        %v5778 = vlaneseq
        %v5779 = vshrl.u32 %v5778, 7
        %v5780 = vsub.s32 0, %v5779
        %v5781 = vrot.slane %v5776, %v5780
        %v5783 = vadd.f32 %v5775, %v5781
        %v5784 = vld [vmem:[#allocation22] sm:$0xff]
        %v5785 = vld [vmem:[#allocation22 + $0x8] sm:$0xff]
        %v5786 = vld [vmem:[#allocation22 + $0x10] sm:$0xff]
        %v5787 = vld [vmem:[#allocation22 + $0x18] sm:$0xff]
        %v5788 = vld [vmem:[#allocation22 + $0x20] sm:$0xff]
        %v5789 = vld [vmem:[#allocation22 + $0x28] sm:$0xff]
        %v5790 = vld [vmem:[#allocation22 + $0x30] sm:$0xff]
        %v5791 = vld [vmem:[#allocation22 + $0x38] sm:$0xff]
        %v5792 = vld [vmem:[#allocation22 + $0x40] sm:$0xff]
        %v5793 = vld [vmem:[#allocation22 + $0x48] sm:$0xff]
        %v5794 = vld [vmem:[#allocation22 + $0x50] sm:$0xff]
        %v5795 = vld [vmem:[#allocation22 + $0x58] sm:$0xff]
        %v5796 = vld [vmem:[#allocation22 + $0x60] sm:$0xff]
        %v5797 = vld [vmem:[#allocation22 + $0x68] sm:$0xff]
        %v5798 = vld [vmem:[#allocation22 + $0x70] sm:$0xff]
        %v5799 = vld [vmem:[#allocation22 + $0x78] sm:$0xff]
        %v5800 = vld [vmem:[#allocation22 + $0x80] sm:$0xff]
        %v5801 = vld [vmem:[#allocation22 + $0x88] sm:$0xff]
        %v5802 = vld [vmem:[#allocation22 + $0x90] sm:$0xff]
        %v5803 = vld [vmem:[#allocation22 + $0x98] sm:$0xff]
        %v5804 = vld [vmem:[#allocation22 + $0xa0] sm:$0xff]
        %v5805 = vld [vmem:[#allocation22 + $0xa8] sm:$0xff]
        %v5806 = vld [vmem:[#allocation22 + $0xb0] sm:$0xff]
        %v5807 = vld [vmem:[#allocation22 + $0xb8] sm:$0xff]
        %v5808 = vld [vmem:[#allocation22 + $0xc0] sm:$0xff]
        %v5809 = vld [vmem:[#allocation22 + $0xc8] sm:$0xff]
        %v5810 = vld [vmem:[#allocation22 + $0xd0] sm:$0xff]
        %v5811 = vld [vmem:[#allocation22 + $0xd8] sm:$0xff]
        %v5812 = vld [vmem:[#allocation22 + $0xe0] sm:$0xff]
        %v5813 = vld [vmem:[#allocation22 + $0xe8] sm:$0xff]
        %v5814 = vld [vmem:[#allocation22 + $0xf0] sm:$0xff]
        %v5815 = vld [vmem:[#allocation22 + $0xf8] sm:$0xff]
        %v5816 = vld [vmem:[%s51] sm:$0x3]
        %v5818 = vlaneseq
        %v5819 = vshrl.u32 %v5818, 7
        %v5820 = vsub.s32 0, %v5819
        %v5821 = vrot.slane %v5816, %v5820
        %v5822 = vlaneseq
        %v5823 = vshrl.u32 %v5822, 7
        %v5824 = vsub.s32 1, %v5823
        %v5825 = vrot.slane %v5816, %v5824
        %5828 = vmatprep.subr.mxu0 %v5785
        %5829 = vmatpush1.msra.mxu0 %v5784
        %5830 = vmatprep.subr.mxu0 %v5787
        %5831 = vmatpush1.msra.mxu0 %v5786
        %5832 = vmatprep.subr.mxu0 %v5789
        %5833 = vmatpush1.msra.mxu0 %v5788
        %5834 = vmatprep.subr.mxu0 %v5791
        %5835 = vmatpush1.msra.mxu0 %v5790
        %5836 = vmatprep.subr.mxu0 %v5793
        %5837 = vmatpush1.msra.mxu0 %v5792
        %5838 = vmatprep.subr.mxu0 %v5795
        %5839 = vmatpush1.msra.mxu0 %v5794
        %5840 = vmatprep.subr.mxu0 %v5797
        %5841 = vmatpush1.msra.mxu0 %v5796
        %5842 = vmatprep.subr.mxu0 %v5799
        %5843 = vmatpush1.msra.mxu0 %v5798
        %5844 = vmatprep.subr.mxu0 %v5801
        %5845 = vmatpush1.msra.mxu0 %v5800
        %5846 = vmatprep.subr.mxu0 %v5803
        %5847 = vmatpush1.msra.mxu0 %v5802
        %5848 = vmatprep.subr.mxu0 %v5805
        %5849 = vmatpush1.msra.mxu0 %v5804
        %5850 = vmatprep.subr.mxu0 %v5807
        %5851 = vmatpush1.msra.mxu0 %v5806
        %5852 = vmatprep.subr.mxu0 %v5809
        %5853 = vmatpush1.msra.mxu0 %v5808
        %5854 = vmatprep.subr.mxu0 %v5811
        %5855 = vmatpush1.msra.mxu0 %v5810
        %5856 = vmatprep.subr.mxu0 %v5813
        %5857 = vmatpush1.msra.mxu0 %v5812
        %5858 = vmatprep.subr.mxu0 %v5815
        %5859 = vmatpush1.msra.mxu0 %v5814
        %5860 = vmatprep.subr.mxu0 0.0
        %5861 = vmatpush1.msra.mxu0 0.0
        %5862 = vmatprep.subr.mxu0 0.0
        %5863 = vmatpush1.msra.mxu0 0.0
        %5864 = vmatprep.subr.mxu0 0.0
        %5865 = vmatpush1.msra.mxu0 0.0
        %5866 = vmatprep.subr.mxu0 0.0
        %5867 = vmatpush1.msra.mxu0 0.0
        %5868 = vmatprep.subr.mxu0 0.0
        %5869 = vmatpush1.msra.mxu0 0.0
        %5870 = vmatprep.subr.mxu0 0.0
        %5871 = vmatpush1.msra.mxu0 0.0
        %5872 = vmatprep.subr.mxu0 0.0
        %5873 = vmatpush1.msra.mxu0 0.0
        %5874 = vmatprep.subr.mxu0 0.0
        %5875 = vmatpush1.msra.mxu0 0.0
        %5876 = vmatprep.subr.mxu0 0.0
        %5877 = vmatpush1.msra.mxu0 0.0
        %5878 = vmatprep.subr.mxu0 0.0
        %5879 = vmatpush1.msra.mxu0 0.0
        %5880 = vmatprep.subr.mxu0 0.0
        %5881 = vmatpush1.msra.mxu0 0.0
        %5882 = vmatprep.subr.mxu0 0.0
        %5883 = vmatpush1.msra.mxu0 0.0
        %5884 = vmatprep.subr.mxu0 0.0
        %5885 = vmatpush1.msra.mxu0 0.0
        %5886 = vmatprep.subr.mxu0 0.0
        %5887 = vmatpush1.msra.mxu0 0.0
        %5888 = vmatprep.subr.mxu0 0.0
        %5889 = vmatpush1.msra.mxu0 0.0
        %5890 = vmatprep.subr.mxu0 0.0
        %5891 = vmatpush1.msra.mxu0 0.0
        %5892 = vmatprep.mubr.f32.mxu0 0.0
        %5893 = vmatmul.mubr.f32.gmra.mrb[0].mxu0 %v5783
        %v5894 = vpop.f32.mrb[0].mxu0
        %v5895 = vadd.f32 %v5821, %v5894
        %v5896 = vpop.f32.mrb[0].mxu0
        %v5897 = vadd.f32 %v5825, %v5896
        %5898 = vdwg.mxu0
        %v5899 = vmax.f32 %v5895, 0.0
        %v5900 = vmax.f32 %v5897, 0.0
        %v5901 = vld [vmem:[#allocation23] sm:$0xff]
        %v5902 = vld [vmem:[#allocation23 + $0x8] sm:$0xff]
        %v5903 = vld [vmem:[#allocation23 + $0x10] sm:$0xff]
        %v5904 = vld [vmem:[#allocation23 + $0x18] sm:$0xff]
        %v5905 = vld [vmem:[#allocation23 + $0x20] sm:$0xff]
        %v5906 = vld [vmem:[#allocation23 + $0x28] sm:$0xff]
        %v5907 = vld [vmem:[#allocation23 + $0x30] sm:$0xff]
        %v5908 = vld [vmem:[#allocation23 + $0x38] sm:$0xff]
        %v5909 = vld [vmem:[#allocation23 + $0x40] sm:$0xff]
        %v5910 = vld [vmem:[#allocation23 + $0x48] sm:$0xff]
        %v5911 = vld [vmem:[#allocation23 + $0x50] sm:$0xff]
        %v5912 = vld [vmem:[#allocation23 + $0x58] sm:$0xff]
        %v5913 = vld [vmem:[#allocation23 + $0x60] sm:$0xff]
        %v5914 = vld [vmem:[#allocation23 + $0x68] sm:$0xff]
        %v5915 = vld [vmem:[#allocation23 + $0x70] sm:$0xff]
        %v5916 = vld [vmem:[#allocation23 + $0x78] sm:$0xff]
        %v5917 = vld [vmem:[#allocation23 + $0x80] sm:$0xff]
        %v5918 = vld [vmem:[#allocation23 + $0x88] sm:$0xff]
        %v5919 = vld [vmem:[#allocation23 + $0x90] sm:$0xff]
        %v5920 = vld [vmem:[#allocation23 + $0x98] sm:$0xff]
        %v5921 = vld [vmem:[#allocation23 + $0xa0] sm:$0xff]
        %v5922 = vld [vmem:[#allocation23 + $0xa8] sm:$0xff]
        %v5923 = vld [vmem:[#allocation23 + $0xb0] sm:$0xff]
        %v5924 = vld [vmem:[#allocation23 + $0xb8] sm:$0xff]
        %v5925 = vld [vmem:[#allocation23 + $0xc0] sm:$0xff]
        %v5926 = vld [vmem:[#allocation23 + $0xc8] sm:$0xff]
        %v5927 = vld [vmem:[#allocation23 + $0xd0] sm:$0xff]
        %v5928 = vld [vmem:[#allocation23 + $0xd8] sm:$0xff]
        %v5929 = vld [vmem:[#allocation23 + $0xe0] sm:$0xff]
        %v5930 = vld [vmem:[#allocation23 + $0xe8] sm:$0xff]
        %v5931 = vld [vmem:[#allocation23 + $0xf0] sm:$0xff]
        %v5932 = vld [vmem:[#allocation23 + $0xf8] sm:$0xff]
        %v5933 = vld [vmem:[%s55] sm:$0x1]
        %v5935 = vlaneseq
        %v5936 = vshrl.u32 %v5935, 7
        %v5937 = vsub.s32 0, %v5936
        %v5938 = vrot.slane %v5933, %v5937
        %5940 = vmatprep.subr.mxu0 0.0
        %5941 = vmatpush1.msra.mxu0 %v5901
        %5942 = vmatprep.subr.mxu0 0.0
        %5943 = vmatpush1.msra.mxu0 %v5902
        %5944 = vmatprep.subr.mxu0 0.0
        %5945 = vmatpush1.msra.mxu0 %v5903
        %5946 = vmatprep.subr.mxu0 0.0
        %5947 = vmatpush1.msra.mxu0 %v5904
        %5948 = vmatprep.subr.mxu0 0.0
        %5949 = vmatpush1.msra.mxu0 %v5905
        %5950 = vmatprep.subr.mxu0 0.0
        %5951 = vmatpush1.msra.mxu0 %v5906
        %5952 = vmatprep.subr.mxu0 0.0
        %5953 = vmatpush1.msra.mxu0 %v5907
        %5954 = vmatprep.subr.mxu0 0.0
        %5955 = vmatpush1.msra.mxu0 %v5908
        %5956 = vmatprep.subr.mxu0 0.0
        %5957 = vmatpush1.msra.mxu0 %v5909
        %5958 = vmatprep.subr.mxu0 0.0
        %5959 = vmatpush1.msra.mxu0 %v5910
        %5960 = vmatprep.subr.mxu0 0.0
        %5961 = vmatpush1.msra.mxu0 %v5911
        %5962 = vmatprep.subr.mxu0 0.0
        %5963 = vmatpush1.msra.mxu0 %v5912
        %5964 = vmatprep.subr.mxu0 0.0
        %5965 = vmatpush1.msra.mxu0 %v5913
        %5966 = vmatprep.subr.mxu0 0.0
        %5967 = vmatpush1.msra.mxu0 %v5914
        %5968 = vmatprep.subr.mxu0 0.0
        %5969 = vmatpush1.msra.mxu0 %v5915
        %5970 = vmatprep.subr.mxu0 0.0
        %5971 = vmatpush1.msra.mxu0 %v5916
        %5972 = vmatprep.subr.mxu0 0.0
        %5973 = vmatpush1.msra.mxu0 %v5917
        %5974 = vmatprep.subr.mxu0 0.0
        %5975 = vmatpush1.msra.mxu0 %v5918
        %5976 = vmatprep.subr.mxu0 0.0
        %5977 = vmatpush1.msra.mxu0 %v5919
        %5978 = vmatprep.subr.mxu0 0.0
        %5979 = vmatpush1.msra.mxu0 %v5920
        %5980 = vmatprep.subr.mxu0 0.0
        %5981 = vmatpush1.msra.mxu0 %v5921
        %5982 = vmatprep.subr.mxu0 0.0
        %5983 = vmatpush1.msra.mxu0 %v5922
        %5984 = vmatprep.subr.mxu0 0.0
        %5985 = vmatpush1.msra.mxu0 %v5923
        %5986 = vmatprep.subr.mxu0 0.0
        %5987 = vmatpush1.msra.mxu0 %v5924
        %5988 = vmatprep.subr.mxu0 0.0
        %5989 = vmatpush1.msra.mxu0 %v5925
        %5990 = vmatprep.subr.mxu0 0.0
        %5991 = vmatpush1.msra.mxu0 %v5926
        %5992 = vmatprep.subr.mxu0 0.0
        %5993 = vmatpush1.msra.mxu0 %v5927
        %5994 = vmatprep.subr.mxu0 0.0
        %5995 = vmatpush1.msra.mxu0 %v5928
        %5996 = vmatprep.subr.mxu0 0.0
        %5997 = vmatpush1.msra.mxu0 %v5929
        %5998 = vmatprep.subr.mxu0 0.0
        %5999 = vmatpush1.msra.mxu0 %v5930
        %6000 = vmatprep.subr.mxu0 0.0
        %6001 = vmatpush1.msra.mxu0 %v5931
        %6002 = vmatprep.subr.mxu0 0.0
        %6003 = vmatpush1.msra.mxu0 %v5932
        %6004 = vmatprep.mubr.f32.mxu0 %v5900
        %6005 = vmatmul.mubr.f32.gmra.mrb[0].mxu0 %v5899
        %v6006 = vpop.f32.mrb[0].mxu0
        %v6007 = vadd.f32 %v5938, %v6006
        %v6008 = vpop.f32.mrb[0].mxu0
        %6009 = vdwg.mxu0
        %v6010 = vadd.f32 %v5783, %v6007
        %6011 = vadd.xlane.f32.xlu0 %v6010
        %v6012 = vpop.xlane.xlu0 %6011
        %v6013 = vmul.f32 %v6012, 0.0078125
        %v6014 = vmul.f32 %v6010, %v6010
        %6015 = vadd.xlane.f32.xlu0 %v6014
        %v6016 = vpop.xlane.xlu0 %6015
        %v6017 = vmul.f32 %v6016, 0.0078125
        %v6018 = vmul.f32 %v6013, %v6013
        %v6019 = vsub.f32 %v6017, %v6018
        %v6020 = vsub.f32 %v6010, %v6013
        %v6021 = vadd.f32 %v6019, 1e-06
        %v6022 = vrsqrt.pop %v6021
        %v6023 = vmul.f32 %v6020, %v6022
        %v6024 = vld [vmem:[%s57] sm:$0x1]
        %v6026 = vlaneseq
        %v6027 = vshrl.u32 %v6026, 7
        %v6028 = vsub.s32 0, %v6027
        %v6029 = vrot.slane %v6024, %v6028
        %v6031 = vmul.f32 %v6023, %v6029
        %v6032 = vld [vmem:[%s59] sm:$0x1]
        %v6034 = vlaneseq
        %v6035 = vshrl.u32 %v6034, 7
        %v6036 = vsub.s32 0, %v6035
        %v6037 = vrot.slane %v6032, %v6036
        %v6039 = vadd.f32 %v6031, %v6037
        %6040 = vst [vmem:[%s1201] sm:$0xff] %v6039
        %s6041 = sand.u32 %s747, 1
        %s6042 = scalar_lea.sflag [#allocation4], %s6041
        %s6043 = sand.u32 %s747, 1
        %s6044 = smul.addr %s6043, 8
        %s6045 = scalar_lea.vmem [#allocation25], %s6044
        // Predicated region
        $region197: #{tpu_custom_call.1} parent=139 // pred_check
          %p6046 = pneg %p757
        $region198: #{tpu_custom_call.1} parent=139 // pred_check_branch
          %6048 = sbr.rel (%p6046) target = $region200
        $region199: #{tpu_custom_call.1} parent=139 // pred_region
          %s6050 = ssub.s32 128, 128
          %6051 = vsyncadd %s6042, %s6050
          %s6052 = smul.addr %s89, 128
          %s6053 = scalar_lea.hbm %s61, %s6052
          %s6055 = sshll.u32 %s6045, 4
          %s6056 = int_to_ptr.vmem [resolvable:$true] %s6055
          %6058 = dma.vmem_to_hbm [thread:$0]  %s6056, 128, %s6053, %s6042
        $region200: #{tpu_custom_call.1} parent=139 // pred_fallthru
          _
      $region140: #{tpu_custom_call.1} parent=5 // pred_fallthru
        _
      %p6059 = scmp.le.s32.totalorder 2, %s84
      // Predicated region
      $region201: #{tpu_custom_call.1} parent=5 // pred_check
        %p6060 = pneg %p6059
      $region202: #{tpu_custom_call.1} parent=5 // pred_check_branch
        %6062 = sbr.rel (%p6060) target = $region204
      $region203: #{tpu_custom_call.1} parent=5 // pred_region
        %s6063 = ssub.s32 %s84, 2
        // Predicated region
        $region205: #{tpu_custom_call.1} parent=203 // pred_check
          %p6064 = pneg %p763
        $region206: #{tpu_custom_call.1} parent=203 // pred_check_branch
          %6066 = sbr.rel (%p6064) target = $region208
        $region207: #{tpu_custom_call.1} parent=203 // pred_region
          %s6067 = sand.u32 %s748, 1
          %s6068 = scalar_lea.sflag [#allocation4], %s6067
          %s6069 = sand.u32 %s748, 1
          %s6070 = smul.addr %s6069, 8
          %s6071 = scalar_lea.vmem [#allocation25], %s6070
          %6072 = dma.done %s6068, 128
        $region208: #{tpu_custom_call.1} parent=203 // pred_fallthru
          _
      $region204: #{tpu_custom_call.1} parent=5 // pred_fallthru
        _
    $region6: #{tpu_custom_call.1} parent=1 // loop_footer
      %s88 = sadd.s32 1, %s84
    $region7: #{tpu_custom_call.1} parent=1 // loop_footer_branch
      %83 = sbr.rel target = $region3
    $region8: #{tpu_custom_call.1} parent=1 // loop_exit
      _
    %6073 = vsyncpa [#allocation3], 1
    %s6074 = scalar_lea.sflag [#allocation3], 1
    %6075 = vsyncpa %s6074, 1
    %6076 = vsyncpa [#allocation6], 1
    %s6077 = scalar_lea.sflag [#allocation6], 1
    %6078 = vsyncpa %s6077, 1
    %6079 = vsyncpa [#allocation9], 1
    %s6080 = scalar_lea.sflag [#allocation9], 1
    %6081 = vsyncpa %s6080, 1
    %6082 = vsyncpa [#allocation12], 1
    %6083 = vsyncpa [#allocation15], 1
    %6084 = vsyncpa [#allocation18], 1
    %6085 = vsyncpa [#allocation21], 1
    %6086 = vsyncpa [#allocation24], 1
    %6087 = vsyncpa [#allocation4], 1
    %s6088 = scalar_lea.sflag [#allocation4], 1
    %6089 = vsyncpa %s6088, 1

</llo_original>
